<compile_context>
chip_gen: v7x
topology: tpu7x:2x2x1
jax: 0.10.0
libtpu: 0.0.40
codegen_flags: <defaults>
</compile_context>

<pallas_src>
import jax
import jax.numpy as jnp
from jax.experimental import pallas as pl
from jax.experimental.pallas import tpu as pltpu


def _cdiv(a, b):
    return (a + b - 1) // b


def _round_up(x, m):
    return (x + m - 1) // m * m


def _make_pnn_kernel(field_num, embed_dim):
    F, D = field_num, embed_dim
    FD = F * D  # demo uses FD == 128 (one full lane tile); rolls stay lane-native

    def kernel(e_ref, w_all_ref, b_all_ref,
               wd0_ref, bd0_ref, wd1_ref, bd1_ref,
               wo_ref, bo_ref, out_ref):
        # e arrives bf16, (T, F*D) lane-dense, already value-scaled.
        e_bf = e_ref[...]
        e32 = e_bf.astype(jnp.float32)   # products in f32 (v5e has no bf16 VPU)

        # Fused LHS [ e | e*shift_0 | ... | e*shift_{F-1} ] -> (T, (F+1)*FD) bf16.
        # pltpu.roll(e, FD - s*D) gives shifted[n, g*D+d] = e[n, (g+s)%F, d]
        # (single XLU lane rotate per s in an otherwise idle slot), so the
        # pre-folded w_all contracts it straight to l_z + l_p in ONE streaming
        # MXU matmul -- no per-shift accumulate, no (N,F,F) tensor.
        chunks = [e_bf, (e32 * e32).astype(jnp.bfloat16)]            # l_z chunk, s = 0
        for s in range(1, F):
            rolled = pltpu.roll(e32, shift=FD - s * D, axis=1)       # fields shifted by +s
            chunks.append((e32 * rolled).astype(jnp.bfloat16))
        lhs = jnp.concatenate(chunks, axis=-1)                       # 128-lane-aligned chunks

        acc = jnp.dot(lhs, w_all_ref[...],
                      preferred_element_type=jnp.float32) + b_all_ref[...]
        y = jnp.maximum(acc, 0.0)

        # Deep MLP head (dropout == identity at inference); bf16 MXU operands,
        # f32 accumulate + bias add.
        y = jnp.maximum(
            jnp.dot(y.astype(jnp.bfloat16), wd0_ref[...],
                    preferred_element_type=jnp.float32) + bd0_ref[...], 0.0)
        y = jnp.maximum(
            jnp.dot(y.astype(jnp.bfloat16), wd1_ref[...],
                    preferred_element_type=jnp.float32) + bd1_ref[...], 0.0)

        # Output layer emitted lane-dense: contract the (1, H1) output row
        # against y's hidden dim -> (1, T), so the store is an unmasked
        # full-lane row write instead of a masked (T, 1) column.
        out_row = jax.lax.dot_general(
            wo_ref[...], y, (((1,), (1,)), ((), ())),
            preferred_element_type=jnp.float32)                      # (1, T)
        out_ref[...] = out_row + bo_ref[...]

    return kernel


def prepare_params(params):
    """One-time, batch-independent preprocessing (hoisted out of the forward).

    Folds W_p onto the cyclic-shift pair ordering used by the kernel
    (w_fold[s][g*D+d, k] = W_p[g, (g+s)%F, k]), pre-sums the three biases and
    casts the MXU weight operands to bf16.
    """
    F = int(round(params['W_p'].shape[0] ** 0.5))
    P = params['W_p'].shape[1]
    D = params['embedding'].shape[1]
    Wp3 = params['W_p'].reshape(F, F, P)
    g = jnp.arange(F)
    blocks = [params['W_z']]                                   # (F*D, P)
    for s in range(F):
        w_sg = Wp3[g, (g + s) % F, :]                          # (F, P)
        blocks.append(jnp.repeat(w_sg, D, axis=0))             # (F*D, P)
    w_all = jnp.concatenate(blocks, axis=0).astype(jnp.bfloat16)   # ((F+1)*F*D, P)
    return {
        'embedding': params['embedding'],
        'w_all': w_all,
        'b_all': (params['b_z'] + params['b_p'] + params['bias']).astype(jnp.float32),
        'W_d0': params['W_d0'].astype(jnp.bfloat16),
        'b_d0': params['b_d0'].astype(jnp.float32),
        'W_d1': params['W_d1'].astype(jnp.bfloat16),
        'b_d1': params['b_d1'].astype(jnp.float32),
        'wo_row': params['W_out'].T.astype(jnp.float32),       # (1, H1)
        'b_out': params['b_out'].astype(jnp.float32),          # (1, 1)
    }


@jax.jit
def pnn_forward(feature_index, feature_value, prepped):
    """feature_index: (N, F) int32; feature_value: (N, F) float32 -> (N, 1)."""
    emb_table = prepped['embedding']
    D = emb_table.shape[1]
    N, F = feature_index.shape
    FD = F * D

    # Embedding gather + feature-value scaling, flattened to a lane-dense
    # (N, F*D) slab and cast to bf16 (halves the kernel's only large HBM read).
    # TODO(synk): fuse the gather into the kernel (manual DMA / in-kernel table
    # lookup) to drop the gathered-slab HBM round trip entirely.
    emb = jnp.take(emb_table, feature_index, axis=0)                 # (N, F, D)
    e_flat = (emb * feature_value[:, :, None]).reshape(N, FD).astype(jnp.bfloat16)

    # Tile sizing: ~1024 rows/tile, multiple of 128 (bf16 sublane packing +
    # MXU M fill), and >= 2 grid steps so v7x's two TensorCores both get work
    # while padding stays minimal (N=1200 -> 2 x 640 rows).
    n_tiles = max(2, _cdiv(N, 1024))
    tile_n = _round_up(_cdiv(N, n_tiles), 128)
    grid_n = _cdiv(N, tile_n)
    n_pad = grid_n * tile_n
    if n_pad != N:
        e_flat = jnp.pad(e_flat, ((0, n_pad - N), (0, 0)))

    row_spec = pl.BlockSpec((tile_n, FD), lambda i: (i, 0))
    # Lane-dense output: (grid, 1, tile_n) rows; leading grid dim squeezed.
    out_spec = pl.BlockSpec((None, 1, tile_n), lambda i: (i, 0, 0))

    def resident(a):  # full-array block, constant index map -> stays in VMEM
        return pl.BlockSpec(a.shape, lambda i: (0,) * a.ndim)

    weights = (prepped['w_all'], prepped['b_all'],
               prepped['W_d0'], prepped['b_d0'],
               prepped['W_d1'], prepped['b_d1'],
               prepped['wo_row'], prepped['b_out'])

    out = pl.pallas_call(
        _make_pnn_kernel(F, D),
        out_shape=jax.ShapeDtypeStruct((grid_n, 1, tile_n), jnp.float32),
        grid=(grid_n,),
        in_specs=[row_spec] + [resident(w) for w in weights],
        out_specs=out_spec,
        compiler_params=pltpu.CompilerParams(
            dimension_semantics=("parallel",),
            vmem_limit_bytes=32 * 1024 * 1024),
    )(e_flat, *weights)
    return out.reshape(n_pad, 1)[:N]


def init_params(key, num_features, field_num, embedding_dims, pnn_output_dim,
                deep_layers_output_num):
    ks = jax.random.split(key, 16)
    D, F, P = embedding_dims, field_num, pnn_output_dim
    H0, H1 = deep_layers_output_num

    def lin(k, fan_in, fan_out):
        # uniform(-1/sqrt(fan_in), 1/sqrt(fan_in)), like torch.nn.Linear default
        bound = 1.0 / jnp.sqrt(fan_in)
        kw, kb = jax.random.split(k)
        W = jax.random.uniform(kw, (fan_in, fan_out), jnp.float32, -bound, bound)
        b = jax.random.uniform(kb, (1, fan_out), jnp.float32, -bound, bound)
        return W, b

    params = {}
    params['embedding'] = jax.random.normal(ks[0], (num_features, D), jnp.float32)
    params['W_z'], params['b_z'] = lin(ks[1], F * D, P)          # linear_layers
    params['W_p'], params['b_p'] = lin(ks[2], F * F, P)          # inner_layer
    params['bias'] = jax.random.uniform(ks[3], (1, P), jnp.float32)  # torch.rand
    params['W_d0'], params['b_d0'] = lin(ks[4], P, H0)           # deep_layers[0]
    params['W_d1'], params['b_d1'] = lin(ks[5], H0, H1)          # deep_layers[1]
    params['W_out'], params['b_out'] = lin(ks[6], H1, 1)         # output_layer
    return params


def pnn_reference(feature_index, feature_value, params):
    """Pure-JAX f32 reference mirroring the PyTorch forward (IPNN branch)."""
    emb = jnp.take(params['embedding'], feature_index, axis=0)
    N, F, D = emb.shape
    e = emb * feature_value[:, :, None]
    l_z = e.reshape(N, F * D) @ params['W_z'] + params['b_z']
    p = jnp.einsum('nfd,ngd->nfg', e, e).reshape(N, F * F)
    l_p = p @ params['W_p'] + params['b_p']
    y = jax.nn.relu(l_z + l_p + params['bias'])
    y = jax.nn.relu(y @ params['W_d0'] + params['b_d0'])
    y = jax.nn.relu(y @ params['W_d1'] + params['b_d1'])
    return y @ params['W_out'] + params['b_out']


if __name__ == "__main__":
    # Small shapes consistent with the module; N chosen so the kernel
    # exercises a 2-step batch grid and the padding path.
    N = 1200           # batch
    F = 8              # field_num
    D = 16             # embedding_dims  -> F*D = 128 (one full lane tile)
    V = 200            # num_features
    P = 32             # pnn_output_dim
    deep = [32, 32]    # deep_layers_output_num
    # dropout_deep -> identity at inference

    key = jax.random.PRNGKey(0)
    kp, ki, kv = jax.random.split(key, 3)

    params = init_params(kp, V, F, D, P, deep)
    prepped = prepare_params(params)      # hoisted, batch-independent fold/casts
    feature_index = jax.random.randint(ki, (N, F), 0, V, dtype=jnp.int32)
    feature_value = jax.random.uniform(kv, (N, F), jnp.float32)
    label = jnp.zeros((N, 1), jnp.float32)  # unused, as in the PyTorch forward

    out = pnn_forward(feature_index, feature_value, prepped)
    out = jax.block_until_ready(out)

    ref = pnn_reference(feature_index, feature_value, params)
    assert out.shape == (N, 1)
    max_err = float(jnp.max(jnp.abs(out - ref)))
    # bf16 MXU operands (f32 accumulate) vs. the f32 reference.
    assert jnp.allclose(out, ref, atol=5e-2, rtol=5e-2), (max_err, out[:4], ref[:4])

    print("KERNEL_OK")
</pallas_src>

<mosaic_0001>
module attributes {stable_mosaic.version = 11 : i64} {
  func.func @kernel(%arg0: i32, %arg1: memref<640x128xbf16, #tpu.memory_space<vmem>>, %arg2: memref<1152x32xbf16, #tpu.memory_space<vmem>>, %arg3: memref<1x32xf32, #tpu.memory_space<vmem>>, %arg4: memref<32x32xbf16, #tpu.memory_space<vmem>>, %arg5: memref<1x32xf32, #tpu.memory_space<vmem>>, %arg6: memref<32x32xbf16, #tpu.memory_space<vmem>>, %arg7: memref<1x32xf32, #tpu.memory_space<vmem>>, %arg8: memref<1x32xf32, #tpu.memory_space<vmem>>, %arg9: memref<1x1xf32, #tpu.memory_space<vmem>>, %arg10: memref<1x1x640xf32, #tpu.memory_space<vmem>>) attributes {dimension_semantics = [#tpu.dimension_semantics<parallel>], iteration_bounds = array<i64: 2>, scalar_prefetch = 0 : i64, scratch_operands = 0 : i64, tpu.core_type = #tpu.core_type<tc>, window_params = [{transform_indices = @transform_0, window_bounds = array<i64: 640, 128>}, {pipeline_mode = #tpu.pipeline_mode<synchronous>, transform_indices = @transform_1, window_bounds = array<i64: 1152, 32>}, {pipeline_mode = #tpu.pipeline_mode<synchronous>, transform_indices = @transform_2, window_bounds = array<i64: 1, 32>}, {pipeline_mode = #tpu.pipeline_mode<synchronous>, transform_indices = @transform_3, window_bounds = array<i64: 32, 32>}, {pipeline_mode = #tpu.pipeline_mode<synchronous>, transform_indices = @transform_4, window_bounds = array<i64: 1, 32>}, {pipeline_mode = #tpu.pipeline_mode<synchronous>, transform_indices = @transform_5, window_bounds = array<i64: 32, 32>}, {pipeline_mode = #tpu.pipeline_mode<synchronous>, transform_indices = @transform_6, window_bounds = array<i64: 1, 32>}, {pipeline_mode = #tpu.pipeline_mode<synchronous>, transform_indices = @transform_7, window_bounds = array<i64: 1, 32>}, {pipeline_mode = #tpu.pipeline_mode<synchronous>, transform_indices = @transform_8, window_bounds = array<i64: 1, 1>}, {transform_indices = @transform_9, window_bounds = array<i64: 1, 1, 640>}]} {
    %c0 = arith.constant 0 : index
    %c0_0 = arith.constant 0 : index
    %0 = vector.load %arg1[%c0, %c0_0] : memref<640x128xbf16, #tpu.memory_space<vmem>>, vector<640x128xbf16>
    %1 = arith.extf %0 : vector<640x128xbf16> to vector<640x128xf32>
    %2 = arith.mulf %1, %1 : vector<640x128xf32>
    %3 = arith.truncf %2 : vector<640x128xf32> to vector<640x128xbf16>
    %c112_i32 = arith.constant 112 : i32
    %4 = tpu.dynamic_rotate %1 by %c112_i32 dim 1 : vector<640x128xf32>, i32 -> vector<640x128xf32>
    %5 = arith.mulf %1, %4 : vector<640x128xf32>
    %6 = arith.truncf %5 : vector<640x128xf32> to vector<640x128xbf16>
    %c96_i32 = arith.constant 96 : i32
    %7 = tpu.dynamic_rotate %1 by %c96_i32 dim 1 : vector<640x128xf32>, i32 -> vector<640x128xf32>
    %8 = arith.mulf %1, %7 : vector<640x128xf32>
    %9 = arith.truncf %8 : vector<640x128xf32> to vector<640x128xbf16>
    %c80_i32 = arith.constant 80 : i32
    %10 = tpu.dynamic_rotate %1 by %c80_i32 dim 1 : vector<640x128xf32>, i32 -> vector<640x128xf32>
    %11 = arith.mulf %1, %10 : vector<640x128xf32>
    %12 = arith.truncf %11 : vector<640x128xf32> to vector<640x128xbf16>
    %c64_i32 = arith.constant 64 : i32
    %13 = tpu.dynamic_rotate %1 by %c64_i32 dim 1 : vector<640x128xf32>, i32 -> vector<640x128xf32>
    %14 = arith.mulf %1, %13 : vector<640x128xf32>
    %15 = arith.truncf %14 : vector<640x128xf32> to vector<640x128xbf16>
    %c48_i32 = arith.constant 48 : i32
    %16 = tpu.dynamic_rotate %1 by %c48_i32 dim 1 : vector<640x128xf32>, i32 -> vector<640x128xf32>
    %17 = arith.mulf %1, %16 : vector<640x128xf32>
    %18 = arith.truncf %17 : vector<640x128xf32> to vector<640x128xbf16>
    %c32_i32 = arith.constant 32 : i32
    %19 = tpu.dynamic_rotate %1 by %c32_i32 dim 1 : vector<640x128xf32>, i32 -> vector<640x128xf32>
    %20 = arith.mulf %1, %19 : vector<640x128xf32>
    %21 = arith.truncf %20 : vector<640x128xf32> to vector<640x128xbf16>
    %c16_i32 = arith.constant 16 : i32
    %22 = tpu.dynamic_rotate %1 by %c16_i32 dim 1 : vector<640x128xf32>, i32 -> vector<640x128xf32>
    %23 = arith.mulf %1, %22 : vector<640x128xf32>
    %24 = arith.truncf %23 : vector<640x128xf32> to vector<640x128xbf16>
    %25 = tpu.concatenate %0, %3, %6, %9, %12, %15, %18, %21, %24 in 1 : vector<640x128xbf16>, vector<640x128xbf16>, vector<640x128xbf16>, vector<640x128xbf16>, vector<640x128xbf16>, vector<640x128xbf16>, vector<640x128xbf16>, vector<640x128xbf16>, vector<640x128xbf16> -> vector<640x1152xbf16>
    %c0_1 = arith.constant 0 : index
    %c0_2 = arith.constant 0 : index
    %26 = vector.load %arg2[%c0_1, %c0_2] : memref<1152x32xbf16, #tpu.memory_space<vmem>>, vector<1152x32xbf16>
    %cst = arith.constant dense<0.000000e+00> : vector<640x32xf32>
    %27 = tpu.matmul %25, %26, %cst {dimension_numbers = #tpu.dot_dimension_numbers<[1], [0], [0], [1], [0, 0, 1, 1], [], []>} : vector<640x1152xbf16>, vector<1152x32xbf16>, vector<640x32xf32> -> vector<640x32xf32>
    %c0_3 = arith.constant 0 : index
    %c0_4 = arith.constant 0 : index
    %28 = vector.load %arg3[%c0_3, %c0_4] : memref<1x32xf32, #tpu.memory_space<vmem>>, vector<1x32xf32>
    %29 = vector.broadcast %28 : vector<1x32xf32> to vector<640x32xf32>
    %30 = arith.addf %27, %29 : vector<640x32xf32>
    %cst_5 = arith.constant 0.000000e+00 : f32
    %31 = vector.broadcast %cst_5 : f32 to vector<640x32xf32>
    %32 = arith.maximumf %30, %31 : vector<640x32xf32>
    %33 = arith.truncf %32 : vector<640x32xf32> to vector<640x32xbf16>
    %c0_6 = arith.constant 0 : index
    %c0_7 = arith.constant 0 : index
    %34 = vector.load %arg4[%c0_6, %c0_7] : memref<32x32xbf16, #tpu.memory_space<vmem>>, vector<32x32xbf16>
    %cst_8 = arith.constant dense<0.000000e+00> : vector<640x32xf32>
    %35 = tpu.matmul %33, %34, %cst_8 {dimension_numbers = #tpu.dot_dimension_numbers<[1], [0], [0], [1], [0, 0, 1, 1], [], []>} : vector<640x32xbf16>, vector<32x32xbf16>, vector<640x32xf32> -> vector<640x32xf32>
    %c0_9 = arith.constant 0 : index
    %c0_10 = arith.constant 0 : index
    %36 = vector.load %arg5[%c0_9, %c0_10] : memref<1x32xf32, #tpu.memory_space<vmem>>, vector<1x32xf32>
    %37 = vector.broadcast %36 : vector<1x32xf32> to vector<640x32xf32>
    %38 = arith.addf %35, %37 : vector<640x32xf32>
    %cst_11 = arith.constant 0.000000e+00 : f32
    %39 = vector.broadcast %cst_11 : f32 to vector<640x32xf32>
    %40 = arith.maximumf %38, %39 : vector<640x32xf32>
    %41 = arith.truncf %40 : vector<640x32xf32> to vector<640x32xbf16>
    %c0_12 = arith.constant 0 : index
    %c0_13 = arith.constant 0 : index
    %42 = vector.load %arg6[%c0_12, %c0_13] : memref<32x32xbf16, #tpu.memory_space<vmem>>, vector<32x32xbf16>
    %cst_14 = arith.constant dense<0.000000e+00> : vector<640x32xf32>
    %43 = tpu.matmul %41, %42, %cst_14 {dimension_numbers = #tpu.dot_dimension_numbers<[1], [0], [0], [1], [0, 0, 1, 1], [], []>} : vector<640x32xbf16>, vector<32x32xbf16>, vector<640x32xf32> -> vector<640x32xf32>
    %c0_15 = arith.constant 0 : index
    %c0_16 = arith.constant 0 : index
    %44 = vector.load %arg7[%c0_15, %c0_16] : memref<1x32xf32, #tpu.memory_space<vmem>>, vector<1x32xf32>
    %45 = vector.broadcast %44 : vector<1x32xf32> to vector<640x32xf32>
    %46 = arith.addf %43, %45 : vector<640x32xf32>
    %cst_17 = arith.constant 0.000000e+00 : f32
    %47 = vector.broadcast %cst_17 : f32 to vector<640x32xf32>
    %48 = arith.maximumf %46, %47 : vector<640x32xf32>
    %c0_18 = arith.constant 0 : index
    %c0_19 = arith.constant 0 : index
    %49 = vector.load %arg8[%c0_18, %c0_19] : memref<1x32xf32, #tpu.memory_space<vmem>>, vector<1x32xf32>
    %cst_20 = arith.constant dense<0.000000e+00> : vector<1x640xf32>
    %50 = tpu.matmul %49, %48, %cst_20 {dimension_numbers = #tpu.dot_dimension_numbers<[1], [1], [0], [0], [0, 0, 1, 0], [], []>} : vector<1x32xf32>, vector<640x32xf32>, vector<1x640xf32> -> vector<1x640xf32>
    %c0_21 = arith.constant 0 : index
    %c0_22 = arith.constant 0 : index
    %51 = vector.load %arg9[%c0_21, %c0_22] : memref<1x1xf32, #tpu.memory_space<vmem>>, vector<1x1xf32>
    %52 = vector.broadcast %51 : vector<1x1xf32> to vector<1x640xf32>
    %53 = arith.addf %50, %52 : vector<1x640xf32>
    %c0_23 = arith.constant 0 : index
    %c0_24 = arith.constant 0 : index
    %c0_25 = arith.constant 0 : index
    %54 = vector.load %arg10[%c0_23, %c0_24, %c0_25] : memref<1x1x640xf32, #tpu.memory_space<vmem>>, vector<1x1x640xf32>
    %55 = vector.shape_cast %54 : vector<1x1x640xf32> to vector<1x640xf32>
    %56 = vector.shape_cast %53 : vector<1x640xf32> to vector<1x1x640xf32>
    tpu.vector_store %arg10[%c0_23, %c0_24, %c0_25], %56 {strides = array<i32>} : memref<1x1x640xf32, #tpu.memory_space<vmem>>, vector<1x1x640xf32>,
    return
  }
  func.func @transform_0(%arg0: i32) -> (i32, i32) {
    %c0_i32 = arith.constant 0 : i32
    %c0_i32_0 = arith.constant 0 : i32
    return %arg0, %c0_i32 : i32, i32
  }
  func.func @transform_1(%arg0: i32) -> (i32, i32) {
    %c0_i32 = arith.constant 0 : i32
    %c0_i32_0 = arith.constant 0 : i32
    %c0_i32_1 = arith.constant 0 : i32
    return %c0_i32, %c0_i32_0 : i32, i32
  }
  func.func @transform_2(%arg0: i32) -> (i32, i32) {
    %c0_i32 = arith.constant 0 : i32
    %c0_i32_0 = arith.constant 0 : i32
    %c0_i32_1 = arith.constant 0 : i32
    return %c0_i32, %c0_i32_0 : i32, i32
  }
  func.func @transform_3(%arg0: i32) -> (i32, i32) {
    %c0_i32 = arith.constant 0 : i32
    %c0_i32_0 = arith.constant 0 : i32
    %c0_i32_1 = arith.constant 0 : i32
    return %c0_i32, %c0_i32_0 : i32, i32
  }
  func.func @transform_4(%arg0: i32) -> (i32, i32) {
    %c0_i32 = arith.constant 0 : i32
    %c0_i32_0 = arith.constant 0 : i32
    %c0_i32_1 = arith.constant 0 : i32
    return %c0_i32, %c0_i32_0 : i32, i32
  }
  func.func @transform_5(%arg0: i32) -> (i32, i32) {
    %c0_i32 = arith.constant 0 : i32
    %c0_i32_0 = arith.constant 0 : i32
    %c0_i32_1 = arith.constant 0 : i32
    return %c0_i32, %c0_i32_0 : i32, i32
  }
  func.func @transform_6(%arg0: i32) -> (i32, i32) {
    %c0_i32 = arith.constant 0 : i32
    %c0_i32_0 = arith.constant 0 : i32
    %c0_i32_1 = arith.constant 0 : i32
    return %c0_i32, %c0_i32_0 : i32, i32
  }
  func.func @transform_7(%arg0: i32) -> (i32, i32) {
    %c0_i32 = arith.constant 0 : i32
    %c0_i32_0 = arith.constant 0 : i32
    %c0_i32_1 = arith.constant 0 : i32
    return %c0_i32, %c0_i32_0 : i32, i32
  }
  func.func @transform_8(%arg0: i32) -> (i32, i32) {
    %c0_i32 = arith.constant 0 : i32
    %c0_i32_0 = arith.constant 0 : i32
    %c0_i32_1 = arith.constant 0 : i32
    return %c0_i32, %c0_i32_0 : i32, i32
  }
  func.func @transform_9(%arg0: i32) -> (i32, i32, i32) {
    %c0_i32 = arith.constant 0 : i32
    %c0_i32_0 = arith.constant 0 : i32
    %c0_i32_1 = arith.constant 0 : i32
    return %arg0, %c0_i32, %c0_i32_0 : i32, i32, i32
  }
}

</mosaic_0001>

<llo_original>
// kernel: pnn_forward.1
$region0: #{pnn_forward.1}
  #allocation0 [shape = 'u32[]', space=smem, size = 0x4, offset = 0x4, fixed_abs, tag = 'smem constant byte address 0x4 - core index']
  #allocation1 [shape = 'u32[144,128]{1,0:T(1,128)}', space=vmem, size = 0x12000, scoped, tag = 'internal scratch']
  #allocation2 [shape = 'f32[1,1]{1,0:T(1,128)S(1)}', space=vmem, size = 0x200, scoped, tag = 'scoped memory for pnn_forward.1']
  %s0 = inlined_call_operand.vmem [shape: bf16[1280,128], index: 0, kind: input, shape index: {}]
  %s1 = inlined_call_operand.vmem [shape: bf16[1152,32], index: 1, kind: input, shape index: {}]
  %s2 = inlined_call_operand.vmem [shape: f32[1,32], index: 2, kind: input, shape index: {}]
  %s3 = inlined_call_operand.vmem [shape: bf16[32,32], index: 3, kind: input, shape index: {}]
  %s4 = inlined_call_operand.vmem [shape: f32[1,32], index: 4, kind: input, shape index: {}]
  %s5 = inlined_call_operand.vmem [shape: bf16[32,32], index: 5, kind: input, shape index: {}]
  %s6 = inlined_call_operand.vmem [shape: f32[1,32], index: 6, kind: input, shape index: {}]
  %s7 = inlined_call_operand.vmem [shape: f32[1,32], index: 7, kind: input, shape index: {}]
  %s8 = inlined_call_operand.<no memory space> [shape: f32[1,1], index: 8, kind: input, shape index: {}]
  %s9 = inlined_call_operand.hbm [shape: f32[2,1,640], index: 9, kind: output, shape index: {}]
  %s10 = sld [smem:[#allocation0]]
  $region69: #{pnn_forward.1} parent=0
    _
  %s12 = ssub.s32 1, %s10
  %s13 = scalar_select 0, %s12, %s10
  %v14 = vstv %s8
  %15 = vst [vmem:[#allocation2] sm:$0x1] %v14
  $region1: #{pnn_forward.1} parent=0
    #allocation3 [shape = 'u8[5120]{0}', space=vmem, size = 0x1400, scoped, tag = 'output window, operand 0']
    #allocation4 [shape = 's32[2]{0}', space=sflag, size = 0x8, scoped, tag = 'scoped memory for pnn_forward.1']
    %16 = vsyncpa [#allocation4], 0
    %s17 = scalar_lea.sflag [#allocation4], 1
    %18 = vsyncpa %s17, 0
    loop: start=0, step=1, limit=4
    $region2: #{pnn_forward.1} parent=1 // loop_pre_header
      _
    $region3: #{pnn_forward.1} parent=1 // loop_header
      %s20 = sphi 0, %s24
      %p21 = scmp.ge.s32.totalorder %s20, 4
      %s30 = sphi 0, %s32
      %s33 = sphi 0, %s30
      %s34 = sphi 0, %s33
      %s50 = sphi 0, %s34
      %s54 = sphi 0, %s54
      %s56 = sphi 0, %s54
      %s57 = sphi 0, %s56
      %s71 = sphi 0, %s57
      %s75 = sphi 0, %s75
      %s77 = sphi 0, %s75
      %s78 = sphi 0, %s77
      %s92 = sphi 0, %s78
      %s96 = sphi 0, %s96
      %s98 = sphi 0, %s96
      %s99 = sphi 0, %s98
      %s113 = sphi 0, %s99
      %s117 = sphi 0, %s117
      %s119 = sphi 0, %s117
      %s120 = sphi 0, %s119
      %s134 = sphi 0, %s120
      %s138 = sphi 0, %s138
      %s140 = sphi 0, %s138
      %s141 = sphi 0, %s140
      %s155 = sphi 0, %s141
      %s159 = sphi 0, %s159
      %s161 = sphi 0, %s159
      %s162 = sphi 0, %s161
      %s176 = sphi 0, %s162
      %s180 = sphi 0, %s180
      %s182 = sphi 0, %s180
      %s183 = sphi 0, %s182
      %s197 = sphi 0, %s183
      %s201 = sphi 0, %s201
      %s203 = sphi 0, %s201
      %s204 = sphi 0, %s203
      %s218 = sphi 0, %s204
      %s224 = sphi 0, %s226
      %s227 = sphi 0, %s224
      %s228 = sphi 0, %s227
      %s244 = sphi 0, %s228
    $region4: #{pnn_forward.1} parent=1 // loop_header_branch
      %23 = sbr.rel (%p21) target = $region8
    $region5: #{pnn_forward.1} parent=1 // loop_body
      %s25 = ssub.s32 %s20, 1
      %s26 = ssub.s32 %s20, 2
      %s27 = sadd.s32 %s20, 1
      %s28 = ssub.s32 %s20, %s27
      %p29 = scmp.eq.s32.totalorder %s28, 0
      %s31 = sadd.s32 %s30, 1
      %s32 = scalar_select %p29, %s30, %s31
      %p35 = pneg %p29
      %p36 = scmp.eq.s32.totalorder %s20, 1
      %p37 = por %p35, %p36
      %p38 = scmp.ne.s32.totalorder %s30, %s33
      %p39 = scmp.eq.s32.totalorder %s20, 0
      %p40 = por %p38, %p39
      %p41 = scmp.ne.s32.totalorder %s30, %s33
      %p42 = scmp.eq.s32.totalorder %s25, 1
      %p43 = por %p41, %p42
      %p44 = scmp.ne.s32.totalorder %s33, %s34
      %p45 = scmp.eq.s32.totalorder %s25, 0
      %p46 = por %p44, %p45
      %p47 = scmp.ne.s32.totalorder %s33, %s34
      %p48 = scmp.eq.s32.totalorder %s26, 1
      %p49 = por %p47, %p48
      %p51 = scmp.ne.s32.totalorder %s34, %s50
      %p52 = scmp.eq.s32.totalorder %s26, 0
      %p53 = por %p51, %p52
      %s55 = sadd.s32 %s54, 1
      %p58 = scmp.eq.s32.totalorder %s20, 1
      %p59 = scmp.ne.s32.totalorder %s54, %s56
      %p60 = scmp.eq.s32.totalorder %s20, 0
      %p61 = por %p59, %p60
      %p62 = scmp.ne.s32.totalorder %s54, %s56
      %p63 = scmp.eq.s32.totalorder %s25, 1
      %p64 = por %p62, %p63
      %p65 = scmp.ne.s32.totalorder %s56, %s57
      %p66 = scmp.eq.s32.totalorder %s25, 0
      %p67 = por %p65, %p66
      %p68 = scmp.ne.s32.totalorder %s56, %s57
      %p69 = scmp.eq.s32.totalorder %s26, 1
      %p70 = por %p68, %p69
      %p72 = scmp.ne.s32.totalorder %s57, %s71
      %p73 = scmp.eq.s32.totalorder %s26, 0
      %p74 = por %p72, %p73
      %s76 = sadd.s32 %s75, 1
      %p79 = scmp.eq.s32.totalorder %s20, 1
      %p80 = scmp.ne.s32.totalorder %s75, %s77
      %p81 = scmp.eq.s32.totalorder %s20, 0
      %p82 = por %p80, %p81
      %p83 = scmp.ne.s32.totalorder %s75, %s77
      %p84 = scmp.eq.s32.totalorder %s25, 1
      %p85 = por %p83, %p84
      %p86 = scmp.ne.s32.totalorder %s77, %s78
      %p87 = scmp.eq.s32.totalorder %s25, 0
      %p88 = por %p86, %p87
      %p89 = scmp.ne.s32.totalorder %s77, %s78
      %p90 = scmp.eq.s32.totalorder %s26, 1
      %p91 = por %p89, %p90
      %p93 = scmp.ne.s32.totalorder %s78, %s92
      %p94 = scmp.eq.s32.totalorder %s26, 0
      %p95 = por %p93, %p94
      %s97 = sadd.s32 %s96, 1
      %p100 = scmp.eq.s32.totalorder %s20, 1
      %p101 = scmp.ne.s32.totalorder %s96, %s98
      %p102 = scmp.eq.s32.totalorder %s20, 0
      %p103 = por %p101, %p102
      %p104 = scmp.ne.s32.totalorder %s96, %s98
      %p105 = scmp.eq.s32.totalorder %s25, 1
      %p106 = por %p104, %p105
      %p107 = scmp.ne.s32.totalorder %s98, %s99
      %p108 = scmp.eq.s32.totalorder %s25, 0
      %p109 = por %p107, %p108
      %p110 = scmp.ne.s32.totalorder %s98, %s99
      %p111 = scmp.eq.s32.totalorder %s26, 1
      %p112 = por %p110, %p111
      %p114 = scmp.ne.s32.totalorder %s99, %s113
      %p115 = scmp.eq.s32.totalorder %s26, 0
      %p116 = por %p114, %p115
      %s118 = sadd.s32 %s117, 1
      %p121 = scmp.eq.s32.totalorder %s20, 1
      %p122 = scmp.ne.s32.totalorder %s117, %s119
      %p123 = scmp.eq.s32.totalorder %s20, 0
      %p124 = por %p122, %p123
      %p125 = scmp.ne.s32.totalorder %s117, %s119
      %p126 = scmp.eq.s32.totalorder %s25, 1
      %p127 = por %p125, %p126
      %p128 = scmp.ne.s32.totalorder %s119, %s120
      %p129 = scmp.eq.s32.totalorder %s25, 0
      %p130 = por %p128, %p129
      %p131 = scmp.ne.s32.totalorder %s119, %s120
      %p132 = scmp.eq.s32.totalorder %s26, 1
      %p133 = por %p131, %p132
      %p135 = scmp.ne.s32.totalorder %s120, %s134
      %p136 = scmp.eq.s32.totalorder %s26, 0
      %p137 = por %p135, %p136
      %s139 = sadd.s32 %s138, 1
      %p142 = scmp.eq.s32.totalorder %s20, 1
      %p143 = scmp.ne.s32.totalorder %s138, %s140
      %p144 = scmp.eq.s32.totalorder %s20, 0
      %p145 = por %p143, %p144
      %p146 = scmp.ne.s32.totalorder %s138, %s140
      %p147 = scmp.eq.s32.totalorder %s25, 1
      %p148 = por %p146, %p147
      %p149 = scmp.ne.s32.totalorder %s140, %s141
      %p150 = scmp.eq.s32.totalorder %s25, 0
      %p151 = por %p149, %p150
      %p152 = scmp.ne.s32.totalorder %s140, %s141
      %p153 = scmp.eq.s32.totalorder %s26, 1
      %p154 = por %p152, %p153
      %p156 = scmp.ne.s32.totalorder %s141, %s155
      %p157 = scmp.eq.s32.totalorder %s26, 0
      %p158 = por %p156, %p157
      %s160 = sadd.s32 %s159, 1
      %p163 = scmp.eq.s32.totalorder %s20, 1
      %p164 = scmp.ne.s32.totalorder %s159, %s161
      %p165 = scmp.eq.s32.totalorder %s20, 0
      %p166 = por %p164, %p165
      %p167 = scmp.ne.s32.totalorder %s159, %s161
      %p168 = scmp.eq.s32.totalorder %s25, 1
      %p169 = por %p167, %p168
      %p170 = scmp.ne.s32.totalorder %s161, %s162
      %p171 = scmp.eq.s32.totalorder %s25, 0
      %p172 = por %p170, %p171
      %p173 = scmp.ne.s32.totalorder %s161, %s162
      %p174 = scmp.eq.s32.totalorder %s26, 1
      %p175 = por %p173, %p174
      %p177 = scmp.ne.s32.totalorder %s162, %s176
      %p178 = scmp.eq.s32.totalorder %s26, 0
      %p179 = por %p177, %p178
      %s181 = sadd.s32 %s180, 1
      %p184 = scmp.eq.s32.totalorder %s20, 1
      %p185 = scmp.ne.s32.totalorder %s180, %s182
      %p186 = scmp.eq.s32.totalorder %s20, 0
      %p187 = por %p185, %p186
      %p188 = scmp.ne.s32.totalorder %s180, %s182
      %p189 = scmp.eq.s32.totalorder %s25, 1
      %p190 = por %p188, %p189
      %p191 = scmp.ne.s32.totalorder %s182, %s183
      %p192 = scmp.eq.s32.totalorder %s25, 0
      %p193 = por %p191, %p192
      %p194 = scmp.ne.s32.totalorder %s182, %s183
      %p195 = scmp.eq.s32.totalorder %s26, 1
      %p196 = por %p194, %p195
      %p198 = scmp.ne.s32.totalorder %s183, %s197
      %p199 = scmp.eq.s32.totalorder %s26, 0
      %p200 = por %p198, %p199
      %s202 = sadd.s32 %s201, 1
      %p205 = scmp.eq.s32.totalorder %s20, 1
      %p206 = scmp.ne.s32.totalorder %s201, %s203
      %p207 = scmp.eq.s32.totalorder %s20, 0
      %p208 = por %p206, %p207
      %p209 = scmp.ne.s32.totalorder %s201, %s203
      %p210 = scmp.eq.s32.totalorder %s25, 1
      %p211 = por %p209, %p210
      %p212 = scmp.ne.s32.totalorder %s203, %s204
      %p213 = scmp.eq.s32.totalorder %s25, 0
      %p214 = por %p212, %p213
      %p215 = scmp.ne.s32.totalorder %s203, %s204
      %p216 = scmp.eq.s32.totalorder %s26, 1
      %p217 = por %p215, %p216
      %p219 = scmp.ne.s32.totalorder %s204, %s218
      %p220 = scmp.eq.s32.totalorder %s26, 0
      %p221 = por %p219, %p220
      %s222 = ssub.s32 %s20, %s27
      %p223 = scmp.eq.s32.totalorder %s222, 0
      %s225 = sadd.s32 %s224, 1
      %s226 = scalar_select %p223, %s224, %s225
      %p229 = pneg %p223
      %p230 = scmp.eq.s32.totalorder %s20, 1
      %p231 = por %p229, %p230
      %p232 = scmp.ne.s32.totalorder %s224, %s227
      %p233 = scmp.eq.s32.totalorder %s20, 0
      %p234 = por %p232, %p233
      %p235 = scmp.ne.s32.totalorder %s224, %s227
      %p236 = scmp.eq.s32.totalorder %s25, 1
      %p237 = por %p235, %p236
      %p238 = scmp.ne.s32.totalorder %s227, %s228
      %p239 = scmp.eq.s32.totalorder %s25, 0
      %p240 = por %p238, %p239
      %p241 = scmp.ne.s32.totalorder %s227, %s228
      %p242 = scmp.eq.s32.totalorder %s26, 1
      %p243 = por %p241, %p242
      %p245 = scmp.ne.s32.totalorder %s228, %s244
      %p246 = scmp.eq.s32.totalorder %s26, 0
      %p247 = por %p245, %p246
      %p248 = scmp.le.s32.totalorder 1, %s20
      %p249 = scmp.lt.s32.totalorder %s20, 3
      %p250 = pnand %p248, %p249
      %p251 = pneg %p250
      // Predicated region
      $region9: #{pnn_forward.1} parent=5 // pred_check
        _
      $region10: #{pnn_forward.1} parent=5 // pred_check_branch
        %253 = sbr.rel (%p250) target = $region12
      $region11: #{pnn_forward.1} parent=5 // pred_region
        %s254 = ssub.s32 %s20, 1
        // Predicated region
        $region13: #{pnn_forward.1} parent=11 // pred_check
          %p255 = pneg %p67
        $region14: #{pnn_forward.1} parent=11 // pred_check_branch
          %257 = sbr.rel (%p255) target = $region16
        $region15: #{pnn_forward.1} parent=11 // pred_region
          _
        $region16: #{pnn_forward.1} parent=11 // pred_fallthru
          _
        // Predicated region
        $region17: #{pnn_forward.1} parent=11 // pred_check
          %p258 = pneg %p88
        $region18: #{pnn_forward.1} parent=11 // pred_check_branch
          %260 = sbr.rel (%p258) target = $region20
        $region19: #{pnn_forward.1} parent=11 // pred_region
          _
        $region20: #{pnn_forward.1} parent=11 // pred_fallthru
          _
        // Predicated region
        $region21: #{pnn_forward.1} parent=11 // pred_check
          %p261 = pneg %p109
        $region22: #{pnn_forward.1} parent=11 // pred_check_branch
          %263 = sbr.rel (%p261) target = $region24
        $region23: #{pnn_forward.1} parent=11 // pred_region
          _
        $region24: #{pnn_forward.1} parent=11 // pred_fallthru
          _
        // Predicated region
        $region25: #{pnn_forward.1} parent=11 // pred_check
          %p264 = pneg %p130
        $region26: #{pnn_forward.1} parent=11 // pred_check_branch
          %266 = sbr.rel (%p264) target = $region28
        $region27: #{pnn_forward.1} parent=11 // pred_region
          _
        $region28: #{pnn_forward.1} parent=11 // pred_fallthru
          _
        // Predicated region
        $region29: #{pnn_forward.1} parent=11 // pred_check
          %p267 = pneg %p151
        $region30: #{pnn_forward.1} parent=11 // pred_check_branch
          %269 = sbr.rel (%p267) target = $region32
        $region31: #{pnn_forward.1} parent=11 // pred_region
          _
        $region32: #{pnn_forward.1} parent=11 // pred_fallthru
          _
        // Predicated region
        $region33: #{pnn_forward.1} parent=11 // pred_check
          %p270 = pneg %p172
        $region34: #{pnn_forward.1} parent=11 // pred_check_branch
          %272 = sbr.rel (%p270) target = $region36
        $region35: #{pnn_forward.1} parent=11 // pred_region
          _
        $region36: #{pnn_forward.1} parent=11 // pred_fallthru
          _
        // Predicated region
        $region37: #{pnn_forward.1} parent=11 // pred_check
          %p273 = pneg %p193
        $region38: #{pnn_forward.1} parent=11 // pred_check_branch
          %275 = sbr.rel (%p273) target = $region40
        $region39: #{pnn_forward.1} parent=11 // pred_region
          _
        $region40: #{pnn_forward.1} parent=11 // pred_fallthru
          _
        // Predicated region
        $region41: #{pnn_forward.1} parent=11 // pred_check
          %p276 = pneg %p214
        $region42: #{pnn_forward.1} parent=11 // pred_check_branch
          %278 = sbr.rel (%p276) target = $region44
        $region43: #{pnn_forward.1} parent=11 // pred_region
          _
        $region44: #{pnn_forward.1} parent=11 // pred_fallthru
          _
      $region12: #{pnn_forward.1} parent=5 // pred_fallthru
        _
      %p279 = scmp.lt.s32.totalorder %s20, 2
      // Predicated region
      $region45: #{pnn_forward.1} parent=5 // pred_check
        %p280 = pneg %p279
      $region46: #{pnn_forward.1} parent=5 // pred_check_branch
        %282 = sbr.rel (%p280) target = $region48
      $region47: #{pnn_forward.1} parent=5 // pred_region
        // Predicated region
        $region49: #{pnn_forward.1} parent=47 // pred_check
          %p283 = pneg %p40
        $region50: #{pnn_forward.1} parent=47 // pred_check_branch
          %285 = sbr.rel (%p283) target = $region52
        $region51: #{pnn_forward.1} parent=47 // pred_region
          %s286 = smul.u32 80, %s20
          %p287 = scmp.lt.s32.totalorder %s286, 159
          %s288 = scalar_select %p287, %s286, 159
          %s289 = smul.addr %s288, 4
          %s290 = scalar_lea.vmem %s0, %s289
          %s291 = smul.u32 80, %s20
        $region52: #{pnn_forward.1} parent=47 // pred_fallthru
          _
      $region48: #{pnn_forward.1} parent=5 // pred_fallthru
        _
      %p292 = scmp.le.s32.totalorder 1, %s20
      %p293 = scmp.lt.s32.totalorder %s20, 3
      %p294 = pnand %p292, %p293
      %p295 = pneg %p294
      // Predicated region
      $region53: #{pnn_forward.1} parent=5 // pred_check
        _
      $region54: #{pnn_forward.1} parent=5 // pred_check_branch
        %297 = sbr.rel (%p294) target = $region56
      $region55: #{pnn_forward.1} parent=5 // pred_region
        %s298 = ssub.s32 %s20, 1
        %s299 = smul.u32 80, %s25
        %p300 = scmp.lt.s32.totalorder %s299, 159
        %s301 = scalar_select %p300, %s299, 159
        %s302 = smul.addr %s301, 4
        %s303 = scalar_lea.vmem %s0, %s302
        %p304 = pneg %p46
        %p305 = pneg %p43
        %p306 = pneg %p67
        %p307 = pneg %p64
        %p308 = pneg %p88
        %p309 = pneg %p85
        %p310 = pneg %p109
        %p311 = pneg %p106
        %p312 = pneg %p130
        %p313 = pneg %p127
        %p314 = pneg %p151
        %p315 = pneg %p148
        %p316 = pneg %p172
        %p317 = pneg %p169
        %p318 = pneg %p193
        %p319 = pneg %p190
        %p320 = pneg %p214
        %p321 = pneg %p211
        %p322 = pneg %p240
        %p323 = pneg %p237
        %s324 = sand.u32 %s227, 1
        %s325 = scalar_lea.sflag [#allocation4], %s324
        %s326 = sand.u32 %s227, 1
        %s327 = smul.addr %s326, 5
        %s328 = scalar_lea.vmem [#allocation3], %s327
        %s329 = smul.u32 80, %s25
        %p330 = scmp.lt.s32.totalorder %s329, 159
        %s331 = scalar_select %p330, %s329, 159
        %s332 = smul.addr %s331, 4
        %s333 = scalar_lea.vmem %s0, %s332
        %s334 = smul.u32 80, %s25
        %v336 = vld [vmem:[%s333] sm:$0xf]
        %v337 = vld [vmem:[%s333 + $0x4] sm:$0xf]
        %v338 = vld [vmem:[%s333 + $0x8] sm:$0xf]
        %v339 = vld [vmem:[%s333 + $0xc] sm:$0xf]
        %v340 = vld [vmem:[%s333 + $0x10] sm:$0xf]
        %v341 = vld [vmem:[%s333 + $0x14] sm:$0xf]
        %v342 = vld [vmem:[%s333 + $0x18] sm:$0xf]
        %v343 = vld [vmem:[%s333 + $0x1c] sm:$0xf]
        %v344 = vld [vmem:[%s333 + $0x20] sm:$0xf]
        %v345 = vld [vmem:[%s333 + $0x24] sm:$0xf]
        %v346 = vld [vmem:[%s333 + $0x28] sm:$0xf]
        %v347 = vld [vmem:[%s333 + $0x2c] sm:$0xf]
        %v348 = vld [vmem:[%s333 + $0x30] sm:$0xf]
        %v349 = vld [vmem:[%s333 + $0x34] sm:$0xf]
        %v350 = vld [vmem:[%s333 + $0x38] sm:$0xf]
        %v351 = vld [vmem:[%s333 + $0x3c] sm:$0xf]
        %v352 = vld [vmem:[%s333 + $0x40] sm:$0xf]
        %v353 = vld [vmem:[%s333 + $0x44] sm:$0xf]
        %v354 = vld [vmem:[%s333 + $0x48] sm:$0xf]
        %v355 = vld [vmem:[%s333 + $0x4c] sm:$0xf]
        %v356 = vld [vmem:[%s333 + $0x50] sm:$0xf]
        %v357 = vld [vmem:[%s333 + $0x54] sm:$0xf]
        %v358 = vld [vmem:[%s333 + $0x58] sm:$0xf]
        %v359 = vld [vmem:[%s333 + $0x5c] sm:$0xf]
        %v360 = vld [vmem:[%s333 + $0x60] sm:$0xf]
        %v361 = vld [vmem:[%s333 + $0x64] sm:$0xf]
        %v362 = vld [vmem:[%s333 + $0x68] sm:$0xf]
        %v363 = vld [vmem:[%s333 + $0x6c] sm:$0xf]
        %v364 = vld [vmem:[%s333 + $0x70] sm:$0xf]
        %v365 = vld [vmem:[%s333 + $0x74] sm:$0xf]
        %v366 = vld [vmem:[%s333 + $0x78] sm:$0xf]
        %v367 = vld [vmem:[%s333 + $0x7c] sm:$0xf]
        %v368 = vld [vmem:[%s333 + $0x80] sm:$0xf]
        %v369 = vld [vmem:[%s333 + $0x84] sm:$0xf]
        %v370 = vld [vmem:[%s333 + $0x88] sm:$0xf]
        %v371 = vld [vmem:[%s333 + $0x8c] sm:$0xf]
        %v372 = vld [vmem:[%s333 + $0x90] sm:$0xf]
        %v373 = vld [vmem:[%s333 + $0x94] sm:$0xf]
        %v374 = vld [vmem:[%s333 + $0x98] sm:$0xf]
        %v375 = vld [vmem:[%s333 + $0x9c] sm:$0xf]
        %v376 = vld [vmem:[%s333 + $0xa0] sm:$0xf]
        %v377 = vld [vmem:[%s333 + $0xa4] sm:$0xf]
        %v378 = vld [vmem:[%s333 + $0xa8] sm:$0xf]
        %v379 = vld [vmem:[%s333 + $0xac] sm:$0xf]
        %v380 = vld [vmem:[%s333 + $0xb0] sm:$0xf]
        %v381 = vld [vmem:[%s333 + $0xb4] sm:$0xf]
        %v382 = vld [vmem:[%s333 + $0xb8] sm:$0xf]
        %v383 = vld [vmem:[%s333 + $0xbc] sm:$0xf]
        %v384 = vld [vmem:[%s333 + $0xc0] sm:$0xf]
        %v385 = vld [vmem:[%s333 + $0xc4] sm:$0xf]
        %v386 = vld [vmem:[%s333 + $0xc8] sm:$0xf]
        %v387 = vld [vmem:[%s333 + $0xcc] sm:$0xf]
        %v388 = vld [vmem:[%s333 + $0xd0] sm:$0xf]
        %v389 = vld [vmem:[%s333 + $0xd4] sm:$0xf]
        %v390 = vld [vmem:[%s333 + $0xd8] sm:$0xf]
        %v391 = vld [vmem:[%s333 + $0xdc] sm:$0xf]
        %v392 = vld [vmem:[%s333 + $0xe0] sm:$0xf]
        %v393 = vld [vmem:[%s333 + $0xe4] sm:$0xf]
        %v394 = vld [vmem:[%s333 + $0xe8] sm:$0xf]
        %v395 = vld [vmem:[%s333 + $0xec] sm:$0xf]
        %v396 = vld [vmem:[%s333 + $0xf0] sm:$0xf]
        %v397 = vld [vmem:[%s333 + $0xf4] sm:$0xf]
        %v398 = vld [vmem:[%s333 + $0xf8] sm:$0xf]
        %v399 = vld [vmem:[%s333 + $0xfc] sm:$0xf]
        %v400 = vld [vmem:[%s333 + $0x100] sm:$0xf]
        %v401 = vld [vmem:[%s333 + $0x104] sm:$0xf]
        %v402 = vld [vmem:[%s333 + $0x108] sm:$0xf]
        %v403 = vld [vmem:[%s333 + $0x10c] sm:$0xf]
        %v404 = vld [vmem:[%s333 + $0x110] sm:$0xf]
        %v405 = vld [vmem:[%s333 + $0x114] sm:$0xf]
        %v406 = vld [vmem:[%s333 + $0x118] sm:$0xf]
        %v407 = vld [vmem:[%s333 + $0x11c] sm:$0xf]
        %v408 = vld [vmem:[%s333 + $0x120] sm:$0xf]
        %v409 = vld [vmem:[%s333 + $0x124] sm:$0xf]
        %v410 = vld [vmem:[%s333 + $0x128] sm:$0xf]
        %v411 = vld [vmem:[%s333 + $0x12c] sm:$0xf]
        %v412 = vld [vmem:[%s333 + $0x130] sm:$0xf]
        %v413 = vld [vmem:[%s333 + $0x134] sm:$0xf]
        %v414 = vld [vmem:[%s333 + $0x138] sm:$0xf]
        %v415 = vld [vmem:[%s333 + $0x13c] sm:$0xf]
        %v416 = vunpack.c.l.bf16 %v336
        %v417 = vunpack.c.l.bf16 %v337
        %v418 = vunpack.c.l.bf16 %v338
        %v419 = vunpack.c.l.bf16 %v339
        %v420 = vunpack.c.l.bf16 %v340
        %v421 = vunpack.c.l.bf16 %v341
        %v422 = vunpack.c.l.bf16 %v342
        %v423 = vunpack.c.l.bf16 %v343
        %v424 = vunpack.c.l.bf16 %v344
        %v425 = vunpack.c.l.bf16 %v345
        %v426 = vunpack.c.l.bf16 %v346
        %v427 = vunpack.c.l.bf16 %v347
        %v428 = vunpack.c.l.bf16 %v348
        %v429 = vunpack.c.l.bf16 %v349
        %v430 = vunpack.c.l.bf16 %v350
        %v431 = vunpack.c.l.bf16 %v351
        %v432 = vunpack.c.l.bf16 %v352
        %v433 = vunpack.c.l.bf16 %v353
        %v434 = vunpack.c.l.bf16 %v354
        %v435 = vunpack.c.l.bf16 %v355
        %v436 = vunpack.c.l.bf16 %v356
        %v437 = vunpack.c.l.bf16 %v357
        %v438 = vunpack.c.l.bf16 %v358
        %v439 = vunpack.c.l.bf16 %v359
        %v440 = vunpack.c.l.bf16 %v360
        %v441 = vunpack.c.l.bf16 %v361
        %v442 = vunpack.c.l.bf16 %v362
        %v443 = vunpack.c.l.bf16 %v363
        %v444 = vunpack.c.l.bf16 %v364
        %v445 = vunpack.c.l.bf16 %v365
        %v446 = vunpack.c.l.bf16 %v366
        %v447 = vunpack.c.l.bf16 %v367
        %v448 = vunpack.c.l.bf16 %v368
        %v449 = vunpack.c.l.bf16 %v369
        %v450 = vunpack.c.l.bf16 %v370
        %v451 = vunpack.c.l.bf16 %v371
        %v452 = vunpack.c.l.bf16 %v372
        %v453 = vunpack.c.l.bf16 %v373
        %v454 = vunpack.c.l.bf16 %v374
        %v455 = vunpack.c.l.bf16 %v375
        %v456 = vunpack.c.l.bf16 %v376
        %v457 = vunpack.c.l.bf16 %v377
        %v458 = vunpack.c.l.bf16 %v378
        %v459 = vunpack.c.l.bf16 %v379
        %v460 = vunpack.c.l.bf16 %v380
        %v461 = vunpack.c.l.bf16 %v381
        %v462 = vunpack.c.l.bf16 %v382
        %v463 = vunpack.c.l.bf16 %v383
        %v464 = vunpack.c.l.bf16 %v384
        %v465 = vunpack.c.l.bf16 %v385
        %v466 = vunpack.c.l.bf16 %v386
        %v467 = vunpack.c.l.bf16 %v387
        %v468 = vunpack.c.l.bf16 %v388
        %v469 = vunpack.c.l.bf16 %v389
        %v470 = vunpack.c.l.bf16 %v390
        %v471 = vunpack.c.l.bf16 %v391
        %v472 = vunpack.c.l.bf16 %v392
        %v473 = vunpack.c.l.bf16 %v393
        %v474 = vunpack.c.l.bf16 %v394
        %v475 = vunpack.c.l.bf16 %v395
        %v476 = vunpack.c.l.bf16 %v396
        %v477 = vunpack.c.l.bf16 %v397
        %v478 = vunpack.c.l.bf16 %v398
        %v479 = vunpack.c.l.bf16 %v399
        %v480 = vunpack.c.l.bf16 %v400
        %v481 = vunpack.c.l.bf16 %v401
        %v482 = vunpack.c.l.bf16 %v402
        %v483 = vunpack.c.l.bf16 %v403
        %v484 = vunpack.c.l.bf16 %v404
        %v485 = vunpack.c.l.bf16 %v405
        %v486 = vunpack.c.l.bf16 %v406
        %v487 = vunpack.c.l.bf16 %v407
        %v488 = vunpack.c.l.bf16 %v408
        %v489 = vunpack.c.l.bf16 %v409
        %v490 = vunpack.c.l.bf16 %v410
        %v491 = vunpack.c.l.bf16 %v411
        %v492 = vunpack.c.l.bf16 %v412
        %v493 = vunpack.c.l.bf16 %v413
        %v494 = vunpack.c.l.bf16 %v414
        %v495 = vunpack.c.l.bf16 %v415
        %v496 = vmul.f32 %v416, %v416
        %v497 = vmul.f32 %v417, %v417
        %v498 = vmul.f32 %v418, %v418
        %v499 = vmul.f32 %v419, %v419
        %v500 = vmul.f32 %v420, %v420
        %v501 = vmul.f32 %v421, %v421
        %v502 = vmul.f32 %v422, %v422
        %v503 = vmul.f32 %v423, %v423
        %v504 = vmul.f32 %v424, %v424
        %v505 = vmul.f32 %v425, %v425
        %v506 = vmul.f32 %v426, %v426
        %v507 = vmul.f32 %v427, %v427
        %v508 = vmul.f32 %v428, %v428
        %v509 = vmul.f32 %v429, %v429
        %v510 = vmul.f32 %v430, %v430
        %v511 = vmul.f32 %v431, %v431
        %v512 = vmul.f32 %v432, %v432
        %v513 = vmul.f32 %v433, %v433
        %v514 = vmul.f32 %v434, %v434
        %v515 = vmul.f32 %v435, %v435
        %v516 = vmul.f32 %v436, %v436
        %v517 = vmul.f32 %v437, %v437
        %v518 = vmul.f32 %v438, %v438
        %v519 = vmul.f32 %v439, %v439
        %v520 = vmul.f32 %v440, %v440
        %v521 = vmul.f32 %v441, %v441
        %v522 = vmul.f32 %v442, %v442
        %v523 = vmul.f32 %v443, %v443
        %v524 = vmul.f32 %v444, %v444
        %v525 = vmul.f32 %v445, %v445
        %v526 = vmul.f32 %v446, %v446
        %v527 = vmul.f32 %v447, %v447
        %v528 = vmul.f32 %v448, %v448
        %v529 = vmul.f32 %v449, %v449
        %v530 = vmul.f32 %v450, %v450
        %v531 = vmul.f32 %v451, %v451
        %v532 = vmul.f32 %v452, %v452
        %v533 = vmul.f32 %v453, %v453
        %v534 = vmul.f32 %v454, %v454
        %v535 = vmul.f32 %v455, %v455
        %v536 = vmul.f32 %v456, %v456
        %v537 = vmul.f32 %v457, %v457
        %v538 = vmul.f32 %v458, %v458
        %v539 = vmul.f32 %v459, %v459
        %v540 = vmul.f32 %v460, %v460
        %v541 = vmul.f32 %v461, %v461
        %v542 = vmul.f32 %v462, %v462
        %v543 = vmul.f32 %v463, %v463
        %v544 = vmul.f32 %v464, %v464
        %v545 = vmul.f32 %v465, %v465
        %v546 = vmul.f32 %v466, %v466
        %v547 = vmul.f32 %v467, %v467
        %v548 = vmul.f32 %v468, %v468
        %v549 = vmul.f32 %v469, %v469
        %v550 = vmul.f32 %v470, %v470
        %v551 = vmul.f32 %v471, %v471
        %v552 = vmul.f32 %v472, %v472
        %v553 = vmul.f32 %v473, %v473
        %v554 = vmul.f32 %v474, %v474
        %v555 = vmul.f32 %v475, %v475
        %v556 = vmul.f32 %v476, %v476
        %v557 = vmul.f32 %v477, %v477
        %v558 = vmul.f32 %v478, %v478
        %v559 = vmul.f32 %v479, %v479
        %v560 = vmul.f32 %v480, %v480
        %v561 = vmul.f32 %v481, %v481
        %v562 = vmul.f32 %v482, %v482
        %v563 = vmul.f32 %v483, %v483
        %v564 = vmul.f32 %v484, %v484
        %v565 = vmul.f32 %v485, %v485
        %v566 = vmul.f32 %v486, %v486
        %v567 = vmul.f32 %v487, %v487
        %v568 = vmul.f32 %v488, %v488
        %v569 = vmul.f32 %v489, %v489
        %v570 = vmul.f32 %v490, %v490
        %v571 = vmul.f32 %v491, %v491
        %v572 = vmul.f32 %v492, %v492
        %v573 = vmul.f32 %v493, %v493
        %v574 = vmul.f32 %v494, %v494
        %v575 = vmul.f32 %v495, %v495
        %v576 = vpack.c.bf16 %v497, %v496
        %v577 = vpack.c.bf16 %v499, %v498
        %v578 = vpack.c.bf16 %v501, %v500
        %v579 = vpack.c.bf16 %v503, %v502
        %v580 = vpack.c.bf16 %v505, %v504
        %v581 = vpack.c.bf16 %v507, %v506
        %v582 = vpack.c.bf16 %v509, %v508
        %v583 = vpack.c.bf16 %v511, %v510
        %v584 = vpack.c.bf16 %v513, %v512
        %v585 = vpack.c.bf16 %v515, %v514
        %v586 = vpack.c.bf16 %v517, %v516
        %v587 = vpack.c.bf16 %v519, %v518
        %v588 = vpack.c.bf16 %v521, %v520
        %v589 = vpack.c.bf16 %v523, %v522
        %v590 = vpack.c.bf16 %v525, %v524
        %v591 = vpack.c.bf16 %v527, %v526
        %v592 = vpack.c.bf16 %v529, %v528
        %v593 = vpack.c.bf16 %v531, %v530
        %v594 = vpack.c.bf16 %v533, %v532
        %v595 = vpack.c.bf16 %v535, %v534
        %v596 = vpack.c.bf16 %v537, %v536
        %v597 = vpack.c.bf16 %v539, %v538
        %v598 = vpack.c.bf16 %v541, %v540
        %v599 = vpack.c.bf16 %v543, %v542
        %v600 = vpack.c.bf16 %v545, %v544
        %v601 = vpack.c.bf16 %v547, %v546
        %v602 = vpack.c.bf16 %v549, %v548
        %v603 = vpack.c.bf16 %v551, %v550
        %v604 = vpack.c.bf16 %v553, %v552
        %v605 = vpack.c.bf16 %v555, %v554
        %v606 = vpack.c.bf16 %v557, %v556
        %v607 = vpack.c.bf16 %v559, %v558
        %v608 = vpack.c.bf16 %v561, %v560
        %v609 = vpack.c.bf16 %v563, %v562
        %v610 = vpack.c.bf16 %v565, %v564
        %v611 = vpack.c.bf16 %v567, %v566
        %v612 = vpack.c.bf16 %v569, %v568
        %v613 = vpack.c.bf16 %v571, %v570
        %v614 = vpack.c.bf16 %v573, %v572
        %v615 = vpack.c.bf16 %v575, %v574
        %616 = vrot.lane.b32.xlu0 %v416, 112
        %v617 = vpop.permute.xlu0 %616
        %618 = vrot.lane.b32.xlu0 %v417, 112
        %v619 = vpop.permute.xlu0 %618
        %620 = vrot.lane.b32.xlu0 %v418, 112
        %v621 = vpop.permute.xlu0 %620
        %622 = vrot.lane.b32.xlu0 %v419, 112
        %v623 = vpop.permute.xlu0 %622
        %624 = vrot.lane.b32.xlu0 %v420, 112
        %v625 = vpop.permute.xlu0 %624
        %626 = vrot.lane.b32.xlu0 %v421, 112
        %v627 = vpop.permute.xlu0 %626
        %628 = vrot.lane.b32.xlu0 %v422, 112
        %v629 = vpop.permute.xlu0 %628
        %630 = vrot.lane.b32.xlu0 %v423, 112
        %v631 = vpop.permute.xlu0 %630
        %632 = vrot.lane.b32.xlu0 %v424, 112
        %v633 = vpop.permute.xlu0 %632
        %634 = vrot.lane.b32.xlu0 %v425, 112
        %v635 = vpop.permute.xlu0 %634
        %636 = vrot.lane.b32.xlu0 %v426, 112
        %v637 = vpop.permute.xlu0 %636
        %638 = vrot.lane.b32.xlu0 %v427, 112
        %v639 = vpop.permute.xlu0 %638
        %640 = vrot.lane.b32.xlu0 %v428, 112
        %v641 = vpop.permute.xlu0 %640
        %642 = vrot.lane.b32.xlu0 %v429, 112
        %v643 = vpop.permute.xlu0 %642
        %644 = vrot.lane.b32.xlu0 %v430, 112
        %v645 = vpop.permute.xlu0 %644
        %646 = vrot.lane.b32.xlu0 %v431, 112
        %v647 = vpop.permute.xlu0 %646
        %648 = vrot.lane.b32.xlu0 %v432, 112
        %v649 = vpop.permute.xlu0 %648
        %650 = vrot.lane.b32.xlu0 %v433, 112
        %v651 = vpop.permute.xlu0 %650
        %652 = vrot.lane.b32.xlu0 %v434, 112
        %v653 = vpop.permute.xlu0 %652
        %654 = vrot.lane.b32.xlu0 %v435, 112
        %v655 = vpop.permute.xlu0 %654
        %656 = vrot.lane.b32.xlu0 %v436, 112
        %v657 = vpop.permute.xlu0 %656
        %658 = vrot.lane.b32.xlu0 %v437, 112
        %v659 = vpop.permute.xlu0 %658
        %660 = vrot.lane.b32.xlu0 %v438, 112
        %v661 = vpop.permute.xlu0 %660
        %662 = vrot.lane.b32.xlu0 %v439, 112
        %v663 = vpop.permute.xlu0 %662
        %664 = vrot.lane.b32.xlu0 %v440, 112
        %v665 = vpop.permute.xlu0 %664
        %666 = vrot.lane.b32.xlu0 %v441, 112
        %v667 = vpop.permute.xlu0 %666
        %668 = vrot.lane.b32.xlu0 %v442, 112
        %v669 = vpop.permute.xlu0 %668
        %670 = vrot.lane.b32.xlu0 %v443, 112
        %v671 = vpop.permute.xlu0 %670
        %672 = vrot.lane.b32.xlu0 %v444, 112
        %v673 = vpop.permute.xlu0 %672
        %674 = vrot.lane.b32.xlu0 %v445, 112
        %v675 = vpop.permute.xlu0 %674
        %676 = vrot.lane.b32.xlu0 %v446, 112
        %v677 = vpop.permute.xlu0 %676
        %678 = vrot.lane.b32.xlu0 %v447, 112
        %v679 = vpop.permute.xlu0 %678
        %680 = vrot.lane.b32.xlu0 %v448, 112
        %v681 = vpop.permute.xlu0 %680
        %682 = vrot.lane.b32.xlu0 %v449, 112
        %v683 = vpop.permute.xlu0 %682
        %684 = vrot.lane.b32.xlu0 %v450, 112
        %v685 = vpop.permute.xlu0 %684
        %686 = vrot.lane.b32.xlu0 %v451, 112
        %v687 = vpop.permute.xlu0 %686
        %688 = vrot.lane.b32.xlu0 %v452, 112
        %v689 = vpop.permute.xlu0 %688
        %690 = vrot.lane.b32.xlu0 %v453, 112
        %v691 = vpop.permute.xlu0 %690
        %692 = vrot.lane.b32.xlu0 %v454, 112
        %v693 = vpop.permute.xlu0 %692
        %694 = vrot.lane.b32.xlu0 %v455, 112
        %v695 = vpop.permute.xlu0 %694
        %696 = vrot.lane.b32.xlu0 %v456, 112
        %v697 = vpop.permute.xlu0 %696
        %698 = vrot.lane.b32.xlu0 %v457, 112
        %v699 = vpop.permute.xlu0 %698
        %700 = vrot.lane.b32.xlu0 %v458, 112
        %v701 = vpop.permute.xlu0 %700
        %702 = vrot.lane.b32.xlu0 %v459, 112
        %v703 = vpop.permute.xlu0 %702
        %704 = vrot.lane.b32.xlu0 %v460, 112
        %v705 = vpop.permute.xlu0 %704
        %706 = vrot.lane.b32.xlu0 %v461, 112
        %v707 = vpop.permute.xlu0 %706
        %708 = vrot.lane.b32.xlu0 %v462, 112
        %v709 = vpop.permute.xlu0 %708
        %710 = vrot.lane.b32.xlu0 %v463, 112
        %v711 = vpop.permute.xlu0 %710
        %712 = vrot.lane.b32.xlu0 %v464, 112
        %v713 = vpop.permute.xlu0 %712
        %714 = vrot.lane.b32.xlu0 %v465, 112
        %v715 = vpop.permute.xlu0 %714
        %716 = vrot.lane.b32.xlu0 %v466, 112
        %v717 = vpop.permute.xlu0 %716
        %718 = vrot.lane.b32.xlu0 %v467, 112
        %v719 = vpop.permute.xlu0 %718
        %720 = vrot.lane.b32.xlu0 %v468, 112
        %v721 = vpop.permute.xlu0 %720
        %722 = vrot.lane.b32.xlu0 %v469, 112
        %v723 = vpop.permute.xlu0 %722
        %724 = vrot.lane.b32.xlu0 %v470, 112
        %v725 = vpop.permute.xlu0 %724
        %726 = vrot.lane.b32.xlu0 %v471, 112
        %v727 = vpop.permute.xlu0 %726
        %728 = vrot.lane.b32.xlu0 %v472, 112
        %v729 = vpop.permute.xlu0 %728
        %730 = vrot.lane.b32.xlu0 %v473, 112
        %v731 = vpop.permute.xlu0 %730
        %732 = vrot.lane.b32.xlu0 %v474, 112
        %v733 = vpop.permute.xlu0 %732
        %734 = vrot.lane.b32.xlu0 %v475, 112
        %v735 = vpop.permute.xlu0 %734
        %736 = vrot.lane.b32.xlu0 %v476, 112
        %v737 = vpop.permute.xlu0 %736
        %738 = vrot.lane.b32.xlu0 %v477, 112
        %v739 = vpop.permute.xlu0 %738
        %740 = vrot.lane.b32.xlu0 %v478, 112
        %v741 = vpop.permute.xlu0 %740
        %742 = vrot.lane.b32.xlu0 %v479, 112
        %v743 = vpop.permute.xlu0 %742
        %744 = vrot.lane.b32.xlu0 %v480, 112
        %v745 = vpop.permute.xlu0 %744
        %746 = vrot.lane.b32.xlu0 %v481, 112
        %v747 = vpop.permute.xlu0 %746
        %748 = vrot.lane.b32.xlu0 %v482, 112
        %v749 = vpop.permute.xlu0 %748
        %750 = vrot.lane.b32.xlu0 %v483, 112
        %v751 = vpop.permute.xlu0 %750
        %752 = vrot.lane.b32.xlu0 %v484, 112
        %v753 = vpop.permute.xlu0 %752
        %754 = vrot.lane.b32.xlu0 %v485, 112
        %v755 = vpop.permute.xlu0 %754
        %756 = vrot.lane.b32.xlu0 %v486, 112
        %v757 = vpop.permute.xlu0 %756
        %758 = vrot.lane.b32.xlu0 %v487, 112
        %v759 = vpop.permute.xlu0 %758
        %760 = vrot.lane.b32.xlu0 %v488, 112
        %v761 = vpop.permute.xlu0 %760
        %762 = vrot.lane.b32.xlu0 %v489, 112
        %v763 = vpop.permute.xlu0 %762
        %764 = vrot.lane.b32.xlu0 %v490, 112
        %v765 = vpop.permute.xlu0 %764
        %766 = vrot.lane.b32.xlu0 %v491, 112
        %v767 = vpop.permute.xlu0 %766
        %768 = vrot.lane.b32.xlu0 %v492, 112
        %v769 = vpop.permute.xlu0 %768
        %770 = vrot.lane.b32.xlu0 %v493, 112
        %v771 = vpop.permute.xlu0 %770
        %772 = vrot.lane.b32.xlu0 %v494, 112
        %v773 = vpop.permute.xlu0 %772
        %774 = vrot.lane.b32.xlu0 %v495, 112
        %v775 = vpop.permute.xlu0 %774
        %v776 = vmul.f32 %v416, %v617
        %v777 = vmul.f32 %v417, %v619
        %v778 = vmul.f32 %v418, %v621
        %v779 = vmul.f32 %v419, %v623
        %v780 = vmul.f32 %v420, %v625
        %v781 = vmul.f32 %v421, %v627
        %v782 = vmul.f32 %v422, %v629
        %v783 = vmul.f32 %v423, %v631
        %v784 = vmul.f32 %v424, %v633
        %v785 = vmul.f32 %v425, %v635
        %v786 = vmul.f32 %v426, %v637
        %v787 = vmul.f32 %v427, %v639
        %v788 = vmul.f32 %v428, %v641
        %v789 = vmul.f32 %v429, %v643
        %v790 = vmul.f32 %v430, %v645
        %v791 = vmul.f32 %v431, %v647
        %v792 = vmul.f32 %v432, %v649
        %v793 = vmul.f32 %v433, %v651
        %v794 = vmul.f32 %v434, %v653
        %v795 = vmul.f32 %v435, %v655
        %v796 = vmul.f32 %v436, %v657
        %v797 = vmul.f32 %v437, %v659
        %v798 = vmul.f32 %v438, %v661
        %v799 = vmul.f32 %v439, %v663
        %v800 = vmul.f32 %v440, %v665
        %v801 = vmul.f32 %v441, %v667
        %v802 = vmul.f32 %v442, %v669
        %v803 = vmul.f32 %v443, %v671
        %v804 = vmul.f32 %v444, %v673
        %v805 = vmul.f32 %v445, %v675
        %v806 = vmul.f32 %v446, %v677
        %v807 = vmul.f32 %v447, %v679
        %v808 = vmul.f32 %v448, %v681
        %v809 = vmul.f32 %v449, %v683
        %v810 = vmul.f32 %v450, %v685
        %v811 = vmul.f32 %v451, %v687
        %v812 = vmul.f32 %v452, %v689
        %v813 = vmul.f32 %v453, %v691
        %v814 = vmul.f32 %v454, %v693
        %v815 = vmul.f32 %v455, %v695
        %v816 = vmul.f32 %v456, %v697
        %v817 = vmul.f32 %v457, %v699
        %v818 = vmul.f32 %v458, %v701
        %v819 = vmul.f32 %v459, %v703
        %v820 = vmul.f32 %v460, %v705
        %v821 = vmul.f32 %v461, %v707
        %v822 = vmul.f32 %v462, %v709
        %v823 = vmul.f32 %v463, %v711
        %v824 = vmul.f32 %v464, %v713
        %v825 = vmul.f32 %v465, %v715
        %v826 = vmul.f32 %v466, %v717
        %v827 = vmul.f32 %v467, %v719
        %v828 = vmul.f32 %v468, %v721
        %v829 = vmul.f32 %v469, %v723
        %v830 = vmul.f32 %v470, %v725
        %v831 = vmul.f32 %v471, %v727
        %v832 = vmul.f32 %v472, %v729
        %v833 = vmul.f32 %v473, %v731
        %v834 = vmul.f32 %v474, %v733
        %v835 = vmul.f32 %v475, %v735
        %v836 = vmul.f32 %v476, %v737
        %v837 = vmul.f32 %v477, %v739
        %v838 = vmul.f32 %v478, %v741
        %v839 = vmul.f32 %v479, %v743
        %v840 = vmul.f32 %v480, %v745
        %v841 = vmul.f32 %v481, %v747
        %v842 = vmul.f32 %v482, %v749
        %v843 = vmul.f32 %v483, %v751
        %v844 = vmul.f32 %v484, %v753
        %v845 = vmul.f32 %v485, %v755
        %v846 = vmul.f32 %v486, %v757
        %v847 = vmul.f32 %v487, %v759
        %v848 = vmul.f32 %v488, %v761
        %v849 = vmul.f32 %v489, %v763
        %v850 = vmul.f32 %v490, %v765
        %v851 = vmul.f32 %v491, %v767
        %v852 = vmul.f32 %v492, %v769
        %v853 = vmul.f32 %v493, %v771
        %v854 = vmul.f32 %v494, %v773
        %v855 = vmul.f32 %v495, %v775
        %v856 = vpack.c.bf16 %v777, %v776
        %v857 = vpack.c.bf16 %v779, %v778
        %v858 = vpack.c.bf16 %v781, %v780
        %v859 = vpack.c.bf16 %v783, %v782
        %v860 = vpack.c.bf16 %v785, %v784
        %v861 = vpack.c.bf16 %v787, %v786
        %v862 = vpack.c.bf16 %v789, %v788
        %v863 = vpack.c.bf16 %v791, %v790
        %v864 = vpack.c.bf16 %v793, %v792
        %v865 = vpack.c.bf16 %v795, %v794
        %v866 = vpack.c.bf16 %v797, %v796
        %v867 = vpack.c.bf16 %v799, %v798
        %v868 = vpack.c.bf16 %v801, %v800
        %v869 = vpack.c.bf16 %v803, %v802
        %v870 = vpack.c.bf16 %v805, %v804
        %v871 = vpack.c.bf16 %v807, %v806
        %v872 = vpack.c.bf16 %v809, %v808
        %v873 = vpack.c.bf16 %v811, %v810
        %v874 = vpack.c.bf16 %v813, %v812
        %v875 = vpack.c.bf16 %v815, %v814
        %v876 = vpack.c.bf16 %v817, %v816
        %v877 = vpack.c.bf16 %v819, %v818
        %v878 = vpack.c.bf16 %v821, %v820
        %v879 = vpack.c.bf16 %v823, %v822
        %v880 = vpack.c.bf16 %v825, %v824
        %v881 = vpack.c.bf16 %v827, %v826
        %v882 = vpack.c.bf16 %v829, %v828
        %v883 = vpack.c.bf16 %v831, %v830
        %v884 = vpack.c.bf16 %v833, %v832
        %v885 = vpack.c.bf16 %v835, %v834
        %v886 = vpack.c.bf16 %v837, %v836
        %v887 = vpack.c.bf16 %v839, %v838
        %v888 = vpack.c.bf16 %v841, %v840
        %v889 = vpack.c.bf16 %v843, %v842
        %v890 = vpack.c.bf16 %v845, %v844
        %v891 = vpack.c.bf16 %v847, %v846
        %v892 = vpack.c.bf16 %v849, %v848
        %v893 = vpack.c.bf16 %v851, %v850
        %v894 = vpack.c.bf16 %v853, %v852
        %v895 = vpack.c.bf16 %v855, %v854
        %896 = vrot.lane.b32.xlu0 %v416, 96
        %v897 = vpop.permute.xlu0 %896
        %898 = vrot.lane.b32.xlu0 %v417, 96
        %v899 = vpop.permute.xlu0 %898
        %900 = vrot.lane.b32.xlu0 %v418, 96
        %v901 = vpop.permute.xlu0 %900
        %902 = vrot.lane.b32.xlu0 %v419, 96
        %v903 = vpop.permute.xlu0 %902
        %904 = vrot.lane.b32.xlu0 %v420, 96
        %v905 = vpop.permute.xlu0 %904
        %906 = vrot.lane.b32.xlu0 %v421, 96
        %v907 = vpop.permute.xlu0 %906
        %908 = vrot.lane.b32.xlu0 %v422, 96
        %v909 = vpop.permute.xlu0 %908
        %910 = vrot.lane.b32.xlu0 %v423, 96
        %v911 = vpop.permute.xlu0 %910
        %912 = vrot.lane.b32.xlu0 %v424, 96
        %v913 = vpop.permute.xlu0 %912
        %914 = vrot.lane.b32.xlu0 %v425, 96
        %v915 = vpop.permute.xlu0 %914
        %916 = vrot.lane.b32.xlu0 %v426, 96
        %v917 = vpop.permute.xlu0 %916
        %918 = vrot.lane.b32.xlu0 %v427, 96
        %v919 = vpop.permute.xlu0 %918
        %920 = vrot.lane.b32.xlu0 %v428, 96
        %v921 = vpop.permute.xlu0 %920
        %922 = vrot.lane.b32.xlu0 %v429, 96
        %v923 = vpop.permute.xlu0 %922
        %924 = vrot.lane.b32.xlu0 %v430, 96
        %v925 = vpop.permute.xlu0 %924
        %926 = vrot.lane.b32.xlu0 %v431, 96
        %v927 = vpop.permute.xlu0 %926
        %928 = vrot.lane.b32.xlu0 %v432, 96
        %v929 = vpop.permute.xlu0 %928
        %930 = vrot.lane.b32.xlu0 %v433, 96
        %v931 = vpop.permute.xlu0 %930
        %932 = vrot.lane.b32.xlu0 %v434, 96
        %v933 = vpop.permute.xlu0 %932
        %934 = vrot.lane.b32.xlu0 %v435, 96
        %v935 = vpop.permute.xlu0 %934
        %936 = vrot.lane.b32.xlu0 %v436, 96
        %v937 = vpop.permute.xlu0 %936
        %938 = vrot.lane.b32.xlu0 %v437, 96
        %v939 = vpop.permute.xlu0 %938
        %940 = vrot.lane.b32.xlu0 %v438, 96
        %v941 = vpop.permute.xlu0 %940
        %942 = vrot.lane.b32.xlu0 %v439, 96
        %v943 = vpop.permute.xlu0 %942
        %944 = vrot.lane.b32.xlu0 %v440, 96
        %v945 = vpop.permute.xlu0 %944
        %946 = vrot.lane.b32.xlu0 %v441, 96
        %v947 = vpop.permute.xlu0 %946
        %948 = vrot.lane.b32.xlu0 %v442, 96
        %v949 = vpop.permute.xlu0 %948
        %950 = vrot.lane.b32.xlu0 %v443, 96
        %v951 = vpop.permute.xlu0 %950
        %952 = vrot.lane.b32.xlu0 %v444, 96
        %v953 = vpop.permute.xlu0 %952
        %954 = vrot.lane.b32.xlu0 %v445, 96
        %v955 = vpop.permute.xlu0 %954
        %956 = vrot.lane.b32.xlu0 %v446, 96
        %v957 = vpop.permute.xlu0 %956
        %958 = vrot.lane.b32.xlu0 %v447, 96
        %v959 = vpop.permute.xlu0 %958
        %960 = vrot.lane.b32.xlu0 %v448, 96
        %v961 = vpop.permute.xlu0 %960
        %962 = vrot.lane.b32.xlu0 %v449, 96
        %v963 = vpop.permute.xlu0 %962
        %964 = vrot.lane.b32.xlu0 %v450, 96
        %v965 = vpop.permute.xlu0 %964
        %966 = vrot.lane.b32.xlu0 %v451, 96
        %v967 = vpop.permute.xlu0 %966
        %968 = vrot.lane.b32.xlu0 %v452, 96
        %v969 = vpop.permute.xlu0 %968
        %970 = vrot.lane.b32.xlu0 %v453, 96
        %v971 = vpop.permute.xlu0 %970
        %972 = vrot.lane.b32.xlu0 %v454, 96
        %v973 = vpop.permute.xlu0 %972
        %974 = vrot.lane.b32.xlu0 %v455, 96
        %v975 = vpop.permute.xlu0 %974
        %976 = vrot.lane.b32.xlu0 %v456, 96
        %v977 = vpop.permute.xlu0 %976
        %978 = vrot.lane.b32.xlu0 %v457, 96
        %v979 = vpop.permute.xlu0 %978
        %980 = vrot.lane.b32.xlu0 %v458, 96
        %v981 = vpop.permute.xlu0 %980
        %982 = vrot.lane.b32.xlu0 %v459, 96
        %v983 = vpop.permute.xlu0 %982
        %984 = vrot.lane.b32.xlu0 %v460, 96
        %v985 = vpop.permute.xlu0 %984
        %986 = vrot.lane.b32.xlu0 %v461, 96
        %v987 = vpop.permute.xlu0 %986
        %988 = vrot.lane.b32.xlu0 %v462, 96
        %v989 = vpop.permute.xlu0 %988
        %990 = vrot.lane.b32.xlu0 %v463, 96
        %v991 = vpop.permute.xlu0 %990
        %992 = vrot.lane.b32.xlu0 %v464, 96
        %v993 = vpop.permute.xlu0 %992
        %994 = vrot.lane.b32.xlu0 %v465, 96
        %v995 = vpop.permute.xlu0 %994
        %996 = vrot.lane.b32.xlu0 %v466, 96
        %v997 = vpop.permute.xlu0 %996
        %998 = vrot.lane.b32.xlu0 %v467, 96
        %v999 = vpop.permute.xlu0 %998
        %1000 = vrot.lane.b32.xlu0 %v468, 96
        %v1001 = vpop.permute.xlu0 %1000
        %1002 = vrot.lane.b32.xlu0 %v469, 96
        %v1003 = vpop.permute.xlu0 %1002
        %1004 = vrot.lane.b32.xlu0 %v470, 96
        %v1005 = vpop.permute.xlu0 %1004
        %1006 = vrot.lane.b32.xlu0 %v471, 96
        %v1007 = vpop.permute.xlu0 %1006
        %1008 = vrot.lane.b32.xlu0 %v472, 96
        %v1009 = vpop.permute.xlu0 %1008
        %1010 = vrot.lane.b32.xlu0 %v473, 96
        %v1011 = vpop.permute.xlu0 %1010
        %1012 = vrot.lane.b32.xlu0 %v474, 96
        %v1013 = vpop.permute.xlu0 %1012
        %1014 = vrot.lane.b32.xlu0 %v475, 96
        %v1015 = vpop.permute.xlu0 %1014
        %1016 = vrot.lane.b32.xlu0 %v476, 96
        %v1017 = vpop.permute.xlu0 %1016
        %1018 = vrot.lane.b32.xlu0 %v477, 96
        %v1019 = vpop.permute.xlu0 %1018
        %1020 = vrot.lane.b32.xlu0 %v478, 96
        %v1021 = vpop.permute.xlu0 %1020
        %1022 = vrot.lane.b32.xlu0 %v479, 96
        %v1023 = vpop.permute.xlu0 %1022
        %1024 = vrot.lane.b32.xlu0 %v480, 96
        %v1025 = vpop.permute.xlu0 %1024
        %1026 = vrot.lane.b32.xlu0 %v481, 96
        %v1027 = vpop.permute.xlu0 %1026
        %1028 = vrot.lane.b32.xlu0 %v482, 96
        %v1029 = vpop.permute.xlu0 %1028
        %1030 = vrot.lane.b32.xlu0 %v483, 96
        %v1031 = vpop.permute.xlu0 %1030
        %1032 = vrot.lane.b32.xlu0 %v484, 96
        %v1033 = vpop.permute.xlu0 %1032
        %1034 = vrot.lane.b32.xlu0 %v485, 96
        %v1035 = vpop.permute.xlu0 %1034
        %1036 = vrot.lane.b32.xlu0 %v486, 96
        %v1037 = vpop.permute.xlu0 %1036
        %1038 = vrot.lane.b32.xlu0 %v487, 96
        %v1039 = vpop.permute.xlu0 %1038
        %1040 = vrot.lane.b32.xlu0 %v488, 96
        %v1041 = vpop.permute.xlu0 %1040
        %1042 = vrot.lane.b32.xlu0 %v489, 96
        %v1043 = vpop.permute.xlu0 %1042
        %1044 = vrot.lane.b32.xlu0 %v490, 96
        %v1045 = vpop.permute.xlu0 %1044
        %1046 = vrot.lane.b32.xlu0 %v491, 96
        %v1047 = vpop.permute.xlu0 %1046
        %1048 = vrot.lane.b32.xlu0 %v492, 96
        %v1049 = vpop.permute.xlu0 %1048
        %1050 = vrot.lane.b32.xlu0 %v493, 96
        %v1051 = vpop.permute.xlu0 %1050
        %1052 = vrot.lane.b32.xlu0 %v494, 96
        %v1053 = vpop.permute.xlu0 %1052
        %1054 = vrot.lane.b32.xlu0 %v495, 96
        %v1055 = vpop.permute.xlu0 %1054
        %v1056 = vmul.f32 %v416, %v897
        %v1057 = vmul.f32 %v417, %v899
        %v1058 = vmul.f32 %v418, %v901
        %v1059 = vmul.f32 %v419, %v903
        %v1060 = vmul.f32 %v420, %v905
        %v1061 = vmul.f32 %v421, %v907
        %v1062 = vmul.f32 %v422, %v909
        %v1063 = vmul.f32 %v423, %v911
        %v1064 = vmul.f32 %v424, %v913
        %v1065 = vmul.f32 %v425, %v915
        %v1066 = vmul.f32 %v426, %v917
        %v1067 = vmul.f32 %v427, %v919
        %v1068 = vmul.f32 %v428, %v921
        %v1069 = vmul.f32 %v429, %v923
        %v1070 = vmul.f32 %v430, %v925
        %v1071 = vmul.f32 %v431, %v927
        %v1072 = vmul.f32 %v432, %v929
        %v1073 = vmul.f32 %v433, %v931
        %v1074 = vmul.f32 %v434, %v933
        %v1075 = vmul.f32 %v435, %v935
        %v1076 = vmul.f32 %v436, %v937
        %v1077 = vmul.f32 %v437, %v939
        %v1078 = vmul.f32 %v438, %v941
        %v1079 = vmul.f32 %v439, %v943
        %v1080 = vmul.f32 %v440, %v945
        %v1081 = vmul.f32 %v441, %v947
        %v1082 = vmul.f32 %v442, %v949
        %v1083 = vmul.f32 %v443, %v951
        %v1084 = vmul.f32 %v444, %v953
        %v1085 = vmul.f32 %v445, %v955
        %v1086 = vmul.f32 %v446, %v957
        %v1087 = vmul.f32 %v447, %v959
        %v1088 = vmul.f32 %v448, %v961
        %v1089 = vmul.f32 %v449, %v963
        %v1090 = vmul.f32 %v450, %v965
        %v1091 = vmul.f32 %v451, %v967
        %v1092 = vmul.f32 %v452, %v969
        %v1093 = vmul.f32 %v453, %v971
        %v1094 = vmul.f32 %v454, %v973
        %v1095 = vmul.f32 %v455, %v975
        %v1096 = vmul.f32 %v456, %v977
        %v1097 = vmul.f32 %v457, %v979
        %v1098 = vmul.f32 %v458, %v981
        %v1099 = vmul.f32 %v459, %v983
        %v1100 = vmul.f32 %v460, %v985
        %v1101 = vmul.f32 %v461, %v987
        %v1102 = vmul.f32 %v462, %v989
        %v1103 = vmul.f32 %v463, %v991
        %v1104 = vmul.f32 %v464, %v993
        %v1105 = vmul.f32 %v465, %v995
        %v1106 = vmul.f32 %v466, %v997
        %v1107 = vmul.f32 %v467, %v999
        %v1108 = vmul.f32 %v468, %v1001
        %v1109 = vmul.f32 %v469, %v1003
        %v1110 = vmul.f32 %v470, %v1005
        %v1111 = vmul.f32 %v471, %v1007
        %v1112 = vmul.f32 %v472, %v1009
        %v1113 = vmul.f32 %v473, %v1011
        %v1114 = vmul.f32 %v474, %v1013
        %v1115 = vmul.f32 %v475, %v1015
        %v1116 = vmul.f32 %v476, %v1017
        %v1117 = vmul.f32 %v477, %v1019
        %v1118 = vmul.f32 %v478, %v1021
        %v1119 = vmul.f32 %v479, %v1023
        %v1120 = vmul.f32 %v480, %v1025
        %v1121 = vmul.f32 %v481, %v1027
        %v1122 = vmul.f32 %v482, %v1029
        %v1123 = vmul.f32 %v483, %v1031
        %v1124 = vmul.f32 %v484, %v1033
        %v1125 = vmul.f32 %v485, %v1035
        %v1126 = vmul.f32 %v486, %v1037
        %v1127 = vmul.f32 %v487, %v1039
        %v1128 = vmul.f32 %v488, %v1041
        %v1129 = vmul.f32 %v489, %v1043
        %v1130 = vmul.f32 %v490, %v1045
        %v1131 = vmul.f32 %v491, %v1047
        %v1132 = vmul.f32 %v492, %v1049
        %v1133 = vmul.f32 %v493, %v1051
        %v1134 = vmul.f32 %v494, %v1053
        %v1135 = vmul.f32 %v495, %v1055
        %v1136 = vpack.c.bf16 %v1057, %v1056
        %v1137 = vpack.c.bf16 %v1059, %v1058
        %v1138 = vpack.c.bf16 %v1061, %v1060
        %v1139 = vpack.c.bf16 %v1063, %v1062
        %v1140 = vpack.c.bf16 %v1065, %v1064
        %v1141 = vpack.c.bf16 %v1067, %v1066
        %v1142 = vpack.c.bf16 %v1069, %v1068
        %v1143 = vpack.c.bf16 %v1071, %v1070
        %v1144 = vpack.c.bf16 %v1073, %v1072
        %v1145 = vpack.c.bf16 %v1075, %v1074
        %v1146 = vpack.c.bf16 %v1077, %v1076
        %v1147 = vpack.c.bf16 %v1079, %v1078
        %v1148 = vpack.c.bf16 %v1081, %v1080
        %v1149 = vpack.c.bf16 %v1083, %v1082
        %v1150 = vpack.c.bf16 %v1085, %v1084
        %v1151 = vpack.c.bf16 %v1087, %v1086
        %v1152 = vpack.c.bf16 %v1089, %v1088
        %v1153 = vpack.c.bf16 %v1091, %v1090
        %v1154 = vpack.c.bf16 %v1093, %v1092
        %v1155 = vpack.c.bf16 %v1095, %v1094
        %v1156 = vpack.c.bf16 %v1097, %v1096
        %v1157 = vpack.c.bf16 %v1099, %v1098
        %v1158 = vpack.c.bf16 %v1101, %v1100
        %v1159 = vpack.c.bf16 %v1103, %v1102
        %v1160 = vpack.c.bf16 %v1105, %v1104
        %v1161 = vpack.c.bf16 %v1107, %v1106
        %v1162 = vpack.c.bf16 %v1109, %v1108
        %v1163 = vpack.c.bf16 %v1111, %v1110
        %v1164 = vpack.c.bf16 %v1113, %v1112
        %v1165 = vpack.c.bf16 %v1115, %v1114
        %v1166 = vpack.c.bf16 %v1117, %v1116
        %v1167 = vpack.c.bf16 %v1119, %v1118
        %v1168 = vpack.c.bf16 %v1121, %v1120
        %v1169 = vpack.c.bf16 %v1123, %v1122
        %v1170 = vpack.c.bf16 %v1125, %v1124
        %v1171 = vpack.c.bf16 %v1127, %v1126
        %v1172 = vpack.c.bf16 %v1129, %v1128
        %v1173 = vpack.c.bf16 %v1131, %v1130
        %v1174 = vpack.c.bf16 %v1133, %v1132
        %v1175 = vpack.c.bf16 %v1135, %v1134
        %1176 = vrot.lane.b32.xlu0 %v416, 80
        %v1177 = vpop.permute.xlu0 %1176
        %1178 = vrot.lane.b32.xlu0 %v417, 80
        %v1179 = vpop.permute.xlu0 %1178
        %1180 = vrot.lane.b32.xlu0 %v418, 80
        %v1181 = vpop.permute.xlu0 %1180
        %1182 = vrot.lane.b32.xlu0 %v419, 80
        %v1183 = vpop.permute.xlu0 %1182
        %1184 = vrot.lane.b32.xlu0 %v420, 80
        %v1185 = vpop.permute.xlu0 %1184
        %1186 = vrot.lane.b32.xlu0 %v421, 80
        %v1187 = vpop.permute.xlu0 %1186
        %1188 = vrot.lane.b32.xlu0 %v422, 80
        %v1189 = vpop.permute.xlu0 %1188
        %1190 = vrot.lane.b32.xlu0 %v423, 80
        %v1191 = vpop.permute.xlu0 %1190
        %1192 = vrot.lane.b32.xlu0 %v424, 80
        %v1193 = vpop.permute.xlu0 %1192
        %1194 = vrot.lane.b32.xlu0 %v425, 80
        %v1195 = vpop.permute.xlu0 %1194
        %1196 = vrot.lane.b32.xlu0 %v426, 80
        %v1197 = vpop.permute.xlu0 %1196
        %1198 = vrot.lane.b32.xlu0 %v427, 80
        %v1199 = vpop.permute.xlu0 %1198
        %1200 = vrot.lane.b32.xlu0 %v428, 80
        %v1201 = vpop.permute.xlu0 %1200
        %1202 = vrot.lane.b32.xlu0 %v429, 80
        %v1203 = vpop.permute.xlu0 %1202
        %1204 = vrot.lane.b32.xlu0 %v430, 80
        %v1205 = vpop.permute.xlu0 %1204
        %1206 = vrot.lane.b32.xlu0 %v431, 80
        %v1207 = vpop.permute.xlu0 %1206
        %1208 = vrot.lane.b32.xlu0 %v432, 80
        %v1209 = vpop.permute.xlu0 %1208
        %1210 = vrot.lane.b32.xlu0 %v433, 80
        %v1211 = vpop.permute.xlu0 %1210
        %1212 = vrot.lane.b32.xlu0 %v434, 80
        %v1213 = vpop.permute.xlu0 %1212
        %1214 = vrot.lane.b32.xlu0 %v435, 80
        %v1215 = vpop.permute.xlu0 %1214
        %1216 = vrot.lane.b32.xlu0 %v436, 80
        %v1217 = vpop.permute.xlu0 %1216
        %1218 = vrot.lane.b32.xlu0 %v437, 80
        %v1219 = vpop.permute.xlu0 %1218
        %1220 = vrot.lane.b32.xlu0 %v438, 80
        %v1221 = vpop.permute.xlu0 %1220
        %1222 = vrot.lane.b32.xlu0 %v439, 80
        %v1223 = vpop.permute.xlu0 %1222
        %1224 = vrot.lane.b32.xlu0 %v440, 80
        %v1225 = vpop.permute.xlu0 %1224
        %1226 = vrot.lane.b32.xlu0 %v441, 80
        %v1227 = vpop.permute.xlu0 %1226
        %1228 = vrot.lane.b32.xlu0 %v442, 80
        %v1229 = vpop.permute.xlu0 %1228
        %1230 = vrot.lane.b32.xlu0 %v443, 80
        %v1231 = vpop.permute.xlu0 %1230
        %1232 = vrot.lane.b32.xlu0 %v444, 80
        %v1233 = vpop.permute.xlu0 %1232
        %1234 = vrot.lane.b32.xlu0 %v445, 80
        %v1235 = vpop.permute.xlu0 %1234
        %1236 = vrot.lane.b32.xlu0 %v446, 80
        %v1237 = vpop.permute.xlu0 %1236
        %1238 = vrot.lane.b32.xlu0 %v447, 80
        %v1239 = vpop.permute.xlu0 %1238
        %1240 = vrot.lane.b32.xlu0 %v448, 80
        %v1241 = vpop.permute.xlu0 %1240
        %1242 = vrot.lane.b32.xlu0 %v449, 80
        %v1243 = vpop.permute.xlu0 %1242
        %1244 = vrot.lane.b32.xlu0 %v450, 80
        %v1245 = vpop.permute.xlu0 %1244
        %1246 = vrot.lane.b32.xlu0 %v451, 80
        %v1247 = vpop.permute.xlu0 %1246
        %1248 = vrot.lane.b32.xlu0 %v452, 80
        %v1249 = vpop.permute.xlu0 %1248
        %1250 = vrot.lane.b32.xlu0 %v453, 80
        %v1251 = vpop.permute.xlu0 %1250
        %1252 = vrot.lane.b32.xlu0 %v454, 80
        %v1253 = vpop.permute.xlu0 %1252
        %1254 = vrot.lane.b32.xlu0 %v455, 80
        %v1255 = vpop.permute.xlu0 %1254
        %1256 = vrot.lane.b32.xlu0 %v456, 80
        %v1257 = vpop.permute.xlu0 %1256
        %1258 = vrot.lane.b32.xlu0 %v457, 80
        %v1259 = vpop.permute.xlu0 %1258
        %1260 = vrot.lane.b32.xlu0 %v458, 80
        %v1261 = vpop.permute.xlu0 %1260
        %1262 = vrot.lane.b32.xlu0 %v459, 80
        %v1263 = vpop.permute.xlu0 %1262
        %1264 = vrot.lane.b32.xlu0 %v460, 80
        %v1265 = vpop.permute.xlu0 %1264
        %1266 = vrot.lane.b32.xlu0 %v461, 80
        %v1267 = vpop.permute.xlu0 %1266
        %1268 = vrot.lane.b32.xlu0 %v462, 80
        %v1269 = vpop.permute.xlu0 %1268
        %1270 = vrot.lane.b32.xlu0 %v463, 80
        %v1271 = vpop.permute.xlu0 %1270
        %1272 = vrot.lane.b32.xlu0 %v464, 80
        %v1273 = vpop.permute.xlu0 %1272
        %1274 = vrot.lane.b32.xlu0 %v465, 80
        %v1275 = vpop.permute.xlu0 %1274
        %1276 = vrot.lane.b32.xlu0 %v466, 80
        %v1277 = vpop.permute.xlu0 %1276
        %1278 = vrot.lane.b32.xlu0 %v467, 80
        %v1279 = vpop.permute.xlu0 %1278
        %1280 = vrot.lane.b32.xlu0 %v468, 80
        %v1281 = vpop.permute.xlu0 %1280
        %1282 = vrot.lane.b32.xlu0 %v469, 80
        %v1283 = vpop.permute.xlu0 %1282
        %1284 = vrot.lane.b32.xlu0 %v470, 80
        %v1285 = vpop.permute.xlu0 %1284
        %1286 = vrot.lane.b32.xlu0 %v471, 80
        %v1287 = vpop.permute.xlu0 %1286
        %1288 = vrot.lane.b32.xlu0 %v472, 80
        %v1289 = vpop.permute.xlu0 %1288
        %1290 = vrot.lane.b32.xlu0 %v473, 80
        %v1291 = vpop.permute.xlu0 %1290
        %1292 = vrot.lane.b32.xlu0 %v474, 80
        %v1293 = vpop.permute.xlu0 %1292
        %1294 = vrot.lane.b32.xlu0 %v475, 80
        %v1295 = vpop.permute.xlu0 %1294
        %1296 = vrot.lane.b32.xlu0 %v476, 80
        %v1297 = vpop.permute.xlu0 %1296
        %1298 = vrot.lane.b32.xlu0 %v477, 80
        %v1299 = vpop.permute.xlu0 %1298
        %1300 = vrot.lane.b32.xlu0 %v478, 80
        %v1301 = vpop.permute.xlu0 %1300
        %1302 = vrot.lane.b32.xlu0 %v479, 80
        %v1303 = vpop.permute.xlu0 %1302
        %1304 = vrot.lane.b32.xlu0 %v480, 80
        %v1305 = vpop.permute.xlu0 %1304
        %1306 = vrot.lane.b32.xlu0 %v481, 80
        %v1307 = vpop.permute.xlu0 %1306
        %1308 = vrot.lane.b32.xlu0 %v482, 80
        %v1309 = vpop.permute.xlu0 %1308
        %1310 = vrot.lane.b32.xlu0 %v483, 80
        %v1311 = vpop.permute.xlu0 %1310
        %1312 = vrot.lane.b32.xlu0 %v484, 80
        %v1313 = vpop.permute.xlu0 %1312
        %1314 = vrot.lane.b32.xlu0 %v485, 80
        %v1315 = vpop.permute.xlu0 %1314
        %1316 = vrot.lane.b32.xlu0 %v486, 80
        %v1317 = vpop.permute.xlu0 %1316
        %1318 = vrot.lane.b32.xlu0 %v487, 80
        %v1319 = vpop.permute.xlu0 %1318
        %1320 = vrot.lane.b32.xlu0 %v488, 80
        %v1321 = vpop.permute.xlu0 %1320
        %1322 = vrot.lane.b32.xlu0 %v489, 80
        %v1323 = vpop.permute.xlu0 %1322
        %1324 = vrot.lane.b32.xlu0 %v490, 80
        %v1325 = vpop.permute.xlu0 %1324
        %1326 = vrot.lane.b32.xlu0 %v491, 80
        %v1327 = vpop.permute.xlu0 %1326
        %1328 = vrot.lane.b32.xlu0 %v492, 80
        %v1329 = vpop.permute.xlu0 %1328
        %1330 = vrot.lane.b32.xlu0 %v493, 80
        %v1331 = vpop.permute.xlu0 %1330
        %1332 = vrot.lane.b32.xlu0 %v494, 80
        %v1333 = vpop.permute.xlu0 %1332
        %1334 = vrot.lane.b32.xlu0 %v495, 80
        %v1335 = vpop.permute.xlu0 %1334
        %v1336 = vmul.f32 %v416, %v1177
        %v1337 = vmul.f32 %v417, %v1179
        %v1338 = vmul.f32 %v418, %v1181
        %v1339 = vmul.f32 %v419, %v1183
        %v1340 = vmul.f32 %v420, %v1185
        %v1341 = vmul.f32 %v421, %v1187
        %v1342 = vmul.f32 %v422, %v1189
        %v1343 = vmul.f32 %v423, %v1191
        %v1344 = vmul.f32 %v424, %v1193
        %v1345 = vmul.f32 %v425, %v1195
        %v1346 = vmul.f32 %v426, %v1197
        %v1347 = vmul.f32 %v427, %v1199
        %v1348 = vmul.f32 %v428, %v1201
        %v1349 = vmul.f32 %v429, %v1203
        %v1350 = vmul.f32 %v430, %v1205
        %v1351 = vmul.f32 %v431, %v1207
        %v1352 = vmul.f32 %v432, %v1209
        %v1353 = vmul.f32 %v433, %v1211
        %v1354 = vmul.f32 %v434, %v1213
        %v1355 = vmul.f32 %v435, %v1215
        %v1356 = vmul.f32 %v436, %v1217
        %v1357 = vmul.f32 %v437, %v1219
        %v1358 = vmul.f32 %v438, %v1221
        %v1359 = vmul.f32 %v439, %v1223
        %v1360 = vmul.f32 %v440, %v1225
        %v1361 = vmul.f32 %v441, %v1227
        %v1362 = vmul.f32 %v442, %v1229
        %v1363 = vmul.f32 %v443, %v1231
        %v1364 = vmul.f32 %v444, %v1233
        %v1365 = vmul.f32 %v445, %v1235
        %v1366 = vmul.f32 %v446, %v1237
        %v1367 = vmul.f32 %v447, %v1239
        %v1368 = vmul.f32 %v448, %v1241
        %v1369 = vmul.f32 %v449, %v1243
        %v1370 = vmul.f32 %v450, %v1245
        %v1371 = vmul.f32 %v451, %v1247
        %v1372 = vmul.f32 %v452, %v1249
        %v1373 = vmul.f32 %v453, %v1251
        %v1374 = vmul.f32 %v454, %v1253
        %v1375 = vmul.f32 %v455, %v1255
        %v1376 = vmul.f32 %v456, %v1257
        %v1377 = vmul.f32 %v457, %v1259
        %v1378 = vmul.f32 %v458, %v1261
        %v1379 = vmul.f32 %v459, %v1263
        %v1380 = vmul.f32 %v460, %v1265
        %v1381 = vmul.f32 %v461, %v1267
        %v1382 = vmul.f32 %v462, %v1269
        %v1383 = vmul.f32 %v463, %v1271
        %v1384 = vmul.f32 %v464, %v1273
        %v1385 = vmul.f32 %v465, %v1275
        %v1386 = vmul.f32 %v466, %v1277
        %v1387 = vmul.f32 %v467, %v1279
        %v1388 = vmul.f32 %v468, %v1281
        %v1389 = vmul.f32 %v469, %v1283
        %v1390 = vmul.f32 %v470, %v1285
        %v1391 = vmul.f32 %v471, %v1287
        %v1392 = vmul.f32 %v472, %v1289
        %v1393 = vmul.f32 %v473, %v1291
        %v1394 = vmul.f32 %v474, %v1293
        %v1395 = vmul.f32 %v475, %v1295
        %v1396 = vmul.f32 %v476, %v1297
        %v1397 = vmul.f32 %v477, %v1299
        %v1398 = vmul.f32 %v478, %v1301
        %v1399 = vmul.f32 %v479, %v1303
        %v1400 = vmul.f32 %v480, %v1305
        %v1401 = vmul.f32 %v481, %v1307
        %v1402 = vmul.f32 %v482, %v1309
        %v1403 = vmul.f32 %v483, %v1311
        %v1404 = vmul.f32 %v484, %v1313
        %v1405 = vmul.f32 %v485, %v1315
        %v1406 = vmul.f32 %v486, %v1317
        %v1407 = vmul.f32 %v487, %v1319
        %v1408 = vmul.f32 %v488, %v1321
        %v1409 = vmul.f32 %v489, %v1323
        %v1410 = vmul.f32 %v490, %v1325
        %v1411 = vmul.f32 %v491, %v1327
        %v1412 = vmul.f32 %v492, %v1329
        %v1413 = vmul.f32 %v493, %v1331
        %v1414 = vmul.f32 %v494, %v1333
        %v1415 = vmul.f32 %v495, %v1335
        %v1416 = vpack.c.bf16 %v1337, %v1336
        %v1417 = vpack.c.bf16 %v1339, %v1338
        %v1418 = vpack.c.bf16 %v1341, %v1340
        %v1419 = vpack.c.bf16 %v1343, %v1342
        %v1420 = vpack.c.bf16 %v1345, %v1344
        %v1421 = vpack.c.bf16 %v1347, %v1346
        %v1422 = vpack.c.bf16 %v1349, %v1348
        %v1423 = vpack.c.bf16 %v1351, %v1350
        %v1424 = vpack.c.bf16 %v1353, %v1352
        %v1425 = vpack.c.bf16 %v1355, %v1354
        %v1426 = vpack.c.bf16 %v1357, %v1356
        %v1427 = vpack.c.bf16 %v1359, %v1358
        %v1428 = vpack.c.bf16 %v1361, %v1360
        %v1429 = vpack.c.bf16 %v1363, %v1362
        %v1430 = vpack.c.bf16 %v1365, %v1364
        %v1431 = vpack.c.bf16 %v1367, %v1366
        %v1432 = vpack.c.bf16 %v1369, %v1368
        %v1433 = vpack.c.bf16 %v1371, %v1370
        %v1434 = vpack.c.bf16 %v1373, %v1372
        %v1435 = vpack.c.bf16 %v1375, %v1374
        %v1436 = vpack.c.bf16 %v1377, %v1376
        %v1437 = vpack.c.bf16 %v1379, %v1378
        %v1438 = vpack.c.bf16 %v1381, %v1380
        %v1439 = vpack.c.bf16 %v1383, %v1382
        %v1440 = vpack.c.bf16 %v1385, %v1384
        %v1441 = vpack.c.bf16 %v1387, %v1386
        %v1442 = vpack.c.bf16 %v1389, %v1388
        %v1443 = vpack.c.bf16 %v1391, %v1390
        %v1444 = vpack.c.bf16 %v1393, %v1392
        %v1445 = vpack.c.bf16 %v1395, %v1394
        %v1446 = vpack.c.bf16 %v1397, %v1396
        %v1447 = vpack.c.bf16 %v1399, %v1398
        %v1448 = vpack.c.bf16 %v1401, %v1400
        %v1449 = vpack.c.bf16 %v1403, %v1402
        %v1450 = vpack.c.bf16 %v1405, %v1404
        %v1451 = vpack.c.bf16 %v1407, %v1406
        %v1452 = vpack.c.bf16 %v1409, %v1408
        %v1453 = vpack.c.bf16 %v1411, %v1410
        %v1454 = vpack.c.bf16 %v1413, %v1412
        %v1455 = vpack.c.bf16 %v1415, %v1414
        %1456 = vrot.lane.b32.xlu0 %v416, 64
        %v1457 = vpop.permute.xlu0 %1456
        %1458 = vrot.lane.b32.xlu0 %v417, 64
        %v1459 = vpop.permute.xlu0 %1458
        %1460 = vrot.lane.b32.xlu0 %v418, 64
        %v1461 = vpop.permute.xlu0 %1460
        %1462 = vrot.lane.b32.xlu0 %v419, 64
        %v1463 = vpop.permute.xlu0 %1462
        %1464 = vrot.lane.b32.xlu0 %v420, 64
        %v1465 = vpop.permute.xlu0 %1464
        %1466 = vrot.lane.b32.xlu0 %v421, 64
        %v1467 = vpop.permute.xlu0 %1466
        %1468 = vrot.lane.b32.xlu0 %v422, 64
        %v1469 = vpop.permute.xlu0 %1468
        %1470 = vrot.lane.b32.xlu0 %v423, 64
        %v1471 = vpop.permute.xlu0 %1470
        %1472 = vrot.lane.b32.xlu0 %v424, 64
        %v1473 = vpop.permute.xlu0 %1472
        %1474 = vrot.lane.b32.xlu0 %v425, 64
        %v1475 = vpop.permute.xlu0 %1474
        %1476 = vrot.lane.b32.xlu0 %v426, 64
        %v1477 = vpop.permute.xlu0 %1476
        %1478 = vrot.lane.b32.xlu0 %v427, 64
        %v1479 = vpop.permute.xlu0 %1478
        %1480 = vrot.lane.b32.xlu0 %v428, 64
        %v1481 = vpop.permute.xlu0 %1480
        %1482 = vrot.lane.b32.xlu0 %v429, 64
        %v1483 = vpop.permute.xlu0 %1482
        %1484 = vrot.lane.b32.xlu0 %v430, 64
        %v1485 = vpop.permute.xlu0 %1484
        %1486 = vrot.lane.b32.xlu0 %v431, 64
        %v1487 = vpop.permute.xlu0 %1486
        %1488 = vrot.lane.b32.xlu0 %v432, 64
        %v1489 = vpop.permute.xlu0 %1488
        %1490 = vrot.lane.b32.xlu0 %v433, 64
        %v1491 = vpop.permute.xlu0 %1490
        %1492 = vrot.lane.b32.xlu0 %v434, 64
        %v1493 = vpop.permute.xlu0 %1492
        %1494 = vrot.lane.b32.xlu0 %v435, 64
        %v1495 = vpop.permute.xlu0 %1494
        %1496 = vrot.lane.b32.xlu0 %v436, 64
        %v1497 = vpop.permute.xlu0 %1496
        %1498 = vrot.lane.b32.xlu0 %v437, 64
        %v1499 = vpop.permute.xlu0 %1498
        %1500 = vrot.lane.b32.xlu0 %v438, 64
        %v1501 = vpop.permute.xlu0 %1500
        %1502 = vrot.lane.b32.xlu0 %v439, 64
        %v1503 = vpop.permute.xlu0 %1502
        %1504 = vrot.lane.b32.xlu0 %v440, 64
        %v1505 = vpop.permute.xlu0 %1504
        %1506 = vrot.lane.b32.xlu0 %v441, 64
        %v1507 = vpop.permute.xlu0 %1506
        %1508 = vrot.lane.b32.xlu0 %v442, 64
        %v1509 = vpop.permute.xlu0 %1508
        %1510 = vrot.lane.b32.xlu0 %v443, 64
        %v1511 = vpop.permute.xlu0 %1510
        %1512 = vrot.lane.b32.xlu0 %v444, 64
        %v1513 = vpop.permute.xlu0 %1512
        %1514 = vrot.lane.b32.xlu0 %v445, 64
        %v1515 = vpop.permute.xlu0 %1514
        %1516 = vrot.lane.b32.xlu0 %v446, 64
        %v1517 = vpop.permute.xlu0 %1516
        %1518 = vrot.lane.b32.xlu0 %v447, 64
        %v1519 = vpop.permute.xlu0 %1518
        %1520 = vrot.lane.b32.xlu0 %v448, 64
        %v1521 = vpop.permute.xlu0 %1520
        %1522 = vrot.lane.b32.xlu0 %v449, 64
        %v1523 = vpop.permute.xlu0 %1522
        %1524 = vrot.lane.b32.xlu0 %v450, 64
        %v1525 = vpop.permute.xlu0 %1524
        %1526 = vrot.lane.b32.xlu0 %v451, 64
        %v1527 = vpop.permute.xlu0 %1526
        %1528 = vrot.lane.b32.xlu0 %v452, 64
        %v1529 = vpop.permute.xlu0 %1528
        %1530 = vrot.lane.b32.xlu0 %v453, 64
        %v1531 = vpop.permute.xlu0 %1530
        %1532 = vrot.lane.b32.xlu0 %v454, 64
        %v1533 = vpop.permute.xlu0 %1532
        %1534 = vrot.lane.b32.xlu0 %v455, 64
        %v1535 = vpop.permute.xlu0 %1534
        %1536 = vrot.lane.b32.xlu0 %v456, 64
        %v1537 = vpop.permute.xlu0 %1536
        %1538 = vrot.lane.b32.xlu0 %v457, 64
        %v1539 = vpop.permute.xlu0 %1538
        %1540 = vrot.lane.b32.xlu0 %v458, 64
        %v1541 = vpop.permute.xlu0 %1540
        %1542 = vrot.lane.b32.xlu0 %v459, 64
        %v1543 = vpop.permute.xlu0 %1542
        %1544 = vrot.lane.b32.xlu0 %v460, 64
        %v1545 = vpop.permute.xlu0 %1544
        %1546 = vrot.lane.b32.xlu0 %v461, 64
        %v1547 = vpop.permute.xlu0 %1546
        %1548 = vrot.lane.b32.xlu0 %v462, 64
        %v1549 = vpop.permute.xlu0 %1548
        %1550 = vrot.lane.b32.xlu0 %v463, 64
        %v1551 = vpop.permute.xlu0 %1550
        %1552 = vrot.lane.b32.xlu0 %v464, 64
        %v1553 = vpop.permute.xlu0 %1552
        %1554 = vrot.lane.b32.xlu0 %v465, 64
        %v1555 = vpop.permute.xlu0 %1554
        %1556 = vrot.lane.b32.xlu0 %v466, 64
        %v1557 = vpop.permute.xlu0 %1556
        %1558 = vrot.lane.b32.xlu0 %v467, 64
        %v1559 = vpop.permute.xlu0 %1558
        %1560 = vrot.lane.b32.xlu0 %v468, 64
        %v1561 = vpop.permute.xlu0 %1560
        %1562 = vrot.lane.b32.xlu0 %v469, 64
        %v1563 = vpop.permute.xlu0 %1562
        %1564 = vrot.lane.b32.xlu0 %v470, 64
        %v1565 = vpop.permute.xlu0 %1564
        %1566 = vrot.lane.b32.xlu0 %v471, 64
        %v1567 = vpop.permute.xlu0 %1566
        %1568 = vrot.lane.b32.xlu0 %v472, 64
        %v1569 = vpop.permute.xlu0 %1568
        %1570 = vrot.lane.b32.xlu0 %v473, 64
        %v1571 = vpop.permute.xlu0 %1570
        %1572 = vrot.lane.b32.xlu0 %v474, 64
        %v1573 = vpop.permute.xlu0 %1572
        %1574 = vrot.lane.b32.xlu0 %v475, 64
        %v1575 = vpop.permute.xlu0 %1574
        %1576 = vrot.lane.b32.xlu0 %v476, 64
        %v1577 = vpop.permute.xlu0 %1576
        %1578 = vrot.lane.b32.xlu0 %v477, 64
        %v1579 = vpop.permute.xlu0 %1578
        %1580 = vrot.lane.b32.xlu0 %v478, 64
        %v1581 = vpop.permute.xlu0 %1580
        %1582 = vrot.lane.b32.xlu0 %v479, 64
        %v1583 = vpop.permute.xlu0 %1582
        %1584 = vrot.lane.b32.xlu0 %v480, 64
        %v1585 = vpop.permute.xlu0 %1584
        %1586 = vrot.lane.b32.xlu0 %v481, 64
        %v1587 = vpop.permute.xlu0 %1586
        %1588 = vrot.lane.b32.xlu0 %v482, 64
        %v1589 = vpop.permute.xlu0 %1588
        %1590 = vrot.lane.b32.xlu0 %v483, 64
        %v1591 = vpop.permute.xlu0 %1590
        %1592 = vrot.lane.b32.xlu0 %v484, 64
        %v1593 = vpop.permute.xlu0 %1592
        %1594 = vrot.lane.b32.xlu0 %v485, 64
        %v1595 = vpop.permute.xlu0 %1594
        %1596 = vrot.lane.b32.xlu0 %v486, 64
        %v1597 = vpop.permute.xlu0 %1596
        %1598 = vrot.lane.b32.xlu0 %v487, 64
        %v1599 = vpop.permute.xlu0 %1598
        %1600 = vrot.lane.b32.xlu0 %v488, 64
        %v1601 = vpop.permute.xlu0 %1600
        %1602 = vrot.lane.b32.xlu0 %v489, 64
        %v1603 = vpop.permute.xlu0 %1602
        %1604 = vrot.lane.b32.xlu0 %v490, 64
        %v1605 = vpop.permute.xlu0 %1604
        %1606 = vrot.lane.b32.xlu0 %v491, 64
        %v1607 = vpop.permute.xlu0 %1606
        %1608 = vrot.lane.b32.xlu0 %v492, 64
        %v1609 = vpop.permute.xlu0 %1608
        %1610 = vrot.lane.b32.xlu0 %v493, 64
        %v1611 = vpop.permute.xlu0 %1610
        %1612 = vrot.lane.b32.xlu0 %v494, 64
        %v1613 = vpop.permute.xlu0 %1612
        %1614 = vrot.lane.b32.xlu0 %v495, 64
        %v1615 = vpop.permute.xlu0 %1614
        %v1616 = vmul.f32 %v416, %v1457
        %v1617 = vmul.f32 %v417, %v1459
        %v1618 = vmul.f32 %v418, %v1461
        %v1619 = vmul.f32 %v419, %v1463
        %v1620 = vmul.f32 %v420, %v1465
        %v1621 = vmul.f32 %v421, %v1467
        %v1622 = vmul.f32 %v422, %v1469
        %v1623 = vmul.f32 %v423, %v1471
        %v1624 = vmul.f32 %v424, %v1473
        %v1625 = vmul.f32 %v425, %v1475
        %v1626 = vmul.f32 %v426, %v1477
        %v1627 = vmul.f32 %v427, %v1479
        %v1628 = vmul.f32 %v428, %v1481
        %v1629 = vmul.f32 %v429, %v1483
        %v1630 = vmul.f32 %v430, %v1485
        %v1631 = vmul.f32 %v431, %v1487
        %v1632 = vmul.f32 %v432, %v1489
        %v1633 = vmul.f32 %v433, %v1491
        %v1634 = vmul.f32 %v434, %v1493
        %v1635 = vmul.f32 %v435, %v1495
        %v1636 = vmul.f32 %v436, %v1497
        %v1637 = vmul.f32 %v437, %v1499
        %v1638 = vmul.f32 %v438, %v1501
        %v1639 = vmul.f32 %v439, %v1503
        %v1640 = vmul.f32 %v440, %v1505
        %v1641 = vmul.f32 %v441, %v1507
        %v1642 = vmul.f32 %v442, %v1509
        %v1643 = vmul.f32 %v443, %v1511
        %v1644 = vmul.f32 %v444, %v1513
        %v1645 = vmul.f32 %v445, %v1515
        %v1646 = vmul.f32 %v446, %v1517
        %v1647 = vmul.f32 %v447, %v1519
        %v1648 = vmul.f32 %v448, %v1521
        %v1649 = vmul.f32 %v449, %v1523
        %v1650 = vmul.f32 %v450, %v1525
        %v1651 = vmul.f32 %v451, %v1527
        %v1652 = vmul.f32 %v452, %v1529
        %v1653 = vmul.f32 %v453, %v1531
        %v1654 = vmul.f32 %v454, %v1533
        %v1655 = vmul.f32 %v455, %v1535
        %v1656 = vmul.f32 %v456, %v1537
        %v1657 = vmul.f32 %v457, %v1539
        %v1658 = vmul.f32 %v458, %v1541
        %v1659 = vmul.f32 %v459, %v1543
        %v1660 = vmul.f32 %v460, %v1545
        %v1661 = vmul.f32 %v461, %v1547
        %v1662 = vmul.f32 %v462, %v1549
        %v1663 = vmul.f32 %v463, %v1551
        %v1664 = vmul.f32 %v464, %v1553
        %v1665 = vmul.f32 %v465, %v1555
        %v1666 = vmul.f32 %v466, %v1557
        %v1667 = vmul.f32 %v467, %v1559
        %v1668 = vmul.f32 %v468, %v1561
        %v1669 = vmul.f32 %v469, %v1563
        %v1670 = vmul.f32 %v470, %v1565
        %v1671 = vmul.f32 %v471, %v1567
        %v1672 = vmul.f32 %v472, %v1569
        %v1673 = vmul.f32 %v473, %v1571
        %v1674 = vmul.f32 %v474, %v1573
        %v1675 = vmul.f32 %v475, %v1575
        %v1676 = vmul.f32 %v476, %v1577
        %v1677 = vmul.f32 %v477, %v1579
        %v1678 = vmul.f32 %v478, %v1581
        %v1679 = vmul.f32 %v479, %v1583
        %v1680 = vmul.f32 %v480, %v1585
        %v1681 = vmul.f32 %v481, %v1587
        %v1682 = vmul.f32 %v482, %v1589
        %v1683 = vmul.f32 %v483, %v1591
        %v1684 = vmul.f32 %v484, %v1593
        %v1685 = vmul.f32 %v485, %v1595
        %v1686 = vmul.f32 %v486, %v1597
        %v1687 = vmul.f32 %v487, %v1599
        %v1688 = vmul.f32 %v488, %v1601
        %v1689 = vmul.f32 %v489, %v1603
        %v1690 = vmul.f32 %v490, %v1605
        %v1691 = vmul.f32 %v491, %v1607
        %v1692 = vmul.f32 %v492, %v1609
        %v1693 = vmul.f32 %v493, %v1611
        %v1694 = vmul.f32 %v494, %v1613
        %v1695 = vmul.f32 %v495, %v1615
        %v1696 = vpack.c.bf16 %v1617, %v1616
        %v1697 = vpack.c.bf16 %v1619, %v1618
        %v1698 = vpack.c.bf16 %v1621, %v1620
        %v1699 = vpack.c.bf16 %v1623, %v1622
        %v1700 = vpack.c.bf16 %v1625, %v1624
        %v1701 = vpack.c.bf16 %v1627, %v1626
        %v1702 = vpack.c.bf16 %v1629, %v1628
        %v1703 = vpack.c.bf16 %v1631, %v1630
        %v1704 = vpack.c.bf16 %v1633, %v1632
        %v1705 = vpack.c.bf16 %v1635, %v1634
        %v1706 = vpack.c.bf16 %v1637, %v1636
        %v1707 = vpack.c.bf16 %v1639, %v1638
        %v1708 = vpack.c.bf16 %v1641, %v1640
        %v1709 = vpack.c.bf16 %v1643, %v1642
        %v1710 = vpack.c.bf16 %v1645, %v1644
        %v1711 = vpack.c.bf16 %v1647, %v1646
        %v1712 = vpack.c.bf16 %v1649, %v1648
        %v1713 = vpack.c.bf16 %v1651, %v1650
        %v1714 = vpack.c.bf16 %v1653, %v1652
        %v1715 = vpack.c.bf16 %v1655, %v1654
        %v1716 = vpack.c.bf16 %v1657, %v1656
        %v1717 = vpack.c.bf16 %v1659, %v1658
        %v1718 = vpack.c.bf16 %v1661, %v1660
        %v1719 = vpack.c.bf16 %v1663, %v1662
        %v1720 = vpack.c.bf16 %v1665, %v1664
        %v1721 = vpack.c.bf16 %v1667, %v1666
        %v1722 = vpack.c.bf16 %v1669, %v1668
        %v1723 = vpack.c.bf16 %v1671, %v1670
        %v1724 = vpack.c.bf16 %v1673, %v1672
        %v1725 = vpack.c.bf16 %v1675, %v1674
        %v1726 = vpack.c.bf16 %v1677, %v1676
        %v1727 = vpack.c.bf16 %v1679, %v1678
        %v1728 = vpack.c.bf16 %v1681, %v1680
        %v1729 = vpack.c.bf16 %v1683, %v1682
        %v1730 = vpack.c.bf16 %v1685, %v1684
        %v1731 = vpack.c.bf16 %v1687, %v1686
        %v1732 = vpack.c.bf16 %v1689, %v1688
        %v1733 = vpack.c.bf16 %v1691, %v1690
        %v1734 = vpack.c.bf16 %v1693, %v1692
        %v1735 = vpack.c.bf16 %v1695, %v1694
        %1736 = vrot.lane.b32.xlu0 %v416, 48
        %v1737 = vpop.permute.xlu0 %1736
        %1738 = vrot.lane.b32.xlu0 %v417, 48
        %v1739 = vpop.permute.xlu0 %1738
        %1740 = vrot.lane.b32.xlu0 %v418, 48
        %v1741 = vpop.permute.xlu0 %1740
        %1742 = vrot.lane.b32.xlu0 %v419, 48
        %v1743 = vpop.permute.xlu0 %1742
        %1744 = vrot.lane.b32.xlu0 %v420, 48
        %v1745 = vpop.permute.xlu0 %1744
        %1746 = vrot.lane.b32.xlu0 %v421, 48
        %v1747 = vpop.permute.xlu0 %1746
        %1748 = vrot.lane.b32.xlu0 %v422, 48
        %v1749 = vpop.permute.xlu0 %1748
        %1750 = vrot.lane.b32.xlu0 %v423, 48
        %v1751 = vpop.permute.xlu0 %1750
        %1752 = vrot.lane.b32.xlu0 %v424, 48
        %v1753 = vpop.permute.xlu0 %1752
        %1754 = vrot.lane.b32.xlu0 %v425, 48
        %v1755 = vpop.permute.xlu0 %1754
        %1756 = vrot.lane.b32.xlu0 %v426, 48
        %v1757 = vpop.permute.xlu0 %1756
        %1758 = vrot.lane.b32.xlu0 %v427, 48
        %v1759 = vpop.permute.xlu0 %1758
        %1760 = vrot.lane.b32.xlu0 %v428, 48
        %v1761 = vpop.permute.xlu0 %1760
        %1762 = vrot.lane.b32.xlu0 %v429, 48
        %v1763 = vpop.permute.xlu0 %1762
        %1764 = vrot.lane.b32.xlu0 %v430, 48
        %v1765 = vpop.permute.xlu0 %1764
        %1766 = vrot.lane.b32.xlu0 %v431, 48
        %v1767 = vpop.permute.xlu0 %1766
        %1768 = vrot.lane.b32.xlu0 %v432, 48
        %v1769 = vpop.permute.xlu0 %1768
        %1770 = vrot.lane.b32.xlu0 %v433, 48
        %v1771 = vpop.permute.xlu0 %1770
        %1772 = vrot.lane.b32.xlu0 %v434, 48
        %v1773 = vpop.permute.xlu0 %1772
        %1774 = vrot.lane.b32.xlu0 %v435, 48
        %v1775 = vpop.permute.xlu0 %1774
        %1776 = vrot.lane.b32.xlu0 %v436, 48
        %v1777 = vpop.permute.xlu0 %1776
        %1778 = vrot.lane.b32.xlu0 %v437, 48
        %v1779 = vpop.permute.xlu0 %1778
        %1780 = vrot.lane.b32.xlu0 %v438, 48
        %v1781 = vpop.permute.xlu0 %1780
        %1782 = vrot.lane.b32.xlu0 %v439, 48
        %v1783 = vpop.permute.xlu0 %1782
        %1784 = vrot.lane.b32.xlu0 %v440, 48
        %v1785 = vpop.permute.xlu0 %1784
        %1786 = vrot.lane.b32.xlu0 %v441, 48
        %v1787 = vpop.permute.xlu0 %1786
        %1788 = vrot.lane.b32.xlu0 %v442, 48
        %v1789 = vpop.permute.xlu0 %1788
        %1790 = vrot.lane.b32.xlu0 %v443, 48
        %v1791 = vpop.permute.xlu0 %1790
        %1792 = vrot.lane.b32.xlu0 %v444, 48
        %v1793 = vpop.permute.xlu0 %1792
        %1794 = vrot.lane.b32.xlu0 %v445, 48
        %v1795 = vpop.permute.xlu0 %1794
        %1796 = vrot.lane.b32.xlu0 %v446, 48
        %v1797 = vpop.permute.xlu0 %1796
        %1798 = vrot.lane.b32.xlu0 %v447, 48
        %v1799 = vpop.permute.xlu0 %1798
        %1800 = vrot.lane.b32.xlu0 %v448, 48
        %v1801 = vpop.permute.xlu0 %1800
        %1802 = vrot.lane.b32.xlu0 %v449, 48
        %v1803 = vpop.permute.xlu0 %1802
        %1804 = vrot.lane.b32.xlu0 %v450, 48
        %v1805 = vpop.permute.xlu0 %1804
        %1806 = vrot.lane.b32.xlu0 %v451, 48
        %v1807 = vpop.permute.xlu0 %1806
        %1808 = vrot.lane.b32.xlu0 %v452, 48
        %v1809 = vpop.permute.xlu0 %1808
        %1810 = vrot.lane.b32.xlu0 %v453, 48
        %v1811 = vpop.permute.xlu0 %1810
        %1812 = vrot.lane.b32.xlu0 %v454, 48
        %v1813 = vpop.permute.xlu0 %1812
        %1814 = vrot.lane.b32.xlu0 %v455, 48
        %v1815 = vpop.permute.xlu0 %1814
        %1816 = vrot.lane.b32.xlu0 %v456, 48
        %v1817 = vpop.permute.xlu0 %1816
        %1818 = vrot.lane.b32.xlu0 %v457, 48
        %v1819 = vpop.permute.xlu0 %1818
        %1820 = vrot.lane.b32.xlu0 %v458, 48
        %v1821 = vpop.permute.xlu0 %1820
        %1822 = vrot.lane.b32.xlu0 %v459, 48
        %v1823 = vpop.permute.xlu0 %1822
        %1824 = vrot.lane.b32.xlu0 %v460, 48
        %v1825 = vpop.permute.xlu0 %1824
        %1826 = vrot.lane.b32.xlu0 %v461, 48
        %v1827 = vpop.permute.xlu0 %1826
        %1828 = vrot.lane.b32.xlu0 %v462, 48
        %v1829 = vpop.permute.xlu0 %1828
        %1830 = vrot.lane.b32.xlu0 %v463, 48
        %v1831 = vpop.permute.xlu0 %1830
        %1832 = vrot.lane.b32.xlu0 %v464, 48
        %v1833 = vpop.permute.xlu0 %1832
        %1834 = vrot.lane.b32.xlu0 %v465, 48
        %v1835 = vpop.permute.xlu0 %1834
        %1836 = vrot.lane.b32.xlu0 %v466, 48
        %v1837 = vpop.permute.xlu0 %1836
        %1838 = vrot.lane.b32.xlu0 %v467, 48
        %v1839 = vpop.permute.xlu0 %1838
        %1840 = vrot.lane.b32.xlu0 %v468, 48
        %v1841 = vpop.permute.xlu0 %1840
        %1842 = vrot.lane.b32.xlu0 %v469, 48
        %v1843 = vpop.permute.xlu0 %1842
        %1844 = vrot.lane.b32.xlu0 %v470, 48
        %v1845 = vpop.permute.xlu0 %1844
        %1846 = vrot.lane.b32.xlu0 %v471, 48
        %v1847 = vpop.permute.xlu0 %1846
        %1848 = vrot.lane.b32.xlu0 %v472, 48
        %v1849 = vpop.permute.xlu0 %1848
        %1850 = vrot.lane.b32.xlu0 %v473, 48
        %v1851 = vpop.permute.xlu0 %1850
        %1852 = vrot.lane.b32.xlu0 %v474, 48
        %v1853 = vpop.permute.xlu0 %1852
        %1854 = vrot.lane.b32.xlu0 %v475, 48
        %v1855 = vpop.permute.xlu0 %1854
        %1856 = vrot.lane.b32.xlu0 %v476, 48
        %v1857 = vpop.permute.xlu0 %1856
        %1858 = vrot.lane.b32.xlu0 %v477, 48
        %v1859 = vpop.permute.xlu0 %1858
        %1860 = vrot.lane.b32.xlu0 %v478, 48
        %v1861 = vpop.permute.xlu0 %1860
        %1862 = vrot.lane.b32.xlu0 %v479, 48
        %v1863 = vpop.permute.xlu0 %1862
        %1864 = vrot.lane.b32.xlu0 %v480, 48
        %v1865 = vpop.permute.xlu0 %1864
        %1866 = vrot.lane.b32.xlu0 %v481, 48
        %v1867 = vpop.permute.xlu0 %1866
        %1868 = vrot.lane.b32.xlu0 %v482, 48
        %v1869 = vpop.permute.xlu0 %1868
        %1870 = vrot.lane.b32.xlu0 %v483, 48
        %v1871 = vpop.permute.xlu0 %1870
        %1872 = vrot.lane.b32.xlu0 %v484, 48
        %v1873 = vpop.permute.xlu0 %1872
        %1874 = vrot.lane.b32.xlu0 %v485, 48
        %v1875 = vpop.permute.xlu0 %1874
        %1876 = vrot.lane.b32.xlu0 %v486, 48
        %v1877 = vpop.permute.xlu0 %1876
        %1878 = vrot.lane.b32.xlu0 %v487, 48
        %v1879 = vpop.permute.xlu0 %1878
        %1880 = vrot.lane.b32.xlu0 %v488, 48
        %v1881 = vpop.permute.xlu0 %1880
        %1882 = vrot.lane.b32.xlu0 %v489, 48
        %v1883 = vpop.permute.xlu0 %1882
        %1884 = vrot.lane.b32.xlu0 %v490, 48
        %v1885 = vpop.permute.xlu0 %1884
        %1886 = vrot.lane.b32.xlu0 %v491, 48
        %v1887 = vpop.permute.xlu0 %1886
        %1888 = vrot.lane.b32.xlu0 %v492, 48
        %v1889 = vpop.permute.xlu0 %1888
        %1890 = vrot.lane.b32.xlu0 %v493, 48
        %v1891 = vpop.permute.xlu0 %1890
        %1892 = vrot.lane.b32.xlu0 %v494, 48
        %v1893 = vpop.permute.xlu0 %1892
        %1894 = vrot.lane.b32.xlu0 %v495, 48
        %v1895 = vpop.permute.xlu0 %1894
        %v1896 = vmul.f32 %v416, %v1737
        %v1897 = vmul.f32 %v417, %v1739
        %v1898 = vmul.f32 %v418, %v1741
        %v1899 = vmul.f32 %v419, %v1743
        %v1900 = vmul.f32 %v420, %v1745
        %v1901 = vmul.f32 %v421, %v1747
        %v1902 = vmul.f32 %v422, %v1749
        %v1903 = vmul.f32 %v423, %v1751
        %v1904 = vmul.f32 %v424, %v1753
        %v1905 = vmul.f32 %v425, %v1755
        %v1906 = vmul.f32 %v426, %v1757
        %v1907 = vmul.f32 %v427, %v1759
        %v1908 = vmul.f32 %v428, %v1761
        %v1909 = vmul.f32 %v429, %v1763
        %v1910 = vmul.f32 %v430, %v1765
        %v1911 = vmul.f32 %v431, %v1767
        %v1912 = vmul.f32 %v432, %v1769
        %v1913 = vmul.f32 %v433, %v1771
        %v1914 = vmul.f32 %v434, %v1773
        %v1915 = vmul.f32 %v435, %v1775
        %v1916 = vmul.f32 %v436, %v1777
        %v1917 = vmul.f32 %v437, %v1779
        %v1918 = vmul.f32 %v438, %v1781
        %v1919 = vmul.f32 %v439, %v1783
        %v1920 = vmul.f32 %v440, %v1785
        %v1921 = vmul.f32 %v441, %v1787
        %v1922 = vmul.f32 %v442, %v1789
        %v1923 = vmul.f32 %v443, %v1791
        %v1924 = vmul.f32 %v444, %v1793
        %v1925 = vmul.f32 %v445, %v1795
        %v1926 = vmul.f32 %v446, %v1797
        %v1927 = vmul.f32 %v447, %v1799
        %v1928 = vmul.f32 %v448, %v1801
        %v1929 = vmul.f32 %v449, %v1803
        %v1930 = vmul.f32 %v450, %v1805
        %v1931 = vmul.f32 %v451, %v1807
        %v1932 = vmul.f32 %v452, %v1809
        %v1933 = vmul.f32 %v453, %v1811
        %v1934 = vmul.f32 %v454, %v1813
        %v1935 = vmul.f32 %v455, %v1815
        %v1936 = vmul.f32 %v456, %v1817
        %v1937 = vmul.f32 %v457, %v1819
        %v1938 = vmul.f32 %v458, %v1821
        %v1939 = vmul.f32 %v459, %v1823
        %v1940 = vmul.f32 %v460, %v1825
        %v1941 = vmul.f32 %v461, %v1827
        %v1942 = vmul.f32 %v462, %v1829
        %v1943 = vmul.f32 %v463, %v1831
        %v1944 = vmul.f32 %v464, %v1833
        %v1945 = vmul.f32 %v465, %v1835
        %v1946 = vmul.f32 %v466, %v1837
        %v1947 = vmul.f32 %v467, %v1839
        %v1948 = vmul.f32 %v468, %v1841
        %v1949 = vmul.f32 %v469, %v1843
        %v1950 = vmul.f32 %v470, %v1845
        %v1951 = vmul.f32 %v471, %v1847
        %v1952 = vmul.f32 %v472, %v1849
        %v1953 = vmul.f32 %v473, %v1851
        %v1954 = vmul.f32 %v474, %v1853
        %v1955 = vmul.f32 %v475, %v1855
        %v1956 = vmul.f32 %v476, %v1857
        %v1957 = vmul.f32 %v477, %v1859
        %v1958 = vmul.f32 %v478, %v1861
        %v1959 = vmul.f32 %v479, %v1863
        %v1960 = vmul.f32 %v480, %v1865
        %v1961 = vmul.f32 %v481, %v1867
        %v1962 = vmul.f32 %v482, %v1869
        %v1963 = vmul.f32 %v483, %v1871
        %v1964 = vmul.f32 %v484, %v1873
        %v1965 = vmul.f32 %v485, %v1875
        %v1966 = vmul.f32 %v486, %v1877
        %v1967 = vmul.f32 %v487, %v1879
        %v1968 = vmul.f32 %v488, %v1881
        %v1969 = vmul.f32 %v489, %v1883
        %v1970 = vmul.f32 %v490, %v1885
        %v1971 = vmul.f32 %v491, %v1887
        %v1972 = vmul.f32 %v492, %v1889
        %v1973 = vmul.f32 %v493, %v1891
        %v1974 = vmul.f32 %v494, %v1893
        %v1975 = vmul.f32 %v495, %v1895
        %v1976 = vpack.c.bf16 %v1897, %v1896
        %v1977 = vpack.c.bf16 %v1899, %v1898
        %v1978 = vpack.c.bf16 %v1901, %v1900
        %v1979 = vpack.c.bf16 %v1903, %v1902
        %v1980 = vpack.c.bf16 %v1905, %v1904
        %v1981 = vpack.c.bf16 %v1907, %v1906
        %v1982 = vpack.c.bf16 %v1909, %v1908
        %v1983 = vpack.c.bf16 %v1911, %v1910
        %v1984 = vpack.c.bf16 %v1913, %v1912
        %v1985 = vpack.c.bf16 %v1915, %v1914
        %v1986 = vpack.c.bf16 %v1917, %v1916
        %v1987 = vpack.c.bf16 %v1919, %v1918
        %v1988 = vpack.c.bf16 %v1921, %v1920
        %v1989 = vpack.c.bf16 %v1923, %v1922
        %v1990 = vpack.c.bf16 %v1925, %v1924
        %v1991 = vpack.c.bf16 %v1927, %v1926
        %v1992 = vpack.c.bf16 %v1929, %v1928
        %v1993 = vpack.c.bf16 %v1931, %v1930
        %v1994 = vpack.c.bf16 %v1933, %v1932
        %v1995 = vpack.c.bf16 %v1935, %v1934
        %v1996 = vpack.c.bf16 %v1937, %v1936
        %v1997 = vpack.c.bf16 %v1939, %v1938
        %v1998 = vpack.c.bf16 %v1941, %v1940
        %v1999 = vpack.c.bf16 %v1943, %v1942
        %v2000 = vpack.c.bf16 %v1945, %v1944
        %v2001 = vpack.c.bf16 %v1947, %v1946
        %v2002 = vpack.c.bf16 %v1949, %v1948
        %v2003 = vpack.c.bf16 %v1951, %v1950
        %v2004 = vpack.c.bf16 %v1953, %v1952
        %v2005 = vpack.c.bf16 %v1955, %v1954
        %v2006 = vpack.c.bf16 %v1957, %v1956
        %v2007 = vpack.c.bf16 %v1959, %v1958
        %v2008 = vpack.c.bf16 %v1961, %v1960
        %v2009 = vpack.c.bf16 %v1963, %v1962
        %v2010 = vpack.c.bf16 %v1965, %v1964
        %v2011 = vpack.c.bf16 %v1967, %v1966
        %v2012 = vpack.c.bf16 %v1969, %v1968
        %v2013 = vpack.c.bf16 %v1971, %v1970
        %v2014 = vpack.c.bf16 %v1973, %v1972
        %v2015 = vpack.c.bf16 %v1975, %v1974
        %2016 = vrot.lane.b32.xlu0 %v416, 32
        %v2017 = vpop.permute.xlu0 %2016
        %2018 = vrot.lane.b32.xlu0 %v417, 32
        %v2019 = vpop.permute.xlu0 %2018
        %2020 = vrot.lane.b32.xlu0 %v418, 32
        %v2021 = vpop.permute.xlu0 %2020
        %2022 = vrot.lane.b32.xlu0 %v419, 32
        %v2023 = vpop.permute.xlu0 %2022
        %2024 = vrot.lane.b32.xlu0 %v420, 32
        %v2025 = vpop.permute.xlu0 %2024
        %2026 = vrot.lane.b32.xlu0 %v421, 32
        %v2027 = vpop.permute.xlu0 %2026
        %2028 = vrot.lane.b32.xlu0 %v422, 32
        %v2029 = vpop.permute.xlu0 %2028
        %2030 = vrot.lane.b32.xlu0 %v423, 32
        %v2031 = vpop.permute.xlu0 %2030
        %2032 = vrot.lane.b32.xlu0 %v424, 32
        %v2033 = vpop.permute.xlu0 %2032
        %2034 = vrot.lane.b32.xlu0 %v425, 32
        %v2035 = vpop.permute.xlu0 %2034
        %2036 = vrot.lane.b32.xlu0 %v426, 32
        %v2037 = vpop.permute.xlu0 %2036
        %2038 = vrot.lane.b32.xlu0 %v427, 32
        %v2039 = vpop.permute.xlu0 %2038
        %2040 = vrot.lane.b32.xlu0 %v428, 32
        %v2041 = vpop.permute.xlu0 %2040
        %2042 = vrot.lane.b32.xlu0 %v429, 32
        %v2043 = vpop.permute.xlu0 %2042
        %2044 = vrot.lane.b32.xlu0 %v430, 32
        %v2045 = vpop.permute.xlu0 %2044
        %2046 = vrot.lane.b32.xlu0 %v431, 32
        %v2047 = vpop.permute.xlu0 %2046
        %2048 = vrot.lane.b32.xlu0 %v432, 32
        %v2049 = vpop.permute.xlu0 %2048
        %2050 = vrot.lane.b32.xlu0 %v433, 32
        %v2051 = vpop.permute.xlu0 %2050
        %2052 = vrot.lane.b32.xlu0 %v434, 32
        %v2053 = vpop.permute.xlu0 %2052
        %2054 = vrot.lane.b32.xlu0 %v435, 32
        %v2055 = vpop.permute.xlu0 %2054
        %2056 = vrot.lane.b32.xlu0 %v436, 32
        %v2057 = vpop.permute.xlu0 %2056
        %2058 = vrot.lane.b32.xlu0 %v437, 32
        %v2059 = vpop.permute.xlu0 %2058
        %2060 = vrot.lane.b32.xlu0 %v438, 32
        %v2061 = vpop.permute.xlu0 %2060
        %2062 = vrot.lane.b32.xlu0 %v439, 32
        %v2063 = vpop.permute.xlu0 %2062
        %2064 = vrot.lane.b32.xlu0 %v440, 32
        %v2065 = vpop.permute.xlu0 %2064
        %2066 = vrot.lane.b32.xlu0 %v441, 32
        %v2067 = vpop.permute.xlu0 %2066
        %2068 = vrot.lane.b32.xlu0 %v442, 32
        %v2069 = vpop.permute.xlu0 %2068
        %2070 = vrot.lane.b32.xlu0 %v443, 32
        %v2071 = vpop.permute.xlu0 %2070
        %2072 = vrot.lane.b32.xlu0 %v444, 32
        %v2073 = vpop.permute.xlu0 %2072
        %2074 = vrot.lane.b32.xlu0 %v445, 32
        %v2075 = vpop.permute.xlu0 %2074
        %2076 = vrot.lane.b32.xlu0 %v446, 32
        %v2077 = vpop.permute.xlu0 %2076
        %2078 = vrot.lane.b32.xlu0 %v447, 32
        %v2079 = vpop.permute.xlu0 %2078
        %2080 = vrot.lane.b32.xlu0 %v448, 32
        %v2081 = vpop.permute.xlu0 %2080
        %2082 = vrot.lane.b32.xlu0 %v449, 32
        %v2083 = vpop.permute.xlu0 %2082
        %2084 = vrot.lane.b32.xlu0 %v450, 32
        %v2085 = vpop.permute.xlu0 %2084
        %2086 = vrot.lane.b32.xlu0 %v451, 32
        %v2087 = vpop.permute.xlu0 %2086
        %2088 = vrot.lane.b32.xlu0 %v452, 32
        %v2089 = vpop.permute.xlu0 %2088
        %2090 = vrot.lane.b32.xlu0 %v453, 32
        %v2091 = vpop.permute.xlu0 %2090
        %2092 = vrot.lane.b32.xlu0 %v454, 32
        %v2093 = vpop.permute.xlu0 %2092
        %2094 = vrot.lane.b32.xlu0 %v455, 32
        %v2095 = vpop.permute.xlu0 %2094
        %2096 = vrot.lane.b32.xlu0 %v456, 32
        %v2097 = vpop.permute.xlu0 %2096
        %2098 = vrot.lane.b32.xlu0 %v457, 32
        %v2099 = vpop.permute.xlu0 %2098
        %2100 = vrot.lane.b32.xlu0 %v458, 32
        %v2101 = vpop.permute.xlu0 %2100
        %2102 = vrot.lane.b32.xlu0 %v459, 32
        %v2103 = vpop.permute.xlu0 %2102
        %2104 = vrot.lane.b32.xlu0 %v460, 32
        %v2105 = vpop.permute.xlu0 %2104
        %2106 = vrot.lane.b32.xlu0 %v461, 32
        %v2107 = vpop.permute.xlu0 %2106
        %2108 = vrot.lane.b32.xlu0 %v462, 32
        %v2109 = vpop.permute.xlu0 %2108
        %2110 = vrot.lane.b32.xlu0 %v463, 32
        %v2111 = vpop.permute.xlu0 %2110
        %2112 = vrot.lane.b32.xlu0 %v464, 32
        %v2113 = vpop.permute.xlu0 %2112
        %2114 = vrot.lane.b32.xlu0 %v465, 32
        %v2115 = vpop.permute.xlu0 %2114
        %2116 = vrot.lane.b32.xlu0 %v466, 32
        %v2117 = vpop.permute.xlu0 %2116
        %2118 = vrot.lane.b32.xlu0 %v467, 32
        %v2119 = vpop.permute.xlu0 %2118
        %2120 = vrot.lane.b32.xlu0 %v468, 32
        %v2121 = vpop.permute.xlu0 %2120
        %2122 = vrot.lane.b32.xlu0 %v469, 32
        %v2123 = vpop.permute.xlu0 %2122
        %2124 = vrot.lane.b32.xlu0 %v470, 32
        %v2125 = vpop.permute.xlu0 %2124
        %2126 = vrot.lane.b32.xlu0 %v471, 32
        %v2127 = vpop.permute.xlu0 %2126
        %2128 = vrot.lane.b32.xlu0 %v472, 32
        %v2129 = vpop.permute.xlu0 %2128
        %2130 = vrot.lane.b32.xlu0 %v473, 32
        %v2131 = vpop.permute.xlu0 %2130
        %2132 = vrot.lane.b32.xlu0 %v474, 32
        %v2133 = vpop.permute.xlu0 %2132
        %2134 = vrot.lane.b32.xlu0 %v475, 32
        %v2135 = vpop.permute.xlu0 %2134
        %2136 = vrot.lane.b32.xlu0 %v476, 32
        %v2137 = vpop.permute.xlu0 %2136
        %2138 = vrot.lane.b32.xlu0 %v477, 32
        %v2139 = vpop.permute.xlu0 %2138
        %2140 = vrot.lane.b32.xlu0 %v478, 32
        %v2141 = vpop.permute.xlu0 %2140
        %2142 = vrot.lane.b32.xlu0 %v479, 32
        %v2143 = vpop.permute.xlu0 %2142
        %2144 = vrot.lane.b32.xlu0 %v480, 32
        %v2145 = vpop.permute.xlu0 %2144
        %2146 = vrot.lane.b32.xlu0 %v481, 32
        %v2147 = vpop.permute.xlu0 %2146
        %2148 = vrot.lane.b32.xlu0 %v482, 32
        %v2149 = vpop.permute.xlu0 %2148
        %2150 = vrot.lane.b32.xlu0 %v483, 32
        %v2151 = vpop.permute.xlu0 %2150
        %2152 = vrot.lane.b32.xlu0 %v484, 32
        %v2153 = vpop.permute.xlu0 %2152
        %2154 = vrot.lane.b32.xlu0 %v485, 32
        %v2155 = vpop.permute.xlu0 %2154
        %2156 = vrot.lane.b32.xlu0 %v486, 32
        %v2157 = vpop.permute.xlu0 %2156
        %2158 = vrot.lane.b32.xlu0 %v487, 32
        %v2159 = vpop.permute.xlu0 %2158
        %2160 = vrot.lane.b32.xlu0 %v488, 32
        %v2161 = vpop.permute.xlu0 %2160
        %2162 = vrot.lane.b32.xlu0 %v489, 32
        %v2163 = vpop.permute.xlu0 %2162
        %2164 = vrot.lane.b32.xlu0 %v490, 32
        %v2165 = vpop.permute.xlu0 %2164
        %2166 = vrot.lane.b32.xlu0 %v491, 32
        %v2167 = vpop.permute.xlu0 %2166
        %2168 = vrot.lane.b32.xlu0 %v492, 32
        %v2169 = vpop.permute.xlu0 %2168
        %2170 = vrot.lane.b32.xlu0 %v493, 32
        %v2171 = vpop.permute.xlu0 %2170
        %2172 = vrot.lane.b32.xlu0 %v494, 32
        %v2173 = vpop.permute.xlu0 %2172
        %2174 = vrot.lane.b32.xlu0 %v495, 32
        %v2175 = vpop.permute.xlu0 %2174
        %v2176 = vmul.f32 %v416, %v2017
        %v2177 = vmul.f32 %v417, %v2019
        %v2178 = vmul.f32 %v418, %v2021
        %v2179 = vmul.f32 %v419, %v2023
        %v2180 = vmul.f32 %v420, %v2025
        %v2181 = vmul.f32 %v421, %v2027
        %v2182 = vmul.f32 %v422, %v2029
        %v2183 = vmul.f32 %v423, %v2031
        %v2184 = vmul.f32 %v424, %v2033
        %v2185 = vmul.f32 %v425, %v2035
        %v2186 = vmul.f32 %v426, %v2037
        %v2187 = vmul.f32 %v427, %v2039
        %v2188 = vmul.f32 %v428, %v2041
        %v2189 = vmul.f32 %v429, %v2043
        %v2190 = vmul.f32 %v430, %v2045
        %v2191 = vmul.f32 %v431, %v2047
        %v2192 = vmul.f32 %v432, %v2049
        %v2193 = vmul.f32 %v433, %v2051
        %v2194 = vmul.f32 %v434, %v2053
        %v2195 = vmul.f32 %v435, %v2055
        %v2196 = vmul.f32 %v436, %v2057
        %v2197 = vmul.f32 %v437, %v2059
        %v2198 = vmul.f32 %v438, %v2061
        %v2199 = vmul.f32 %v439, %v2063
        %v2200 = vmul.f32 %v440, %v2065
        %v2201 = vmul.f32 %v441, %v2067
        %v2202 = vmul.f32 %v442, %v2069
        %v2203 = vmul.f32 %v443, %v2071
        %v2204 = vmul.f32 %v444, %v2073
        %v2205 = vmul.f32 %v445, %v2075
        %v2206 = vmul.f32 %v446, %v2077
        %v2207 = vmul.f32 %v447, %v2079
        %v2208 = vmul.f32 %v448, %v2081
        %v2209 = vmul.f32 %v449, %v2083
        %v2210 = vmul.f32 %v450, %v2085
        %v2211 = vmul.f32 %v451, %v2087
        %v2212 = vmul.f32 %v452, %v2089
        %v2213 = vmul.f32 %v453, %v2091
        %v2214 = vmul.f32 %v454, %v2093
        %v2215 = vmul.f32 %v455, %v2095
        %v2216 = vmul.f32 %v456, %v2097
        %v2217 = vmul.f32 %v457, %v2099
        %v2218 = vmul.f32 %v458, %v2101
        %v2219 = vmul.f32 %v459, %v2103
        %v2220 = vmul.f32 %v460, %v2105
        %v2221 = vmul.f32 %v461, %v2107
        %v2222 = vmul.f32 %v462, %v2109
        %v2223 = vmul.f32 %v463, %v2111
        %v2224 = vmul.f32 %v464, %v2113
        %v2225 = vmul.f32 %v465, %v2115
        %v2226 = vmul.f32 %v466, %v2117
        %v2227 = vmul.f32 %v467, %v2119
        %v2228 = vmul.f32 %v468, %v2121
        %v2229 = vmul.f32 %v469, %v2123
        %v2230 = vmul.f32 %v470, %v2125
        %v2231 = vmul.f32 %v471, %v2127
        %v2232 = vmul.f32 %v472, %v2129
        %v2233 = vmul.f32 %v473, %v2131
        %v2234 = vmul.f32 %v474, %v2133
        %v2235 = vmul.f32 %v475, %v2135
        %v2236 = vmul.f32 %v476, %v2137
        %v2237 = vmul.f32 %v477, %v2139
        %v2238 = vmul.f32 %v478, %v2141
        %v2239 = vmul.f32 %v479, %v2143
        %v2240 = vmul.f32 %v480, %v2145
        %v2241 = vmul.f32 %v481, %v2147
        %v2242 = vmul.f32 %v482, %v2149
        %v2243 = vmul.f32 %v483, %v2151
        %v2244 = vmul.f32 %v484, %v2153
        %v2245 = vmul.f32 %v485, %v2155
        %v2246 = vmul.f32 %v486, %v2157
        %v2247 = vmul.f32 %v487, %v2159
        %v2248 = vmul.f32 %v488, %v2161
        %v2249 = vmul.f32 %v489, %v2163
        %v2250 = vmul.f32 %v490, %v2165
        %v2251 = vmul.f32 %v491, %v2167
        %v2252 = vmul.f32 %v492, %v2169
        %v2253 = vmul.f32 %v493, %v2171
        %v2254 = vmul.f32 %v494, %v2173
        %v2255 = vmul.f32 %v495, %v2175
        %v2256 = vpack.c.bf16 %v2177, %v2176
        %v2257 = vpack.c.bf16 %v2179, %v2178
        %v2258 = vpack.c.bf16 %v2181, %v2180
        %v2259 = vpack.c.bf16 %v2183, %v2182
        %v2260 = vpack.c.bf16 %v2185, %v2184
        %v2261 = vpack.c.bf16 %v2187, %v2186
        %v2262 = vpack.c.bf16 %v2189, %v2188
        %v2263 = vpack.c.bf16 %v2191, %v2190
        %v2264 = vpack.c.bf16 %v2193, %v2192
        %v2265 = vpack.c.bf16 %v2195, %v2194
        %v2266 = vpack.c.bf16 %v2197, %v2196
        %v2267 = vpack.c.bf16 %v2199, %v2198
        %v2268 = vpack.c.bf16 %v2201, %v2200
        %v2269 = vpack.c.bf16 %v2203, %v2202
        %v2270 = vpack.c.bf16 %v2205, %v2204
        %v2271 = vpack.c.bf16 %v2207, %v2206
        %v2272 = vpack.c.bf16 %v2209, %v2208
        %v2273 = vpack.c.bf16 %v2211, %v2210
        %v2274 = vpack.c.bf16 %v2213, %v2212
        %v2275 = vpack.c.bf16 %v2215, %v2214
        %v2276 = vpack.c.bf16 %v2217, %v2216
        %v2277 = vpack.c.bf16 %v2219, %v2218
        %v2278 = vpack.c.bf16 %v2221, %v2220
        %v2279 = vpack.c.bf16 %v2223, %v2222
        %v2280 = vpack.c.bf16 %v2225, %v2224
        %v2281 = vpack.c.bf16 %v2227, %v2226
        %v2282 = vpack.c.bf16 %v2229, %v2228
        %v2283 = vpack.c.bf16 %v2231, %v2230
        %v2284 = vpack.c.bf16 %v2233, %v2232
        %v2285 = vpack.c.bf16 %v2235, %v2234
        %v2286 = vpack.c.bf16 %v2237, %v2236
        %v2287 = vpack.c.bf16 %v2239, %v2238
        %v2288 = vpack.c.bf16 %v2241, %v2240
        %v2289 = vpack.c.bf16 %v2243, %v2242
        %v2290 = vpack.c.bf16 %v2245, %v2244
        %v2291 = vpack.c.bf16 %v2247, %v2246
        %v2292 = vpack.c.bf16 %v2249, %v2248
        %v2293 = vpack.c.bf16 %v2251, %v2250
        %v2294 = vpack.c.bf16 %v2253, %v2252
        %v2295 = vpack.c.bf16 %v2255, %v2254
        %2296 = vrot.lane.b32.xlu0 %v416, 16
        %v2297 = vpop.permute.xlu0 %2296
        %2298 = vrot.lane.b32.xlu0 %v417, 16
        %v2299 = vpop.permute.xlu0 %2298
        %2300 = vrot.lane.b32.xlu0 %v418, 16
        %v2301 = vpop.permute.xlu0 %2300
        %2302 = vrot.lane.b32.xlu0 %v419, 16
        %v2303 = vpop.permute.xlu0 %2302
        %2304 = vrot.lane.b32.xlu0 %v420, 16
        %v2305 = vpop.permute.xlu0 %2304
        %2306 = vrot.lane.b32.xlu0 %v421, 16
        %v2307 = vpop.permute.xlu0 %2306
        %2308 = vrot.lane.b32.xlu0 %v422, 16
        %v2309 = vpop.permute.xlu0 %2308
        %2310 = vrot.lane.b32.xlu0 %v423, 16
        %v2311 = vpop.permute.xlu0 %2310
        %2312 = vrot.lane.b32.xlu0 %v424, 16
        %v2313 = vpop.permute.xlu0 %2312
        %2314 = vrot.lane.b32.xlu0 %v425, 16
        %v2315 = vpop.permute.xlu0 %2314
        %2316 = vrot.lane.b32.xlu0 %v426, 16
        %v2317 = vpop.permute.xlu0 %2316
        %2318 = vrot.lane.b32.xlu0 %v427, 16
        %v2319 = vpop.permute.xlu0 %2318
        %2320 = vrot.lane.b32.xlu0 %v428, 16
        %v2321 = vpop.permute.xlu0 %2320
        %2322 = vrot.lane.b32.xlu0 %v429, 16
        %v2323 = vpop.permute.xlu0 %2322
        %2324 = vrot.lane.b32.xlu0 %v430, 16
        %v2325 = vpop.permute.xlu0 %2324
        %2326 = vrot.lane.b32.xlu0 %v431, 16
        %v2327 = vpop.permute.xlu0 %2326
        %2328 = vrot.lane.b32.xlu0 %v432, 16
        %v2329 = vpop.permute.xlu0 %2328
        %2330 = vrot.lane.b32.xlu0 %v433, 16
        %v2331 = vpop.permute.xlu0 %2330
        %2332 = vrot.lane.b32.xlu0 %v434, 16
        %v2333 = vpop.permute.xlu0 %2332
        %2334 = vrot.lane.b32.xlu0 %v435, 16
        %v2335 = vpop.permute.xlu0 %2334
        %2336 = vrot.lane.b32.xlu0 %v436, 16
        %v2337 = vpop.permute.xlu0 %2336
        %2338 = vrot.lane.b32.xlu0 %v437, 16
        %v2339 = vpop.permute.xlu0 %2338
        %2340 = vrot.lane.b32.xlu0 %v438, 16
        %v2341 = vpop.permute.xlu0 %2340
        %2342 = vrot.lane.b32.xlu0 %v439, 16
        %v2343 = vpop.permute.xlu0 %2342
        %2344 = vrot.lane.b32.xlu0 %v440, 16
        %v2345 = vpop.permute.xlu0 %2344
        %2346 = vrot.lane.b32.xlu0 %v441, 16
        %v2347 = vpop.permute.xlu0 %2346
        %2348 = vrot.lane.b32.xlu0 %v442, 16
        %v2349 = vpop.permute.xlu0 %2348
        %2350 = vrot.lane.b32.xlu0 %v443, 16
        %v2351 = vpop.permute.xlu0 %2350
        %2352 = vrot.lane.b32.xlu0 %v444, 16
        %v2353 = vpop.permute.xlu0 %2352
        %2354 = vrot.lane.b32.xlu0 %v445, 16
        %v2355 = vpop.permute.xlu0 %2354
        %2356 = vrot.lane.b32.xlu0 %v446, 16
        %v2357 = vpop.permute.xlu0 %2356
        %2358 = vrot.lane.b32.xlu0 %v447, 16
        %v2359 = vpop.permute.xlu0 %2358
        %2360 = vrot.lane.b32.xlu0 %v448, 16
        %v2361 = vpop.permute.xlu0 %2360
        %2362 = vrot.lane.b32.xlu0 %v449, 16
        %v2363 = vpop.permute.xlu0 %2362
        %2364 = vrot.lane.b32.xlu0 %v450, 16
        %v2365 = vpop.permute.xlu0 %2364
        %2366 = vrot.lane.b32.xlu0 %v451, 16
        %v2367 = vpop.permute.xlu0 %2366
        %2368 = vrot.lane.b32.xlu0 %v452, 16
        %v2369 = vpop.permute.xlu0 %2368
        %2370 = vrot.lane.b32.xlu0 %v453, 16
        %v2371 = vpop.permute.xlu0 %2370
        %2372 = vrot.lane.b32.xlu0 %v454, 16
        %v2373 = vpop.permute.xlu0 %2372
        %2374 = vrot.lane.b32.xlu0 %v455, 16
        %v2375 = vpop.permute.xlu0 %2374
        %2376 = vrot.lane.b32.xlu0 %v456, 16
        %v2377 = vpop.permute.xlu0 %2376
        %2378 = vrot.lane.b32.xlu0 %v457, 16
        %v2379 = vpop.permute.xlu0 %2378
        %2380 = vrot.lane.b32.xlu0 %v458, 16
        %v2381 = vpop.permute.xlu0 %2380
        %2382 = vrot.lane.b32.xlu0 %v459, 16
        %v2383 = vpop.permute.xlu0 %2382
        %2384 = vrot.lane.b32.xlu0 %v460, 16
        %v2385 = vpop.permute.xlu0 %2384
        %2386 = vrot.lane.b32.xlu0 %v461, 16
        %v2387 = vpop.permute.xlu0 %2386
        %2388 = vrot.lane.b32.xlu0 %v462, 16
        %v2389 = vpop.permute.xlu0 %2388
        %2390 = vrot.lane.b32.xlu0 %v463, 16
        %v2391 = vpop.permute.xlu0 %2390
        %2392 = vrot.lane.b32.xlu0 %v464, 16
        %v2393 = vpop.permute.xlu0 %2392
        %2394 = vrot.lane.b32.xlu0 %v465, 16
        %v2395 = vpop.permute.xlu0 %2394
        %2396 = vrot.lane.b32.xlu0 %v466, 16
        %v2397 = vpop.permute.xlu0 %2396
        %2398 = vrot.lane.b32.xlu0 %v467, 16
        %v2399 = vpop.permute.xlu0 %2398
        %2400 = vrot.lane.b32.xlu0 %v468, 16
        %v2401 = vpop.permute.xlu0 %2400
        %2402 = vrot.lane.b32.xlu0 %v469, 16
        %v2403 = vpop.permute.xlu0 %2402
        %2404 = vrot.lane.b32.xlu0 %v470, 16
        %v2405 = vpop.permute.xlu0 %2404
        %2406 = vrot.lane.b32.xlu0 %v471, 16
        %v2407 = vpop.permute.xlu0 %2406
        %2408 = vrot.lane.b32.xlu0 %v472, 16
        %v2409 = vpop.permute.xlu0 %2408
        %2410 = vrot.lane.b32.xlu0 %v473, 16
        %v2411 = vpop.permute.xlu0 %2410
        %2412 = vrot.lane.b32.xlu0 %v474, 16
        %v2413 = vpop.permute.xlu0 %2412
        %2414 = vrot.lane.b32.xlu0 %v475, 16
        %v2415 = vpop.permute.xlu0 %2414
        %2416 = vrot.lane.b32.xlu0 %v476, 16
        %v2417 = vpop.permute.xlu0 %2416
        %2418 = vrot.lane.b32.xlu0 %v477, 16
        %v2419 = vpop.permute.xlu0 %2418
        %2420 = vrot.lane.b32.xlu0 %v478, 16
        %v2421 = vpop.permute.xlu0 %2420
        %2422 = vrot.lane.b32.xlu0 %v479, 16
        %v2423 = vpop.permute.xlu0 %2422
        %2424 = vrot.lane.b32.xlu0 %v480, 16
        %v2425 = vpop.permute.xlu0 %2424
        %2426 = vrot.lane.b32.xlu0 %v481, 16
        %v2427 = vpop.permute.xlu0 %2426
        %2428 = vrot.lane.b32.xlu0 %v482, 16
        %v2429 = vpop.permute.xlu0 %2428
        %2430 = vrot.lane.b32.xlu0 %v483, 16
        %v2431 = vpop.permute.xlu0 %2430
        %2432 = vrot.lane.b32.xlu0 %v484, 16
        %v2433 = vpop.permute.xlu0 %2432
        %2434 = vrot.lane.b32.xlu0 %v485, 16
        %v2435 = vpop.permute.xlu0 %2434
        %2436 = vrot.lane.b32.xlu0 %v486, 16
        %v2437 = vpop.permute.xlu0 %2436
        %2438 = vrot.lane.b32.xlu0 %v487, 16
        %v2439 = vpop.permute.xlu0 %2438
        %2440 = vrot.lane.b32.xlu0 %v488, 16
        %v2441 = vpop.permute.xlu0 %2440
        %2442 = vrot.lane.b32.xlu0 %v489, 16
        %v2443 = vpop.permute.xlu0 %2442
        %2444 = vrot.lane.b32.xlu0 %v490, 16
        %v2445 = vpop.permute.xlu0 %2444
        %2446 = vrot.lane.b32.xlu0 %v491, 16
        %v2447 = vpop.permute.xlu0 %2446
        %2448 = vrot.lane.b32.xlu0 %v492, 16
        %v2449 = vpop.permute.xlu0 %2448
        %2450 = vrot.lane.b32.xlu0 %v493, 16
        %v2451 = vpop.permute.xlu0 %2450
        %2452 = vrot.lane.b32.xlu0 %v494, 16
        %v2453 = vpop.permute.xlu0 %2452
        %2454 = vrot.lane.b32.xlu0 %v495, 16
        %v2455 = vpop.permute.xlu0 %2454
        %v2456 = vmul.f32 %v416, %v2297
        %v2457 = vmul.f32 %v417, %v2299
        %v2458 = vmul.f32 %v418, %v2301
        %v2459 = vmul.f32 %v419, %v2303
        %v2460 = vmul.f32 %v420, %v2305
        %v2461 = vmul.f32 %v421, %v2307
        %v2462 = vmul.f32 %v422, %v2309
        %v2463 = vmul.f32 %v423, %v2311
        %v2464 = vmul.f32 %v424, %v2313
        %v2465 = vmul.f32 %v425, %v2315
        %v2466 = vmul.f32 %v426, %v2317
        %v2467 = vmul.f32 %v427, %v2319
        %v2468 = vmul.f32 %v428, %v2321
        %v2469 = vmul.f32 %v429, %v2323
        %v2470 = vmul.f32 %v430, %v2325
        %v2471 = vmul.f32 %v431, %v2327
        %v2472 = vmul.f32 %v432, %v2329
        %v2473 = vmul.f32 %v433, %v2331
        %v2474 = vmul.f32 %v434, %v2333
        %v2475 = vmul.f32 %v435, %v2335
        %v2476 = vmul.f32 %v436, %v2337
        %v2477 = vmul.f32 %v437, %v2339
        %v2478 = vmul.f32 %v438, %v2341
        %v2479 = vmul.f32 %v439, %v2343
        %v2480 = vmul.f32 %v440, %v2345
        %v2481 = vmul.f32 %v441, %v2347
        %v2482 = vmul.f32 %v442, %v2349
        %v2483 = vmul.f32 %v443, %v2351
        %v2484 = vmul.f32 %v444, %v2353
        %v2485 = vmul.f32 %v445, %v2355
        %v2486 = vmul.f32 %v446, %v2357
        %v2487 = vmul.f32 %v447, %v2359
        %v2488 = vmul.f32 %v448, %v2361
        %v2489 = vmul.f32 %v449, %v2363
        %v2490 = vmul.f32 %v450, %v2365
        %v2491 = vmul.f32 %v451, %v2367
        %v2492 = vmul.f32 %v452, %v2369
        %v2493 = vmul.f32 %v453, %v2371
        %v2494 = vmul.f32 %v454, %v2373
        %v2495 = vmul.f32 %v455, %v2375
        %v2496 = vmul.f32 %v456, %v2377
        %v2497 = vmul.f32 %v457, %v2379
        %v2498 = vmul.f32 %v458, %v2381
        %v2499 = vmul.f32 %v459, %v2383
        %v2500 = vmul.f32 %v460, %v2385
        %v2501 = vmul.f32 %v461, %v2387
        %v2502 = vmul.f32 %v462, %v2389
        %v2503 = vmul.f32 %v463, %v2391
        %v2504 = vmul.f32 %v464, %v2393
        %v2505 = vmul.f32 %v465, %v2395
        %v2506 = vmul.f32 %v466, %v2397
        %v2507 = vmul.f32 %v467, %v2399
        %v2508 = vmul.f32 %v468, %v2401
        %v2509 = vmul.f32 %v469, %v2403
        %v2510 = vmul.f32 %v470, %v2405
        %v2511 = vmul.f32 %v471, %v2407
        %v2512 = vmul.f32 %v472, %v2409
        %v2513 = vmul.f32 %v473, %v2411
        %v2514 = vmul.f32 %v474, %v2413
        %v2515 = vmul.f32 %v475, %v2415
        %v2516 = vmul.f32 %v476, %v2417
        %v2517 = vmul.f32 %v477, %v2419
        %v2518 = vmul.f32 %v478, %v2421
        %v2519 = vmul.f32 %v479, %v2423
        %v2520 = vmul.f32 %v480, %v2425
        %v2521 = vmul.f32 %v481, %v2427
        %v2522 = vmul.f32 %v482, %v2429
        %v2523 = vmul.f32 %v483, %v2431
        %v2524 = vmul.f32 %v484, %v2433
        %v2525 = vmul.f32 %v485, %v2435
        %v2526 = vmul.f32 %v486, %v2437
        %v2527 = vmul.f32 %v487, %v2439
        %v2528 = vmul.f32 %v488, %v2441
        %v2529 = vmul.f32 %v489, %v2443
        %v2530 = vmul.f32 %v490, %v2445
        %v2531 = vmul.f32 %v491, %v2447
        %v2532 = vmul.f32 %v492, %v2449
        %v2533 = vmul.f32 %v493, %v2451
        %v2534 = vmul.f32 %v494, %v2453
        %v2535 = vmul.f32 %v495, %v2455
        %v2536 = vpack.c.bf16 %v2457, %v2456
        %v2537 = vpack.c.bf16 %v2459, %v2458
        %v2538 = vpack.c.bf16 %v2461, %v2460
        %v2539 = vpack.c.bf16 %v2463, %v2462
        %v2540 = vpack.c.bf16 %v2465, %v2464
        %v2541 = vpack.c.bf16 %v2467, %v2466
        %v2542 = vpack.c.bf16 %v2469, %v2468
        %v2543 = vpack.c.bf16 %v2471, %v2470
        %v2544 = vpack.c.bf16 %v2473, %v2472
        %v2545 = vpack.c.bf16 %v2475, %v2474
        %v2546 = vpack.c.bf16 %v2477, %v2476
        %v2547 = vpack.c.bf16 %v2479, %v2478
        %v2548 = vpack.c.bf16 %v2481, %v2480
        %v2549 = vpack.c.bf16 %v2483, %v2482
        %v2550 = vpack.c.bf16 %v2485, %v2484
        %v2551 = vpack.c.bf16 %v2487, %v2486
        %v2552 = vpack.c.bf16 %v2489, %v2488
        %v2553 = vpack.c.bf16 %v2491, %v2490
        %v2554 = vpack.c.bf16 %v2493, %v2492
        %v2555 = vpack.c.bf16 %v2495, %v2494
        %v2556 = vpack.c.bf16 %v2497, %v2496
        %v2557 = vpack.c.bf16 %v2499, %v2498
        %v2558 = vpack.c.bf16 %v2501, %v2500
        %v2559 = vpack.c.bf16 %v2503, %v2502
        %v2560 = vpack.c.bf16 %v2505, %v2504
        %v2561 = vpack.c.bf16 %v2507, %v2506
        %v2562 = vpack.c.bf16 %v2509, %v2508
        %v2563 = vpack.c.bf16 %v2511, %v2510
        %v2564 = vpack.c.bf16 %v2513, %v2512
        %v2565 = vpack.c.bf16 %v2515, %v2514
        %v2566 = vpack.c.bf16 %v2517, %v2516
        %v2567 = vpack.c.bf16 %v2519, %v2518
        %v2568 = vpack.c.bf16 %v2521, %v2520
        %v2569 = vpack.c.bf16 %v2523, %v2522
        %v2570 = vpack.c.bf16 %v2525, %v2524
        %v2571 = vpack.c.bf16 %v2527, %v2526
        %v2572 = vpack.c.bf16 %v2529, %v2528
        %v2573 = vpack.c.bf16 %v2531, %v2530
        %v2574 = vpack.c.bf16 %v2533, %v2532
        %v2575 = vpack.c.bf16 %v2535, %v2534
        %v2656 = vunpack.c.l.b16 %v336
        %v2657 = vunpack.c.l.b16 %v337
        %v2658 = vunpack.c.l.b16 %v338
        %v2659 = vunpack.c.l.b16 %v339
        %v2660 = vunpack.c.l.b16 %v340
        %v2661 = vunpack.c.l.b16 %v341
        %v2662 = vunpack.c.l.b16 %v342
        %v2663 = vunpack.c.l.b16 %v343
        %v2664 = vunpack.c.l.b16 %v344
        %v2665 = vunpack.c.l.b16 %v345
        %v2666 = vunpack.c.l.b16 %v346
        %v2667 = vunpack.c.l.b16 %v347
        %v2668 = vunpack.c.l.b16 %v348
        %v2669 = vunpack.c.l.b16 %v349
        %v2670 = vunpack.c.l.b16 %v350
        %v2671 = vunpack.c.l.b16 %v351
        %v2672 = vunpack.c.l.b16 %v352
        %v2673 = vunpack.c.l.b16 %v353
        %v2674 = vunpack.c.l.b16 %v354
        %v2675 = vunpack.c.l.b16 %v355
        %v2676 = vunpack.c.l.b16 %v356
        %v2677 = vunpack.c.l.b16 %v357
        %v2678 = vunpack.c.l.b16 %v358
        %v2679 = vunpack.c.l.b16 %v359
        %v2680 = vunpack.c.l.b16 %v360
        %v2681 = vunpack.c.l.b16 %v361
        %v2682 = vunpack.c.l.b16 %v362
        %v2683 = vunpack.c.l.b16 %v363
        %v2684 = vunpack.c.l.b16 %v364
        %v2685 = vunpack.c.l.b16 %v365
        %v2686 = vunpack.c.l.b16 %v366
        %v2687 = vunpack.c.l.b16 %v367
        %v2688 = vunpack.c.l.b16 %v368
        %v2689 = vunpack.c.l.b16 %v369
        %v2690 = vunpack.c.l.b16 %v370
        %v2691 = vunpack.c.l.b16 %v371
        %v2692 = vunpack.c.l.b16 %v372
        %v2693 = vunpack.c.l.b16 %v373
        %v2694 = vunpack.c.l.b16 %v374
        %v2695 = vunpack.c.l.b16 %v375
        %v2696 = vunpack.c.l.b16 %v376
        %v2697 = vunpack.c.l.b16 %v377
        %v2698 = vunpack.c.l.b16 %v378
        %v2699 = vunpack.c.l.b16 %v379
        %v2700 = vunpack.c.l.b16 %v380
        %v2701 = vunpack.c.l.b16 %v381
        %v2702 = vunpack.c.l.b16 %v382
        %v2703 = vunpack.c.l.b16 %v383
        %v2704 = vunpack.c.l.b16 %v384
        %v2705 = vunpack.c.l.b16 %v385
        %v2706 = vunpack.c.l.b16 %v386
        %v2707 = vunpack.c.l.b16 %v387
        %v2708 = vunpack.c.l.b16 %v388
        %v2709 = vunpack.c.l.b16 %v389
        %v2710 = vunpack.c.l.b16 %v390
        %v2711 = vunpack.c.l.b16 %v391
        %v2712 = vunpack.c.l.b16 %v392
        %v2713 = vunpack.c.l.b16 %v393
        %v2714 = vunpack.c.l.b16 %v394
        %v2715 = vunpack.c.l.b16 %v395
        %v2716 = vunpack.c.l.b16 %v396
        %v2717 = vunpack.c.l.b16 %v397
        %v2718 = vunpack.c.l.b16 %v398
        %v2719 = vunpack.c.l.b16 %v399
        %v2720 = vunpack.c.l.b16 %v400
        %v2721 = vunpack.c.l.b16 %v401
        %v2722 = vunpack.c.l.b16 %v402
        %v2723 = vunpack.c.l.b16 %v403
        %v2724 = vunpack.c.l.b16 %v404
        %v2725 = vunpack.c.l.b16 %v405
        %v2726 = vunpack.c.l.b16 %v406
        %v2727 = vunpack.c.l.b16 %v407
        %v2728 = vunpack.c.l.b16 %v408
        %v2729 = vunpack.c.l.b16 %v409
        %v2730 = vunpack.c.l.b16 %v410
        %v2731 = vunpack.c.l.b16 %v411
        %v2732 = vunpack.c.l.b16 %v412
        %v2733 = vunpack.c.l.b16 %v413
        %v2734 = vunpack.c.l.b16 %v414
        %v2735 = vunpack.c.l.b16 %v415
        %v2736 = vpack.c.b16 %v2657, %v2656
        %v2737 = vpack.c.b16 %v2659, %v2658
        %v2738 = vpack.c.b16 %v2661, %v2660
        %v2739 = vpack.c.b16 %v2663, %v2662
        %v2740 = vpack.c.b16 %v2665, %v2664
        %v2741 = vpack.c.b16 %v2667, %v2666
        %v2742 = vpack.c.b16 %v2669, %v2668
        %v2743 = vpack.c.b16 %v2671, %v2670
        %v2744 = vpack.c.b16 %v2673, %v2672
        %v2745 = vpack.c.b16 %v2675, %v2674
        %v2746 = vpack.c.b16 %v2677, %v2676
        %v2747 = vpack.c.b16 %v2679, %v2678
        %v2748 = vpack.c.b16 %v2681, %v2680
        %v2749 = vpack.c.b16 %v2683, %v2682
        %v2750 = vpack.c.b16 %v2685, %v2684
        %v2751 = vpack.c.b16 %v2687, %v2686
        %v2752 = vpack.c.b16 %v2689, %v2688
        %v2753 = vpack.c.b16 %v2691, %v2690
        %v2754 = vpack.c.b16 %v2693, %v2692
        %v2755 = vpack.c.b16 %v2695, %v2694
        %v2756 = vpack.c.b16 %v2697, %v2696
        %v2757 = vpack.c.b16 %v2699, %v2698
        %v2758 = vpack.c.b16 %v2701, %v2700
        %v2759 = vpack.c.b16 %v2703, %v2702
        %v2760 = vpack.c.b16 %v2705, %v2704
        %v2761 = vpack.c.b16 %v2707, %v2706
        %v2762 = vpack.c.b16 %v2709, %v2708
        %v2763 = vpack.c.b16 %v2711, %v2710
        %v2764 = vpack.c.b16 %v2713, %v2712
        %v2765 = vpack.c.b16 %v2715, %v2714
        %v2766 = vpack.c.b16 %v2717, %v2716
        %v2767 = vpack.c.b16 %v2719, %v2718
        %v2768 = vpack.c.b16 %v2721, %v2720
        %v2769 = vpack.c.b16 %v2723, %v2722
        %v2770 = vpack.c.b16 %v2725, %v2724
        %v2771 = vpack.c.b16 %v2727, %v2726
        %v2772 = vpack.c.b16 %v2729, %v2728
        %v2773 = vpack.c.b16 %v2731, %v2730
        %v2774 = vpack.c.b16 %v2733, %v2732
        %v2775 = vpack.c.b16 %v2735, %v2734
        %v2816 = vld [vmem:[%s1] sm:$0xf]
        %v2817 = vld [vmem:[%s1 + $0x4] sm:$0xf]
        %v2818 = vld [vmem:[%s1 + $0x8] sm:$0xf]
        %v2819 = vld [vmem:[%s1 + $0xc] sm:$0xf]
        %v2820 = vld [vmem:[%s1 + $0x10] sm:$0xf]
        %v2821 = vld [vmem:[%s1 + $0x14] sm:$0xf]
        %v2822 = vld [vmem:[%s1 + $0x18] sm:$0xf]
        %v2823 = vld [vmem:[%s1 + $0x1c] sm:$0xf]
        %v2824 = vld [vmem:[%s1 + $0x20] sm:$0xf]
        %v2825 = vld [vmem:[%s1 + $0x24] sm:$0xf]
        %v2826 = vld [vmem:[%s1 + $0x28] sm:$0xf]
        %v2827 = vld [vmem:[%s1 + $0x2c] sm:$0xf]
        %v2828 = vld [vmem:[%s1 + $0x30] sm:$0xf]
        %v2829 = vld [vmem:[%s1 + $0x34] sm:$0xf]
        %v2830 = vld [vmem:[%s1 + $0x38] sm:$0xf]
        %v2831 = vld [vmem:[%s1 + $0x3c] sm:$0xf]
        %v2832 = vld [vmem:[%s1 + $0x40] sm:$0xf]
        %v2833 = vld [vmem:[%s1 + $0x44] sm:$0xf]
        %v2834 = vld [vmem:[%s1 + $0x48] sm:$0xf]
        %v2835 = vld [vmem:[%s1 + $0x4c] sm:$0xf]
        %v2836 = vld [vmem:[%s1 + $0x50] sm:$0xf]
        %v2837 = vld [vmem:[%s1 + $0x54] sm:$0xf]
        %v2838 = vld [vmem:[%s1 + $0x58] sm:$0xf]
        %v2839 = vld [vmem:[%s1 + $0x5c] sm:$0xf]
        %v2840 = vld [vmem:[%s1 + $0x60] sm:$0xf]
        %v2841 = vld [vmem:[%s1 + $0x64] sm:$0xf]
        %v2842 = vld [vmem:[%s1 + $0x68] sm:$0xf]
        %v2843 = vld [vmem:[%s1 + $0x6c] sm:$0xf]
        %v2844 = vld [vmem:[%s1 + $0x70] sm:$0xf]
        %v2845 = vld [vmem:[%s1 + $0x74] sm:$0xf]
        %v2846 = vld [vmem:[%s1 + $0x78] sm:$0xf]
        %v2847 = vld [vmem:[%s1 + $0x7c] sm:$0xf]
        %v2848 = vld [vmem:[%s1 + $0x80] sm:$0xf]
        %v2849 = vld [vmem:[%s1 + $0x84] sm:$0xf]
        %v2850 = vld [vmem:[%s1 + $0x88] sm:$0xf]
        %v2851 = vld [vmem:[%s1 + $0x8c] sm:$0xf]
        %v2852 = vld [vmem:[%s1 + $0x90] sm:$0xf]
        %v2853 = vld [vmem:[%s1 + $0x94] sm:$0xf]
        %v2854 = vld [vmem:[%s1 + $0x98] sm:$0xf]
        %v2855 = vld [vmem:[%s1 + $0x9c] sm:$0xf]
        %v2856 = vld [vmem:[%s1 + $0xa0] sm:$0xf]
        %v2857 = vld [vmem:[%s1 + $0xa4] sm:$0xf]
        %v2858 = vld [vmem:[%s1 + $0xa8] sm:$0xf]
        %v2859 = vld [vmem:[%s1 + $0xac] sm:$0xf]
        %v2860 = vld [vmem:[%s1 + $0xb0] sm:$0xf]
        %v2861 = vld [vmem:[%s1 + $0xb4] sm:$0xf]
        %v2862 = vld [vmem:[%s1 + $0xb8] sm:$0xf]
        %v2863 = vld [vmem:[%s1 + $0xbc] sm:$0xf]
        %v2864 = vld [vmem:[%s1 + $0xc0] sm:$0xf]
        %v2865 = vld [vmem:[%s1 + $0xc4] sm:$0xf]
        %v2866 = vld [vmem:[%s1 + $0xc8] sm:$0xf]
        %v2867 = vld [vmem:[%s1 + $0xcc] sm:$0xf]
        %v2868 = vld [vmem:[%s1 + $0xd0] sm:$0xf]
        %v2869 = vld [vmem:[%s1 + $0xd4] sm:$0xf]
        %v2870 = vld [vmem:[%s1 + $0xd8] sm:$0xf]
        %v2871 = vld [vmem:[%s1 + $0xdc] sm:$0xf]
        %v2872 = vld [vmem:[%s1 + $0xe0] sm:$0xf]
        %v2873 = vld [vmem:[%s1 + $0xe4] sm:$0xf]
        %v2874 = vld [vmem:[%s1 + $0xe8] sm:$0xf]
        %v2875 = vld [vmem:[%s1 + $0xec] sm:$0xf]
        %v2876 = vld [vmem:[%s1 + $0xf0] sm:$0xf]
        %v2877 = vld [vmem:[%s1 + $0xf4] sm:$0xf]
        %v2878 = vld [vmem:[%s1 + $0xf8] sm:$0xf]
        %v2879 = vld [vmem:[%s1 + $0xfc] sm:$0xf]
        %v2880 = vld [vmem:[%s1 + $0x100] sm:$0xf]
        %v2881 = vld [vmem:[%s1 + $0x104] sm:$0xf]
        %v2882 = vld [vmem:[%s1 + $0x108] sm:$0xf]
        %v2883 = vld [vmem:[%s1 + $0x10c] sm:$0xf]
        %v2884 = vld [vmem:[%s1 + $0x110] sm:$0xf]
        %v2885 = vld [vmem:[%s1 + $0x114] sm:$0xf]
        %v2886 = vld [vmem:[%s1 + $0x118] sm:$0xf]
        %v2887 = vld [vmem:[%s1 + $0x11c] sm:$0xf]
        %v2888 = vld [vmem:[%s1 + $0x120] sm:$0xf]
        %v2889 = vld [vmem:[%s1 + $0x124] sm:$0xf]
        %v2890 = vld [vmem:[%s1 + $0x128] sm:$0xf]
        %v2891 = vld [vmem:[%s1 + $0x12c] sm:$0xf]
        %v2892 = vld [vmem:[%s1 + $0x130] sm:$0xf]
        %v2893 = vld [vmem:[%s1 + $0x134] sm:$0xf]
        %v2894 = vld [vmem:[%s1 + $0x138] sm:$0xf]
        %v2895 = vld [vmem:[%s1 + $0x13c] sm:$0xf]
        %v2896 = vld [vmem:[%s1 + $0x140] sm:$0xf]
        %v2897 = vld [vmem:[%s1 + $0x144] sm:$0xf]
        %v2898 = vld [vmem:[%s1 + $0x148] sm:$0xf]
        %v2899 = vld [vmem:[%s1 + $0x14c] sm:$0xf]
        %v2900 = vld [vmem:[%s1 + $0x150] sm:$0xf]
        %v2901 = vld [vmem:[%s1 + $0x154] sm:$0xf]
        %v2902 = vld [vmem:[%s1 + $0x158] sm:$0xf]
        %v2903 = vld [vmem:[%s1 + $0x15c] sm:$0xf]
        %v2904 = vld [vmem:[%s1 + $0x160] sm:$0xf]
        %v2905 = vld [vmem:[%s1 + $0x164] sm:$0xf]
        %v2906 = vld [vmem:[%s1 + $0x168] sm:$0xf]
        %v2907 = vld [vmem:[%s1 + $0x16c] sm:$0xf]
        %v2908 = vld [vmem:[%s1 + $0x170] sm:$0xf]
        %v2909 = vld [vmem:[%s1 + $0x174] sm:$0xf]
        %v2910 = vld [vmem:[%s1 + $0x178] sm:$0xf]
        %v2911 = vld [vmem:[%s1 + $0x17c] sm:$0xf]
        %v2912 = vld [vmem:[%s1 + $0x180] sm:$0xf]
        %v2913 = vld [vmem:[%s1 + $0x184] sm:$0xf]
        %v2914 = vld [vmem:[%s1 + $0x188] sm:$0xf]
        %v2915 = vld [vmem:[%s1 + $0x18c] sm:$0xf]
        %v2916 = vld [vmem:[%s1 + $0x190] sm:$0xf]
        %v2917 = vld [vmem:[%s1 + $0x194] sm:$0xf]
        %v2918 = vld [vmem:[%s1 + $0x198] sm:$0xf]
        %v2919 = vld [vmem:[%s1 + $0x19c] sm:$0xf]
        %v2920 = vld [vmem:[%s1 + $0x1a0] sm:$0xf]
        %v2921 = vld [vmem:[%s1 + $0x1a4] sm:$0xf]
        %v2922 = vld [vmem:[%s1 + $0x1a8] sm:$0xf]
        %v2923 = vld [vmem:[%s1 + $0x1ac] sm:$0xf]
        %v2924 = vld [vmem:[%s1 + $0x1b0] sm:$0xf]
        %v2925 = vld [vmem:[%s1 + $0x1b4] sm:$0xf]
        %v2926 = vld [vmem:[%s1 + $0x1b8] sm:$0xf]
        %v2927 = vld [vmem:[%s1 + $0x1bc] sm:$0xf]
        %v2928 = vld [vmem:[%s1 + $0x1c0] sm:$0xf]
        %v2929 = vld [vmem:[%s1 + $0x1c4] sm:$0xf]
        %v2930 = vld [vmem:[%s1 + $0x1c8] sm:$0xf]
        %v2931 = vld [vmem:[%s1 + $0x1cc] sm:$0xf]
        %v2932 = vld [vmem:[%s1 + $0x1d0] sm:$0xf]
        %v2933 = vld [vmem:[%s1 + $0x1d4] sm:$0xf]
        %v2934 = vld [vmem:[%s1 + $0x1d8] sm:$0xf]
        %v2935 = vld [vmem:[%s1 + $0x1dc] sm:$0xf]
        %v2936 = vld [vmem:[%s1 + $0x1e0] sm:$0xf]
        %v2937 = vld [vmem:[%s1 + $0x1e4] sm:$0xf]
        %v2938 = vld [vmem:[%s1 + $0x1e8] sm:$0xf]
        %v2939 = vld [vmem:[%s1 + $0x1ec] sm:$0xf]
        %v2940 = vld [vmem:[%s1 + $0x1f0] sm:$0xf]
        %v2941 = vld [vmem:[%s1 + $0x1f4] sm:$0xf]
        %v2942 = vld [vmem:[%s1 + $0x1f8] sm:$0xf]
        %v2943 = vld [vmem:[%s1 + $0x1fc] sm:$0xf]
        %v2944 = vld [vmem:[%s1 + $0x200] sm:$0xf]
        %v2945 = vld [vmem:[%s1 + $0x204] sm:$0xf]
        %v2946 = vld [vmem:[%s1 + $0x208] sm:$0xf]
        %v2947 = vld [vmem:[%s1 + $0x20c] sm:$0xf]
        %v2948 = vld [vmem:[%s1 + $0x210] sm:$0xf]
        %v2949 = vld [vmem:[%s1 + $0x214] sm:$0xf]
        %v2950 = vld [vmem:[%s1 + $0x218] sm:$0xf]
        %v2951 = vld [vmem:[%s1 + $0x21c] sm:$0xf]
        %v2952 = vld [vmem:[%s1 + $0x220] sm:$0xf]
        %v2953 = vld [vmem:[%s1 + $0x224] sm:$0xf]
        %v2954 = vld [vmem:[%s1 + $0x228] sm:$0xf]
        %v2955 = vld [vmem:[%s1 + $0x22c] sm:$0xf]
        %v2956 = vld [vmem:[%s1 + $0x230] sm:$0xf]
        %v2957 = vld [vmem:[%s1 + $0x234] sm:$0xf]
        %v2958 = vld [vmem:[%s1 + $0x238] sm:$0xf]
        %v2959 = vld [vmem:[%s1 + $0x23c] sm:$0xf]
        %v2960 = vld [vmem:[%s2] sm:$0x1]
        %v2962 = vlaneseq
        %v2963 = vshrl.u32 %v2962, 7
        %v2964 = vsub.s32 0, %v2963
        %v2965 = vrot.slane %v2960, %v2964
        %v3111 = vunpack.c.l.b16 %v2816
        %v3112 = vunpack.c.l.b16 %v2817
        %v3113 = vunpack.c.l.b16 %v2818
        %v3114 = vunpack.c.l.b16 %v2819
        %v3115 = vunpack.c.l.b16 %v2820
        %v3116 = vunpack.c.l.b16 %v2821
        %v3117 = vunpack.c.l.b16 %v2822
        %v3118 = vunpack.c.l.b16 %v2823
        %v3119 = vunpack.c.l.b16 %v2824
        %v3120 = vunpack.c.l.b16 %v2825
        %v3121 = vunpack.c.l.b16 %v2826
        %v3122 = vunpack.c.l.b16 %v2827
        %v3123 = vunpack.c.l.b16 %v2828
        %v3124 = vunpack.c.l.b16 %v2829
        %v3125 = vunpack.c.l.b16 %v2830
        %v3126 = vunpack.c.l.b16 %v2831
        %v3127 = vunpack.c.l.b16 %v2832
        %v3128 = vunpack.c.l.b16 %v2833
        %v3129 = vunpack.c.l.b16 %v2834
        %v3130 = vunpack.c.l.b16 %v2835
        %v3131 = vunpack.c.l.b16 %v2836
        %v3132 = vunpack.c.l.b16 %v2837
        %v3133 = vunpack.c.l.b16 %v2838
        %v3134 = vunpack.c.l.b16 %v2839
        %v3135 = vunpack.c.l.b16 %v2840
        %v3136 = vunpack.c.l.b16 %v2841
        %v3137 = vunpack.c.l.b16 %v2842
        %v3138 = vunpack.c.l.b16 %v2843
        %v3139 = vunpack.c.l.b16 %v2844
        %v3140 = vunpack.c.l.b16 %v2845
        %v3141 = vunpack.c.l.b16 %v2846
        %v3142 = vunpack.c.l.b16 %v2847
        %v3143 = vunpack.c.l.b16 %v2848
        %v3144 = vunpack.c.l.b16 %v2849
        %v3145 = vunpack.c.l.b16 %v2850
        %v3146 = vunpack.c.l.b16 %v2851
        %v3147 = vunpack.c.l.b16 %v2852
        %v3148 = vunpack.c.l.b16 %v2853
        %v3149 = vunpack.c.l.b16 %v2854
        %v3150 = vunpack.c.l.b16 %v2855
        %v3151 = vunpack.c.l.b16 %v2856
        %v3152 = vunpack.c.l.b16 %v2857
        %v3153 = vunpack.c.l.b16 %v2858
        %v3154 = vunpack.c.l.b16 %v2859
        %v3155 = vunpack.c.l.b16 %v2860
        %v3156 = vunpack.c.l.b16 %v2861
        %v3157 = vunpack.c.l.b16 %v2862
        %v3158 = vunpack.c.l.b16 %v2863
        %v3159 = vunpack.c.l.b16 %v2864
        %v3160 = vunpack.c.l.b16 %v2865
        %v3161 = vunpack.c.l.b16 %v2866
        %v3162 = vunpack.c.l.b16 %v2867
        %v3163 = vunpack.c.l.b16 %v2868
        %v3164 = vunpack.c.l.b16 %v2869
        %v3165 = vunpack.c.l.b16 %v2870
        %v3166 = vunpack.c.l.b16 %v2871
        %v3167 = vunpack.c.l.b16 %v2872
        %v3168 = vunpack.c.l.b16 %v2873
        %v3169 = vunpack.c.l.b16 %v2874
        %v3170 = vunpack.c.l.b16 %v2875
        %v3171 = vunpack.c.l.b16 %v2876
        %v3172 = vunpack.c.l.b16 %v2877
        %v3173 = vunpack.c.l.b16 %v2878
        %v3174 = vunpack.c.l.b16 %v2879
        %v3175 = vunpack.c.l.b16 %v2880
        %v3176 = vunpack.c.l.b16 %v2881
        %v3177 = vunpack.c.l.b16 %v2882
        %v3178 = vunpack.c.l.b16 %v2883
        %v3179 = vunpack.c.l.b16 %v2884
        %v3180 = vunpack.c.l.b16 %v2885
        %v3181 = vunpack.c.l.b16 %v2886
        %v3182 = vunpack.c.l.b16 %v2887
        %v3183 = vunpack.c.l.b16 %v2888
        %v3184 = vunpack.c.l.b16 %v2889
        %v3185 = vunpack.c.l.b16 %v2890
        %v3186 = vunpack.c.l.b16 %v2891
        %v3187 = vunpack.c.l.b16 %v2892
        %v3188 = vunpack.c.l.b16 %v2893
        %v3189 = vunpack.c.l.b16 %v2894
        %v3190 = vunpack.c.l.b16 %v2895
        %v3191 = vunpack.c.l.b16 %v2896
        %v3192 = vunpack.c.l.b16 %v2897
        %v3193 = vunpack.c.l.b16 %v2898
        %v3194 = vunpack.c.l.b16 %v2899
        %v3195 = vunpack.c.l.b16 %v2900
        %v3196 = vunpack.c.l.b16 %v2901
        %v3197 = vunpack.c.l.b16 %v2902
        %v3198 = vunpack.c.l.b16 %v2903
        %v3199 = vunpack.c.l.b16 %v2904
        %v3200 = vunpack.c.l.b16 %v2905
        %v3201 = vunpack.c.l.b16 %v2906
        %v3202 = vunpack.c.l.b16 %v2907
        %v3203 = vunpack.c.l.b16 %v2908
        %v3204 = vunpack.c.l.b16 %v2909
        %v3205 = vunpack.c.l.b16 %v2910
        %v3206 = vunpack.c.l.b16 %v2911
        %v3207 = vunpack.c.l.b16 %v2912
        %v3208 = vunpack.c.l.b16 %v2913
        %v3209 = vunpack.c.l.b16 %v2914
        %v3210 = vunpack.c.l.b16 %v2915
        %v3211 = vunpack.c.l.b16 %v2916
        %v3212 = vunpack.c.l.b16 %v2917
        %v3213 = vunpack.c.l.b16 %v2918
        %v3214 = vunpack.c.l.b16 %v2919
        %v3215 = vunpack.c.l.b16 %v2920
        %v3216 = vunpack.c.l.b16 %v2921
        %v3217 = vunpack.c.l.b16 %v2922
        %v3218 = vunpack.c.l.b16 %v2923
        %v3219 = vunpack.c.l.b16 %v2924
        %v3220 = vunpack.c.l.b16 %v2925
        %v3221 = vunpack.c.l.b16 %v2926
        %v3222 = vunpack.c.l.b16 %v2927
        %v3223 = vunpack.c.l.b16 %v2928
        %v3224 = vunpack.c.l.b16 %v2929
        %v3225 = vunpack.c.l.b16 %v2930
        %v3226 = vunpack.c.l.b16 %v2931
        %v3227 = vunpack.c.l.b16 %v2932
        %v3228 = vunpack.c.l.b16 %v2933
        %v3229 = vunpack.c.l.b16 %v2934
        %v3230 = vunpack.c.l.b16 %v2935
        %v3231 = vunpack.c.l.b16 %v2936
        %v3232 = vunpack.c.l.b16 %v2937
        %v3233 = vunpack.c.l.b16 %v2938
        %v3234 = vunpack.c.l.b16 %v2939
        %v3235 = vunpack.c.l.b16 %v2940
        %v3236 = vunpack.c.l.b16 %v2941
        %v3237 = vunpack.c.l.b16 %v2942
        %v3238 = vunpack.c.l.b16 %v2943
        %v3239 = vunpack.c.l.b16 %v2944
        %v3240 = vunpack.c.l.b16 %v2945
        %v3241 = vunpack.c.l.b16 %v2946
        %v3242 = vunpack.c.l.b16 %v2947
        %v3243 = vunpack.c.l.b16 %v2948
        %v3244 = vunpack.c.l.b16 %v2949
        %v3245 = vunpack.c.l.b16 %v2950
        %v3246 = vunpack.c.l.b16 %v2951
        %v3247 = vunpack.c.l.b16 %v2952
        %v3248 = vunpack.c.l.b16 %v2953
        %v3249 = vunpack.c.l.b16 %v2954
        %v3250 = vunpack.c.l.b16 %v2955
        %v3251 = vunpack.c.l.b16 %v2956
        %v3252 = vunpack.c.l.b16 %v2957
        %v3253 = vunpack.c.l.b16 %v2958
        %v3254 = vunpack.c.l.b16 %v2959
        %v3255 = vpack.c.b16 %v3112, %v3111
        %v3256 = vpack.c.b16 %v3114, %v3113
        %v3257 = vpack.c.b16 %v3116, %v3115
        %v3258 = vpack.c.b16 %v3118, %v3117
        %v3259 = vpack.c.b16 %v3120, %v3119
        %v3260 = vpack.c.b16 %v3122, %v3121
        %v3261 = vpack.c.b16 %v3124, %v3123
        %v3262 = vpack.c.b16 %v3126, %v3125
        %v3263 = vpack.c.b16 %v3128, %v3127
        %v3264 = vpack.c.b16 %v3130, %v3129
        %v3265 = vpack.c.b16 %v3132, %v3131
        %v3266 = vpack.c.b16 %v3134, %v3133
        %v3267 = vpack.c.b16 %v3136, %v3135
        %v3268 = vpack.c.b16 %v3138, %v3137
        %v3269 = vpack.c.b16 %v3140, %v3139
        %v3270 = vpack.c.b16 %v3142, %v3141
        %v3271 = vpack.c.b16 %v3144, %v3143
        %v3272 = vpack.c.b16 %v3146, %v3145
        %v3273 = vpack.c.b16 %v3148, %v3147
        %v3274 = vpack.c.b16 %v3150, %v3149
        %v3275 = vpack.c.b16 %v3152, %v3151
        %v3276 = vpack.c.b16 %v3154, %v3153
        %v3277 = vpack.c.b16 %v3156, %v3155
        %v3278 = vpack.c.b16 %v3158, %v3157
        %v3279 = vpack.c.b16 %v3160, %v3159
        %v3280 = vpack.c.b16 %v3162, %v3161
        %v3281 = vpack.c.b16 %v3164, %v3163
        %v3282 = vpack.c.b16 %v3166, %v3165
        %v3283 = vpack.c.b16 %v3168, %v3167
        %v3284 = vpack.c.b16 %v3170, %v3169
        %v3285 = vpack.c.b16 %v3172, %v3171
        %v3286 = vpack.c.b16 %v3174, %v3173
        %v3287 = vpack.c.b16 %v3176, %v3175
        %v3288 = vpack.c.b16 %v3178, %v3177
        %v3289 = vpack.c.b16 %v3180, %v3179
        %v3290 = vpack.c.b16 %v3182, %v3181
        %v3291 = vpack.c.b16 %v3184, %v3183
        %v3292 = vpack.c.b16 %v3186, %v3185
        %v3293 = vpack.c.b16 %v3188, %v3187
        %v3294 = vpack.c.b16 %v3190, %v3189
        %v3295 = vpack.c.b16 %v3192, %v3191
        %v3296 = vpack.c.b16 %v3194, %v3193
        %v3297 = vpack.c.b16 %v3196, %v3195
        %v3298 = vpack.c.b16 %v3198, %v3197
        %v3299 = vpack.c.b16 %v3200, %v3199
        %v3300 = vpack.c.b16 %v3202, %v3201
        %v3301 = vpack.c.b16 %v3204, %v3203
        %v3302 = vpack.c.b16 %v3206, %v3205
        %v3303 = vpack.c.b16 %v3208, %v3207
        %v3304 = vpack.c.b16 %v3210, %v3209
        %v3305 = vpack.c.b16 %v3212, %v3211
        %v3306 = vpack.c.b16 %v3214, %v3213
        %v3307 = vpack.c.b16 %v3216, %v3215
        %v3308 = vpack.c.b16 %v3218, %v3217
        %v3309 = vpack.c.b16 %v3220, %v3219
        %v3310 = vpack.c.b16 %v3222, %v3221
        %v3311 = vpack.c.b16 %v3224, %v3223
        %v3312 = vpack.c.b16 %v3226, %v3225
        %v3313 = vpack.c.b16 %v3228, %v3227
        %v3314 = vpack.c.b16 %v3230, %v3229
        %v3315 = vpack.c.b16 %v3232, %v3231
        %v3316 = vpack.c.b16 %v3234, %v3233
        %v3317 = vpack.c.b16 %v3236, %v3235
        %v3318 = vpack.c.b16 %v3238, %v3237
        %v3319 = vpack.c.b16 %v3240, %v3239
        %v3320 = vpack.c.b16 %v3242, %v3241
        %v3321 = vpack.c.b16 %v3244, %v3243
        %v3322 = vpack.c.b16 %v3246, %v3245
        %v3323 = vpack.c.b16 %v3248, %v3247
        %v3324 = vpack.c.b16 %v3250, %v3249
        %v3325 = vpack.c.b16 %v3252, %v3251
        %v3326 = vpack.c.b16 %v3254, %v3253
        %3399 = vmatprep.subr.bf16.mxu0 0
        %3400 = vmatpush1.bf16.msra.mxu0 %v3255
        %3401 = vmatprep.subr.bf16.mxu0 0
        %3402 = vmatpush1.bf16.msra.mxu0 %v3256
        %3403 = vmatprep.subr.bf16.mxu0 0
        %3404 = vmatpush1.bf16.msra.mxu0 %v3257
        %3405 = vmatprep.subr.bf16.mxu0 0
        %3406 = vmatpush1.bf16.msra.mxu0 %v3258
        %3407 = vmatprep.subr.bf16.mxu0 0
        %3408 = vmatpush1.bf16.msra.mxu0 %v3259
        %3409 = vmatprep.subr.bf16.mxu0 0
        %3410 = vmatpush1.bf16.msra.mxu0 %v3260
        %3411 = vmatprep.subr.bf16.mxu0 0
        %3412 = vmatpush1.bf16.msra.mxu0 %v3261
        %3413 = vmatprep.subr.bf16.mxu0 0
        %3414 = vmatpush1.bf16.msra.mxu0 %v3262
        %3415 = vmatprep.subr.bf16.mxu0 0
        %3416 = vmatpush1.bf16.msra.mxu0 %v3263
        %3417 = vmatprep.subr.bf16.mxu0 0
        %3418 = vmatpush1.bf16.msra.mxu0 %v3264
        %3419 = vmatprep.subr.bf16.mxu0 0
        %3420 = vmatpush1.bf16.msra.mxu0 %v3265
        %3421 = vmatprep.subr.bf16.mxu0 0
        %3422 = vmatpush1.bf16.msra.mxu0 %v3266
        %3423 = vmatprep.subr.bf16.mxu0 0
        %3424 = vmatpush1.bf16.msra.mxu0 %v3267
        %3425 = vmatprep.subr.bf16.mxu0 0
        %3426 = vmatpush1.bf16.msra.mxu0 %v3268
        %3427 = vmatprep.subr.bf16.mxu0 0
        %3428 = vmatpush1.bf16.msra.mxu0 %v3269
        %3429 = vmatprep.subr.bf16.mxu0 0
        %3430 = vmatpush1.bf16.msra.mxu0 %v3270
        %3431 = vmatprep.mubr.bf16.mxu0 %v576
        %3432 = vmatmul.mubr.bf16.gmra.mrb[0].mxu0 %v2736
        %v3433 = vpop.f32.mrb[0].mxu0
        %v3434 = vadd.f32 %v2965, %v3433
        %v3435 = vpop.f32.mrb[0].mxu0
        %v3436 = vpop.f32.mrb[0].mxu0
        %v3437 = vadd.f32 %v2965, %v3436
        %v3438 = vpop.f32.mrb[0].mxu0
        %3439 = vmatprep.mubr.bf16.mxu0 %v577
        %3440 = vmatmul.mubr.bf16.gmra.mrb[0].mxu0 %v2737
        %v3441 = vpop.f32.mrb[0].mxu0
        %v3442 = vadd.f32 %v2965, %v3441
        %v3443 = vpop.f32.mrb[0].mxu0
        %v3444 = vpop.f32.mrb[0].mxu0
        %v3445 = vadd.f32 %v2965, %v3444
        %v3446 = vpop.f32.mrb[0].mxu0
        %3447 = vmatprep.mubr.bf16.mxu0 %v578
        %3448 = vmatmul.mubr.bf16.gmra.mrb[0].mxu0 %v2738
        %v3449 = vpop.f32.mrb[0].mxu0
        %v3450 = vadd.f32 %v2965, %v3449
        %v3451 = vpop.f32.mrb[0].mxu0
        %v3452 = vpop.f32.mrb[0].mxu0
        %v3453 = vadd.f32 %v2965, %v3452
        %v3454 = vpop.f32.mrb[0].mxu0
        %3455 = vmatprep.mubr.bf16.mxu0 %v579
        %3456 = vmatmul.mubr.bf16.gmra.mrb[0].mxu0 %v2739
        %v3457 = vpop.f32.mrb[0].mxu0
        %v3458 = vadd.f32 %v2965, %v3457
        %v3459 = vpop.f32.mrb[0].mxu0
        %v3460 = vpop.f32.mrb[0].mxu0
        %v3461 = vadd.f32 %v2965, %v3460
        %v3462 = vpop.f32.mrb[0].mxu0
        %3463 = vmatprep.mubr.bf16.mxu0 %v580
        %3464 = vmatmul.mubr.bf16.gmra.mrb[0].mxu0 %v2740
        %v3465 = vpop.f32.mrb[0].mxu0
        %v3466 = vadd.f32 %v2965, %v3465
        %v3467 = vpop.f32.mrb[0].mxu0
        %v3468 = vpop.f32.mrb[0].mxu0
        %v3469 = vadd.f32 %v2965, %v3468
        %v3470 = vpop.f32.mrb[0].mxu0
        %3471 = vmatprep.mubr.bf16.mxu0 %v581
        %3472 = vmatmul.mubr.bf16.gmra.mrb[0].mxu0 %v2741
        %v3473 = vpop.f32.mrb[0].mxu0
        %v3474 = vadd.f32 %v2965, %v3473
        %v3475 = vpop.f32.mrb[0].mxu0
        %v3476 = vpop.f32.mrb[0].mxu0
        %v3477 = vadd.f32 %v2965, %v3476
        %v3478 = vpop.f32.mrb[0].mxu0
        %3479 = vmatprep.mubr.bf16.mxu0 %v582
        %3480 = vmatmul.mubr.bf16.gmra.mrb[0].mxu0 %v2742
        %v3481 = vpop.f32.mrb[0].mxu0
        %v3482 = vadd.f32 %v2965, %v3481
        %v3483 = vpop.f32.mrb[0].mxu0
        %v3484 = vpop.f32.mrb[0].mxu0
        %v3485 = vadd.f32 %v2965, %v3484
        %v3486 = vpop.f32.mrb[0].mxu0
        %3487 = vmatprep.mubr.bf16.mxu0 %v583
        %3488 = vmatmul.mubr.bf16.gmra.mrb[0].mxu0 %v2743
        %v3489 = vpop.f32.mrb[0].mxu0
        %v3490 = vadd.f32 %v2965, %v3489
        %v3491 = vpop.f32.mrb[0].mxu0
        %v3492 = vpop.f32.mrb[0].mxu0
        %v3493 = vadd.f32 %v2965, %v3492
        %v3494 = vpop.f32.mrb[0].mxu0
        %3495 = vmatprep.mubr.bf16.mxu0 %v584
        %3496 = vmatmul.mubr.bf16.gmra.mrb[0].mxu0 %v2744
        %v3497 = vpop.f32.mrb[0].mxu0
        %v3498 = vadd.f32 %v2965, %v3497
        %v3499 = vpop.f32.mrb[0].mxu0
        %v3500 = vpop.f32.mrb[0].mxu0
        %v3501 = vadd.f32 %v2965, %v3500
        %v3502 = vpop.f32.mrb[0].mxu0
        %3503 = vmatprep.mubr.bf16.mxu0 %v585
        %3504 = vmatmul.mubr.bf16.gmra.mrb[0].mxu0 %v2745
        %v3505 = vpop.f32.mrb[0].mxu0
        %v3506 = vadd.f32 %v2965, %v3505
        %v3507 = vpop.f32.mrb[0].mxu0
        %v3508 = vpop.f32.mrb[0].mxu0
        %v3509 = vadd.f32 %v2965, %v3508
        %v3510 = vpop.f32.mrb[0].mxu0
        %3511 = vmatprep.mubr.bf16.mxu0 %v586
        %3512 = vmatmul.mubr.bf16.gmra.mrb[0].mxu0 %v2746
        %v3513 = vpop.f32.mrb[0].mxu0
        %v3514 = vadd.f32 %v2965, %v3513
        %v3515 = vpop.f32.mrb[0].mxu0
        %v3516 = vpop.f32.mrb[0].mxu0
        %v3517 = vadd.f32 %v2965, %v3516
        %v3518 = vpop.f32.mrb[0].mxu0
        %3519 = vmatprep.mubr.bf16.mxu0 %v587
        %3520 = vmatmul.mubr.bf16.gmra.mrb[0].mxu0 %v2747
        %v3521 = vpop.f32.mrb[0].mxu0
        %v3522 = vadd.f32 %v2965, %v3521
        %v3523 = vpop.f32.mrb[0].mxu0
        %v3524 = vpop.f32.mrb[0].mxu0
        %v3525 = vadd.f32 %v2965, %v3524
        %v3526 = vpop.f32.mrb[0].mxu0
        %3527 = vmatprep.mubr.bf16.mxu0 %v588
        %3528 = vmatmul.mubr.bf16.gmra.mrb[0].mxu0 %v2748
        %v3529 = vpop.f32.mrb[0].mxu0
        %v3530 = vadd.f32 %v2965, %v3529
        %v3531 = vpop.f32.mrb[0].mxu0
        %v3532 = vpop.f32.mrb[0].mxu0
        %v3533 = vadd.f32 %v2965, %v3532
        %v3534 = vpop.f32.mrb[0].mxu0
        %3535 = vmatprep.mubr.bf16.mxu0 %v589
        %3536 = vmatmul.mubr.bf16.gmra.mrb[0].mxu0 %v2749
        %v3537 = vpop.f32.mrb[0].mxu0
        %v3538 = vadd.f32 %v2965, %v3537
        %v3539 = vpop.f32.mrb[0].mxu0
        %v3540 = vpop.f32.mrb[0].mxu0
        %v3541 = vadd.f32 %v2965, %v3540
        %v3542 = vpop.f32.mrb[0].mxu0
        %3543 = vmatprep.mubr.bf16.mxu0 %v590
        %3544 = vmatmul.mubr.bf16.gmra.mrb[0].mxu0 %v2750
        %v3545 = vpop.f32.mrb[0].mxu0
        %v3546 = vadd.f32 %v2965, %v3545
        %v3547 = vpop.f32.mrb[0].mxu0
        %v3548 = vpop.f32.mrb[0].mxu0
        %v3549 = vadd.f32 %v2965, %v3548
        %v3550 = vpop.f32.mrb[0].mxu0
        %3551 = vmatprep.mubr.bf16.mxu0 %v591
        %3552 = vmatmul.mubr.bf16.gmra.mrb[0].mxu0 %v2751
        %v3553 = vpop.f32.mrb[0].mxu0
        %v3554 = vadd.f32 %v2965, %v3553
        %v3555 = vpop.f32.mrb[0].mxu0
        %v3556 = vpop.f32.mrb[0].mxu0
        %v3557 = vadd.f32 %v2965, %v3556
        %v3558 = vpop.f32.mrb[0].mxu0
        %3559 = vmatprep.mubr.bf16.mxu0 %v592
        %3560 = vmatmul.mubr.bf16.gmra.mrb[0].mxu0 %v2752
        %v3561 = vpop.f32.mrb[0].mxu0
        %v3562 = vadd.f32 %v2965, %v3561
        %v3563 = vpop.f32.mrb[0].mxu0
        %v3564 = vpop.f32.mrb[0].mxu0
        %v3565 = vadd.f32 %v2965, %v3564
        %v3566 = vpop.f32.mrb[0].mxu0
        %3567 = vmatprep.mubr.bf16.mxu0 %v593
        %3568 = vmatmul.mubr.bf16.gmra.mrb[0].mxu0 %v2753
        %v3569 = vpop.f32.mrb[0].mxu0
        %v3570 = vadd.f32 %v2965, %v3569
        %v3571 = vpop.f32.mrb[0].mxu0
        %v3572 = vpop.f32.mrb[0].mxu0
        %v3573 = vadd.f32 %v2965, %v3572
        %v3574 = vpop.f32.mrb[0].mxu0
        %3575 = vmatprep.mubr.bf16.mxu0 %v594
        %3576 = vmatmul.mubr.bf16.gmra.mrb[0].mxu0 %v2754
        %v3577 = vpop.f32.mrb[0].mxu0
        %v3578 = vadd.f32 %v2965, %v3577
        %v3579 = vpop.f32.mrb[0].mxu0
        %v3580 = vpop.f32.mrb[0].mxu0
        %v3581 = vadd.f32 %v2965, %v3580
        %v3582 = vpop.f32.mrb[0].mxu0
        %3583 = vmatprep.mubr.bf16.mxu0 %v595
        %3584 = vmatmul.mubr.bf16.gmra.mrb[0].mxu0 %v2755
        %v3585 = vpop.f32.mrb[0].mxu0
        %v3586 = vadd.f32 %v2965, %v3585
        %v3587 = vpop.f32.mrb[0].mxu0
        %v3588 = vpop.f32.mrb[0].mxu0
        %v3589 = vadd.f32 %v2965, %v3588
        %v3590 = vpop.f32.mrb[0].mxu0
        %3591 = vmatprep.mubr.bf16.mxu0 %v596
        %3592 = vmatmul.mubr.bf16.gmra.mrb[0].mxu0 %v2756
        %v3593 = vpop.f32.mrb[0].mxu0
        %v3594 = vadd.f32 %v2965, %v3593
        %v3595 = vpop.f32.mrb[0].mxu0
        %v3596 = vpop.f32.mrb[0].mxu0
        %v3597 = vadd.f32 %v2965, %v3596
        %v3598 = vpop.f32.mrb[0].mxu0
        %3599 = vmatprep.mubr.bf16.mxu0 %v597
        %3600 = vmatmul.mubr.bf16.gmra.mrb[0].mxu0 %v2757
        %v3601 = vpop.f32.mrb[0].mxu0
        %v3602 = vadd.f32 %v2965, %v3601
        %v3603 = vpop.f32.mrb[0].mxu0
        %v3604 = vpop.f32.mrb[0].mxu0
        %v3605 = vadd.f32 %v2965, %v3604
        %v3606 = vpop.f32.mrb[0].mxu0
        %3607 = vmatprep.mubr.bf16.mxu0 %v598
        %3608 = vmatmul.mubr.bf16.gmra.mrb[0].mxu0 %v2758
        %v3609 = vpop.f32.mrb[0].mxu0
        %v3610 = vadd.f32 %v2965, %v3609
        %v3611 = vpop.f32.mrb[0].mxu0
        %v3612 = vpop.f32.mrb[0].mxu0
        %v3613 = vadd.f32 %v2965, %v3612
        %v3614 = vpop.f32.mrb[0].mxu0
        %3615 = vmatprep.mubr.bf16.mxu0 %v599
        %3616 = vmatmul.mubr.bf16.gmra.mrb[0].mxu0 %v2759
        %v3617 = vpop.f32.mrb[0].mxu0
        %v3618 = vadd.f32 %v2965, %v3617
        %v3619 = vpop.f32.mrb[0].mxu0
        %v3620 = vpop.f32.mrb[0].mxu0
        %v3621 = vadd.f32 %v2965, %v3620
        %v3622 = vpop.f32.mrb[0].mxu0
        %3623 = vmatprep.mubr.bf16.mxu0 %v600
        %3624 = vmatmul.mubr.bf16.gmra.mrb[0].mxu0 %v2760
        %v3625 = vpop.f32.mrb[0].mxu0
        %v3626 = vadd.f32 %v2965, %v3625
        %v3627 = vpop.f32.mrb[0].mxu0
        %v3628 = vpop.f32.mrb[0].mxu0
        %v3629 = vadd.f32 %v2965, %v3628
        %v3630 = vpop.f32.mrb[0].mxu0
        %3631 = vmatprep.mubr.bf16.mxu0 %v601
        %3632 = vmatmul.mubr.bf16.gmra.mrb[0].mxu0 %v2761
        %v3633 = vpop.f32.mrb[0].mxu0
        %v3634 = vadd.f32 %v2965, %v3633
        %v3635 = vpop.f32.mrb[0].mxu0
        %v3636 = vpop.f32.mrb[0].mxu0
        %v3637 = vadd.f32 %v2965, %v3636
        %v3638 = vpop.f32.mrb[0].mxu0
        %3639 = vmatprep.mubr.bf16.mxu0 %v602
        %3640 = vmatmul.mubr.bf16.gmra.mrb[0].mxu0 %v2762
        %v3641 = vpop.f32.mrb[0].mxu0
        %v3642 = vadd.f32 %v2965, %v3641
        %v3643 = vpop.f32.mrb[0].mxu0
        %v3644 = vpop.f32.mrb[0].mxu0
        %v3645 = vadd.f32 %v2965, %v3644
        %v3646 = vpop.f32.mrb[0].mxu0
        %3647 = vmatprep.mubr.bf16.mxu0 %v603
        %3648 = vmatmul.mubr.bf16.gmra.mrb[0].mxu0 %v2763
        %v3649 = vpop.f32.mrb[0].mxu0
        %v3650 = vadd.f32 %v2965, %v3649
        %v3651 = vpop.f32.mrb[0].mxu0
        %v3652 = vpop.f32.mrb[0].mxu0
        %v3653 = vadd.f32 %v2965, %v3652
        %v3654 = vpop.f32.mrb[0].mxu0
        %3655 = vmatprep.mubr.bf16.mxu0 %v604
        %3656 = vmatmul.mubr.bf16.gmra.mrb[0].mxu0 %v2764
        %v3657 = vpop.f32.mrb[0].mxu0
        %v3658 = vadd.f32 %v2965, %v3657
        %v3659 = vpop.f32.mrb[0].mxu0
        %v3660 = vpop.f32.mrb[0].mxu0
        %v3661 = vadd.f32 %v2965, %v3660
        %v3662 = vpop.f32.mrb[0].mxu0
        %3663 = vmatprep.mubr.bf16.mxu0 %v605
        %3664 = vmatmul.mubr.bf16.gmra.mrb[0].mxu0 %v2765
        %v3665 = vpop.f32.mrb[0].mxu0
        %v3666 = vadd.f32 %v2965, %v3665
        %v3667 = vpop.f32.mrb[0].mxu0
        %v3668 = vpop.f32.mrb[0].mxu0
        %v3669 = vadd.f32 %v2965, %v3668
        %v3670 = vpop.f32.mrb[0].mxu0
        %3671 = vmatprep.mubr.bf16.mxu0 %v606
        %3672 = vmatmul.mubr.bf16.gmra.mrb[0].mxu0 %v2766
        %v3673 = vpop.f32.mrb[0].mxu0
        %v3674 = vadd.f32 %v2965, %v3673
        %v3675 = vpop.f32.mrb[0].mxu0
        %v3676 = vpop.f32.mrb[0].mxu0
        %v3677 = vadd.f32 %v2965, %v3676
        %v3678 = vpop.f32.mrb[0].mxu0
        %3679 = vmatprep.mubr.bf16.mxu0 %v607
        %3680 = vmatmul.mubr.bf16.gmra.mrb[0].mxu0 %v2767
        %v3681 = vpop.f32.mrb[0].mxu0
        %v3682 = vadd.f32 %v2965, %v3681
        %v3683 = vpop.f32.mrb[0].mxu0
        %v3684 = vpop.f32.mrb[0].mxu0
        %v3685 = vadd.f32 %v2965, %v3684
        %v3686 = vpop.f32.mrb[0].mxu0
        %3687 = vmatprep.mubr.bf16.mxu0 %v608
        %3688 = vmatmul.mubr.bf16.gmra.mrb[0].mxu0 %v2768
        %v3689 = vpop.f32.mrb[0].mxu0
        %v3690 = vadd.f32 %v2965, %v3689
        %v3691 = vpop.f32.mrb[0].mxu0
        %v3692 = vpop.f32.mrb[0].mxu0
        %v3693 = vadd.f32 %v2965, %v3692
        %v3694 = vpop.f32.mrb[0].mxu0
        %3695 = vmatprep.mubr.bf16.mxu0 %v609
        %3696 = vmatmul.mubr.bf16.gmra.mrb[0].mxu0 %v2769
        %v3697 = vpop.f32.mrb[0].mxu0
        %v3698 = vadd.f32 %v2965, %v3697
        %v3699 = vpop.f32.mrb[0].mxu0
        %v3700 = vpop.f32.mrb[0].mxu0
        %v3701 = vadd.f32 %v2965, %v3700
        %v3702 = vpop.f32.mrb[0].mxu0
        %3703 = vmatprep.mubr.bf16.mxu0 %v610
        %3704 = vmatmul.mubr.bf16.gmra.mrb[0].mxu0 %v2770
        %v3705 = vpop.f32.mrb[0].mxu0
        %v3706 = vadd.f32 %v2965, %v3705
        %v3707 = vpop.f32.mrb[0].mxu0
        %v3708 = vpop.f32.mrb[0].mxu0
        %v3709 = vadd.f32 %v2965, %v3708
        %v3710 = vpop.f32.mrb[0].mxu0
        %3711 = vmatprep.mubr.bf16.mxu0 %v611
        %3712 = vmatmul.mubr.bf16.gmra.mrb[0].mxu0 %v2771
        %v3713 = vpop.f32.mrb[0].mxu0
        %v3714 = vadd.f32 %v2965, %v3713
        %v3715 = vpop.f32.mrb[0].mxu0
        %v3716 = vpop.f32.mrb[0].mxu0
        %v3717 = vadd.f32 %v2965, %v3716
        %v3718 = vpop.f32.mrb[0].mxu0
        %3719 = vmatprep.mubr.bf16.mxu0 %v612
        %3720 = vmatmul.mubr.bf16.gmra.mrb[0].mxu0 %v2772
        %v3721 = vpop.f32.mrb[0].mxu0
        %v3722 = vadd.f32 %v2965, %v3721
        %v3723 = vpop.f32.mrb[0].mxu0
        %v3724 = vpop.f32.mrb[0].mxu0
        %v3725 = vadd.f32 %v2965, %v3724
        %v3726 = vpop.f32.mrb[0].mxu0
        %3727 = vmatprep.mubr.bf16.mxu0 %v613
        %3728 = vmatmul.mubr.bf16.gmra.mrb[0].mxu0 %v2773
        %v3729 = vpop.f32.mrb[0].mxu0
        %v3730 = vadd.f32 %v2965, %v3729
        %v3731 = vpop.f32.mrb[0].mxu0
        %v3732 = vpop.f32.mrb[0].mxu0
        %v3733 = vadd.f32 %v2965, %v3732
        %v3734 = vpop.f32.mrb[0].mxu0
        %3735 = vmatprep.mubr.bf16.mxu0 %v614
        %3736 = vmatmul.mubr.bf16.gmra.mrb[0].mxu0 %v2774
        %v3737 = vpop.f32.mrb[0].mxu0
        %v3738 = vadd.f32 %v2965, %v3737
        %v3739 = vpop.f32.mrb[0].mxu0
        %v3740 = vpop.f32.mrb[0].mxu0
        %v3741 = vadd.f32 %v2965, %v3740
        %v3742 = vpop.f32.mrb[0].mxu0
        %3743 = vmatprep.mubr.bf16.mxu0 %v615
        %3744 = vmatmul.mubr.bf16.gmra.mrb[0].mxu0 %v2775
        %v3745 = vpop.f32.mrb[0].mxu0
        %v3746 = vadd.f32 %v2965, %v3745
        %v3747 = vpop.f32.mrb[0].mxu0
        %v3748 = vpop.f32.mrb[0].mxu0
        %v3749 = vadd.f32 %v2965, %v3748
        %v3750 = vpop.f32.mrb[0].mxu0
        %3751 = vdwg.mxu0
        %3752 = vmatprep.subr.bf16.mxu0 0
        %3753 = vmatpush1.bf16.msra.mxu0 %v3271
        %3754 = vmatprep.subr.bf16.mxu0 0
        %3755 = vmatpush1.bf16.msra.mxu0 %v3272
        %3756 = vmatprep.subr.bf16.mxu0 0
        %3757 = vmatpush1.bf16.msra.mxu0 %v3273
        %3758 = vmatprep.subr.bf16.mxu0 0
        %3759 = vmatpush1.bf16.msra.mxu0 %v3274
        %3760 = vmatprep.subr.bf16.mxu0 0
        %3761 = vmatpush1.bf16.msra.mxu0 %v3275
        %3762 = vmatprep.subr.bf16.mxu0 0
        %3763 = vmatpush1.bf16.msra.mxu0 %v3276
        %3764 = vmatprep.subr.bf16.mxu0 0
        %3765 = vmatpush1.bf16.msra.mxu0 %v3277
        %3766 = vmatprep.subr.bf16.mxu0 0
        %3767 = vmatpush1.bf16.msra.mxu0 %v3278
        %3768 = vmatprep.subr.bf16.mxu0 0
        %3769 = vmatpush1.bf16.msra.mxu0 %v3279
        %3770 = vmatprep.subr.bf16.mxu0 0
        %3771 = vmatpush1.bf16.msra.mxu0 %v3280
        %3772 = vmatprep.subr.bf16.mxu0 0
        %3773 = vmatpush1.bf16.msra.mxu0 %v3281
        %3774 = vmatprep.subr.bf16.mxu0 0
        %3775 = vmatpush1.bf16.msra.mxu0 %v3282
        %3776 = vmatprep.subr.bf16.mxu0 0
        %3777 = vmatpush1.bf16.msra.mxu0 %v3283
        %3778 = vmatprep.subr.bf16.mxu0 0
        %3779 = vmatpush1.bf16.msra.mxu0 %v3284
        %3780 = vmatprep.subr.bf16.mxu0 0
        %3781 = vmatpush1.bf16.msra.mxu0 %v3285
        %3782 = vmatprep.subr.bf16.mxu0 0
        %3783 = vmatpush1.bf16.msra.mxu0 %v3286
        %3784 = vmatprep.mubr.bf16.mxu0 %v1136
        %3785 = vmatmul.mubr.bf16.gmra.mrb[0].mxu0 %v856
        %v3786 = vpop.f32.mrb[0].mxu0
        %v3787 = vadd.f32 %v3434, %v3786
        %v3788 = vpop.f32.mrb[0].mxu0
        %v3789 = vpop.f32.mrb[0].mxu0
        %v3790 = vadd.f32 %v3437, %v3789
        %v3791 = vpop.f32.mrb[0].mxu0
        %3792 = vmatprep.mubr.bf16.mxu0 %v1137
        %3793 = vmatmul.mubr.bf16.gmra.mrb[0].mxu0 %v857
        %v3794 = vpop.f32.mrb[0].mxu0
        %v3795 = vadd.f32 %v3442, %v3794
        %v3796 = vpop.f32.mrb[0].mxu0
        %v3797 = vpop.f32.mrb[0].mxu0
        %v3798 = vadd.f32 %v3445, %v3797
        %v3799 = vpop.f32.mrb[0].mxu0
        %3800 = vmatprep.mubr.bf16.mxu0 %v1138
        %3801 = vmatmul.mubr.bf16.gmra.mrb[0].mxu0 %v858
        %v3802 = vpop.f32.mrb[0].mxu0
        %v3803 = vadd.f32 %v3450, %v3802
        %v3804 = vpop.f32.mrb[0].mxu0
        %v3805 = vpop.f32.mrb[0].mxu0
        %v3806 = vadd.f32 %v3453, %v3805
        %v3807 = vpop.f32.mrb[0].mxu0
        %3808 = vmatprep.mubr.bf16.mxu0 %v1139
        %3809 = vmatmul.mubr.bf16.gmra.mrb[0].mxu0 %v859
        %v3810 = vpop.f32.mrb[0].mxu0
        %v3811 = vadd.f32 %v3458, %v3810
        %v3812 = vpop.f32.mrb[0].mxu0
        %v3813 = vpop.f32.mrb[0].mxu0
        %v3814 = vadd.f32 %v3461, %v3813
        %v3815 = vpop.f32.mrb[0].mxu0
        %3816 = vmatprep.mubr.bf16.mxu0 %v1140
        %3817 = vmatmul.mubr.bf16.gmra.mrb[0].mxu0 %v860
        %v3818 = vpop.f32.mrb[0].mxu0
        %v3819 = vadd.f32 %v3466, %v3818
        %v3820 = vpop.f32.mrb[0].mxu0
        %v3821 = vpop.f32.mrb[0].mxu0
        %v3822 = vadd.f32 %v3469, %v3821
        %v3823 = vpop.f32.mrb[0].mxu0
        %3824 = vmatprep.mubr.bf16.mxu0 %v1141
        %3825 = vmatmul.mubr.bf16.gmra.mrb[0].mxu0 %v861
        %v3826 = vpop.f32.mrb[0].mxu0
        %v3827 = vadd.f32 %v3474, %v3826
        %v3828 = vpop.f32.mrb[0].mxu0
        %v3829 = vpop.f32.mrb[0].mxu0
        %v3830 = vadd.f32 %v3477, %v3829
        %v3831 = vpop.f32.mrb[0].mxu0
        %3832 = vmatprep.mubr.bf16.mxu0 %v1142
        %3833 = vmatmul.mubr.bf16.gmra.mrb[0].mxu0 %v862
        %v3834 = vpop.f32.mrb[0].mxu0
        %v3835 = vadd.f32 %v3482, %v3834
        %v3836 = vpop.f32.mrb[0].mxu0
        %v3837 = vpop.f32.mrb[0].mxu0
        %v3838 = vadd.f32 %v3485, %v3837
        %v3839 = vpop.f32.mrb[0].mxu0
        %3840 = vmatprep.mubr.bf16.mxu0 %v1143
        %3841 = vmatmul.mubr.bf16.gmra.mrb[0].mxu0 %v863
        %v3842 = vpop.f32.mrb[0].mxu0
        %v3843 = vadd.f32 %v3490, %v3842
        %v3844 = vpop.f32.mrb[0].mxu0
        %v3845 = vpop.f32.mrb[0].mxu0
        %v3846 = vadd.f32 %v3493, %v3845
        %v3847 = vpop.f32.mrb[0].mxu0
        %3848 = vmatprep.mubr.bf16.mxu0 %v1144
        %3849 = vmatmul.mubr.bf16.gmra.mrb[0].mxu0 %v864
        %v3850 = vpop.f32.mrb[0].mxu0
        %v3851 = vadd.f32 %v3498, %v3850
        %v3852 = vpop.f32.mrb[0].mxu0
        %v3853 = vpop.f32.mrb[0].mxu0
        %v3854 = vadd.f32 %v3501, %v3853
        %v3855 = vpop.f32.mrb[0].mxu0
        %3856 = vmatprep.mubr.bf16.mxu0 %v1145
        %3857 = vmatmul.mubr.bf16.gmra.mrb[0].mxu0 %v865
        %v3858 = vpop.f32.mrb[0].mxu0
        %v3859 = vadd.f32 %v3506, %v3858
        %v3860 = vpop.f32.mrb[0].mxu0
        %v3861 = vpop.f32.mrb[0].mxu0
        %v3862 = vadd.f32 %v3509, %v3861
        %v3863 = vpop.f32.mrb[0].mxu0
        %3864 = vmatprep.mubr.bf16.mxu0 %v1146
        %3865 = vmatmul.mubr.bf16.gmra.mrb[0].mxu0 %v866
        %v3866 = vpop.f32.mrb[0].mxu0
        %v3867 = vadd.f32 %v3514, %v3866
        %v3868 = vpop.f32.mrb[0].mxu0
        %v3869 = vpop.f32.mrb[0].mxu0
        %v3870 = vadd.f32 %v3517, %v3869
        %v3871 = vpop.f32.mrb[0].mxu0
        %3872 = vmatprep.mubr.bf16.mxu0 %v1147
        %3873 = vmatmul.mubr.bf16.gmra.mrb[0].mxu0 %v867
        %v3874 = vpop.f32.mrb[0].mxu0
        %v3875 = vadd.f32 %v3522, %v3874
        %v3876 = vpop.f32.mrb[0].mxu0
        %v3877 = vpop.f32.mrb[0].mxu0
        %v3878 = vadd.f32 %v3525, %v3877
        %v3879 = vpop.f32.mrb[0].mxu0
        %3880 = vmatprep.mubr.bf16.mxu0 %v1148
        %3881 = vmatmul.mubr.bf16.gmra.mrb[0].mxu0 %v868
        %v3882 = vpop.f32.mrb[0].mxu0
        %v3883 = vadd.f32 %v3530, %v3882
        %v3884 = vpop.f32.mrb[0].mxu0
        %v3885 = vpop.f32.mrb[0].mxu0
        %v3886 = vadd.f32 %v3533, %v3885
        %v3887 = vpop.f32.mrb[0].mxu0
        %3888 = vmatprep.mubr.bf16.mxu0 %v1149
        %3889 = vmatmul.mubr.bf16.gmra.mrb[0].mxu0 %v869
        %v3890 = vpop.f32.mrb[0].mxu0
        %v3891 = vadd.f32 %v3538, %v3890
        %v3892 = vpop.f32.mrb[0].mxu0
        %v3893 = vpop.f32.mrb[0].mxu0
        %v3894 = vadd.f32 %v3541, %v3893
        %v3895 = vpop.f32.mrb[0].mxu0
        %3896 = vmatprep.mubr.bf16.mxu0 %v1150
        %3897 = vmatmul.mubr.bf16.gmra.mrb[0].mxu0 %v870
        %v3898 = vpop.f32.mrb[0].mxu0
        %v3899 = vadd.f32 %v3546, %v3898
        %v3900 = vpop.f32.mrb[0].mxu0
        %v3901 = vpop.f32.mrb[0].mxu0
        %v3902 = vadd.f32 %v3549, %v3901
        %v3903 = vpop.f32.mrb[0].mxu0
        %3904 = vmatprep.mubr.bf16.mxu0 %v1151
        %3905 = vmatmul.mubr.bf16.gmra.mrb[0].mxu0 %v871
        %v3906 = vpop.f32.mrb[0].mxu0
        %v3907 = vadd.f32 %v3554, %v3906
        %v3908 = vpop.f32.mrb[0].mxu0
        %v3909 = vpop.f32.mrb[0].mxu0
        %v3910 = vadd.f32 %v3557, %v3909
        %v3911 = vpop.f32.mrb[0].mxu0
        %3912 = vmatprep.mubr.bf16.mxu0 %v1152
        %3913 = vmatmul.mubr.bf16.gmra.mrb[0].mxu0 %v872
        %v3914 = vpop.f32.mrb[0].mxu0
        %v3915 = vadd.f32 %v3562, %v3914
        %v3916 = vpop.f32.mrb[0].mxu0
        %v3917 = vpop.f32.mrb[0].mxu0
        %v3918 = vadd.f32 %v3565, %v3917
        %v3919 = vpop.f32.mrb[0].mxu0
        %3920 = vmatprep.mubr.bf16.mxu0 %v1153
        %3921 = vmatmul.mubr.bf16.gmra.mrb[0].mxu0 %v873
        %v3922 = vpop.f32.mrb[0].mxu0
        %v3923 = vadd.f32 %v3570, %v3922
        %v3924 = vpop.f32.mrb[0].mxu0
        %v3925 = vpop.f32.mrb[0].mxu0
        %v3926 = vadd.f32 %v3573, %v3925
        %v3927 = vpop.f32.mrb[0].mxu0
        %3928 = vmatprep.mubr.bf16.mxu0 %v1154
        %3929 = vmatmul.mubr.bf16.gmra.mrb[0].mxu0 %v874
        %v3930 = vpop.f32.mrb[0].mxu0
        %v3931 = vadd.f32 %v3578, %v3930
        %v3932 = vpop.f32.mrb[0].mxu0
        %v3933 = vpop.f32.mrb[0].mxu0
        %v3934 = vadd.f32 %v3581, %v3933
        %v3935 = vpop.f32.mrb[0].mxu0
        %3936 = vmatprep.mubr.bf16.mxu0 %v1155
        %3937 = vmatmul.mubr.bf16.gmra.mrb[0].mxu0 %v875
        %v3938 = vpop.f32.mrb[0].mxu0
        %v3939 = vadd.f32 %v3586, %v3938
        %v3940 = vpop.f32.mrb[0].mxu0
        %v3941 = vpop.f32.mrb[0].mxu0
        %v3942 = vadd.f32 %v3589, %v3941
        %v3943 = vpop.f32.mrb[0].mxu0
        %3944 = vmatprep.mubr.bf16.mxu0 %v1156
        %3945 = vmatmul.mubr.bf16.gmra.mrb[0].mxu0 %v876
        %v3946 = vpop.f32.mrb[0].mxu0
        %v3947 = vadd.f32 %v3594, %v3946
        %v3948 = vpop.f32.mrb[0].mxu0
        %v3949 = vpop.f32.mrb[0].mxu0
        %v3950 = vadd.f32 %v3597, %v3949
        %v3951 = vpop.f32.mrb[0].mxu0
        %3952 = vmatprep.mubr.bf16.mxu0 %v1157
        %3953 = vmatmul.mubr.bf16.gmra.mrb[0].mxu0 %v877
        %v3954 = vpop.f32.mrb[0].mxu0
        %v3955 = vadd.f32 %v3602, %v3954
        %v3956 = vpop.f32.mrb[0].mxu0
        %v3957 = vpop.f32.mrb[0].mxu0
        %v3958 = vadd.f32 %v3605, %v3957
        %v3959 = vpop.f32.mrb[0].mxu0
        %3960 = vmatprep.mubr.bf16.mxu0 %v1158
        %3961 = vmatmul.mubr.bf16.gmra.mrb[0].mxu0 %v878
        %v3962 = vpop.f32.mrb[0].mxu0
        %v3963 = vadd.f32 %v3610, %v3962
        %v3964 = vpop.f32.mrb[0].mxu0
        %v3965 = vpop.f32.mrb[0].mxu0
        %v3966 = vadd.f32 %v3613, %v3965
        %v3967 = vpop.f32.mrb[0].mxu0
        %3968 = vmatprep.mubr.bf16.mxu0 %v1159
        %3969 = vmatmul.mubr.bf16.gmra.mrb[0].mxu0 %v879
        %v3970 = vpop.f32.mrb[0].mxu0
        %v3971 = vadd.f32 %v3618, %v3970
        %v3972 = vpop.f32.mrb[0].mxu0
        %v3973 = vpop.f32.mrb[0].mxu0
        %v3974 = vadd.f32 %v3621, %v3973
        %v3975 = vpop.f32.mrb[0].mxu0
        %3976 = vmatprep.mubr.bf16.mxu0 %v1160
        %3977 = vmatmul.mubr.bf16.gmra.mrb[0].mxu0 %v880
        %v3978 = vpop.f32.mrb[0].mxu0
        %v3979 = vadd.f32 %v3626, %v3978
        %v3980 = vpop.f32.mrb[0].mxu0
        %v3981 = vpop.f32.mrb[0].mxu0
        %v3982 = vadd.f32 %v3629, %v3981
        %v3983 = vpop.f32.mrb[0].mxu0
        %3984 = vmatprep.mubr.bf16.mxu0 %v1161
        %3985 = vmatmul.mubr.bf16.gmra.mrb[0].mxu0 %v881
        %v3986 = vpop.f32.mrb[0].mxu0
        %v3987 = vadd.f32 %v3634, %v3986
        %v3988 = vpop.f32.mrb[0].mxu0
        %v3989 = vpop.f32.mrb[0].mxu0
        %v3990 = vadd.f32 %v3637, %v3989
        %v3991 = vpop.f32.mrb[0].mxu0
        %3992 = vmatprep.mubr.bf16.mxu0 %v1162
        %3993 = vmatmul.mubr.bf16.gmra.mrb[0].mxu0 %v882
        %v3994 = vpop.f32.mrb[0].mxu0
        %v3995 = vadd.f32 %v3642, %v3994
        %v3996 = vpop.f32.mrb[0].mxu0
        %v3997 = vpop.f32.mrb[0].mxu0
        %v3998 = vadd.f32 %v3645, %v3997
        %v3999 = vpop.f32.mrb[0].mxu0
        %4000 = vmatprep.mubr.bf16.mxu0 %v1163
        %4001 = vmatmul.mubr.bf16.gmra.mrb[0].mxu0 %v883
        %v4002 = vpop.f32.mrb[0].mxu0
        %v4003 = vadd.f32 %v3650, %v4002
        %v4004 = vpop.f32.mrb[0].mxu0
        %v4005 = vpop.f32.mrb[0].mxu0
        %v4006 = vadd.f32 %v3653, %v4005
        %v4007 = vpop.f32.mrb[0].mxu0
        %4008 = vmatprep.mubr.bf16.mxu0 %v1164
        %4009 = vmatmul.mubr.bf16.gmra.mrb[0].mxu0 %v884
        %v4010 = vpop.f32.mrb[0].mxu0
        %v4011 = vadd.f32 %v3658, %v4010
        %v4012 = vpop.f32.mrb[0].mxu0
        %v4013 = vpop.f32.mrb[0].mxu0
        %v4014 = vadd.f32 %v3661, %v4013
        %v4015 = vpop.f32.mrb[0].mxu0
        %4016 = vmatprep.mubr.bf16.mxu0 %v1165
        %4017 = vmatmul.mubr.bf16.gmra.mrb[0].mxu0 %v885
        %v4018 = vpop.f32.mrb[0].mxu0
        %v4019 = vadd.f32 %v3666, %v4018
        %v4020 = vpop.f32.mrb[0].mxu0
        %v4021 = vpop.f32.mrb[0].mxu0
        %v4022 = vadd.f32 %v3669, %v4021
        %v4023 = vpop.f32.mrb[0].mxu0
        %4024 = vmatprep.mubr.bf16.mxu0 %v1166
        %4025 = vmatmul.mubr.bf16.gmra.mrb[0].mxu0 %v886
        %v4026 = vpop.f32.mrb[0].mxu0
        %v4027 = vadd.f32 %v3674, %v4026
        %v4028 = vpop.f32.mrb[0].mxu0
        %v4029 = vpop.f32.mrb[0].mxu0
        %v4030 = vadd.f32 %v3677, %v4029
        %v4031 = vpop.f32.mrb[0].mxu0
        %4032 = vmatprep.mubr.bf16.mxu0 %v1167
        %4033 = vmatmul.mubr.bf16.gmra.mrb[0].mxu0 %v887
        %v4034 = vpop.f32.mrb[0].mxu0
        %v4035 = vadd.f32 %v3682, %v4034
        %v4036 = vpop.f32.mrb[0].mxu0
        %v4037 = vpop.f32.mrb[0].mxu0
        %v4038 = vadd.f32 %v3685, %v4037
        %v4039 = vpop.f32.mrb[0].mxu0
        %4040 = vmatprep.mubr.bf16.mxu0 %v1168
        %4041 = vmatmul.mubr.bf16.gmra.mrb[0].mxu0 %v888
        %v4042 = vpop.f32.mrb[0].mxu0
        %v4043 = vadd.f32 %v3690, %v4042
        %v4044 = vpop.f32.mrb[0].mxu0
        %v4045 = vpop.f32.mrb[0].mxu0
        %v4046 = vadd.f32 %v3693, %v4045
        %v4047 = vpop.f32.mrb[0].mxu0
        %4048 = vmatprep.mubr.bf16.mxu0 %v1169
        %4049 = vmatmul.mubr.bf16.gmra.mrb[0].mxu0 %v889
        %v4050 = vpop.f32.mrb[0].mxu0
        %v4051 = vadd.f32 %v3698, %v4050
        %v4052 = vpop.f32.mrb[0].mxu0
        %v4053 = vpop.f32.mrb[0].mxu0
        %v4054 = vadd.f32 %v3701, %v4053
        %v4055 = vpop.f32.mrb[0].mxu0
        %4056 = vmatprep.mubr.bf16.mxu0 %v1170
        %4057 = vmatmul.mubr.bf16.gmra.mrb[0].mxu0 %v890
        %v4058 = vpop.f32.mrb[0].mxu0
        %v4059 = vadd.f32 %v3706, %v4058
        %v4060 = vpop.f32.mrb[0].mxu0
        %v4061 = vpop.f32.mrb[0].mxu0
        %v4062 = vadd.f32 %v3709, %v4061
        %v4063 = vpop.f32.mrb[0].mxu0
        %4064 = vmatprep.mubr.bf16.mxu0 %v1171
        %4065 = vmatmul.mubr.bf16.gmra.mrb[0].mxu0 %v891
        %v4066 = vpop.f32.mrb[0].mxu0
        %v4067 = vadd.f32 %v3714, %v4066
        %v4068 = vpop.f32.mrb[0].mxu0
        %v4069 = vpop.f32.mrb[0].mxu0
        %v4070 = vadd.f32 %v3717, %v4069
        %v4071 = vpop.f32.mrb[0].mxu0
        %4072 = vmatprep.mubr.bf16.mxu0 %v1172
        %4073 = vmatmul.mubr.bf16.gmra.mrb[0].mxu0 %v892
        %v4074 = vpop.f32.mrb[0].mxu0
        %v4075 = vadd.f32 %v3722, %v4074
        %v4076 = vpop.f32.mrb[0].mxu0
        %v4077 = vpop.f32.mrb[0].mxu0
        %v4078 = vadd.f32 %v3725, %v4077
        %v4079 = vpop.f32.mrb[0].mxu0
        %4080 = vmatprep.mubr.bf16.mxu0 %v1173
        %4081 = vmatmul.mubr.bf16.gmra.mrb[0].mxu0 %v893
        %v4082 = vpop.f32.mrb[0].mxu0
        %v4083 = vadd.f32 %v3730, %v4082
        %v4084 = vpop.f32.mrb[0].mxu0
        %v4085 = vpop.f32.mrb[0].mxu0
        %v4086 = vadd.f32 %v3733, %v4085
        %v4087 = vpop.f32.mrb[0].mxu0
        %4088 = vmatprep.mubr.bf16.mxu0 %v1174
        %4089 = vmatmul.mubr.bf16.gmra.mrb[0].mxu0 %v894
        %v4090 = vpop.f32.mrb[0].mxu0
        %v4091 = vadd.f32 %v3738, %v4090
        %v4092 = vpop.f32.mrb[0].mxu0
        %v4093 = vpop.f32.mrb[0].mxu0
        %v4094 = vadd.f32 %v3741, %v4093
        %v4095 = vpop.f32.mrb[0].mxu0
        %4096 = vmatprep.mubr.bf16.mxu0 %v1175
        %4097 = vmatmul.mubr.bf16.gmra.mrb[0].mxu0 %v895
        %v4098 = vpop.f32.mrb[0].mxu0
        %v4099 = vadd.f32 %v3746, %v4098
        %v4100 = vpop.f32.mrb[0].mxu0
        %v4101 = vpop.f32.mrb[0].mxu0
        %v4102 = vadd.f32 %v3749, %v4101
        %v4103 = vpop.f32.mrb[0].mxu0
        %4104 = vdwg.mxu0
        %4105 = vmatprep.subr.bf16.mxu0 0
        %4106 = vmatpush1.bf16.msra.mxu0 %v3287
        %4107 = vmatprep.subr.bf16.mxu0 0
        %4108 = vmatpush1.bf16.msra.mxu0 %v3288
        %4109 = vmatprep.subr.bf16.mxu0 0
        %4110 = vmatpush1.bf16.msra.mxu0 %v3289
        %4111 = vmatprep.subr.bf16.mxu0 0
        %4112 = vmatpush1.bf16.msra.mxu0 %v3290
        %4113 = vmatprep.subr.bf16.mxu0 0
        %4114 = vmatpush1.bf16.msra.mxu0 %v3291
        %4115 = vmatprep.subr.bf16.mxu0 0
        %4116 = vmatpush1.bf16.msra.mxu0 %v3292
        %4117 = vmatprep.subr.bf16.mxu0 0
        %4118 = vmatpush1.bf16.msra.mxu0 %v3293
        %4119 = vmatprep.subr.bf16.mxu0 0
        %4120 = vmatpush1.bf16.msra.mxu0 %v3294
        %4121 = vmatprep.subr.bf16.mxu0 0
        %4122 = vmatpush1.bf16.msra.mxu0 %v3295
        %4123 = vmatprep.subr.bf16.mxu0 0
        %4124 = vmatpush1.bf16.msra.mxu0 %v3296
        %4125 = vmatprep.subr.bf16.mxu0 0
        %4126 = vmatpush1.bf16.msra.mxu0 %v3297
        %4127 = vmatprep.subr.bf16.mxu0 0
        %4128 = vmatpush1.bf16.msra.mxu0 %v3298
        %4129 = vmatprep.subr.bf16.mxu0 0
        %4130 = vmatpush1.bf16.msra.mxu0 %v3299
        %4131 = vmatprep.subr.bf16.mxu0 0
        %4132 = vmatpush1.bf16.msra.mxu0 %v3300
        %4133 = vmatprep.subr.bf16.mxu0 0
        %4134 = vmatpush1.bf16.msra.mxu0 %v3301
        %4135 = vmatprep.subr.bf16.mxu0 0
        %4136 = vmatpush1.bf16.msra.mxu0 %v3302
        %4137 = vmatprep.mubr.bf16.mxu0 %v1696
        %4138 = vmatmul.mubr.bf16.gmra.mrb[0].mxu0 %v1416
        %v4139 = vpop.f32.mrb[0].mxu0
        %v4140 = vadd.f32 %v3787, %v4139
        %v4141 = vpop.f32.mrb[0].mxu0
        %v4142 = vpop.f32.mrb[0].mxu0
        %v4143 = vadd.f32 %v3790, %v4142
        %v4144 = vpop.f32.mrb[0].mxu0
        %4145 = vmatprep.mubr.bf16.mxu0 %v1697
        %4146 = vmatmul.mubr.bf16.gmra.mrb[0].mxu0 %v1417
        %v4147 = vpop.f32.mrb[0].mxu0
        %v4148 = vadd.f32 %v3795, %v4147
        %v4149 = vpop.f32.mrb[0].mxu0
        %v4150 = vpop.f32.mrb[0].mxu0
        %v4151 = vadd.f32 %v3798, %v4150
        %v4152 = vpop.f32.mrb[0].mxu0
        %4153 = vmatprep.mubr.bf16.mxu0 %v1698
        %4154 = vmatmul.mubr.bf16.gmra.mrb[0].mxu0 %v1418
        %v4155 = vpop.f32.mrb[0].mxu0
        %v4156 = vadd.f32 %v3803, %v4155
        %v4157 = vpop.f32.mrb[0].mxu0
        %v4158 = vpop.f32.mrb[0].mxu0
        %v4159 = vadd.f32 %v3806, %v4158
        %v4160 = vpop.f32.mrb[0].mxu0
        %4161 = vmatprep.mubr.bf16.mxu0 %v1699
        %4162 = vmatmul.mubr.bf16.gmra.mrb[0].mxu0 %v1419
        %v4163 = vpop.f32.mrb[0].mxu0
        %v4164 = vadd.f32 %v3811, %v4163
        %v4165 = vpop.f32.mrb[0].mxu0
        %v4166 = vpop.f32.mrb[0].mxu0
        %v4167 = vadd.f32 %v3814, %v4166
        %v4168 = vpop.f32.mrb[0].mxu0
        %4169 = vmatprep.mubr.bf16.mxu0 %v1700
        %4170 = vmatmul.mubr.bf16.gmra.mrb[0].mxu0 %v1420
        %v4171 = vpop.f32.mrb[0].mxu0
        %v4172 = vadd.f32 %v3819, %v4171
        %v4173 = vpop.f32.mrb[0].mxu0
        %v4174 = vpop.f32.mrb[0].mxu0
        %v4175 = vadd.f32 %v3822, %v4174
        %v4176 = vpop.f32.mrb[0].mxu0
        %4177 = vmatprep.mubr.bf16.mxu0 %v1701
        %4178 = vmatmul.mubr.bf16.gmra.mrb[0].mxu0 %v1421
        %v4179 = vpop.f32.mrb[0].mxu0
        %v4180 = vadd.f32 %v3827, %v4179
        %v4181 = vpop.f32.mrb[0].mxu0
        %v4182 = vpop.f32.mrb[0].mxu0
        %v4183 = vadd.f32 %v3830, %v4182
        %v4184 = vpop.f32.mrb[0].mxu0
        %4185 = vmatprep.mubr.bf16.mxu0 %v1702
        %4186 = vmatmul.mubr.bf16.gmra.mrb[0].mxu0 %v1422
        %v4187 = vpop.f32.mrb[0].mxu0
        %v4188 = vadd.f32 %v3835, %v4187
        %v4189 = vpop.f32.mrb[0].mxu0
        %v4190 = vpop.f32.mrb[0].mxu0
        %v4191 = vadd.f32 %v3838, %v4190
        %v4192 = vpop.f32.mrb[0].mxu0
        %4193 = vmatprep.mubr.bf16.mxu0 %v1703
        %4194 = vmatmul.mubr.bf16.gmra.mrb[0].mxu0 %v1423
        %v4195 = vpop.f32.mrb[0].mxu0
        %v4196 = vadd.f32 %v3843, %v4195
        %v4197 = vpop.f32.mrb[0].mxu0
        %v4198 = vpop.f32.mrb[0].mxu0
        %v4199 = vadd.f32 %v3846, %v4198
        %v4200 = vpop.f32.mrb[0].mxu0
        %4201 = vmatprep.mubr.bf16.mxu0 %v1704
        %4202 = vmatmul.mubr.bf16.gmra.mrb[0].mxu0 %v1424
        %v4203 = vpop.f32.mrb[0].mxu0
        %v4204 = vadd.f32 %v3851, %v4203
        %v4205 = vpop.f32.mrb[0].mxu0
        %v4206 = vpop.f32.mrb[0].mxu0
        %v4207 = vadd.f32 %v3854, %v4206
        %v4208 = vpop.f32.mrb[0].mxu0
        %4209 = vmatprep.mubr.bf16.mxu0 %v1705
        %4210 = vmatmul.mubr.bf16.gmra.mrb[0].mxu0 %v1425
        %v4211 = vpop.f32.mrb[0].mxu0
        %v4212 = vadd.f32 %v3859, %v4211
        %v4213 = vpop.f32.mrb[0].mxu0
        %v4214 = vpop.f32.mrb[0].mxu0
        %v4215 = vadd.f32 %v3862, %v4214
        %v4216 = vpop.f32.mrb[0].mxu0
        %4217 = vmatprep.mubr.bf16.mxu0 %v1706
        %4218 = vmatmul.mubr.bf16.gmra.mrb[0].mxu0 %v1426
        %v4219 = vpop.f32.mrb[0].mxu0
        %v4220 = vadd.f32 %v3867, %v4219
        %v4221 = vpop.f32.mrb[0].mxu0
        %v4222 = vpop.f32.mrb[0].mxu0
        %v4223 = vadd.f32 %v3870, %v4222
        %v4224 = vpop.f32.mrb[0].mxu0
        %4225 = vmatprep.mubr.bf16.mxu0 %v1707
        %4226 = vmatmul.mubr.bf16.gmra.mrb[0].mxu0 %v1427
        %v4227 = vpop.f32.mrb[0].mxu0
        %v4228 = vadd.f32 %v3875, %v4227
        %v4229 = vpop.f32.mrb[0].mxu0
        %v4230 = vpop.f32.mrb[0].mxu0
        %v4231 = vadd.f32 %v3878, %v4230
        %v4232 = vpop.f32.mrb[0].mxu0
        %4233 = vmatprep.mubr.bf16.mxu0 %v1708
        %4234 = vmatmul.mubr.bf16.gmra.mrb[0].mxu0 %v1428
        %v4235 = vpop.f32.mrb[0].mxu0
        %v4236 = vadd.f32 %v3883, %v4235
        %v4237 = vpop.f32.mrb[0].mxu0
        %v4238 = vpop.f32.mrb[0].mxu0
        %v4239 = vadd.f32 %v3886, %v4238
        %v4240 = vpop.f32.mrb[0].mxu0
        %4241 = vmatprep.mubr.bf16.mxu0 %v1709
        %4242 = vmatmul.mubr.bf16.gmra.mrb[0].mxu0 %v1429
        %v4243 = vpop.f32.mrb[0].mxu0
        %v4244 = vadd.f32 %v3891, %v4243
        %v4245 = vpop.f32.mrb[0].mxu0
        %v4246 = vpop.f32.mrb[0].mxu0
        %v4247 = vadd.f32 %v3894, %v4246
        %v4248 = vpop.f32.mrb[0].mxu0
        %4249 = vmatprep.mubr.bf16.mxu0 %v1710
        %4250 = vmatmul.mubr.bf16.gmra.mrb[0].mxu0 %v1430
        %v4251 = vpop.f32.mrb[0].mxu0
        %v4252 = vadd.f32 %v3899, %v4251
        %v4253 = vpop.f32.mrb[0].mxu0
        %v4254 = vpop.f32.mrb[0].mxu0
        %v4255 = vadd.f32 %v3902, %v4254
        %v4256 = vpop.f32.mrb[0].mxu0
        %4257 = vmatprep.mubr.bf16.mxu0 %v1711
        %4258 = vmatmul.mubr.bf16.gmra.mrb[0].mxu0 %v1431
        %v4259 = vpop.f32.mrb[0].mxu0
        %v4260 = vadd.f32 %v3907, %v4259
        %v4261 = vpop.f32.mrb[0].mxu0
        %v4262 = vpop.f32.mrb[0].mxu0
        %v4263 = vadd.f32 %v3910, %v4262
        %v4264 = vpop.f32.mrb[0].mxu0
        %4265 = vmatprep.mubr.bf16.mxu0 %v1712
        %4266 = vmatmul.mubr.bf16.gmra.mrb[0].mxu0 %v1432
        %v4267 = vpop.f32.mrb[0].mxu0
        %v4268 = vadd.f32 %v3915, %v4267
        %v4269 = vpop.f32.mrb[0].mxu0
        %v4270 = vpop.f32.mrb[0].mxu0
        %v4271 = vadd.f32 %v3918, %v4270
        %v4272 = vpop.f32.mrb[0].mxu0
        %4273 = vmatprep.mubr.bf16.mxu0 %v1713
        %4274 = vmatmul.mubr.bf16.gmra.mrb[0].mxu0 %v1433
        %v4275 = vpop.f32.mrb[0].mxu0
        %v4276 = vadd.f32 %v3923, %v4275
        %v4277 = vpop.f32.mrb[0].mxu0
        %v4278 = vpop.f32.mrb[0].mxu0
        %v4279 = vadd.f32 %v3926, %v4278
        %v4280 = vpop.f32.mrb[0].mxu0
        %4281 = vmatprep.mubr.bf16.mxu0 %v1714
        %4282 = vmatmul.mubr.bf16.gmra.mrb[0].mxu0 %v1434
        %v4283 = vpop.f32.mrb[0].mxu0
        %v4284 = vadd.f32 %v3931, %v4283
        %v4285 = vpop.f32.mrb[0].mxu0
        %v4286 = vpop.f32.mrb[0].mxu0
        %v4287 = vadd.f32 %v3934, %v4286
        %v4288 = vpop.f32.mrb[0].mxu0
        %4289 = vmatprep.mubr.bf16.mxu0 %v1715
        %4290 = vmatmul.mubr.bf16.gmra.mrb[0].mxu0 %v1435
        %v4291 = vpop.f32.mrb[0].mxu0
        %v4292 = vadd.f32 %v3939, %v4291
        %v4293 = vpop.f32.mrb[0].mxu0
        %v4294 = vpop.f32.mrb[0].mxu0
        %v4295 = vadd.f32 %v3942, %v4294
        %v4296 = vpop.f32.mrb[0].mxu0
        %4297 = vmatprep.mubr.bf16.mxu0 %v1716
        %4298 = vmatmul.mubr.bf16.gmra.mrb[0].mxu0 %v1436
        %v4299 = vpop.f32.mrb[0].mxu0
        %v4300 = vadd.f32 %v3947, %v4299
        %v4301 = vpop.f32.mrb[0].mxu0
        %v4302 = vpop.f32.mrb[0].mxu0
        %v4303 = vadd.f32 %v3950, %v4302
        %v4304 = vpop.f32.mrb[0].mxu0
        %4305 = vmatprep.mubr.bf16.mxu0 %v1717
        %4306 = vmatmul.mubr.bf16.gmra.mrb[0].mxu0 %v1437
        %v4307 = vpop.f32.mrb[0].mxu0
        %v4308 = vadd.f32 %v3955, %v4307
        %v4309 = vpop.f32.mrb[0].mxu0
        %v4310 = vpop.f32.mrb[0].mxu0
        %v4311 = vadd.f32 %v3958, %v4310
        %v4312 = vpop.f32.mrb[0].mxu0
        %4313 = vmatprep.mubr.bf16.mxu0 %v1718
        %4314 = vmatmul.mubr.bf16.gmra.mrb[0].mxu0 %v1438
        %v4315 = vpop.f32.mrb[0].mxu0
        %v4316 = vadd.f32 %v3963, %v4315
        %v4317 = vpop.f32.mrb[0].mxu0
        %v4318 = vpop.f32.mrb[0].mxu0
        %v4319 = vadd.f32 %v3966, %v4318
        %v4320 = vpop.f32.mrb[0].mxu0
        %4321 = vmatprep.mubr.bf16.mxu0 %v1719
        %4322 = vmatmul.mubr.bf16.gmra.mrb[0].mxu0 %v1439
        %v4323 = vpop.f32.mrb[0].mxu0
        %v4324 = vadd.f32 %v3971, %v4323
        %v4325 = vpop.f32.mrb[0].mxu0
        %v4326 = vpop.f32.mrb[0].mxu0
        %v4327 = vadd.f32 %v3974, %v4326
        %v4328 = vpop.f32.mrb[0].mxu0
        %4329 = vmatprep.mubr.bf16.mxu0 %v1720
        %4330 = vmatmul.mubr.bf16.gmra.mrb[0].mxu0 %v1440
        %v4331 = vpop.f32.mrb[0].mxu0
        %v4332 = vadd.f32 %v3979, %v4331
        %v4333 = vpop.f32.mrb[0].mxu0
        %v4334 = vpop.f32.mrb[0].mxu0
        %v4335 = vadd.f32 %v3982, %v4334
        %v4336 = vpop.f32.mrb[0].mxu0
        %4337 = vmatprep.mubr.bf16.mxu0 %v1721
        %4338 = vmatmul.mubr.bf16.gmra.mrb[0].mxu0 %v1441
        %v4339 = vpop.f32.mrb[0].mxu0
        %v4340 = vadd.f32 %v3987, %v4339
        %v4341 = vpop.f32.mrb[0].mxu0
        %v4342 = vpop.f32.mrb[0].mxu0
        %v4343 = vadd.f32 %v3990, %v4342
        %v4344 = vpop.f32.mrb[0].mxu0
        %4345 = vmatprep.mubr.bf16.mxu0 %v1722
        %4346 = vmatmul.mubr.bf16.gmra.mrb[0].mxu0 %v1442
        %v4347 = vpop.f32.mrb[0].mxu0
        %v4348 = vadd.f32 %v3995, %v4347
        %v4349 = vpop.f32.mrb[0].mxu0
        %v4350 = vpop.f32.mrb[0].mxu0
        %v4351 = vadd.f32 %v3998, %v4350
        %v4352 = vpop.f32.mrb[0].mxu0
        %4353 = vmatprep.mubr.bf16.mxu0 %v1723
        %4354 = vmatmul.mubr.bf16.gmra.mrb[0].mxu0 %v1443
        %v4355 = vpop.f32.mrb[0].mxu0
        %v4356 = vadd.f32 %v4003, %v4355
        %v4357 = vpop.f32.mrb[0].mxu0
        %v4358 = vpop.f32.mrb[0].mxu0
        %v4359 = vadd.f32 %v4006, %v4358
        %v4360 = vpop.f32.mrb[0].mxu0
        %4361 = vmatprep.mubr.bf16.mxu0 %v1724
        %4362 = vmatmul.mubr.bf16.gmra.mrb[0].mxu0 %v1444
        %v4363 = vpop.f32.mrb[0].mxu0
        %v4364 = vadd.f32 %v4011, %v4363
        %v4365 = vpop.f32.mrb[0].mxu0
        %v4366 = vpop.f32.mrb[0].mxu0
        %v4367 = vadd.f32 %v4014, %v4366
        %v4368 = vpop.f32.mrb[0].mxu0
        %4369 = vmatprep.mubr.bf16.mxu0 %v1725
        %4370 = vmatmul.mubr.bf16.gmra.mrb[0].mxu0 %v1445
        %v4371 = vpop.f32.mrb[0].mxu0
        %v4372 = vadd.f32 %v4019, %v4371
        %v4373 = vpop.f32.mrb[0].mxu0
        %v4374 = vpop.f32.mrb[0].mxu0
        %v4375 = vadd.f32 %v4022, %v4374
        %v4376 = vpop.f32.mrb[0].mxu0
        %4377 = vmatprep.mubr.bf16.mxu0 %v1726
        %4378 = vmatmul.mubr.bf16.gmra.mrb[0].mxu0 %v1446
        %v4379 = vpop.f32.mrb[0].mxu0
        %v4380 = vadd.f32 %v4027, %v4379
        %v4381 = vpop.f32.mrb[0].mxu0
        %v4382 = vpop.f32.mrb[0].mxu0
        %v4383 = vadd.f32 %v4030, %v4382
        %v4384 = vpop.f32.mrb[0].mxu0
        %4385 = vmatprep.mubr.bf16.mxu0 %v1727
        %4386 = vmatmul.mubr.bf16.gmra.mrb[0].mxu0 %v1447
        %v4387 = vpop.f32.mrb[0].mxu0
        %v4388 = vadd.f32 %v4035, %v4387
        %v4389 = vpop.f32.mrb[0].mxu0
        %v4390 = vpop.f32.mrb[0].mxu0
        %v4391 = vadd.f32 %v4038, %v4390
        %v4392 = vpop.f32.mrb[0].mxu0
        %4393 = vmatprep.mubr.bf16.mxu0 %v1728
        %4394 = vmatmul.mubr.bf16.gmra.mrb[0].mxu0 %v1448
        %v4395 = vpop.f32.mrb[0].mxu0
        %v4396 = vadd.f32 %v4043, %v4395
        %v4397 = vpop.f32.mrb[0].mxu0
        %v4398 = vpop.f32.mrb[0].mxu0
        %v4399 = vadd.f32 %v4046, %v4398
        %v4400 = vpop.f32.mrb[0].mxu0
        %4401 = vmatprep.mubr.bf16.mxu0 %v1729
        %4402 = vmatmul.mubr.bf16.gmra.mrb[0].mxu0 %v1449
        %v4403 = vpop.f32.mrb[0].mxu0
        %v4404 = vadd.f32 %v4051, %v4403
        %v4405 = vpop.f32.mrb[0].mxu0
        %v4406 = vpop.f32.mrb[0].mxu0
        %v4407 = vadd.f32 %v4054, %v4406
        %v4408 = vpop.f32.mrb[0].mxu0
        %4409 = vmatprep.mubr.bf16.mxu0 %v1730
        %4410 = vmatmul.mubr.bf16.gmra.mrb[0].mxu0 %v1450
        %v4411 = vpop.f32.mrb[0].mxu0
        %v4412 = vadd.f32 %v4059, %v4411
        %v4413 = vpop.f32.mrb[0].mxu0
        %v4414 = vpop.f32.mrb[0].mxu0
        %v4415 = vadd.f32 %v4062, %v4414
        %v4416 = vpop.f32.mrb[0].mxu0
        %4417 = vmatprep.mubr.bf16.mxu0 %v1731
        %4418 = vmatmul.mubr.bf16.gmra.mrb[0].mxu0 %v1451
        %v4419 = vpop.f32.mrb[0].mxu0
        %v4420 = vadd.f32 %v4067, %v4419
        %v4421 = vpop.f32.mrb[0].mxu0
        %v4422 = vpop.f32.mrb[0].mxu0
        %v4423 = vadd.f32 %v4070, %v4422
        %v4424 = vpop.f32.mrb[0].mxu0
        %4425 = vmatprep.mubr.bf16.mxu0 %v1732
        %4426 = vmatmul.mubr.bf16.gmra.mrb[0].mxu0 %v1452
        %v4427 = vpop.f32.mrb[0].mxu0
        %v4428 = vadd.f32 %v4075, %v4427
        %v4429 = vpop.f32.mrb[0].mxu0
        %v4430 = vpop.f32.mrb[0].mxu0
        %v4431 = vadd.f32 %v4078, %v4430
        %v4432 = vpop.f32.mrb[0].mxu0
        %4433 = vmatprep.mubr.bf16.mxu0 %v1733
        %4434 = vmatmul.mubr.bf16.gmra.mrb[0].mxu0 %v1453
        %v4435 = vpop.f32.mrb[0].mxu0
        %v4436 = vadd.f32 %v4083, %v4435
        %v4437 = vpop.f32.mrb[0].mxu0
        %v4438 = vpop.f32.mrb[0].mxu0
        %v4439 = vadd.f32 %v4086, %v4438
        %v4440 = vpop.f32.mrb[0].mxu0
        %4441 = vmatprep.mubr.bf16.mxu0 %v1734
        %4442 = vmatmul.mubr.bf16.gmra.mrb[0].mxu0 %v1454
        %v4443 = vpop.f32.mrb[0].mxu0
        %v4444 = vadd.f32 %v4091, %v4443
        %v4445 = vpop.f32.mrb[0].mxu0
        %v4446 = vpop.f32.mrb[0].mxu0
        %v4447 = vadd.f32 %v4094, %v4446
        %v4448 = vpop.f32.mrb[0].mxu0
        %4449 = vmatprep.mubr.bf16.mxu0 %v1735
        %4450 = vmatmul.mubr.bf16.gmra.mrb[0].mxu0 %v1455
        %v4451 = vpop.f32.mrb[0].mxu0
        %v4452 = vadd.f32 %v4099, %v4451
        %v4453 = vpop.f32.mrb[0].mxu0
        %v4454 = vpop.f32.mrb[0].mxu0
        %v4455 = vadd.f32 %v4102, %v4454
        %v4456 = vpop.f32.mrb[0].mxu0
        %4457 = vdwg.mxu0
        %4458 = vmatprep.subr.bf16.mxu0 0
        %4459 = vmatpush1.bf16.msra.mxu0 %v3303
        %4460 = vmatprep.subr.bf16.mxu0 0
        %4461 = vmatpush1.bf16.msra.mxu0 %v3304
        %4462 = vmatprep.subr.bf16.mxu0 0
        %4463 = vmatpush1.bf16.msra.mxu0 %v3305
        %4464 = vmatprep.subr.bf16.mxu0 0
        %4465 = vmatpush1.bf16.msra.mxu0 %v3306
        %4466 = vmatprep.subr.bf16.mxu0 0
        %4467 = vmatpush1.bf16.msra.mxu0 %v3307
        %4468 = vmatprep.subr.bf16.mxu0 0
        %4469 = vmatpush1.bf16.msra.mxu0 %v3308
        %4470 = vmatprep.subr.bf16.mxu0 0
        %4471 = vmatpush1.bf16.msra.mxu0 %v3309
        %4472 = vmatprep.subr.bf16.mxu0 0
        %4473 = vmatpush1.bf16.msra.mxu0 %v3310
        %4474 = vmatprep.subr.bf16.mxu0 0
        %4475 = vmatpush1.bf16.msra.mxu0 %v3311
        %4476 = vmatprep.subr.bf16.mxu0 0
        %4477 = vmatpush1.bf16.msra.mxu0 %v3312
        %4478 = vmatprep.subr.bf16.mxu0 0
        %4479 = vmatpush1.bf16.msra.mxu0 %v3313
        %4480 = vmatprep.subr.bf16.mxu0 0
        %4481 = vmatpush1.bf16.msra.mxu0 %v3314
        %4482 = vmatprep.subr.bf16.mxu0 0
        %4483 = vmatpush1.bf16.msra.mxu0 %v3315
        %4484 = vmatprep.subr.bf16.mxu0 0
        %4485 = vmatpush1.bf16.msra.mxu0 %v3316
        %4486 = vmatprep.subr.bf16.mxu0 0
        %4487 = vmatpush1.bf16.msra.mxu0 %v3317
        %4488 = vmatprep.subr.bf16.mxu0 0
        %4489 = vmatpush1.bf16.msra.mxu0 %v3318
        %4490 = vmatprep.mubr.bf16.mxu0 %v2256
        %4491 = vmatmul.mubr.bf16.gmra.mrb[0].mxu0 %v1976
        %v4492 = vpop.f32.mrb[0].mxu0
        %v4493 = vadd.f32 %v4140, %v4492
        %v4494 = vpop.f32.mrb[0].mxu0
        %v4495 = vpop.f32.mrb[0].mxu0
        %v4496 = vadd.f32 %v4143, %v4495
        %v4497 = vpop.f32.mrb[0].mxu0
        %4498 = vmatprep.mubr.bf16.mxu0 %v2257
        %4499 = vmatmul.mubr.bf16.gmra.mrb[0].mxu0 %v1977
        %v4500 = vpop.f32.mrb[0].mxu0
        %v4501 = vadd.f32 %v4148, %v4500
        %v4502 = vpop.f32.mrb[0].mxu0
        %v4503 = vpop.f32.mrb[0].mxu0
        %v4504 = vadd.f32 %v4151, %v4503
        %v4505 = vpop.f32.mrb[0].mxu0
        %4506 = vmatprep.mubr.bf16.mxu0 %v2258
        %4507 = vmatmul.mubr.bf16.gmra.mrb[0].mxu0 %v1978
        %v4508 = vpop.f32.mrb[0].mxu0
        %v4509 = vadd.f32 %v4156, %v4508
        %v4510 = vpop.f32.mrb[0].mxu0
        %v4511 = vpop.f32.mrb[0].mxu0
        %v4512 = vadd.f32 %v4159, %v4511
        %v4513 = vpop.f32.mrb[0].mxu0
        %4514 = vmatprep.mubr.bf16.mxu0 %v2259
        %4515 = vmatmul.mubr.bf16.gmra.mrb[0].mxu0 %v1979
        %v4516 = vpop.f32.mrb[0].mxu0
        %v4517 = vadd.f32 %v4164, %v4516
        %v4518 = vpop.f32.mrb[0].mxu0
        %v4519 = vpop.f32.mrb[0].mxu0
        %v4520 = vadd.f32 %v4167, %v4519
        %v4521 = vpop.f32.mrb[0].mxu0
        %4522 = vmatprep.mubr.bf16.mxu0 %v2260
        %4523 = vmatmul.mubr.bf16.gmra.mrb[0].mxu0 %v1980
        %v4524 = vpop.f32.mrb[0].mxu0
        %v4525 = vadd.f32 %v4172, %v4524
        %v4526 = vpop.f32.mrb[0].mxu0
        %v4527 = vpop.f32.mrb[0].mxu0
        %v4528 = vadd.f32 %v4175, %v4527
        %v4529 = vpop.f32.mrb[0].mxu0
        %4530 = vmatprep.mubr.bf16.mxu0 %v2261
        %4531 = vmatmul.mubr.bf16.gmra.mrb[0].mxu0 %v1981
        %v4532 = vpop.f32.mrb[0].mxu0
        %v4533 = vadd.f32 %v4180, %v4532
        %v4534 = vpop.f32.mrb[0].mxu0
        %v4535 = vpop.f32.mrb[0].mxu0
        %v4536 = vadd.f32 %v4183, %v4535
        %v4537 = vpop.f32.mrb[0].mxu0
        %4538 = vmatprep.mubr.bf16.mxu0 %v2262
        %4539 = vmatmul.mubr.bf16.gmra.mrb[0].mxu0 %v1982
        %v4540 = vpop.f32.mrb[0].mxu0
        %v4541 = vadd.f32 %v4188, %v4540
        %v4542 = vpop.f32.mrb[0].mxu0
        %v4543 = vpop.f32.mrb[0].mxu0
        %v4544 = vadd.f32 %v4191, %v4543
        %v4545 = vpop.f32.mrb[0].mxu0
        %4546 = vmatprep.mubr.bf16.mxu0 %v2263
        %4547 = vmatmul.mubr.bf16.gmra.mrb[0].mxu0 %v1983
        %v4548 = vpop.f32.mrb[0].mxu0
        %v4549 = vadd.f32 %v4196, %v4548
        %v4550 = vpop.f32.mrb[0].mxu0
        %v4551 = vpop.f32.mrb[0].mxu0
        %v4552 = vadd.f32 %v4199, %v4551
        %v4553 = vpop.f32.mrb[0].mxu0
        %4554 = vmatprep.mubr.bf16.mxu0 %v2264
        %4555 = vmatmul.mubr.bf16.gmra.mrb[0].mxu0 %v1984
        %v4556 = vpop.f32.mrb[0].mxu0
        %v4557 = vadd.f32 %v4204, %v4556
        %v4558 = vpop.f32.mrb[0].mxu0
        %v4559 = vpop.f32.mrb[0].mxu0
        %v4560 = vadd.f32 %v4207, %v4559
        %v4561 = vpop.f32.mrb[0].mxu0
        %4562 = vmatprep.mubr.bf16.mxu0 %v2265
        %4563 = vmatmul.mubr.bf16.gmra.mrb[0].mxu0 %v1985
        %v4564 = vpop.f32.mrb[0].mxu0
        %v4565 = vadd.f32 %v4212, %v4564
        %v4566 = vpop.f32.mrb[0].mxu0
        %v4567 = vpop.f32.mrb[0].mxu0
        %v4568 = vadd.f32 %v4215, %v4567
        %v4569 = vpop.f32.mrb[0].mxu0
        %4570 = vmatprep.mubr.bf16.mxu0 %v2266
        %4571 = vmatmul.mubr.bf16.gmra.mrb[0].mxu0 %v1986
        %v4572 = vpop.f32.mrb[0].mxu0
        %v4573 = vadd.f32 %v4220, %v4572
        %v4574 = vpop.f32.mrb[0].mxu0
        %v4575 = vpop.f32.mrb[0].mxu0
        %v4576 = vadd.f32 %v4223, %v4575
        %v4577 = vpop.f32.mrb[0].mxu0
        %4578 = vmatprep.mubr.bf16.mxu0 %v2267
        %4579 = vmatmul.mubr.bf16.gmra.mrb[0].mxu0 %v1987
        %v4580 = vpop.f32.mrb[0].mxu0
        %v4581 = vadd.f32 %v4228, %v4580
        %v4582 = vpop.f32.mrb[0].mxu0
        %v4583 = vpop.f32.mrb[0].mxu0
        %v4584 = vadd.f32 %v4231, %v4583
        %v4585 = vpop.f32.mrb[0].mxu0
        %4586 = vmatprep.mubr.bf16.mxu0 %v2268
        %4587 = vmatmul.mubr.bf16.gmra.mrb[0].mxu0 %v1988
        %v4588 = vpop.f32.mrb[0].mxu0
        %v4589 = vadd.f32 %v4236, %v4588
        %v4590 = vpop.f32.mrb[0].mxu0
        %v4591 = vpop.f32.mrb[0].mxu0
        %v4592 = vadd.f32 %v4239, %v4591
        %v4593 = vpop.f32.mrb[0].mxu0
        %4594 = vmatprep.mubr.bf16.mxu0 %v2269
        %4595 = vmatmul.mubr.bf16.gmra.mrb[0].mxu0 %v1989
        %v4596 = vpop.f32.mrb[0].mxu0
        %v4597 = vadd.f32 %v4244, %v4596
        %v4598 = vpop.f32.mrb[0].mxu0
        %v4599 = vpop.f32.mrb[0].mxu0
        %v4600 = vadd.f32 %v4247, %v4599
        %v4601 = vpop.f32.mrb[0].mxu0
        %4602 = vmatprep.mubr.bf16.mxu0 %v2270
        %4603 = vmatmul.mubr.bf16.gmra.mrb[0].mxu0 %v1990
        %v4604 = vpop.f32.mrb[0].mxu0
        %v4605 = vadd.f32 %v4252, %v4604
        %v4606 = vpop.f32.mrb[0].mxu0
        %v4607 = vpop.f32.mrb[0].mxu0
        %v4608 = vadd.f32 %v4255, %v4607
        %v4609 = vpop.f32.mrb[0].mxu0
        %4610 = vmatprep.mubr.bf16.mxu0 %v2271
        %4611 = vmatmul.mubr.bf16.gmra.mrb[0].mxu0 %v1991
        %v4612 = vpop.f32.mrb[0].mxu0
        %v4613 = vadd.f32 %v4260, %v4612
        %v4614 = vpop.f32.mrb[0].mxu0
        %v4615 = vpop.f32.mrb[0].mxu0
        %v4616 = vadd.f32 %v4263, %v4615
        %v4617 = vpop.f32.mrb[0].mxu0
        %4618 = vmatprep.mubr.bf16.mxu0 %v2272
        %4619 = vmatmul.mubr.bf16.gmra.mrb[0].mxu0 %v1992
        %v4620 = vpop.f32.mrb[0].mxu0
        %v4621 = vadd.f32 %v4268, %v4620
        %v4622 = vpop.f32.mrb[0].mxu0
        %v4623 = vpop.f32.mrb[0].mxu0
        %v4624 = vadd.f32 %v4271, %v4623
        %v4625 = vpop.f32.mrb[0].mxu0
        %4626 = vmatprep.mubr.bf16.mxu0 %v2273
        %4627 = vmatmul.mubr.bf16.gmra.mrb[0].mxu0 %v1993
        %v4628 = vpop.f32.mrb[0].mxu0
        %v4629 = vadd.f32 %v4276, %v4628
        %v4630 = vpop.f32.mrb[0].mxu0
        %v4631 = vpop.f32.mrb[0].mxu0
        %v4632 = vadd.f32 %v4279, %v4631
        %v4633 = vpop.f32.mrb[0].mxu0
        %4634 = vmatprep.mubr.bf16.mxu0 %v2274
        %4635 = vmatmul.mubr.bf16.gmra.mrb[0].mxu0 %v1994
        %v4636 = vpop.f32.mrb[0].mxu0
        %v4637 = vadd.f32 %v4284, %v4636
        %v4638 = vpop.f32.mrb[0].mxu0
        %v4639 = vpop.f32.mrb[0].mxu0
        %v4640 = vadd.f32 %v4287, %v4639
        %v4641 = vpop.f32.mrb[0].mxu0
        %4642 = vmatprep.mubr.bf16.mxu0 %v2275
        %4643 = vmatmul.mubr.bf16.gmra.mrb[0].mxu0 %v1995
        %v4644 = vpop.f32.mrb[0].mxu0
        %v4645 = vadd.f32 %v4292, %v4644
        %v4646 = vpop.f32.mrb[0].mxu0
        %v4647 = vpop.f32.mrb[0].mxu0
        %v4648 = vadd.f32 %v4295, %v4647
        %v4649 = vpop.f32.mrb[0].mxu0
        %4650 = vmatprep.mubr.bf16.mxu0 %v2276
        %4651 = vmatmul.mubr.bf16.gmra.mrb[0].mxu0 %v1996
        %v4652 = vpop.f32.mrb[0].mxu0
        %v4653 = vadd.f32 %v4300, %v4652
        %v4654 = vpop.f32.mrb[0].mxu0
        %v4655 = vpop.f32.mrb[0].mxu0
        %v4656 = vadd.f32 %v4303, %v4655
        %v4657 = vpop.f32.mrb[0].mxu0
        %4658 = vmatprep.mubr.bf16.mxu0 %v2277
        %4659 = vmatmul.mubr.bf16.gmra.mrb[0].mxu0 %v1997
        %v4660 = vpop.f32.mrb[0].mxu0
        %v4661 = vadd.f32 %v4308, %v4660
        %v4662 = vpop.f32.mrb[0].mxu0
        %v4663 = vpop.f32.mrb[0].mxu0
        %v4664 = vadd.f32 %v4311, %v4663
        %v4665 = vpop.f32.mrb[0].mxu0
        %4666 = vmatprep.mubr.bf16.mxu0 %v2278
        %4667 = vmatmul.mubr.bf16.gmra.mrb[0].mxu0 %v1998
        %v4668 = vpop.f32.mrb[0].mxu0
        %v4669 = vadd.f32 %v4316, %v4668
        %v4670 = vpop.f32.mrb[0].mxu0
        %v4671 = vpop.f32.mrb[0].mxu0
        %v4672 = vadd.f32 %v4319, %v4671
        %v4673 = vpop.f32.mrb[0].mxu0
        %4674 = vmatprep.mubr.bf16.mxu0 %v2279
        %4675 = vmatmul.mubr.bf16.gmra.mrb[0].mxu0 %v1999
        %v4676 = vpop.f32.mrb[0].mxu0
        %v4677 = vadd.f32 %v4324, %v4676
        %v4678 = vpop.f32.mrb[0].mxu0
        %v4679 = vpop.f32.mrb[0].mxu0
        %v4680 = vadd.f32 %v4327, %v4679
        %v4681 = vpop.f32.mrb[0].mxu0
        %4682 = vmatprep.mubr.bf16.mxu0 %v2280
        %4683 = vmatmul.mubr.bf16.gmra.mrb[0].mxu0 %v2000
        %v4684 = vpop.f32.mrb[0].mxu0
        %v4685 = vadd.f32 %v4332, %v4684
        %v4686 = vpop.f32.mrb[0].mxu0
        %v4687 = vpop.f32.mrb[0].mxu0
        %v4688 = vadd.f32 %v4335, %v4687
        %v4689 = vpop.f32.mrb[0].mxu0
        %4690 = vmatprep.mubr.bf16.mxu0 %v2281
        %4691 = vmatmul.mubr.bf16.gmra.mrb[0].mxu0 %v2001
        %v4692 = vpop.f32.mrb[0].mxu0
        %v4693 = vadd.f32 %v4340, %v4692
        %v4694 = vpop.f32.mrb[0].mxu0
        %v4695 = vpop.f32.mrb[0].mxu0
        %v4696 = vadd.f32 %v4343, %v4695
        %v4697 = vpop.f32.mrb[0].mxu0
        %4698 = vmatprep.mubr.bf16.mxu0 %v2282
        %4699 = vmatmul.mubr.bf16.gmra.mrb[0].mxu0 %v2002
        %v4700 = vpop.f32.mrb[0].mxu0
        %v4701 = vadd.f32 %v4348, %v4700
        %v4702 = vpop.f32.mrb[0].mxu0
        %v4703 = vpop.f32.mrb[0].mxu0
        %v4704 = vadd.f32 %v4351, %v4703
        %v4705 = vpop.f32.mrb[0].mxu0
        %4706 = vmatprep.mubr.bf16.mxu0 %v2283
        %4707 = vmatmul.mubr.bf16.gmra.mrb[0].mxu0 %v2003
        %v4708 = vpop.f32.mrb[0].mxu0
        %v4709 = vadd.f32 %v4356, %v4708
        %v4710 = vpop.f32.mrb[0].mxu0
        %v4711 = vpop.f32.mrb[0].mxu0
        %v4712 = vadd.f32 %v4359, %v4711
        %v4713 = vpop.f32.mrb[0].mxu0
        %4714 = vmatprep.mubr.bf16.mxu0 %v2284
        %4715 = vmatmul.mubr.bf16.gmra.mrb[0].mxu0 %v2004
        %v4716 = vpop.f32.mrb[0].mxu0
        %v4717 = vadd.f32 %v4364, %v4716
        %v4718 = vpop.f32.mrb[0].mxu0
        %v4719 = vpop.f32.mrb[0].mxu0
        %v4720 = vadd.f32 %v4367, %v4719
        %v4721 = vpop.f32.mrb[0].mxu0
        %4722 = vmatprep.mubr.bf16.mxu0 %v2285
        %4723 = vmatmul.mubr.bf16.gmra.mrb[0].mxu0 %v2005
        %v4724 = vpop.f32.mrb[0].mxu0
        %v4725 = vadd.f32 %v4372, %v4724
        %v4726 = vpop.f32.mrb[0].mxu0
        %v4727 = vpop.f32.mrb[0].mxu0
        %v4728 = vadd.f32 %v4375, %v4727
        %v4729 = vpop.f32.mrb[0].mxu0
        %4730 = vmatprep.mubr.bf16.mxu0 %v2286
        %4731 = vmatmul.mubr.bf16.gmra.mrb[0].mxu0 %v2006
        %v4732 = vpop.f32.mrb[0].mxu0
        %v4733 = vadd.f32 %v4380, %v4732
        %v4734 = vpop.f32.mrb[0].mxu0
        %v4735 = vpop.f32.mrb[0].mxu0
        %v4736 = vadd.f32 %v4383, %v4735
        %v4737 = vpop.f32.mrb[0].mxu0
        %4738 = vmatprep.mubr.bf16.mxu0 %v2287
        %4739 = vmatmul.mubr.bf16.gmra.mrb[0].mxu0 %v2007
        %v4740 = vpop.f32.mrb[0].mxu0
        %v4741 = vadd.f32 %v4388, %v4740
        %v4742 = vpop.f32.mrb[0].mxu0
        %v4743 = vpop.f32.mrb[0].mxu0
        %v4744 = vadd.f32 %v4391, %v4743
        %v4745 = vpop.f32.mrb[0].mxu0
        %4746 = vmatprep.mubr.bf16.mxu0 %v2288
        %4747 = vmatmul.mubr.bf16.gmra.mrb[0].mxu0 %v2008
        %v4748 = vpop.f32.mrb[0].mxu0
        %v4749 = vadd.f32 %v4396, %v4748
        %v4750 = vpop.f32.mrb[0].mxu0
        %v4751 = vpop.f32.mrb[0].mxu0
        %v4752 = vadd.f32 %v4399, %v4751
        %v4753 = vpop.f32.mrb[0].mxu0
        %4754 = vmatprep.mubr.bf16.mxu0 %v2289
        %4755 = vmatmul.mubr.bf16.gmra.mrb[0].mxu0 %v2009
        %v4756 = vpop.f32.mrb[0].mxu0
        %v4757 = vadd.f32 %v4404, %v4756
        %v4758 = vpop.f32.mrb[0].mxu0
        %v4759 = vpop.f32.mrb[0].mxu0
        %v4760 = vadd.f32 %v4407, %v4759
        %v4761 = vpop.f32.mrb[0].mxu0
        %4762 = vmatprep.mubr.bf16.mxu0 %v2290
        %4763 = vmatmul.mubr.bf16.gmra.mrb[0].mxu0 %v2010
        %v4764 = vpop.f32.mrb[0].mxu0
        %v4765 = vadd.f32 %v4412, %v4764
        %v4766 = vpop.f32.mrb[0].mxu0
        %v4767 = vpop.f32.mrb[0].mxu0
        %v4768 = vadd.f32 %v4415, %v4767
        %v4769 = vpop.f32.mrb[0].mxu0
        %4770 = vmatprep.mubr.bf16.mxu0 %v2291
        %4771 = vmatmul.mubr.bf16.gmra.mrb[0].mxu0 %v2011
        %v4772 = vpop.f32.mrb[0].mxu0
        %v4773 = vadd.f32 %v4420, %v4772
        %v4774 = vpop.f32.mrb[0].mxu0
        %v4775 = vpop.f32.mrb[0].mxu0
        %v4776 = vadd.f32 %v4423, %v4775
        %v4777 = vpop.f32.mrb[0].mxu0
        %4778 = vmatprep.mubr.bf16.mxu0 %v2292
        %4779 = vmatmul.mubr.bf16.gmra.mrb[0].mxu0 %v2012
        %v4780 = vpop.f32.mrb[0].mxu0
        %v4781 = vadd.f32 %v4428, %v4780
        %v4782 = vpop.f32.mrb[0].mxu0
        %v4783 = vpop.f32.mrb[0].mxu0
        %v4784 = vadd.f32 %v4431, %v4783
        %v4785 = vpop.f32.mrb[0].mxu0
        %4786 = vmatprep.mubr.bf16.mxu0 %v2293
        %4787 = vmatmul.mubr.bf16.gmra.mrb[0].mxu0 %v2013
        %v4788 = vpop.f32.mrb[0].mxu0
        %v4789 = vadd.f32 %v4436, %v4788
        %v4790 = vpop.f32.mrb[0].mxu0
        %v4791 = vpop.f32.mrb[0].mxu0
        %v4792 = vadd.f32 %v4439, %v4791
        %v4793 = vpop.f32.mrb[0].mxu0
        %4794 = vmatprep.mubr.bf16.mxu0 %v2294
        %4795 = vmatmul.mubr.bf16.gmra.mrb[0].mxu0 %v2014
        %v4796 = vpop.f32.mrb[0].mxu0
        %v4797 = vadd.f32 %v4444, %v4796
        %v4798 = vpop.f32.mrb[0].mxu0
        %v4799 = vpop.f32.mrb[0].mxu0
        %v4800 = vadd.f32 %v4447, %v4799
        %v4801 = vpop.f32.mrb[0].mxu0
        %4802 = vmatprep.mubr.bf16.mxu0 %v2295
        %4803 = vmatmul.mubr.bf16.gmra.mrb[0].mxu0 %v2015
        %v4804 = vpop.f32.mrb[0].mxu0
        %v4805 = vadd.f32 %v4452, %v4804
        %v4806 = vpop.f32.mrb[0].mxu0
        %v4807 = vpop.f32.mrb[0].mxu0
        %v4808 = vadd.f32 %v4455, %v4807
        %v4809 = vpop.f32.mrb[0].mxu0
        %4810 = vdwg.mxu0
        %4811 = vmatprep.subr.bf16.mxu0 0
        %4812 = vmatpush1.bf16.msra.mxu0 %v3319
        %4813 = vmatprep.subr.bf16.mxu0 0
        %4814 = vmatpush1.bf16.msra.mxu0 %v3320
        %4815 = vmatprep.subr.bf16.mxu0 0
        %4816 = vmatpush1.bf16.msra.mxu0 %v3321
        %4817 = vmatprep.subr.bf16.mxu0 0
        %4818 = vmatpush1.bf16.msra.mxu0 %v3322
        %4819 = vmatprep.subr.bf16.mxu0 0
        %4820 = vmatpush1.bf16.msra.mxu0 %v3323
        %4821 = vmatprep.subr.bf16.mxu0 0
        %4822 = vmatpush1.bf16.msra.mxu0 %v3324
        %4823 = vmatprep.subr.bf16.mxu0 0
        %4824 = vmatpush1.bf16.msra.mxu0 %v3325
        %4825 = vmatprep.subr.bf16.mxu0 0
        %4826 = vmatpush1.bf16.msra.mxu0 %v3326
        %4827 = vmatprep.subr.bf16.mxu0 0
        %4828 = vmatpush1.bf16.msra.mxu0 0
        %4829 = vmatprep.subr.bf16.mxu0 0
        %4830 = vmatpush1.bf16.msra.mxu0 0
        %4831 = vmatprep.subr.bf16.mxu0 0
        %4832 = vmatpush1.bf16.msra.mxu0 0
        %4833 = vmatprep.subr.bf16.mxu0 0
        %4834 = vmatpush1.bf16.msra.mxu0 0
        %4835 = vmatprep.subr.bf16.mxu0 0
        %4836 = vmatpush1.bf16.msra.mxu0 0
        %4837 = vmatprep.subr.bf16.mxu0 0
        %4838 = vmatpush1.bf16.msra.mxu0 0
        %4839 = vmatprep.subr.bf16.mxu0 0
        %4840 = vmatpush1.bf16.msra.mxu0 0
        %4841 = vmatprep.subr.bf16.mxu0 0
        %4842 = vmatpush1.bf16.msra.mxu0 0
        %4843 = vmatprep.mubr.bf16.mxu0 0
        %4844 = vmatmul.mubr.bf16.gmra.mrb[0].mxu0 %v2536
        %v4845 = vpop.f32.mrb[0].mxu0
        %v4846 = vadd.f32 %v4493, %v4845
        %v4847 = vpop.f32.mrb[0].mxu0
        %v4848 = vpop.f32.mrb[0].mxu0
        %v4849 = vadd.f32 %v4496, %v4848
        %v4850 = vpop.f32.mrb[0].mxu0
        %4851 = vmatprep.mubr.bf16.mxu0 0
        %4852 = vmatmul.mubr.bf16.gmra.mrb[0].mxu0 %v2537
        %v4853 = vpop.f32.mrb[0].mxu0
        %v4854 = vadd.f32 %v4501, %v4853
        %v4855 = vpop.f32.mrb[0].mxu0
        %v4856 = vpop.f32.mrb[0].mxu0
        %v4857 = vadd.f32 %v4504, %v4856
        %v4858 = vpop.f32.mrb[0].mxu0
        %4859 = vmatprep.mubr.bf16.mxu0 0
        %4860 = vmatmul.mubr.bf16.gmra.mrb[0].mxu0 %v2538
        %v4861 = vpop.f32.mrb[0].mxu0
        %v4862 = vadd.f32 %v4509, %v4861
        %v4863 = vpop.f32.mrb[0].mxu0
        %v4864 = vpop.f32.mrb[0].mxu0
        %v4865 = vadd.f32 %v4512, %v4864
        %v4866 = vpop.f32.mrb[0].mxu0
        %4867 = vmatprep.mubr.bf16.mxu0 0
        %4868 = vmatmul.mubr.bf16.gmra.mrb[0].mxu0 %v2539
        %v4869 = vpop.f32.mrb[0].mxu0
        %v4870 = vadd.f32 %v4517, %v4869
        %v4871 = vpop.f32.mrb[0].mxu0
        %v4872 = vpop.f32.mrb[0].mxu0
        %v4873 = vadd.f32 %v4520, %v4872
        %v4874 = vpop.f32.mrb[0].mxu0
        %4875 = vmatprep.mubr.bf16.mxu0 0
        %4876 = vmatmul.mubr.bf16.gmra.mrb[0].mxu0 %v2540
        %v4877 = vpop.f32.mrb[0].mxu0
        %v4878 = vadd.f32 %v4525, %v4877
        %v4879 = vpop.f32.mrb[0].mxu0
        %v4880 = vpop.f32.mrb[0].mxu0
        %v4881 = vadd.f32 %v4528, %v4880
        %v4882 = vpop.f32.mrb[0].mxu0
        %4883 = vmatprep.mubr.bf16.mxu0 0
        %4884 = vmatmul.mubr.bf16.gmra.mrb[0].mxu0 %v2541
        %v4885 = vpop.f32.mrb[0].mxu0
        %v4886 = vadd.f32 %v4533, %v4885
        %v4887 = vpop.f32.mrb[0].mxu0
        %v4888 = vpop.f32.mrb[0].mxu0
        %v4889 = vadd.f32 %v4536, %v4888
        %v4890 = vpop.f32.mrb[0].mxu0
        %4891 = vmatprep.mubr.bf16.mxu0 0
        %4892 = vmatmul.mubr.bf16.gmra.mrb[0].mxu0 %v2542
        %v4893 = vpop.f32.mrb[0].mxu0
        %v4894 = vadd.f32 %v4541, %v4893
        %v4895 = vpop.f32.mrb[0].mxu0
        %v4896 = vpop.f32.mrb[0].mxu0
        %v4897 = vadd.f32 %v4544, %v4896
        %v4898 = vpop.f32.mrb[0].mxu0
        %4899 = vmatprep.mubr.bf16.mxu0 0
        %4900 = vmatmul.mubr.bf16.gmra.mrb[0].mxu0 %v2543
        %v4901 = vpop.f32.mrb[0].mxu0
        %v4902 = vadd.f32 %v4549, %v4901
        %v4903 = vpop.f32.mrb[0].mxu0
        %v4904 = vpop.f32.mrb[0].mxu0
        %v4905 = vadd.f32 %v4552, %v4904
        %v4906 = vpop.f32.mrb[0].mxu0
        %4907 = vmatprep.mubr.bf16.mxu0 0
        %4908 = vmatmul.mubr.bf16.gmra.mrb[0].mxu0 %v2544
        %v4909 = vpop.f32.mrb[0].mxu0
        %v4910 = vadd.f32 %v4557, %v4909
        %v4911 = vpop.f32.mrb[0].mxu0
        %v4912 = vpop.f32.mrb[0].mxu0
        %v4913 = vadd.f32 %v4560, %v4912
        %v4914 = vpop.f32.mrb[0].mxu0
        %4915 = vmatprep.mubr.bf16.mxu0 0
        %4916 = vmatmul.mubr.bf16.gmra.mrb[0].mxu0 %v2545
        %v4917 = vpop.f32.mrb[0].mxu0
        %v4918 = vadd.f32 %v4565, %v4917
        %v4919 = vpop.f32.mrb[0].mxu0
        %v4920 = vpop.f32.mrb[0].mxu0
        %v4921 = vadd.f32 %v4568, %v4920
        %v4922 = vpop.f32.mrb[0].mxu0
        %4923 = vmatprep.mubr.bf16.mxu0 0
        %4924 = vmatmul.mubr.bf16.gmra.mrb[0].mxu0 %v2546
        %v4925 = vpop.f32.mrb[0].mxu0
        %v4926 = vadd.f32 %v4573, %v4925
        %v4927 = vpop.f32.mrb[0].mxu0
        %v4928 = vpop.f32.mrb[0].mxu0
        %v4929 = vadd.f32 %v4576, %v4928
        %v4930 = vpop.f32.mrb[0].mxu0
        %4931 = vmatprep.mubr.bf16.mxu0 0
        %4932 = vmatmul.mubr.bf16.gmra.mrb[0].mxu0 %v2547
        %v4933 = vpop.f32.mrb[0].mxu0
        %v4934 = vadd.f32 %v4581, %v4933
        %v4935 = vpop.f32.mrb[0].mxu0
        %v4936 = vpop.f32.mrb[0].mxu0
        %v4937 = vadd.f32 %v4584, %v4936
        %v4938 = vpop.f32.mrb[0].mxu0
        %4939 = vmatprep.mubr.bf16.mxu0 0
        %4940 = vmatmul.mubr.bf16.gmra.mrb[0].mxu0 %v2548
        %v4941 = vpop.f32.mrb[0].mxu0
        %v4942 = vadd.f32 %v4589, %v4941
        %v4943 = vpop.f32.mrb[0].mxu0
        %v4944 = vpop.f32.mrb[0].mxu0
        %v4945 = vadd.f32 %v4592, %v4944
        %v4946 = vpop.f32.mrb[0].mxu0
        %4947 = vmatprep.mubr.bf16.mxu0 0
        %4948 = vmatmul.mubr.bf16.gmra.mrb[0].mxu0 %v2549
        %v4949 = vpop.f32.mrb[0].mxu0
        %v4950 = vadd.f32 %v4597, %v4949
        %v4951 = vpop.f32.mrb[0].mxu0
        %v4952 = vpop.f32.mrb[0].mxu0
        %v4953 = vadd.f32 %v4600, %v4952
        %v4954 = vpop.f32.mrb[0].mxu0
        %4955 = vmatprep.mubr.bf16.mxu0 0
        %4956 = vmatmul.mubr.bf16.gmra.mrb[0].mxu0 %v2550
        %v4957 = vpop.f32.mrb[0].mxu0
        %v4958 = vadd.f32 %v4605, %v4957
        %v4959 = vpop.f32.mrb[0].mxu0
        %v4960 = vpop.f32.mrb[0].mxu0
        %v4961 = vadd.f32 %v4608, %v4960
        %v4962 = vpop.f32.mrb[0].mxu0
        %4963 = vmatprep.mubr.bf16.mxu0 0
        %4964 = vmatmul.mubr.bf16.gmra.mrb[0].mxu0 %v2551
        %v4965 = vpop.f32.mrb[0].mxu0
        %v4966 = vadd.f32 %v4613, %v4965
        %v4967 = vpop.f32.mrb[0].mxu0
        %v4968 = vpop.f32.mrb[0].mxu0
        %v4969 = vadd.f32 %v4616, %v4968
        %v4970 = vpop.f32.mrb[0].mxu0
        %4971 = vmatprep.mubr.bf16.mxu0 0
        %4972 = vmatmul.mubr.bf16.gmra.mrb[0].mxu0 %v2552
        %v4973 = vpop.f32.mrb[0].mxu0
        %v4974 = vadd.f32 %v4621, %v4973
        %v4975 = vpop.f32.mrb[0].mxu0
        %v4976 = vpop.f32.mrb[0].mxu0
        %v4977 = vadd.f32 %v4624, %v4976
        %v4978 = vpop.f32.mrb[0].mxu0
        %4979 = vmatprep.mubr.bf16.mxu0 0
        %4980 = vmatmul.mubr.bf16.gmra.mrb[0].mxu0 %v2553
        %v4981 = vpop.f32.mrb[0].mxu0
        %v4982 = vadd.f32 %v4629, %v4981
        %v4983 = vpop.f32.mrb[0].mxu0
        %v4984 = vpop.f32.mrb[0].mxu0
        %v4985 = vadd.f32 %v4632, %v4984
        %v4986 = vpop.f32.mrb[0].mxu0
        %4987 = vmatprep.mubr.bf16.mxu0 0
        %4988 = vmatmul.mubr.bf16.gmra.mrb[0].mxu0 %v2554
        %v4989 = vpop.f32.mrb[0].mxu0
        %v4990 = vadd.f32 %v4637, %v4989
        %v4991 = vpop.f32.mrb[0].mxu0
        %v4992 = vpop.f32.mrb[0].mxu0
        %v4993 = vadd.f32 %v4640, %v4992
        %v4994 = vpop.f32.mrb[0].mxu0
        %4995 = vmatprep.mubr.bf16.mxu0 0
        %4996 = vmatmul.mubr.bf16.gmra.mrb[0].mxu0 %v2555
        %v4997 = vpop.f32.mrb[0].mxu0
        %v4998 = vadd.f32 %v4645, %v4997
        %v4999 = vpop.f32.mrb[0].mxu0
        %v5000 = vpop.f32.mrb[0].mxu0
        %v5001 = vadd.f32 %v4648, %v5000
        %v5002 = vpop.f32.mrb[0].mxu0
        %5003 = vmatprep.mubr.bf16.mxu0 0
        %5004 = vmatmul.mubr.bf16.gmra.mrb[0].mxu0 %v2556
        %v5005 = vpop.f32.mrb[0].mxu0
        %v5006 = vadd.f32 %v4653, %v5005
        %v5007 = vpop.f32.mrb[0].mxu0
        %v5008 = vpop.f32.mrb[0].mxu0
        %v5009 = vadd.f32 %v4656, %v5008
        %v5010 = vpop.f32.mrb[0].mxu0
        %5011 = vmatprep.mubr.bf16.mxu0 0
        %5012 = vmatmul.mubr.bf16.gmra.mrb[0].mxu0 %v2557
        %v5013 = vpop.f32.mrb[0].mxu0
        %v5014 = vadd.f32 %v4661, %v5013
        %v5015 = vpop.f32.mrb[0].mxu0
        %v5016 = vpop.f32.mrb[0].mxu0
        %v5017 = vadd.f32 %v4664, %v5016
        %v5018 = vpop.f32.mrb[0].mxu0
        %5019 = vmatprep.mubr.bf16.mxu0 0
        %5020 = vmatmul.mubr.bf16.gmra.mrb[0].mxu0 %v2558
        %v5021 = vpop.f32.mrb[0].mxu0
        %v5022 = vadd.f32 %v4669, %v5021
        %v5023 = vpop.f32.mrb[0].mxu0
        %v5024 = vpop.f32.mrb[0].mxu0
        %v5025 = vadd.f32 %v4672, %v5024
        %v5026 = vpop.f32.mrb[0].mxu0
        %5027 = vmatprep.mubr.bf16.mxu0 0
        %5028 = vmatmul.mubr.bf16.gmra.mrb[0].mxu0 %v2559
        %v5029 = vpop.f32.mrb[0].mxu0
        %v5030 = vadd.f32 %v4677, %v5029
        %v5031 = vpop.f32.mrb[0].mxu0
        %v5032 = vpop.f32.mrb[0].mxu0
        %v5033 = vadd.f32 %v4680, %v5032
        %v5034 = vpop.f32.mrb[0].mxu0
        %5035 = vmatprep.mubr.bf16.mxu0 0
        %5036 = vmatmul.mubr.bf16.gmra.mrb[0].mxu0 %v2560
        %v5037 = vpop.f32.mrb[0].mxu0
        %v5038 = vadd.f32 %v4685, %v5037
        %v5039 = vpop.f32.mrb[0].mxu0
        %v5040 = vpop.f32.mrb[0].mxu0
        %v5041 = vadd.f32 %v4688, %v5040
        %v5042 = vpop.f32.mrb[0].mxu0
        %5043 = vmatprep.mubr.bf16.mxu0 0
        %5044 = vmatmul.mubr.bf16.gmra.mrb[0].mxu0 %v2561
        %v5045 = vpop.f32.mrb[0].mxu0
        %v5046 = vadd.f32 %v4693, %v5045
        %v5047 = vpop.f32.mrb[0].mxu0
        %v5048 = vpop.f32.mrb[0].mxu0
        %v5049 = vadd.f32 %v4696, %v5048
        %v5050 = vpop.f32.mrb[0].mxu0
        %5051 = vmatprep.mubr.bf16.mxu0 0
        %5052 = vmatmul.mubr.bf16.gmra.mrb[0].mxu0 %v2562
        %v5053 = vpop.f32.mrb[0].mxu0
        %v5054 = vadd.f32 %v4701, %v5053
        %v5055 = vpop.f32.mrb[0].mxu0
        %v5056 = vpop.f32.mrb[0].mxu0
        %v5057 = vadd.f32 %v4704, %v5056
        %v5058 = vpop.f32.mrb[0].mxu0
        %5059 = vmatprep.mubr.bf16.mxu0 0
        %5060 = vmatmul.mubr.bf16.gmra.mrb[0].mxu0 %v2563
        %v5061 = vpop.f32.mrb[0].mxu0
        %v5062 = vadd.f32 %v4709, %v5061
        %v5063 = vpop.f32.mrb[0].mxu0
        %v5064 = vpop.f32.mrb[0].mxu0
        %v5065 = vadd.f32 %v4712, %v5064
        %v5066 = vpop.f32.mrb[0].mxu0
        %5067 = vmatprep.mubr.bf16.mxu0 0
        %5068 = vmatmul.mubr.bf16.gmra.mrb[0].mxu0 %v2564
        %v5069 = vpop.f32.mrb[0].mxu0
        %v5070 = vadd.f32 %v4717, %v5069
        %v5071 = vpop.f32.mrb[0].mxu0
        %v5072 = vpop.f32.mrb[0].mxu0
        %v5073 = vadd.f32 %v4720, %v5072
        %v5074 = vpop.f32.mrb[0].mxu0
        %5075 = vmatprep.mubr.bf16.mxu0 0
        %5076 = vmatmul.mubr.bf16.gmra.mrb[0].mxu0 %v2565
        %v5077 = vpop.f32.mrb[0].mxu0
        %v5078 = vadd.f32 %v4725, %v5077
        %v5079 = vpop.f32.mrb[0].mxu0
        %v5080 = vpop.f32.mrb[0].mxu0
        %v5081 = vadd.f32 %v4728, %v5080
        %v5082 = vpop.f32.mrb[0].mxu0
        %5083 = vmatprep.mubr.bf16.mxu0 0
        %5084 = vmatmul.mubr.bf16.gmra.mrb[0].mxu0 %v2566
        %v5085 = vpop.f32.mrb[0].mxu0
        %v5086 = vadd.f32 %v4733, %v5085
        %v5087 = vpop.f32.mrb[0].mxu0
        %v5088 = vpop.f32.mrb[0].mxu0
        %v5089 = vadd.f32 %v4736, %v5088
        %v5090 = vpop.f32.mrb[0].mxu0
        %5091 = vmatprep.mubr.bf16.mxu0 0
        %5092 = vmatmul.mubr.bf16.gmra.mrb[0].mxu0 %v2567
        %v5093 = vpop.f32.mrb[0].mxu0
        %v5094 = vadd.f32 %v4741, %v5093
        %v5095 = vpop.f32.mrb[0].mxu0
        %v5096 = vpop.f32.mrb[0].mxu0
        %v5097 = vadd.f32 %v4744, %v5096
        %v5098 = vpop.f32.mrb[0].mxu0
        %5099 = vmatprep.mubr.bf16.mxu0 0
        %5100 = vmatmul.mubr.bf16.gmra.mrb[0].mxu0 %v2568
        %v5101 = vpop.f32.mrb[0].mxu0
        %v5102 = vadd.f32 %v4749, %v5101
        %v5103 = vpop.f32.mrb[0].mxu0
        %v5104 = vpop.f32.mrb[0].mxu0
        %v5105 = vadd.f32 %v4752, %v5104
        %v5106 = vpop.f32.mrb[0].mxu0
        %5107 = vmatprep.mubr.bf16.mxu0 0
        %5108 = vmatmul.mubr.bf16.gmra.mrb[0].mxu0 %v2569
        %v5109 = vpop.f32.mrb[0].mxu0
        %v5110 = vadd.f32 %v4757, %v5109
        %v5111 = vpop.f32.mrb[0].mxu0
        %v5112 = vpop.f32.mrb[0].mxu0
        %v5113 = vadd.f32 %v4760, %v5112
        %v5114 = vpop.f32.mrb[0].mxu0
        %5115 = vmatprep.mubr.bf16.mxu0 0
        %5116 = vmatmul.mubr.bf16.gmra.mrb[0].mxu0 %v2570
        %v5117 = vpop.f32.mrb[0].mxu0
        %v5118 = vadd.f32 %v4765, %v5117
        %v5119 = vpop.f32.mrb[0].mxu0
        %v5120 = vpop.f32.mrb[0].mxu0
        %v5121 = vadd.f32 %v4768, %v5120
        %v5122 = vpop.f32.mrb[0].mxu0
        %5123 = vmatprep.mubr.bf16.mxu0 0
        %5124 = vmatmul.mubr.bf16.gmra.mrb[0].mxu0 %v2571
        %v5125 = vpop.f32.mrb[0].mxu0
        %v5126 = vadd.f32 %v4773, %v5125
        %v5127 = vpop.f32.mrb[0].mxu0
        %v5128 = vpop.f32.mrb[0].mxu0
        %v5129 = vadd.f32 %v4776, %v5128
        %v5130 = vpop.f32.mrb[0].mxu0
        %5131 = vmatprep.mubr.bf16.mxu0 0
        %5132 = vmatmul.mubr.bf16.gmra.mrb[0].mxu0 %v2572
        %v5133 = vpop.f32.mrb[0].mxu0
        %v5134 = vadd.f32 %v4781, %v5133
        %v5135 = vpop.f32.mrb[0].mxu0
        %v5136 = vpop.f32.mrb[0].mxu0
        %v5137 = vadd.f32 %v4784, %v5136
        %v5138 = vpop.f32.mrb[0].mxu0
        %5139 = vmatprep.mubr.bf16.mxu0 0
        %5140 = vmatmul.mubr.bf16.gmra.mrb[0].mxu0 %v2573
        %v5141 = vpop.f32.mrb[0].mxu0
        %v5142 = vadd.f32 %v4789, %v5141
        %v5143 = vpop.f32.mrb[0].mxu0
        %v5144 = vpop.f32.mrb[0].mxu0
        %v5145 = vadd.f32 %v4792, %v5144
        %v5146 = vpop.f32.mrb[0].mxu0
        %5147 = vmatprep.mubr.bf16.mxu0 0
        %5148 = vmatmul.mubr.bf16.gmra.mrb[0].mxu0 %v2574
        %v5149 = vpop.f32.mrb[0].mxu0
        %v5150 = vadd.f32 %v4797, %v5149
        %v5151 = vpop.f32.mrb[0].mxu0
        %v5152 = vpop.f32.mrb[0].mxu0
        %v5153 = vadd.f32 %v4800, %v5152
        %v5154 = vpop.f32.mrb[0].mxu0
        %5155 = vmatprep.mubr.bf16.mxu0 0
        %5156 = vmatmul.mubr.bf16.gmra.mrb[0].mxu0 %v2575
        %v5157 = vpop.f32.mrb[0].mxu0
        %v5158 = vadd.f32 %v4805, %v5157
        %v5159 = vpop.f32.mrb[0].mxu0
        %v5160 = vpop.f32.mrb[0].mxu0
        %v5161 = vadd.f32 %v4808, %v5160
        %v5162 = vpop.f32.mrb[0].mxu0
        %5163 = vdwg.mxu0
        %v5164 = vmax.f32 %v4846, 0.0
        %v5165 = vmax.f32 %v4849, 0.0
        %v5166 = vmax.f32 %v4854, 0.0
        %v5167 = vmax.f32 %v4857, 0.0
        %v5168 = vmax.f32 %v4862, 0.0
        %v5169 = vmax.f32 %v4865, 0.0
        %v5170 = vmax.f32 %v4870, 0.0
        %v5171 = vmax.f32 %v4873, 0.0
        %v5172 = vmax.f32 %v4878, 0.0
        %v5173 = vmax.f32 %v4881, 0.0
        %v5174 = vmax.f32 %v4886, 0.0
        %v5175 = vmax.f32 %v4889, 0.0
        %v5176 = vmax.f32 %v4894, 0.0
        %v5177 = vmax.f32 %v4897, 0.0
        %v5178 = vmax.f32 %v4902, 0.0
        %v5179 = vmax.f32 %v4905, 0.0
        %v5180 = vmax.f32 %v4910, 0.0
        %v5181 = vmax.f32 %v4913, 0.0
        %v5182 = vmax.f32 %v4918, 0.0
        %v5183 = vmax.f32 %v4921, 0.0
        %v5184 = vmax.f32 %v4926, 0.0
        %v5185 = vmax.f32 %v4929, 0.0
        %v5186 = vmax.f32 %v4934, 0.0
        %v5187 = vmax.f32 %v4937, 0.0
        %v5188 = vmax.f32 %v4942, 0.0
        %v5189 = vmax.f32 %v4945, 0.0
        %v5190 = vmax.f32 %v4950, 0.0
        %v5191 = vmax.f32 %v4953, 0.0
        %v5192 = vmax.f32 %v4958, 0.0
        %v5193 = vmax.f32 %v4961, 0.0
        %v5194 = vmax.f32 %v4966, 0.0
        %v5195 = vmax.f32 %v4969, 0.0
        %v5196 = vmax.f32 %v4974, 0.0
        %v5197 = vmax.f32 %v4977, 0.0
        %v5198 = vmax.f32 %v4982, 0.0
        %v5199 = vmax.f32 %v4985, 0.0
        %v5200 = vmax.f32 %v4990, 0.0
        %v5201 = vmax.f32 %v4993, 0.0
        %v5202 = vmax.f32 %v4998, 0.0
        %v5203 = vmax.f32 %v5001, 0.0
        %v5204 = vmax.f32 %v5006, 0.0
        %v5205 = vmax.f32 %v5009, 0.0
        %v5206 = vmax.f32 %v5014, 0.0
        %v5207 = vmax.f32 %v5017, 0.0
        %v5208 = vmax.f32 %v5022, 0.0
        %v5209 = vmax.f32 %v5025, 0.0
        %v5210 = vmax.f32 %v5030, 0.0
        %v5211 = vmax.f32 %v5033, 0.0
        %v5212 = vmax.f32 %v5038, 0.0
        %v5213 = vmax.f32 %v5041, 0.0
        %v5214 = vmax.f32 %v5046, 0.0
        %v5215 = vmax.f32 %v5049, 0.0
        %v5216 = vmax.f32 %v5054, 0.0
        %v5217 = vmax.f32 %v5057, 0.0
        %v5218 = vmax.f32 %v5062, 0.0
        %v5219 = vmax.f32 %v5065, 0.0
        %v5220 = vmax.f32 %v5070, 0.0
        %v5221 = vmax.f32 %v5073, 0.0
        %v5222 = vmax.f32 %v5078, 0.0
        %v5223 = vmax.f32 %v5081, 0.0
        %v5224 = vmax.f32 %v5086, 0.0
        %v5225 = vmax.f32 %v5089, 0.0
        %v5226 = vmax.f32 %v5094, 0.0
        %v5227 = vmax.f32 %v5097, 0.0
        %v5228 = vmax.f32 %v5102, 0.0
        %v5229 = vmax.f32 %v5105, 0.0
        %v5230 = vmax.f32 %v5110, 0.0
        %v5231 = vmax.f32 %v5113, 0.0
        %v5232 = vmax.f32 %v5118, 0.0
        %v5233 = vmax.f32 %v5121, 0.0
        %v5234 = vmax.f32 %v5126, 0.0
        %v5235 = vmax.f32 %v5129, 0.0
        %v5236 = vmax.f32 %v5134, 0.0
        %v5237 = vmax.f32 %v5137, 0.0
        %v5238 = vmax.f32 %v5142, 0.0
        %v5239 = vmax.f32 %v5145, 0.0
        %v5240 = vmax.f32 %v5150, 0.0
        %v5241 = vmax.f32 %v5153, 0.0
        %v5242 = vmax.f32 %v5158, 0.0
        %v5243 = vmax.f32 %v5161, 0.0
        %v5244 = vpack.c.bf16 %v5165, %v5164
        %v5245 = vpack.c.bf16 %v5167, %v5166
        %v5246 = vpack.c.bf16 %v5169, %v5168
        %v5247 = vpack.c.bf16 %v5171, %v5170
        %v5248 = vpack.c.bf16 %v5173, %v5172
        %v5249 = vpack.c.bf16 %v5175, %v5174
        %v5250 = vpack.c.bf16 %v5177, %v5176
        %v5251 = vpack.c.bf16 %v5179, %v5178
        %v5252 = vpack.c.bf16 %v5181, %v5180
        %v5253 = vpack.c.bf16 %v5183, %v5182
        %v5254 = vpack.c.bf16 %v5185, %v5184
        %v5255 = vpack.c.bf16 %v5187, %v5186
        %v5256 = vpack.c.bf16 %v5189, %v5188
        %v5257 = vpack.c.bf16 %v5191, %v5190
        %v5258 = vpack.c.bf16 %v5193, %v5192
        %v5259 = vpack.c.bf16 %v5195, %v5194
        %v5260 = vpack.c.bf16 %v5197, %v5196
        %v5261 = vpack.c.bf16 %v5199, %v5198
        %v5262 = vpack.c.bf16 %v5201, %v5200
        %v5263 = vpack.c.bf16 %v5203, %v5202
        %v5264 = vpack.c.bf16 %v5205, %v5204
        %v5265 = vpack.c.bf16 %v5207, %v5206
        %v5266 = vpack.c.bf16 %v5209, %v5208
        %v5267 = vpack.c.bf16 %v5211, %v5210
        %v5268 = vpack.c.bf16 %v5213, %v5212
        %v5269 = vpack.c.bf16 %v5215, %v5214
        %v5270 = vpack.c.bf16 %v5217, %v5216
        %v5271 = vpack.c.bf16 %v5219, %v5218
        %v5272 = vpack.c.bf16 %v5221, %v5220
        %v5273 = vpack.c.bf16 %v5223, %v5222
        %v5274 = vpack.c.bf16 %v5225, %v5224
        %v5275 = vpack.c.bf16 %v5227, %v5226
        %v5276 = vpack.c.bf16 %v5229, %v5228
        %v5277 = vpack.c.bf16 %v5231, %v5230
        %v5278 = vpack.c.bf16 %v5233, %v5232
        %v5279 = vpack.c.bf16 %v5235, %v5234
        %v5280 = vpack.c.bf16 %v5237, %v5236
        %v5281 = vpack.c.bf16 %v5239, %v5238
        %v5282 = vpack.c.bf16 %v5241, %v5240
        %v5283 = vpack.c.bf16 %v5243, %v5242
        %v5284 = vld [vmem:[%s3] sm:$0xf]
        %v5285 = vld [vmem:[%s3 + $0x4] sm:$0xf]
        %v5286 = vld [vmem:[%s3 + $0x8] sm:$0xf]
        %v5287 = vld [vmem:[%s3 + $0xc] sm:$0xf]
        %v5288 = vld [vmem:[%s4] sm:$0x1]
        %v5290 = vlaneseq
        %v5291 = vshrl.u32 %v5290, 7
        %v5292 = vsub.s32 0, %v5291
        %v5293 = vrot.slane %v5288, %v5292
        %v5299 = vunpack.c.l.b16 %v5284
        %v5300 = vunpack.c.l.b16 %v5285
        %v5301 = vunpack.c.l.b16 %v5286
        %v5302 = vunpack.c.l.b16 %v5287
        %v5303 = vpack.c.b16 %v5300, %v5299
        %v5304 = vpack.c.b16 %v5302, %v5301
        %vm5307 = vcmask 261120
        %v5309 = vsel %vm5307, %v5244, 0
        %v5312 = vsel %vm5307, %v5245, 0
        %v5315 = vsel %vm5307, %v5246, 0
        %v5318 = vsel %vm5307, %v5247, 0
        %v5321 = vsel %vm5307, %v5248, 0
        %v5324 = vsel %vm5307, %v5249, 0
        %v5327 = vsel %vm5307, %v5250, 0
        %v5330 = vsel %vm5307, %v5251, 0
        %v5333 = vsel %vm5307, %v5252, 0
        %v5336 = vsel %vm5307, %v5253, 0
        %v5339 = vsel %vm5307, %v5254, 0
        %v5342 = vsel %vm5307, %v5255, 0
        %v5345 = vsel %vm5307, %v5256, 0
        %v5348 = vsel %vm5307, %v5257, 0
        %v5351 = vsel %vm5307, %v5258, 0
        %v5354 = vsel %vm5307, %v5259, 0
        %v5357 = vsel %vm5307, %v5260, 0
        %v5360 = vsel %vm5307, %v5261, 0
        %v5363 = vsel %vm5307, %v5262, 0
        %v5366 = vsel %vm5307, %v5263, 0
        %v5369 = vsel %vm5307, %v5264, 0
        %v5372 = vsel %vm5307, %v5265, 0
        %v5375 = vsel %vm5307, %v5266, 0
        %v5378 = vsel %vm5307, %v5267, 0
        %v5381 = vsel %vm5307, %v5268, 0
        %v5384 = vsel %vm5307, %v5269, 0
        %v5387 = vsel %vm5307, %v5270, 0
        %v5390 = vsel %vm5307, %v5271, 0
        %v5393 = vsel %vm5307, %v5272, 0
        %v5396 = vsel %vm5307, %v5273, 0
        %v5399 = vsel %vm5307, %v5274, 0
        %v5402 = vsel %vm5307, %v5275, 0
        %v5405 = vsel %vm5307, %v5276, 0
        %v5408 = vsel %vm5307, %v5277, 0
        %v5411 = vsel %vm5307, %v5278, 0
        %v5414 = vsel %vm5307, %v5279, 0
        %v5417 = vsel %vm5307, %v5280, 0
        %v5420 = vsel %vm5307, %v5281, 0
        %v5423 = vsel %vm5307, %v5282, 0
        %v5426 = vsel %vm5307, %v5283, 0
        %5428 = vmatprep.subr.bf16.mxu0 0
        %5429 = vmatpush1.bf16.msra.mxu0 %v5303
        %5430 = vmatprep.subr.bf16.mxu0 0
        %5431 = vmatpush1.bf16.msra.mxu0 %v5304
        %5432 = vmatprep.subr.bf16.mxu0 0
        %5433 = vmatpush1.bf16.msra.mxu0 0
        %5434 = vmatprep.subr.bf16.mxu0 0
        %5435 = vmatpush1.bf16.msra.mxu0 0
        %5436 = vmatprep.subr.bf16.mxu0 0
        %5437 = vmatpush1.bf16.msra.mxu0 0
        %5438 = vmatprep.subr.bf16.mxu0 0
        %5439 = vmatpush1.bf16.msra.mxu0 0
        %5440 = vmatprep.subr.bf16.mxu0 0
        %5441 = vmatpush1.bf16.msra.mxu0 0
        %5442 = vmatprep.subr.bf16.mxu0 0
        %5443 = vmatpush1.bf16.msra.mxu0 0
        %5444 = vmatprep.subr.bf16.mxu0 0
        %5445 = vmatpush1.bf16.msra.mxu0 0
        %5446 = vmatprep.subr.bf16.mxu0 0
        %5447 = vmatpush1.bf16.msra.mxu0 0
        %5448 = vmatprep.subr.bf16.mxu0 0
        %5449 = vmatpush1.bf16.msra.mxu0 0
        %5450 = vmatprep.subr.bf16.mxu0 0
        %5451 = vmatpush1.bf16.msra.mxu0 0
        %5452 = vmatprep.subr.bf16.mxu0 0
        %5453 = vmatpush1.bf16.msra.mxu0 0
        %5454 = vmatprep.subr.bf16.mxu0 0
        %5455 = vmatpush1.bf16.msra.mxu0 0
        %5456 = vmatprep.subr.bf16.mxu0 0
        %5457 = vmatpush1.bf16.msra.mxu0 0
        %5458 = vmatprep.subr.bf16.mxu0 0
        %5459 = vmatpush1.bf16.msra.mxu0 0
        %5460 = vmatprep.mubr.bf16.mxu0 0
        %5461 = vmatmul.mubr.bf16.gmra.mrb[0].mxu0 %v5309
        %v5462 = vpop.f32.mrb[0].mxu0
        %v5463 = vadd.f32 %v5293, %v5462
        %v5464 = vpop.f32.mrb[0].mxu0
        %v5465 = vpop.f32.mrb[0].mxu0
        %v5466 = vadd.f32 %v5293, %v5465
        %v5467 = vpop.f32.mrb[0].mxu0
        %5468 = vmatprep.mubr.bf16.mxu0 0
        %5469 = vmatmul.mubr.bf16.gmra.mrb[0].mxu0 %v5312
        %v5470 = vpop.f32.mrb[0].mxu0
        %v5471 = vadd.f32 %v5293, %v5470
        %v5472 = vpop.f32.mrb[0].mxu0
        %v5473 = vpop.f32.mrb[0].mxu0
        %v5474 = vadd.f32 %v5293, %v5473
        %v5475 = vpop.f32.mrb[0].mxu0
        %5476 = vmatprep.mubr.bf16.mxu0 0
        %5477 = vmatmul.mubr.bf16.gmra.mrb[0].mxu0 %v5315
        %v5478 = vpop.f32.mrb[0].mxu0
        %v5479 = vadd.f32 %v5293, %v5478
        %v5480 = vpop.f32.mrb[0].mxu0
        %v5481 = vpop.f32.mrb[0].mxu0
        %v5482 = vadd.f32 %v5293, %v5481
        %v5483 = vpop.f32.mrb[0].mxu0
        %5484 = vmatprep.mubr.bf16.mxu0 0
        %5485 = vmatmul.mubr.bf16.gmra.mrb[0].mxu0 %v5318
        %v5486 = vpop.f32.mrb[0].mxu0
        %v5487 = vadd.f32 %v5293, %v5486
        %v5488 = vpop.f32.mrb[0].mxu0
        %v5489 = vpop.f32.mrb[0].mxu0
        %v5490 = vadd.f32 %v5293, %v5489
        %v5491 = vpop.f32.mrb[0].mxu0
        %5492 = vmatprep.mubr.bf16.mxu0 0
        %5493 = vmatmul.mubr.bf16.gmra.mrb[0].mxu0 %v5321
        %v5494 = vpop.f32.mrb[0].mxu0
        %v5495 = vadd.f32 %v5293, %v5494
        %v5496 = vpop.f32.mrb[0].mxu0
        %v5497 = vpop.f32.mrb[0].mxu0
        %v5498 = vadd.f32 %v5293, %v5497
        %v5499 = vpop.f32.mrb[0].mxu0
        %5500 = vmatprep.mubr.bf16.mxu0 0
        %5501 = vmatmul.mubr.bf16.gmra.mrb[0].mxu0 %v5324
        %v5502 = vpop.f32.mrb[0].mxu0
        %v5503 = vadd.f32 %v5293, %v5502
        %v5504 = vpop.f32.mrb[0].mxu0
        %v5505 = vpop.f32.mrb[0].mxu0
        %v5506 = vadd.f32 %v5293, %v5505
        %v5507 = vpop.f32.mrb[0].mxu0
        %5508 = vmatprep.mubr.bf16.mxu0 0
        %5509 = vmatmul.mubr.bf16.gmra.mrb[0].mxu0 %v5327
        %v5510 = vpop.f32.mrb[0].mxu0
        %v5511 = vadd.f32 %v5293, %v5510
        %v5512 = vpop.f32.mrb[0].mxu0
        %v5513 = vpop.f32.mrb[0].mxu0
        %v5514 = vadd.f32 %v5293, %v5513
        %v5515 = vpop.f32.mrb[0].mxu0
        %5516 = vmatprep.mubr.bf16.mxu0 0
        %5517 = vmatmul.mubr.bf16.gmra.mrb[0].mxu0 %v5330
        %v5518 = vpop.f32.mrb[0].mxu0
        %v5519 = vadd.f32 %v5293, %v5518
        %v5520 = vpop.f32.mrb[0].mxu0
        %v5521 = vpop.f32.mrb[0].mxu0
        %v5522 = vadd.f32 %v5293, %v5521
        %v5523 = vpop.f32.mrb[0].mxu0
        %5524 = vmatprep.mubr.bf16.mxu0 0
        %5525 = vmatmul.mubr.bf16.gmra.mrb[0].mxu0 %v5333
        %v5526 = vpop.f32.mrb[0].mxu0
        %v5527 = vadd.f32 %v5293, %v5526
        %v5528 = vpop.f32.mrb[0].mxu0
        %v5529 = vpop.f32.mrb[0].mxu0
        %v5530 = vadd.f32 %v5293, %v5529
        %v5531 = vpop.f32.mrb[0].mxu0
        %5532 = vmatprep.mubr.bf16.mxu0 0
        %5533 = vmatmul.mubr.bf16.gmra.mrb[0].mxu0 %v5336
        %v5534 = vpop.f32.mrb[0].mxu0
        %v5535 = vadd.f32 %v5293, %v5534
        %v5536 = vpop.f32.mrb[0].mxu0
        %v5537 = vpop.f32.mrb[0].mxu0
        %v5538 = vadd.f32 %v5293, %v5537
        %v5539 = vpop.f32.mrb[0].mxu0
        %5540 = vmatprep.mubr.bf16.mxu0 0
        %5541 = vmatmul.mubr.bf16.gmra.mrb[0].mxu0 %v5339
        %v5542 = vpop.f32.mrb[0].mxu0
        %v5543 = vadd.f32 %v5293, %v5542
        %v5544 = vpop.f32.mrb[0].mxu0
        %v5545 = vpop.f32.mrb[0].mxu0
        %v5546 = vadd.f32 %v5293, %v5545
        %v5547 = vpop.f32.mrb[0].mxu0
        %5548 = vmatprep.mubr.bf16.mxu0 0
        %5549 = vmatmul.mubr.bf16.gmra.mrb[0].mxu0 %v5342
        %v5550 = vpop.f32.mrb[0].mxu0
        %v5551 = vadd.f32 %v5293, %v5550
        %v5552 = vpop.f32.mrb[0].mxu0
        %v5553 = vpop.f32.mrb[0].mxu0
        %v5554 = vadd.f32 %v5293, %v5553
        %v5555 = vpop.f32.mrb[0].mxu0
        %5556 = vmatprep.mubr.bf16.mxu0 0
        %5557 = vmatmul.mubr.bf16.gmra.mrb[0].mxu0 %v5345
        %v5558 = vpop.f32.mrb[0].mxu0
        %v5559 = vadd.f32 %v5293, %v5558
        %v5560 = vpop.f32.mrb[0].mxu0
        %v5561 = vpop.f32.mrb[0].mxu0
        %v5562 = vadd.f32 %v5293, %v5561
        %v5563 = vpop.f32.mrb[0].mxu0
        %5564 = vmatprep.mubr.bf16.mxu0 0
        %5565 = vmatmul.mubr.bf16.gmra.mrb[0].mxu0 %v5348
        %v5566 = vpop.f32.mrb[0].mxu0
        %v5567 = vadd.f32 %v5293, %v5566
        %v5568 = vpop.f32.mrb[0].mxu0
        %v5569 = vpop.f32.mrb[0].mxu0
        %v5570 = vadd.f32 %v5293, %v5569
        %v5571 = vpop.f32.mrb[0].mxu0
        %5572 = vmatprep.mubr.bf16.mxu0 0
        %5573 = vmatmul.mubr.bf16.gmra.mrb[0].mxu0 %v5351
        %v5574 = vpop.f32.mrb[0].mxu0
        %v5575 = vadd.f32 %v5293, %v5574
        %v5576 = vpop.f32.mrb[0].mxu0
        %v5577 = vpop.f32.mrb[0].mxu0
        %v5578 = vadd.f32 %v5293, %v5577
        %v5579 = vpop.f32.mrb[0].mxu0
        %5580 = vmatprep.mubr.bf16.mxu0 0
        %5581 = vmatmul.mubr.bf16.gmra.mrb[0].mxu0 %v5354
        %v5582 = vpop.f32.mrb[0].mxu0
        %v5583 = vadd.f32 %v5293, %v5582
        %v5584 = vpop.f32.mrb[0].mxu0
        %v5585 = vpop.f32.mrb[0].mxu0
        %v5586 = vadd.f32 %v5293, %v5585
        %v5587 = vpop.f32.mrb[0].mxu0
        %5588 = vmatprep.mubr.bf16.mxu0 0
        %5589 = vmatmul.mubr.bf16.gmra.mrb[0].mxu0 %v5357
        %v5590 = vpop.f32.mrb[0].mxu0
        %v5591 = vadd.f32 %v5293, %v5590
        %v5592 = vpop.f32.mrb[0].mxu0
        %v5593 = vpop.f32.mrb[0].mxu0
        %v5594 = vadd.f32 %v5293, %v5593
        %v5595 = vpop.f32.mrb[0].mxu0
        %5596 = vmatprep.mubr.bf16.mxu0 0
        %5597 = vmatmul.mubr.bf16.gmra.mrb[0].mxu0 %v5360
        %v5598 = vpop.f32.mrb[0].mxu0
        %v5599 = vadd.f32 %v5293, %v5598
        %v5600 = vpop.f32.mrb[0].mxu0
        %v5601 = vpop.f32.mrb[0].mxu0
        %v5602 = vadd.f32 %v5293, %v5601
        %v5603 = vpop.f32.mrb[0].mxu0
        %5604 = vmatprep.mubr.bf16.mxu0 0
        %5605 = vmatmul.mubr.bf16.gmra.mrb[0].mxu0 %v5363
        %v5606 = vpop.f32.mrb[0].mxu0
        %v5607 = vadd.f32 %v5293, %v5606
        %v5608 = vpop.f32.mrb[0].mxu0
        %v5609 = vpop.f32.mrb[0].mxu0
        %v5610 = vadd.f32 %v5293, %v5609
        %v5611 = vpop.f32.mrb[0].mxu0
        %5612 = vmatprep.mubr.bf16.mxu0 0
        %5613 = vmatmul.mubr.bf16.gmra.mrb[0].mxu0 %v5366
        %v5614 = vpop.f32.mrb[0].mxu0
        %v5615 = vadd.f32 %v5293, %v5614
        %v5616 = vpop.f32.mrb[0].mxu0
        %v5617 = vpop.f32.mrb[0].mxu0
        %v5618 = vadd.f32 %v5293, %v5617
        %v5619 = vpop.f32.mrb[0].mxu0
        %5620 = vmatprep.mubr.bf16.mxu0 0
        %5621 = vmatmul.mubr.bf16.gmra.mrb[0].mxu0 %v5369
        %v5622 = vpop.f32.mrb[0].mxu0
        %v5623 = vadd.f32 %v5293, %v5622
        %v5624 = vpop.f32.mrb[0].mxu0
        %v5625 = vpop.f32.mrb[0].mxu0
        %v5626 = vadd.f32 %v5293, %v5625
        %v5627 = vpop.f32.mrb[0].mxu0
        %5628 = vmatprep.mubr.bf16.mxu0 0
        %5629 = vmatmul.mubr.bf16.gmra.mrb[0].mxu0 %v5372
        %v5630 = vpop.f32.mrb[0].mxu0
        %v5631 = vadd.f32 %v5293, %v5630
        %v5632 = vpop.f32.mrb[0].mxu0
        %v5633 = vpop.f32.mrb[0].mxu0
        %v5634 = vadd.f32 %v5293, %v5633
        %v5635 = vpop.f32.mrb[0].mxu0
        %5636 = vmatprep.mubr.bf16.mxu0 0
        %5637 = vmatmul.mubr.bf16.gmra.mrb[0].mxu0 %v5375
        %v5638 = vpop.f32.mrb[0].mxu0
        %v5639 = vadd.f32 %v5293, %v5638
        %v5640 = vpop.f32.mrb[0].mxu0
        %v5641 = vpop.f32.mrb[0].mxu0
        %v5642 = vadd.f32 %v5293, %v5641
        %v5643 = vpop.f32.mrb[0].mxu0
        %5644 = vmatprep.mubr.bf16.mxu0 0
        %5645 = vmatmul.mubr.bf16.gmra.mrb[0].mxu0 %v5378
        %v5646 = vpop.f32.mrb[0].mxu0
        %v5647 = vadd.f32 %v5293, %v5646
        %v5648 = vpop.f32.mrb[0].mxu0
        %v5649 = vpop.f32.mrb[0].mxu0
        %v5650 = vadd.f32 %v5293, %v5649
        %v5651 = vpop.f32.mrb[0].mxu0
        %5652 = vmatprep.mubr.bf16.mxu0 0
        %5653 = vmatmul.mubr.bf16.gmra.mrb[0].mxu0 %v5381
        %v5654 = vpop.f32.mrb[0].mxu0
        %v5655 = vadd.f32 %v5293, %v5654
        %v5656 = vpop.f32.mrb[0].mxu0
        %v5657 = vpop.f32.mrb[0].mxu0
        %v5658 = vadd.f32 %v5293, %v5657
        %v5659 = vpop.f32.mrb[0].mxu0
        %5660 = vmatprep.mubr.bf16.mxu0 0
        %5661 = vmatmul.mubr.bf16.gmra.mrb[0].mxu0 %v5384
        %v5662 = vpop.f32.mrb[0].mxu0
        %v5663 = vadd.f32 %v5293, %v5662
        %v5664 = vpop.f32.mrb[0].mxu0
        %v5665 = vpop.f32.mrb[0].mxu0
        %v5666 = vadd.f32 %v5293, %v5665
        %v5667 = vpop.f32.mrb[0].mxu0
        %5668 = vmatprep.mubr.bf16.mxu0 0
        %5669 = vmatmul.mubr.bf16.gmra.mrb[0].mxu0 %v5387
        %v5670 = vpop.f32.mrb[0].mxu0
        %v5671 = vadd.f32 %v5293, %v5670
        %v5672 = vpop.f32.mrb[0].mxu0
        %v5673 = vpop.f32.mrb[0].mxu0
        %v5674 = vadd.f32 %v5293, %v5673
        %v5675 = vpop.f32.mrb[0].mxu0
        %5676 = vmatprep.mubr.bf16.mxu0 0
        %5677 = vmatmul.mubr.bf16.gmra.mrb[0].mxu0 %v5390
        %v5678 = vpop.f32.mrb[0].mxu0
        %v5679 = vadd.f32 %v5293, %v5678
        %v5680 = vpop.f32.mrb[0].mxu0
        %v5681 = vpop.f32.mrb[0].mxu0
        %v5682 = vadd.f32 %v5293, %v5681
        %v5683 = vpop.f32.mrb[0].mxu0
        %5684 = vmatprep.mubr.bf16.mxu0 0
        %5685 = vmatmul.mubr.bf16.gmra.mrb[0].mxu0 %v5393
        %v5686 = vpop.f32.mrb[0].mxu0
        %v5687 = vadd.f32 %v5293, %v5686
        %v5688 = vpop.f32.mrb[0].mxu0
        %v5689 = vpop.f32.mrb[0].mxu0
        %v5690 = vadd.f32 %v5293, %v5689
        %v5691 = vpop.f32.mrb[0].mxu0
        %5692 = vmatprep.mubr.bf16.mxu0 0
        %5693 = vmatmul.mubr.bf16.gmra.mrb[0].mxu0 %v5396
        %v5694 = vpop.f32.mrb[0].mxu0
        %v5695 = vadd.f32 %v5293, %v5694
        %v5696 = vpop.f32.mrb[0].mxu0
        %v5697 = vpop.f32.mrb[0].mxu0
        %v5698 = vadd.f32 %v5293, %v5697
        %v5699 = vpop.f32.mrb[0].mxu0
        %5700 = vmatprep.mubr.bf16.mxu0 0
        %5701 = vmatmul.mubr.bf16.gmra.mrb[0].mxu0 %v5399
        %v5702 = vpop.f32.mrb[0].mxu0
        %v5703 = vadd.f32 %v5293, %v5702
        %v5704 = vpop.f32.mrb[0].mxu0
        %v5705 = vpop.f32.mrb[0].mxu0
        %v5706 = vadd.f32 %v5293, %v5705
        %v5707 = vpop.f32.mrb[0].mxu0
        %5708 = vmatprep.mubr.bf16.mxu0 0
        %5709 = vmatmul.mubr.bf16.gmra.mrb[0].mxu0 %v5402
        %v5710 = vpop.f32.mrb[0].mxu0
        %v5711 = vadd.f32 %v5293, %v5710
        %v5712 = vpop.f32.mrb[0].mxu0
        %v5713 = vpop.f32.mrb[0].mxu0
        %v5714 = vadd.f32 %v5293, %v5713
        %v5715 = vpop.f32.mrb[0].mxu0
        %5716 = vmatprep.mubr.bf16.mxu0 0
        %5717 = vmatmul.mubr.bf16.gmra.mrb[0].mxu0 %v5405
        %v5718 = vpop.f32.mrb[0].mxu0
        %v5719 = vadd.f32 %v5293, %v5718
        %v5720 = vpop.f32.mrb[0].mxu0
        %v5721 = vpop.f32.mrb[0].mxu0
        %v5722 = vadd.f32 %v5293, %v5721
        %v5723 = vpop.f32.mrb[0].mxu0
        %5724 = vmatprep.mubr.bf16.mxu0 0
        %5725 = vmatmul.mubr.bf16.gmra.mrb[0].mxu0 %v5408
        %v5726 = vpop.f32.mrb[0].mxu0
        %v5727 = vadd.f32 %v5293, %v5726
        %v5728 = vpop.f32.mrb[0].mxu0
        %v5729 = vpop.f32.mrb[0].mxu0
        %v5730 = vadd.f32 %v5293, %v5729
        %v5731 = vpop.f32.mrb[0].mxu0
        %5732 = vmatprep.mubr.bf16.mxu0 0
        %5733 = vmatmul.mubr.bf16.gmra.mrb[0].mxu0 %v5411
        %v5734 = vpop.f32.mrb[0].mxu0
        %v5735 = vadd.f32 %v5293, %v5734
        %v5736 = vpop.f32.mrb[0].mxu0
        %v5737 = vpop.f32.mrb[0].mxu0
        %v5738 = vadd.f32 %v5293, %v5737
        %v5739 = vpop.f32.mrb[0].mxu0
        %5740 = vmatprep.mubr.bf16.mxu0 0
        %5741 = vmatmul.mubr.bf16.gmra.mrb[0].mxu0 %v5414
        %v5742 = vpop.f32.mrb[0].mxu0
        %v5743 = vadd.f32 %v5293, %v5742
        %v5744 = vpop.f32.mrb[0].mxu0
        %v5745 = vpop.f32.mrb[0].mxu0
        %v5746 = vadd.f32 %v5293, %v5745
        %v5747 = vpop.f32.mrb[0].mxu0
        %5748 = vmatprep.mubr.bf16.mxu0 0
        %5749 = vmatmul.mubr.bf16.gmra.mrb[0].mxu0 %v5417
        %v5750 = vpop.f32.mrb[0].mxu0
        %v5751 = vadd.f32 %v5293, %v5750
        %v5752 = vpop.f32.mrb[0].mxu0
        %v5753 = vpop.f32.mrb[0].mxu0
        %v5754 = vadd.f32 %v5293, %v5753
        %v5755 = vpop.f32.mrb[0].mxu0
        %5756 = vmatprep.mubr.bf16.mxu0 0
        %5757 = vmatmul.mubr.bf16.gmra.mrb[0].mxu0 %v5420
        %v5758 = vpop.f32.mrb[0].mxu0
        %v5759 = vadd.f32 %v5293, %v5758
        %v5760 = vpop.f32.mrb[0].mxu0
        %v5761 = vpop.f32.mrb[0].mxu0
        %v5762 = vadd.f32 %v5293, %v5761
        %v5763 = vpop.f32.mrb[0].mxu0
        %5764 = vmatprep.mubr.bf16.mxu0 0
        %5765 = vmatmul.mubr.bf16.gmra.mrb[0].mxu0 %v5423
        %v5766 = vpop.f32.mrb[0].mxu0
        %v5767 = vadd.f32 %v5293, %v5766
        %v5768 = vpop.f32.mrb[0].mxu0
        %v5769 = vpop.f32.mrb[0].mxu0
        %v5770 = vadd.f32 %v5293, %v5769
        %v5771 = vpop.f32.mrb[0].mxu0
        %5772 = vmatprep.mubr.bf16.mxu0 0
        %5773 = vmatmul.mubr.bf16.gmra.mrb[0].mxu0 %v5426
        %v5774 = vpop.f32.mrb[0].mxu0
        %v5775 = vadd.f32 %v5293, %v5774
        %v5776 = vpop.f32.mrb[0].mxu0
        %v5777 = vpop.f32.mrb[0].mxu0
        %v5778 = vadd.f32 %v5293, %v5777
        %v5779 = vpop.f32.mrb[0].mxu0
        %5780 = vdwg.mxu0
        %v5781 = vmax.f32 %v5463, 0.0
        %v5782 = vmax.f32 %v5466, 0.0
        %v5783 = vmax.f32 %v5471, 0.0
        %v5784 = vmax.f32 %v5474, 0.0
        %v5785 = vmax.f32 %v5479, 0.0
        %v5786 = vmax.f32 %v5482, 0.0
        %v5787 = vmax.f32 %v5487, 0.0
        %v5788 = vmax.f32 %v5490, 0.0
        %v5789 = vmax.f32 %v5495, 0.0
        %v5790 = vmax.f32 %v5498, 0.0
        %v5791 = vmax.f32 %v5503, 0.0
        %v5792 = vmax.f32 %v5506, 0.0
        %v5793 = vmax.f32 %v5511, 0.0
        %v5794 = vmax.f32 %v5514, 0.0
        %v5795 = vmax.f32 %v5519, 0.0
        %v5796 = vmax.f32 %v5522, 0.0
        %v5797 = vmax.f32 %v5527, 0.0
        %v5798 = vmax.f32 %v5530, 0.0
        %v5799 = vmax.f32 %v5535, 0.0
        %v5800 = vmax.f32 %v5538, 0.0
        %v5801 = vmax.f32 %v5543, 0.0
        %v5802 = vmax.f32 %v5546, 0.0
        %v5803 = vmax.f32 %v5551, 0.0
        %v5804 = vmax.f32 %v5554, 0.0
        %v5805 = vmax.f32 %v5559, 0.0
        %v5806 = vmax.f32 %v5562, 0.0
        %v5807 = vmax.f32 %v5567, 0.0
        %v5808 = vmax.f32 %v5570, 0.0
        %v5809 = vmax.f32 %v5575, 0.0
        %v5810 = vmax.f32 %v5578, 0.0
        %v5811 = vmax.f32 %v5583, 0.0
        %v5812 = vmax.f32 %v5586, 0.0
        %v5813 = vmax.f32 %v5591, 0.0
        %v5814 = vmax.f32 %v5594, 0.0
        %v5815 = vmax.f32 %v5599, 0.0
        %v5816 = vmax.f32 %v5602, 0.0
        %v5817 = vmax.f32 %v5607, 0.0
        %v5818 = vmax.f32 %v5610, 0.0
        %v5819 = vmax.f32 %v5615, 0.0
        %v5820 = vmax.f32 %v5618, 0.0
        %v5821 = vmax.f32 %v5623, 0.0
        %v5822 = vmax.f32 %v5626, 0.0
        %v5823 = vmax.f32 %v5631, 0.0
        %v5824 = vmax.f32 %v5634, 0.0
        %v5825 = vmax.f32 %v5639, 0.0
        %v5826 = vmax.f32 %v5642, 0.0
        %v5827 = vmax.f32 %v5647, 0.0
        %v5828 = vmax.f32 %v5650, 0.0
        %v5829 = vmax.f32 %v5655, 0.0
        %v5830 = vmax.f32 %v5658, 0.0
        %v5831 = vmax.f32 %v5663, 0.0
        %v5832 = vmax.f32 %v5666, 0.0
        %v5833 = vmax.f32 %v5671, 0.0
        %v5834 = vmax.f32 %v5674, 0.0
        %v5835 = vmax.f32 %v5679, 0.0
        %v5836 = vmax.f32 %v5682, 0.0
        %v5837 = vmax.f32 %v5687, 0.0
        %v5838 = vmax.f32 %v5690, 0.0
        %v5839 = vmax.f32 %v5695, 0.0
        %v5840 = vmax.f32 %v5698, 0.0
        %v5841 = vmax.f32 %v5703, 0.0
        %v5842 = vmax.f32 %v5706, 0.0
        %v5843 = vmax.f32 %v5711, 0.0
        %v5844 = vmax.f32 %v5714, 0.0
        %v5845 = vmax.f32 %v5719, 0.0
        %v5846 = vmax.f32 %v5722, 0.0
        %v5847 = vmax.f32 %v5727, 0.0
        %v5848 = vmax.f32 %v5730, 0.0
        %v5849 = vmax.f32 %v5735, 0.0
        %v5850 = vmax.f32 %v5738, 0.0
        %v5851 = vmax.f32 %v5743, 0.0
        %v5852 = vmax.f32 %v5746, 0.0
        %v5853 = vmax.f32 %v5751, 0.0
        %v5854 = vmax.f32 %v5754, 0.0
        %v5855 = vmax.f32 %v5759, 0.0
        %v5856 = vmax.f32 %v5762, 0.0
        %v5857 = vmax.f32 %v5767, 0.0
        %v5858 = vmax.f32 %v5770, 0.0
        %v5859 = vmax.f32 %v5775, 0.0
        %v5860 = vmax.f32 %v5778, 0.0
        %v5861 = vpack.c.bf16 %v5782, %v5781
        %v5862 = vpack.c.bf16 %v5784, %v5783
        %v5863 = vpack.c.bf16 %v5786, %v5785
        %v5864 = vpack.c.bf16 %v5788, %v5787
        %v5865 = vpack.c.bf16 %v5790, %v5789
        %v5866 = vpack.c.bf16 %v5792, %v5791
        %v5867 = vpack.c.bf16 %v5794, %v5793
        %v5868 = vpack.c.bf16 %v5796, %v5795
        %v5869 = vpack.c.bf16 %v5798, %v5797
        %v5870 = vpack.c.bf16 %v5800, %v5799
        %v5871 = vpack.c.bf16 %v5802, %v5801
        %v5872 = vpack.c.bf16 %v5804, %v5803
        %v5873 = vpack.c.bf16 %v5806, %v5805
        %v5874 = vpack.c.bf16 %v5808, %v5807
        %v5875 = vpack.c.bf16 %v5810, %v5809
        %v5876 = vpack.c.bf16 %v5812, %v5811
        %v5877 = vpack.c.bf16 %v5814, %v5813
        %v5878 = vpack.c.bf16 %v5816, %v5815
        %v5879 = vpack.c.bf16 %v5818, %v5817
        %v5880 = vpack.c.bf16 %v5820, %v5819
        %v5881 = vpack.c.bf16 %v5822, %v5821
        %v5882 = vpack.c.bf16 %v5824, %v5823
        %v5883 = vpack.c.bf16 %v5826, %v5825
        %v5884 = vpack.c.bf16 %v5828, %v5827
        %v5885 = vpack.c.bf16 %v5830, %v5829
        %v5886 = vpack.c.bf16 %v5832, %v5831
        %v5887 = vpack.c.bf16 %v5834, %v5833
        %v5888 = vpack.c.bf16 %v5836, %v5835
        %v5889 = vpack.c.bf16 %v5838, %v5837
        %v5890 = vpack.c.bf16 %v5840, %v5839
        %v5891 = vpack.c.bf16 %v5842, %v5841
        %v5892 = vpack.c.bf16 %v5844, %v5843
        %v5893 = vpack.c.bf16 %v5846, %v5845
        %v5894 = vpack.c.bf16 %v5848, %v5847
        %v5895 = vpack.c.bf16 %v5850, %v5849
        %v5896 = vpack.c.bf16 %v5852, %v5851
        %v5897 = vpack.c.bf16 %v5854, %v5853
        %v5898 = vpack.c.bf16 %v5856, %v5855
        %v5899 = vpack.c.bf16 %v5858, %v5857
        %v5900 = vpack.c.bf16 %v5860, %v5859
        %v5901 = vld [vmem:[%s5] sm:$0xf]
        %v5902 = vld [vmem:[%s5 + $0x4] sm:$0xf]
        %v5903 = vld [vmem:[%s5 + $0x8] sm:$0xf]
        %v5904 = vld [vmem:[%s5 + $0xc] sm:$0xf]
        %v5905 = vld [vmem:[%s6] sm:$0x1]
        %v5907 = vlaneseq
        %v5908 = vshrl.u32 %v5907, 7
        %v5909 = vsub.s32 0, %v5908
        %v5910 = vrot.slane %v5905, %v5909
        %v5916 = vunpack.c.l.b16 %v5901
        %v5917 = vunpack.c.l.b16 %v5902
        %v5918 = vunpack.c.l.b16 %v5903
        %v5919 = vunpack.c.l.b16 %v5904
        %v5920 = vpack.c.b16 %v5917, %v5916
        %v5921 = vpack.c.b16 %v5919, %v5918
        %v5925 = vsel %vm5307, %v5861, 0
        %v5928 = vsel %vm5307, %v5862, 0
        %v5931 = vsel %vm5307, %v5863, 0
        %v5934 = vsel %vm5307, %v5864, 0
        %v5937 = vsel %vm5307, %v5865, 0
        %v5940 = vsel %vm5307, %v5866, 0
        %v5943 = vsel %vm5307, %v5867, 0
        %v5946 = vsel %vm5307, %v5868, 0
        %v5949 = vsel %vm5307, %v5869, 0
        %v5952 = vsel %vm5307, %v5870, 0
        %v5955 = vsel %vm5307, %v5871, 0
        %v5958 = vsel %vm5307, %v5872, 0
        %v5961 = vsel %vm5307, %v5873, 0
        %v5964 = vsel %vm5307, %v5874, 0
        %v5967 = vsel %vm5307, %v5875, 0
        %v5970 = vsel %vm5307, %v5876, 0
        %v5973 = vsel %vm5307, %v5877, 0
        %v5976 = vsel %vm5307, %v5878, 0
        %v5979 = vsel %vm5307, %v5879, 0
        %v5982 = vsel %vm5307, %v5880, 0
        %v5985 = vsel %vm5307, %v5881, 0
        %v5988 = vsel %vm5307, %v5882, 0
        %v5991 = vsel %vm5307, %v5883, 0
        %v5994 = vsel %vm5307, %v5884, 0
        %v5997 = vsel %vm5307, %v5885, 0
        %v6000 = vsel %vm5307, %v5886, 0
        %v6003 = vsel %vm5307, %v5887, 0
        %v6006 = vsel %vm5307, %v5888, 0
        %v6009 = vsel %vm5307, %v5889, 0
        %v6012 = vsel %vm5307, %v5890, 0
        %v6015 = vsel %vm5307, %v5891, 0
        %v6018 = vsel %vm5307, %v5892, 0
        %v6021 = vsel %vm5307, %v5893, 0
        %v6024 = vsel %vm5307, %v5894, 0
        %v6027 = vsel %vm5307, %v5895, 0
        %v6030 = vsel %vm5307, %v5896, 0
        %v6033 = vsel %vm5307, %v5897, 0
        %v6036 = vsel %vm5307, %v5898, 0
        %v6039 = vsel %vm5307, %v5899, 0
        %v6042 = vsel %vm5307, %v5900, 0
        %6044 = vmatprep.subr.bf16.mxu0 0
        %6045 = vmatpush1.bf16.msra.mxu0 %v5920
        %6046 = vmatprep.subr.bf16.mxu0 0
        %6047 = vmatpush1.bf16.msra.mxu0 %v5921
        %6048 = vmatprep.subr.bf16.mxu0 0
        %6049 = vmatpush1.bf16.msra.mxu0 0
        %6050 = vmatprep.subr.bf16.mxu0 0
        %6051 = vmatpush1.bf16.msra.mxu0 0
        %6052 = vmatprep.subr.bf16.mxu0 0
        %6053 = vmatpush1.bf16.msra.mxu0 0
        %6054 = vmatprep.subr.bf16.mxu0 0
        %6055 = vmatpush1.bf16.msra.mxu0 0
        %6056 = vmatprep.subr.bf16.mxu0 0
        %6057 = vmatpush1.bf16.msra.mxu0 0
        %6058 = vmatprep.subr.bf16.mxu0 0
        %6059 = vmatpush1.bf16.msra.mxu0 0
        %6060 = vmatprep.subr.bf16.mxu0 0
        %6061 = vmatpush1.bf16.msra.mxu0 0
        %6062 = vmatprep.subr.bf16.mxu0 0
        %6063 = vmatpush1.bf16.msra.mxu0 0
        %6064 = vmatprep.subr.bf16.mxu0 0
        %6065 = vmatpush1.bf16.msra.mxu0 0
        %6066 = vmatprep.subr.bf16.mxu0 0
        %6067 = vmatpush1.bf16.msra.mxu0 0
        %6068 = vmatprep.subr.bf16.mxu0 0
        %6069 = vmatpush1.bf16.msra.mxu0 0
        %6070 = vmatprep.subr.bf16.mxu0 0
        %6071 = vmatpush1.bf16.msra.mxu0 0
        %6072 = vmatprep.subr.bf16.mxu0 0
        %6073 = vmatpush1.bf16.msra.mxu0 0
        %6074 = vmatprep.subr.bf16.mxu0 0
        %6075 = vmatpush1.bf16.msra.mxu0 0
        %6076 = vmatprep.mubr.bf16.mxu0 0
        %6077 = vmatmul.mubr.bf16.gmra.mrb[0].mxu0 %v5925
        %v6078 = vpop.f32.mrb[0].mxu0
        %v6079 = vadd.f32 %v5910, %v6078
        %v6080 = vpop.f32.mrb[0].mxu0
        %v6081 = vpop.f32.mrb[0].mxu0
        %v6082 = vadd.f32 %v5910, %v6081
        %v6083 = vpop.f32.mrb[0].mxu0
        %6084 = vmatprep.mubr.bf16.mxu0 0
        %6085 = vmatmul.mubr.bf16.gmra.mrb[0].mxu0 %v5928
        %v6086 = vpop.f32.mrb[0].mxu0
        %v6087 = vadd.f32 %v5910, %v6086
        %v6088 = vpop.f32.mrb[0].mxu0
        %v6089 = vpop.f32.mrb[0].mxu0
        %v6090 = vadd.f32 %v5910, %v6089
        %v6091 = vpop.f32.mrb[0].mxu0
        %6092 = vmatprep.mubr.bf16.mxu0 0
        %6093 = vmatmul.mubr.bf16.gmra.mrb[0].mxu0 %v5931
        %v6094 = vpop.f32.mrb[0].mxu0
        %v6095 = vadd.f32 %v5910, %v6094
        %v6096 = vpop.f32.mrb[0].mxu0
        %v6097 = vpop.f32.mrb[0].mxu0
        %v6098 = vadd.f32 %v5910, %v6097
        %v6099 = vpop.f32.mrb[0].mxu0
        %6100 = vmatprep.mubr.bf16.mxu0 0
        %6101 = vmatmul.mubr.bf16.gmra.mrb[0].mxu0 %v5934
        %v6102 = vpop.f32.mrb[0].mxu0
        %v6103 = vadd.f32 %v5910, %v6102
        %v6104 = vpop.f32.mrb[0].mxu0
        %v6105 = vpop.f32.mrb[0].mxu0
        %v6106 = vadd.f32 %v5910, %v6105
        %v6107 = vpop.f32.mrb[0].mxu0
        %6108 = vmatprep.mubr.bf16.mxu0 0
        %6109 = vmatmul.mubr.bf16.gmra.mrb[0].mxu0 %v5937
        %v6110 = vpop.f32.mrb[0].mxu0
        %v6111 = vadd.f32 %v5910, %v6110
        %v6112 = vpop.f32.mrb[0].mxu0
        %v6113 = vpop.f32.mrb[0].mxu0
        %v6114 = vadd.f32 %v5910, %v6113
        %v6115 = vpop.f32.mrb[0].mxu0
        %6116 = vmatprep.mubr.bf16.mxu0 0
        %6117 = vmatmul.mubr.bf16.gmra.mrb[0].mxu0 %v5940
        %v6118 = vpop.f32.mrb[0].mxu0
        %v6119 = vadd.f32 %v5910, %v6118
        %v6120 = vpop.f32.mrb[0].mxu0
        %v6121 = vpop.f32.mrb[0].mxu0
        %v6122 = vadd.f32 %v5910, %v6121
        %v6123 = vpop.f32.mrb[0].mxu0
        %6124 = vmatprep.mubr.bf16.mxu0 0
        %6125 = vmatmul.mubr.bf16.gmra.mrb[0].mxu0 %v5943
        %v6126 = vpop.f32.mrb[0].mxu0
        %v6127 = vadd.f32 %v5910, %v6126
        %v6128 = vpop.f32.mrb[0].mxu0
        %v6129 = vpop.f32.mrb[0].mxu0
        %v6130 = vadd.f32 %v5910, %v6129
        %v6131 = vpop.f32.mrb[0].mxu0
        %6132 = vmatprep.mubr.bf16.mxu0 0
        %6133 = vmatmul.mubr.bf16.gmra.mrb[0].mxu0 %v5946
        %v6134 = vpop.f32.mrb[0].mxu0
        %v6135 = vadd.f32 %v5910, %v6134
        %v6136 = vpop.f32.mrb[0].mxu0
        %v6137 = vpop.f32.mrb[0].mxu0
        %v6138 = vadd.f32 %v5910, %v6137
        %v6139 = vpop.f32.mrb[0].mxu0
        %6140 = vmatprep.mubr.bf16.mxu0 0
        %6141 = vmatmul.mubr.bf16.gmra.mrb[0].mxu0 %v5949
        %v6142 = vpop.f32.mrb[0].mxu0
        %v6143 = vadd.f32 %v5910, %v6142
        %v6144 = vpop.f32.mrb[0].mxu0
        %v6145 = vpop.f32.mrb[0].mxu0
        %v6146 = vadd.f32 %v5910, %v6145
        %v6147 = vpop.f32.mrb[0].mxu0
        %6148 = vmatprep.mubr.bf16.mxu0 0
        %6149 = vmatmul.mubr.bf16.gmra.mrb[0].mxu0 %v5952
        %v6150 = vpop.f32.mrb[0].mxu0
        %v6151 = vadd.f32 %v5910, %v6150
        %v6152 = vpop.f32.mrb[0].mxu0
        %v6153 = vpop.f32.mrb[0].mxu0
        %v6154 = vadd.f32 %v5910, %v6153
        %v6155 = vpop.f32.mrb[0].mxu0
        %6156 = vmatprep.mubr.bf16.mxu0 0
        %6157 = vmatmul.mubr.bf16.gmra.mrb[0].mxu0 %v5955
        %v6158 = vpop.f32.mrb[0].mxu0
        %v6159 = vadd.f32 %v5910, %v6158
        %v6160 = vpop.f32.mrb[0].mxu0
        %v6161 = vpop.f32.mrb[0].mxu0
        %v6162 = vadd.f32 %v5910, %v6161
        %v6163 = vpop.f32.mrb[0].mxu0
        %6164 = vmatprep.mubr.bf16.mxu0 0
        %6165 = vmatmul.mubr.bf16.gmra.mrb[0].mxu0 %v5958
        %v6166 = vpop.f32.mrb[0].mxu0
        %v6167 = vadd.f32 %v5910, %v6166
        %v6168 = vpop.f32.mrb[0].mxu0
        %v6169 = vpop.f32.mrb[0].mxu0
        %v6170 = vadd.f32 %v5910, %v6169
        %v6171 = vpop.f32.mrb[0].mxu0
        %6172 = vmatprep.mubr.bf16.mxu0 0
        %6173 = vmatmul.mubr.bf16.gmra.mrb[0].mxu0 %v5961
        %v6174 = vpop.f32.mrb[0].mxu0
        %v6175 = vadd.f32 %v5910, %v6174
        %v6176 = vpop.f32.mrb[0].mxu0
        %v6177 = vpop.f32.mrb[0].mxu0
        %v6178 = vadd.f32 %v5910, %v6177
        %v6179 = vpop.f32.mrb[0].mxu0
        %6180 = vmatprep.mubr.bf16.mxu0 0
        %6181 = vmatmul.mubr.bf16.gmra.mrb[0].mxu0 %v5964
        %v6182 = vpop.f32.mrb[0].mxu0
        %v6183 = vadd.f32 %v5910, %v6182
        %v6184 = vpop.f32.mrb[0].mxu0
        %v6185 = vpop.f32.mrb[0].mxu0
        %v6186 = vadd.f32 %v5910, %v6185
        %v6187 = vpop.f32.mrb[0].mxu0
        %6188 = vmatprep.mubr.bf16.mxu0 0
        %6189 = vmatmul.mubr.bf16.gmra.mrb[0].mxu0 %v5967
        %v6190 = vpop.f32.mrb[0].mxu0
        %v6191 = vadd.f32 %v5910, %v6190
        %v6192 = vpop.f32.mrb[0].mxu0
        %v6193 = vpop.f32.mrb[0].mxu0
        %v6194 = vadd.f32 %v5910, %v6193
        %v6195 = vpop.f32.mrb[0].mxu0
        %6196 = vmatprep.mubr.bf16.mxu0 0
        %6197 = vmatmul.mubr.bf16.gmra.mrb[0].mxu0 %v5970
        %v6198 = vpop.f32.mrb[0].mxu0
        %v6199 = vadd.f32 %v5910, %v6198
        %v6200 = vpop.f32.mrb[0].mxu0
        %v6201 = vpop.f32.mrb[0].mxu0
        %v6202 = vadd.f32 %v5910, %v6201
        %v6203 = vpop.f32.mrb[0].mxu0
        %6204 = vmatprep.mubr.bf16.mxu0 0
        %6205 = vmatmul.mubr.bf16.gmra.mrb[0].mxu0 %v5973
        %v6206 = vpop.f32.mrb[0].mxu0
        %v6207 = vadd.f32 %v5910, %v6206
        %v6208 = vpop.f32.mrb[0].mxu0
        %v6209 = vpop.f32.mrb[0].mxu0
        %v6210 = vadd.f32 %v5910, %v6209
        %v6211 = vpop.f32.mrb[0].mxu0
        %6212 = vmatprep.mubr.bf16.mxu0 0
        %6213 = vmatmul.mubr.bf16.gmra.mrb[0].mxu0 %v5976
        %v6214 = vpop.f32.mrb[0].mxu0
        %v6215 = vadd.f32 %v5910, %v6214
        %v6216 = vpop.f32.mrb[0].mxu0
        %v6217 = vpop.f32.mrb[0].mxu0
        %v6218 = vadd.f32 %v5910, %v6217
        %v6219 = vpop.f32.mrb[0].mxu0
        %6220 = vmatprep.mubr.bf16.mxu0 0
        %6221 = vmatmul.mubr.bf16.gmra.mrb[0].mxu0 %v5979
        %v6222 = vpop.f32.mrb[0].mxu0
        %v6223 = vadd.f32 %v5910, %v6222
        %v6224 = vpop.f32.mrb[0].mxu0
        %v6225 = vpop.f32.mrb[0].mxu0
        %v6226 = vadd.f32 %v5910, %v6225
        %v6227 = vpop.f32.mrb[0].mxu0
        %6228 = vmatprep.mubr.bf16.mxu0 0
        %6229 = vmatmul.mubr.bf16.gmra.mrb[0].mxu0 %v5982
        %v6230 = vpop.f32.mrb[0].mxu0
        %v6231 = vadd.f32 %v5910, %v6230
        %v6232 = vpop.f32.mrb[0].mxu0
        %v6233 = vpop.f32.mrb[0].mxu0
        %v6234 = vadd.f32 %v5910, %v6233
        %v6235 = vpop.f32.mrb[0].mxu0
        %6236 = vmatprep.mubr.bf16.mxu0 0
        %6237 = vmatmul.mubr.bf16.gmra.mrb[0].mxu0 %v5985
        %v6238 = vpop.f32.mrb[0].mxu0
        %v6239 = vadd.f32 %v5910, %v6238
        %v6240 = vpop.f32.mrb[0].mxu0
        %v6241 = vpop.f32.mrb[0].mxu0
        %v6242 = vadd.f32 %v5910, %v6241
        %v6243 = vpop.f32.mrb[0].mxu0
        %6244 = vmatprep.mubr.bf16.mxu0 0
        %6245 = vmatmul.mubr.bf16.gmra.mrb[0].mxu0 %v5988
        %v6246 = vpop.f32.mrb[0].mxu0
        %v6247 = vadd.f32 %v5910, %v6246
        %v6248 = vpop.f32.mrb[0].mxu0
        %v6249 = vpop.f32.mrb[0].mxu0
        %v6250 = vadd.f32 %v5910, %v6249
        %v6251 = vpop.f32.mrb[0].mxu0
        %6252 = vmatprep.mubr.bf16.mxu0 0
        %6253 = vmatmul.mubr.bf16.gmra.mrb[0].mxu0 %v5991
        %v6254 = vpop.f32.mrb[0].mxu0
        %v6255 = vadd.f32 %v5910, %v6254
        %v6256 = vpop.f32.mrb[0].mxu0
        %v6257 = vpop.f32.mrb[0].mxu0
        %v6258 = vadd.f32 %v5910, %v6257
        %v6259 = vpop.f32.mrb[0].mxu0
        %6260 = vmatprep.mubr.bf16.mxu0 0
        %6261 = vmatmul.mubr.bf16.gmra.mrb[0].mxu0 %v5994
        %v6262 = vpop.f32.mrb[0].mxu0
        %v6263 = vadd.f32 %v5910, %v6262
        %v6264 = vpop.f32.mrb[0].mxu0
        %v6265 = vpop.f32.mrb[0].mxu0
        %v6266 = vadd.f32 %v5910, %v6265
        %v6267 = vpop.f32.mrb[0].mxu0
        %6268 = vmatprep.mubr.bf16.mxu0 0
        %6269 = vmatmul.mubr.bf16.gmra.mrb[0].mxu0 %v5997
        %v6270 = vpop.f32.mrb[0].mxu0
        %v6271 = vadd.f32 %v5910, %v6270
        %v6272 = vpop.f32.mrb[0].mxu0
        %v6273 = vpop.f32.mrb[0].mxu0
        %v6274 = vadd.f32 %v5910, %v6273
        %v6275 = vpop.f32.mrb[0].mxu0
        %6276 = vmatprep.mubr.bf16.mxu0 0
        %6277 = vmatmul.mubr.bf16.gmra.mrb[0].mxu0 %v6000
        %v6278 = vpop.f32.mrb[0].mxu0
        %v6279 = vadd.f32 %v5910, %v6278
        %v6280 = vpop.f32.mrb[0].mxu0
        %v6281 = vpop.f32.mrb[0].mxu0
        %v6282 = vadd.f32 %v5910, %v6281
        %v6283 = vpop.f32.mrb[0].mxu0
        %6284 = vmatprep.mubr.bf16.mxu0 0
        %6285 = vmatmul.mubr.bf16.gmra.mrb[0].mxu0 %v6003
        %v6286 = vpop.f32.mrb[0].mxu0
        %v6287 = vadd.f32 %v5910, %v6286
        %v6288 = vpop.f32.mrb[0].mxu0
        %v6289 = vpop.f32.mrb[0].mxu0
        %v6290 = vadd.f32 %v5910, %v6289
        %v6291 = vpop.f32.mrb[0].mxu0
        %6292 = vmatprep.mubr.bf16.mxu0 0
        %6293 = vmatmul.mubr.bf16.gmra.mrb[0].mxu0 %v6006
        %v6294 = vpop.f32.mrb[0].mxu0
        %v6295 = vadd.f32 %v5910, %v6294
        %v6296 = vpop.f32.mrb[0].mxu0
        %v6297 = vpop.f32.mrb[0].mxu0
        %v6298 = vadd.f32 %v5910, %v6297
        %v6299 = vpop.f32.mrb[0].mxu0
        %6300 = vmatprep.mubr.bf16.mxu0 0
        %6301 = vmatmul.mubr.bf16.gmra.mrb[0].mxu0 %v6009
        %v6302 = vpop.f32.mrb[0].mxu0
        %v6303 = vadd.f32 %v5910, %v6302
        %v6304 = vpop.f32.mrb[0].mxu0
        %v6305 = vpop.f32.mrb[0].mxu0
        %v6306 = vadd.f32 %v5910, %v6305
        %v6307 = vpop.f32.mrb[0].mxu0
        %6308 = vmatprep.mubr.bf16.mxu0 0
        %6309 = vmatmul.mubr.bf16.gmra.mrb[0].mxu0 %v6012
        %v6310 = vpop.f32.mrb[0].mxu0
        %v6311 = vadd.f32 %v5910, %v6310
        %v6312 = vpop.f32.mrb[0].mxu0
        %v6313 = vpop.f32.mrb[0].mxu0
        %v6314 = vadd.f32 %v5910, %v6313
        %v6315 = vpop.f32.mrb[0].mxu0
        %6316 = vmatprep.mubr.bf16.mxu0 0
        %6317 = vmatmul.mubr.bf16.gmra.mrb[0].mxu0 %v6015
        %v6318 = vpop.f32.mrb[0].mxu0
        %v6319 = vadd.f32 %v5910, %v6318
        %v6320 = vpop.f32.mrb[0].mxu0
        %v6321 = vpop.f32.mrb[0].mxu0
        %v6322 = vadd.f32 %v5910, %v6321
        %v6323 = vpop.f32.mrb[0].mxu0
        %6324 = vmatprep.mubr.bf16.mxu0 0
        %6325 = vmatmul.mubr.bf16.gmra.mrb[0].mxu0 %v6018
        %v6326 = vpop.f32.mrb[0].mxu0
        %v6327 = vadd.f32 %v5910, %v6326
        %v6328 = vpop.f32.mrb[0].mxu0
        %v6329 = vpop.f32.mrb[0].mxu0
        %v6330 = vadd.f32 %v5910, %v6329
        %v6331 = vpop.f32.mrb[0].mxu0
        %6332 = vmatprep.mubr.bf16.mxu0 0
        %6333 = vmatmul.mubr.bf16.gmra.mrb[0].mxu0 %v6021
        %v6334 = vpop.f32.mrb[0].mxu0
        %v6335 = vadd.f32 %v5910, %v6334
        %v6336 = vpop.f32.mrb[0].mxu0
        %v6337 = vpop.f32.mrb[0].mxu0
        %v6338 = vadd.f32 %v5910, %v6337
        %v6339 = vpop.f32.mrb[0].mxu0
        %6340 = vmatprep.mubr.bf16.mxu0 0
        %6341 = vmatmul.mubr.bf16.gmra.mrb[0].mxu0 %v6024
        %v6342 = vpop.f32.mrb[0].mxu0
        %v6343 = vadd.f32 %v5910, %v6342
        %v6344 = vpop.f32.mrb[0].mxu0
        %v6345 = vpop.f32.mrb[0].mxu0
        %v6346 = vadd.f32 %v5910, %v6345
        %v6347 = vpop.f32.mrb[0].mxu0
        %6348 = vmatprep.mubr.bf16.mxu0 0
        %6349 = vmatmul.mubr.bf16.gmra.mrb[0].mxu0 %v6027
        %v6350 = vpop.f32.mrb[0].mxu0
        %v6351 = vadd.f32 %v5910, %v6350
        %v6352 = vpop.f32.mrb[0].mxu0
        %v6353 = vpop.f32.mrb[0].mxu0
        %v6354 = vadd.f32 %v5910, %v6353
        %v6355 = vpop.f32.mrb[0].mxu0
        %6356 = vmatprep.mubr.bf16.mxu0 0
        %6357 = vmatmul.mubr.bf16.gmra.mrb[0].mxu0 %v6030
        %v6358 = vpop.f32.mrb[0].mxu0
        %v6359 = vadd.f32 %v5910, %v6358
        %v6360 = vpop.f32.mrb[0].mxu0
        %v6361 = vpop.f32.mrb[0].mxu0
        %v6362 = vadd.f32 %v5910, %v6361
        %v6363 = vpop.f32.mrb[0].mxu0
        %6364 = vmatprep.mubr.bf16.mxu0 0
        %6365 = vmatmul.mubr.bf16.gmra.mrb[0].mxu0 %v6033
        %v6366 = vpop.f32.mrb[0].mxu0
        %v6367 = vadd.f32 %v5910, %v6366
        %v6368 = vpop.f32.mrb[0].mxu0
        %v6369 = vpop.f32.mrb[0].mxu0
        %v6370 = vadd.f32 %v5910, %v6369
        %v6371 = vpop.f32.mrb[0].mxu0
        %6372 = vmatprep.mubr.bf16.mxu0 0
        %6373 = vmatmul.mubr.bf16.gmra.mrb[0].mxu0 %v6036
        %v6374 = vpop.f32.mrb[0].mxu0
        %v6375 = vadd.f32 %v5910, %v6374
        %v6376 = vpop.f32.mrb[0].mxu0
        %v6377 = vpop.f32.mrb[0].mxu0
        %v6378 = vadd.f32 %v5910, %v6377
        %v6379 = vpop.f32.mrb[0].mxu0
        %6380 = vmatprep.mubr.bf16.mxu0 0
        %6381 = vmatmul.mubr.bf16.gmra.mrb[0].mxu0 %v6039
        %v6382 = vpop.f32.mrb[0].mxu0
        %v6383 = vadd.f32 %v5910, %v6382
        %v6384 = vpop.f32.mrb[0].mxu0
        %v6385 = vpop.f32.mrb[0].mxu0
        %v6386 = vadd.f32 %v5910, %v6385
        %v6387 = vpop.f32.mrb[0].mxu0
        %6388 = vmatprep.mubr.bf16.mxu0 0
        %6389 = vmatmul.mubr.bf16.gmra.mrb[0].mxu0 %v6042
        %v6390 = vpop.f32.mrb[0].mxu0
        %v6391 = vadd.f32 %v5910, %v6390
        %v6392 = vpop.f32.mrb[0].mxu0
        %v6393 = vpop.f32.mrb[0].mxu0
        %v6394 = vadd.f32 %v5910, %v6393
        %v6395 = vpop.f32.mrb[0].mxu0
        %6396 = vdwg.mxu0
        %v6397 = vmax.f32 %v6079, 0.0
        %v6398 = vmax.f32 %v6082, 0.0
        %v6399 = vmax.f32 %v6087, 0.0
        %v6400 = vmax.f32 %v6090, 0.0
        %v6401 = vmax.f32 %v6095, 0.0
        %v6402 = vmax.f32 %v6098, 0.0
        %v6403 = vmax.f32 %v6103, 0.0
        %v6404 = vmax.f32 %v6106, 0.0
        %v6405 = vmax.f32 %v6111, 0.0
        %v6406 = vmax.f32 %v6114, 0.0
        %v6407 = vmax.f32 %v6119, 0.0
        %v6408 = vmax.f32 %v6122, 0.0
        %v6409 = vmax.f32 %v6127, 0.0
        %v6410 = vmax.f32 %v6130, 0.0
        %v6411 = vmax.f32 %v6135, 0.0
        %v6412 = vmax.f32 %v6138, 0.0
        %v6413 = vmax.f32 %v6143, 0.0
        %v6414 = vmax.f32 %v6146, 0.0
        %v6415 = vmax.f32 %v6151, 0.0
        %v6416 = vmax.f32 %v6154, 0.0
        %v6417 = vmax.f32 %v6159, 0.0
        %v6418 = vmax.f32 %v6162, 0.0
        %v6419 = vmax.f32 %v6167, 0.0
        %v6420 = vmax.f32 %v6170, 0.0
        %v6421 = vmax.f32 %v6175, 0.0
        %v6422 = vmax.f32 %v6178, 0.0
        %v6423 = vmax.f32 %v6183, 0.0
        %v6424 = vmax.f32 %v6186, 0.0
        %v6425 = vmax.f32 %v6191, 0.0
        %v6426 = vmax.f32 %v6194, 0.0
        %v6427 = vmax.f32 %v6199, 0.0
        %v6428 = vmax.f32 %v6202, 0.0
        %v6429 = vmax.f32 %v6207, 0.0
        %v6430 = vmax.f32 %v6210, 0.0
        %v6431 = vmax.f32 %v6215, 0.0
        %v6432 = vmax.f32 %v6218, 0.0
        %v6433 = vmax.f32 %v6223, 0.0
        %v6434 = vmax.f32 %v6226, 0.0
        %v6435 = vmax.f32 %v6231, 0.0
        %v6436 = vmax.f32 %v6234, 0.0
        %v6437 = vmax.f32 %v6239, 0.0
        %v6438 = vmax.f32 %v6242, 0.0
        %v6439 = vmax.f32 %v6247, 0.0
        %v6440 = vmax.f32 %v6250, 0.0
        %v6441 = vmax.f32 %v6255, 0.0
        %v6442 = vmax.f32 %v6258, 0.0
        %v6443 = vmax.f32 %v6263, 0.0
        %v6444 = vmax.f32 %v6266, 0.0
        %v6445 = vmax.f32 %v6271, 0.0
        %v6446 = vmax.f32 %v6274, 0.0
        %v6447 = vmax.f32 %v6279, 0.0
        %v6448 = vmax.f32 %v6282, 0.0
        %v6449 = vmax.f32 %v6287, 0.0
        %v6450 = vmax.f32 %v6290, 0.0
        %v6451 = vmax.f32 %v6295, 0.0
        %v6452 = vmax.f32 %v6298, 0.0
        %v6453 = vmax.f32 %v6303, 0.0
        %v6454 = vmax.f32 %v6306, 0.0
        %v6455 = vmax.f32 %v6311, 0.0
        %v6456 = vmax.f32 %v6314, 0.0
        %v6457 = vmax.f32 %v6319, 0.0
        %v6458 = vmax.f32 %v6322, 0.0
        %v6459 = vmax.f32 %v6327, 0.0
        %v6460 = vmax.f32 %v6330, 0.0
        %v6461 = vmax.f32 %v6335, 0.0
        %v6462 = vmax.f32 %v6338, 0.0
        %v6463 = vmax.f32 %v6343, 0.0
        %v6464 = vmax.f32 %v6346, 0.0
        %v6465 = vmax.f32 %v6351, 0.0
        %v6466 = vmax.f32 %v6354, 0.0
        %v6467 = vmax.f32 %v6359, 0.0
        %v6468 = vmax.f32 %v6362, 0.0
        %v6469 = vmax.f32 %v6367, 0.0
        %v6470 = vmax.f32 %v6370, 0.0
        %v6471 = vmax.f32 %v6375, 0.0
        %v6472 = vmax.f32 %v6378, 0.0
        %v6473 = vmax.f32 %v6383, 0.0
        %v6474 = vmax.f32 %v6386, 0.0
        %v6475 = vmax.f32 %v6391, 0.0
        %v6476 = vmax.f32 %v6394, 0.0
        %v6477 = vld [vmem:[%s7] sm:$0x1]
        %v6478 = vld [vmem:[#allocation2] sm:$0x1]
        %6480 = vset.pattern.permute.xlu0 0
        %6481 = vperm.xlu0 %6480, %v6478
        %v6482 = vpop.permute.xlu0 %6481
        %v6484 = vlaneseq
        %v6485 = vshrl.u32 %v6484, 7
        %v6486 = vsub.s32 0, %v6485
        %v6487 = vrot.slane %v6482, %v6486
        %v6489 = vsel %vm5307, %v6477, 0
        %v6492 = vsel %vm5307, %v6397, 0
        %v6495 = vsel %vm5307, %v6398, 0
        %v6498 = vsel %vm5307, %v6399, 0
        %v6501 = vsel %vm5307, %v6400, 0
        %v6504 = vsel %vm5307, %v6401, 0
        %v6507 = vsel %vm5307, %v6402, 0
        %v6510 = vsel %vm5307, %v6403, 0
        %v6513 = vsel %vm5307, %v6404, 0
        %v6516 = vsel %vm5307, %v6405, 0
        %v6519 = vsel %vm5307, %v6406, 0
        %v6522 = vsel %vm5307, %v6407, 0
        %v6525 = vsel %vm5307, %v6408, 0
        %v6528 = vsel %vm5307, %v6409, 0
        %v6531 = vsel %vm5307, %v6410, 0
        %v6534 = vsel %vm5307, %v6411, 0
        %v6537 = vsel %vm5307, %v6412, 0
        %v6540 = vsel %vm5307, %v6413, 0
        %v6543 = vsel %vm5307, %v6414, 0
        %v6546 = vsel %vm5307, %v6415, 0
        %v6549 = vsel %vm5307, %v6416, 0
        %v6552 = vsel %vm5307, %v6417, 0
        %v6555 = vsel %vm5307, %v6418, 0
        %v6558 = vsel %vm5307, %v6419, 0
        %v6561 = vsel %vm5307, %v6420, 0
        %v6564 = vsel %vm5307, %v6421, 0
        %v6567 = vsel %vm5307, %v6422, 0
        %v6570 = vsel %vm5307, %v6423, 0
        %v6573 = vsel %vm5307, %v6424, 0
        %v6576 = vsel %vm5307, %v6425, 0
        %v6579 = vsel %vm5307, %v6426, 0
        %v6582 = vsel %vm5307, %v6427, 0
        %v6585 = vsel %vm5307, %v6428, 0
        %v6588 = vsel %vm5307, %v6429, 0
        %v6591 = vsel %vm5307, %v6430, 0
        %v6594 = vsel %vm5307, %v6431, 0
        %v6597 = vsel %vm5307, %v6432, 0
        %v6600 = vsel %vm5307, %v6433, 0
        %v6603 = vsel %vm5307, %v6434, 0
        %v6606 = vsel %vm5307, %v6435, 0
        %v6609 = vsel %vm5307, %v6436, 0
        %v6612 = vsel %vm5307, %v6437, 0
        %v6615 = vsel %vm5307, %v6438, 0
        %v6618 = vsel %vm5307, %v6439, 0
        %v6621 = vsel %vm5307, %v6440, 0
        %v6624 = vsel %vm5307, %v6441, 0
        %v6627 = vsel %vm5307, %v6442, 0
        %v6630 = vsel %vm5307, %v6443, 0
        %v6633 = vsel %vm5307, %v6444, 0
        %v6636 = vsel %vm5307, %v6445, 0
        %v6639 = vsel %vm5307, %v6446, 0
        %v6642 = vsel %vm5307, %v6447, 0
        %v6645 = vsel %vm5307, %v6448, 0
        %v6648 = vsel %vm5307, %v6449, 0
        %v6651 = vsel %vm5307, %v6450, 0
        %v6654 = vsel %vm5307, %v6451, 0
        %v6657 = vsel %vm5307, %v6452, 0
        %v6660 = vsel %vm5307, %v6453, 0
        %v6663 = vsel %vm5307, %v6454, 0
        %v6666 = vsel %vm5307, %v6455, 0
        %v6669 = vsel %vm5307, %v6456, 0
        %v6672 = vsel %vm5307, %v6457, 0
        %v6675 = vsel %vm5307, %v6458, 0
        %v6678 = vsel %vm5307, %v6459, 0
        %v6681 = vsel %vm5307, %v6460, 0
        %v6684 = vsel %vm5307, %v6461, 0
        %v6687 = vsel %vm5307, %v6462, 0
        %v6690 = vsel %vm5307, %v6463, 0
        %v6693 = vsel %vm5307, %v6464, 0
        %v6696 = vsel %vm5307, %v6465, 0
        %v6699 = vsel %vm5307, %v6466, 0
        %v6702 = vsel %vm5307, %v6467, 0
        %v6705 = vsel %vm5307, %v6468, 0
        %v6708 = vsel %vm5307, %v6469, 0
        %v6711 = vsel %vm5307, %v6470, 0
        %v6714 = vsel %vm5307, %v6471, 0
        %v6717 = vsel %vm5307, %v6472, 0
        %v6720 = vsel %vm5307, %v6473, 0
        %v6723 = vsel %vm5307, %v6474, 0
        %v6726 = vsel %vm5307, %v6475, 0
        %v6729 = vsel %vm5307, %v6476, 0
        %6731 = vmatprep.subr.mxu0 0.0
        %6732 = vmatpush1.xpose.msra.mxu0 %v6492
        %6733 = vmatprep.subr.mxu0 0.0
        %6734 = vmatpush1.xpose.msra.mxu0 %v6495
        %6735 = vmatprep.subr.mxu0 0.0
        %6736 = vmatpush1.xpose.msra.mxu0 %v6498
        %6737 = vmatprep.subr.mxu0 0.0
        %6738 = vmatpush1.xpose.msra.mxu0 %v6501
        %6739 = vmatprep.subr.mxu0 0.0
        %6740 = vmatpush1.xpose.msra.mxu0 %v6504
        %6741 = vmatprep.subr.mxu0 0.0
        %6742 = vmatpush1.xpose.msra.mxu0 %v6507
        %6743 = vmatprep.subr.mxu0 0.0
        %6744 = vmatpush1.xpose.msra.mxu0 %v6510
        %6745 = vmatprep.subr.mxu0 0.0
        %6746 = vmatpush1.xpose.msra.mxu0 %v6513
        %6747 = vmatprep.subr.mxu0 0.0
        %6748 = vmatpush1.xpose.msra.mxu0 %v6516
        %6749 = vmatprep.subr.mxu0 0.0
        %6750 = vmatpush1.xpose.msra.mxu0 %v6519
        %6751 = vmatprep.subr.mxu0 0.0
        %6752 = vmatpush1.xpose.msra.mxu0 %v6522
        %6753 = vmatprep.subr.mxu0 0.0
        %6754 = vmatpush1.xpose.msra.mxu0 %v6525
        %6755 = vmatprep.subr.mxu0 0.0
        %6756 = vmatpush1.xpose.msra.mxu0 %v6528
        %6757 = vmatprep.subr.mxu0 0.0
        %6758 = vmatpush1.xpose.msra.mxu0 %v6531
        %6759 = vmatprep.subr.mxu0 0.0
        %6760 = vmatpush1.xpose.msra.mxu0 %v6534
        %6761 = vmatprep.subr.mxu0 0.0
        %6762 = vmatpush1.xpose.msra.mxu0 %v6537
        %6763 = vmatprep.subr.mxu0 0.0
        %6764 = vmatpush1.xpose.msra.mxu0 %v6540
        %6765 = vmatprep.subr.mxu0 0.0
        %6766 = vmatpush1.xpose.msra.mxu0 %v6543
        %6767 = vmatprep.subr.mxu0 0.0
        %6768 = vmatpush1.xpose.msra.mxu0 %v6546
        %6769 = vmatprep.subr.mxu0 0.0
        %6770 = vmatpush1.xpose.msra.mxu0 %v6549
        %6771 = vmatprep.subr.mxu0 0.0
        %6772 = vmatpush1.xpose.msra.mxu0 %v6552
        %6773 = vmatprep.subr.mxu0 0.0
        %6774 = vmatpush1.xpose.msra.mxu0 %v6555
        %6775 = vmatprep.subr.mxu0 0.0
        %6776 = vmatpush1.xpose.msra.mxu0 %v6558
        %6777 = vmatprep.subr.mxu0 0.0
        %6778 = vmatpush1.xpose.msra.mxu0 %v6561
        %6779 = vmatprep.subr.mxu0 0.0
        %6780 = vmatpush1.xpose.msra.mxu0 %v6564
        %6781 = vmatprep.subr.mxu0 0.0
        %6782 = vmatpush1.xpose.msra.mxu0 %v6567
        %6783 = vmatprep.subr.mxu0 0.0
        %6784 = vmatpush1.xpose.msra.mxu0 %v6570
        %6785 = vmatprep.subr.mxu0 0.0
        %6786 = vmatpush1.xpose.msra.mxu0 %v6573
        %6787 = vmatprep.subr.mxu0 0.0
        %6788 = vmatpush1.xpose.msra.mxu0 %v6576
        %6789 = vmatprep.subr.mxu0 0.0
        %6790 = vmatpush1.xpose.msra.mxu0 %v6579
        %6791 = vmatprep.subr.mxu0 0.0
        %6792 = vmatpush1.xpose.msra.mxu0 %v6582
        %6793 = vmatprep.subr.mxu0 0.0
        %6794 = vmatpush1.xpose.msra.mxu0 %v6585
        %6795 = vmatprep.mubr.f32.mxu0 0.0
        %6796 = vmatmul.mubr.f32.gmra.mrb[0].mxu0 %v6489
        %v6797 = vpop.f32.mrb[0].mxu0
        %v6798 = vadd.f32 %v6487, %v6797
        %v6799 = vpop.f32.mrb[0].mxu0
        %v6800 = vadd.f32 %v6487, %v6799
        %6801 = vdwg.mxu0
        %6802 = vmatprep.subr.mxu0 0.0
        %6803 = vmatpush1.xpose.msra.mxu0 %v6588
        %6804 = vmatprep.subr.mxu0 0.0
        %6805 = vmatpush1.xpose.msra.mxu0 %v6591
        %6806 = vmatprep.subr.mxu0 0.0
        %6807 = vmatpush1.xpose.msra.mxu0 %v6594
        %6808 = vmatprep.subr.mxu0 0.0
        %6809 = vmatpush1.xpose.msra.mxu0 %v6597
        %6810 = vmatprep.subr.mxu0 0.0
        %6811 = vmatpush1.xpose.msra.mxu0 %v6600
        %6812 = vmatprep.subr.mxu0 0.0
        %6813 = vmatpush1.xpose.msra.mxu0 %v6603
        %6814 = vmatprep.subr.mxu0 0.0
        %6815 = vmatpush1.xpose.msra.mxu0 %v6606
        %6816 = vmatprep.subr.mxu0 0.0
        %6817 = vmatpush1.xpose.msra.mxu0 %v6609
        %6818 = vmatprep.subr.mxu0 0.0
        %6819 = vmatpush1.xpose.msra.mxu0 %v6612
        %6820 = vmatprep.subr.mxu0 0.0
        %6821 = vmatpush1.xpose.msra.mxu0 %v6615
        %6822 = vmatprep.subr.mxu0 0.0
        %6823 = vmatpush1.xpose.msra.mxu0 %v6618
        %6824 = vmatprep.subr.mxu0 0.0
        %6825 = vmatpush1.xpose.msra.mxu0 %v6621
        %6826 = vmatprep.subr.mxu0 0.0
        %6827 = vmatpush1.xpose.msra.mxu0 %v6624
        %6828 = vmatprep.subr.mxu0 0.0
        %6829 = vmatpush1.xpose.msra.mxu0 %v6627
        %6830 = vmatprep.subr.mxu0 0.0
        %6831 = vmatpush1.xpose.msra.mxu0 %v6630
        %6832 = vmatprep.subr.mxu0 0.0
        %6833 = vmatpush1.xpose.msra.mxu0 %v6633
        %6834 = vmatprep.subr.mxu0 0.0
        %6835 = vmatpush1.xpose.msra.mxu0 %v6636
        %6836 = vmatprep.subr.mxu0 0.0
        %6837 = vmatpush1.xpose.msra.mxu0 %v6639
        %6838 = vmatprep.subr.mxu0 0.0
        %6839 = vmatpush1.xpose.msra.mxu0 %v6642
        %6840 = vmatprep.subr.mxu0 0.0
        %6841 = vmatpush1.xpose.msra.mxu0 %v6645
        %6842 = vmatprep.subr.mxu0 0.0
        %6843 = vmatpush1.xpose.msra.mxu0 %v6648
        %6844 = vmatprep.subr.mxu0 0.0
        %6845 = vmatpush1.xpose.msra.mxu0 %v6651
        %6846 = vmatprep.subr.mxu0 0.0
        %6847 = vmatpush1.xpose.msra.mxu0 %v6654
        %6848 = vmatprep.subr.mxu0 0.0
        %6849 = vmatpush1.xpose.msra.mxu0 %v6657
        %6850 = vmatprep.subr.mxu0 0.0
        %6851 = vmatpush1.xpose.msra.mxu0 %v6660
        %6852 = vmatprep.subr.mxu0 0.0
        %6853 = vmatpush1.xpose.msra.mxu0 %v6663
        %6854 = vmatprep.subr.mxu0 0.0
        %6855 = vmatpush1.xpose.msra.mxu0 %v6666
        %6856 = vmatprep.subr.mxu0 0.0
        %6857 = vmatpush1.xpose.msra.mxu0 %v6669
        %6858 = vmatprep.subr.mxu0 0.0
        %6859 = vmatpush1.xpose.msra.mxu0 %v6672
        %6860 = vmatprep.subr.mxu0 0.0
        %6861 = vmatpush1.xpose.msra.mxu0 %v6675
        %6862 = vmatprep.subr.mxu0 0.0
        %6863 = vmatpush1.xpose.msra.mxu0 %v6678
        %6864 = vmatprep.subr.mxu0 0.0
        %6865 = vmatpush1.xpose.msra.mxu0 %v6681
        %6866 = vmatprep.mubr.f32.mxu0 0.0
        %6867 = vmatmul.mubr.f32.gmra.mrb[0].mxu0 %v6489
        %v6868 = vpop.f32.mrb[0].mxu0
        %v6869 = vadd.f32 %v6487, %v6868
        %v6870 = vpop.f32.mrb[0].mxu0
        %v6871 = vadd.f32 %v6487, %v6870
        %6872 = vdwg.mxu0
        %6873 = vmatprep.subr.mxu0 0.0
        %6874 = vmatpush1.xpose.msra.mxu0 %v6684
        %6875 = vmatprep.subr.mxu0 0.0
        %6876 = vmatpush1.xpose.msra.mxu0 %v6687
        %6877 = vmatprep.subr.mxu0 0.0
        %6878 = vmatpush1.xpose.msra.mxu0 %v6690
        %6879 = vmatprep.subr.mxu0 0.0
        %6880 = vmatpush1.xpose.msra.mxu0 %v6693
        %6881 = vmatprep.subr.mxu0 0.0
        %6882 = vmatpush1.xpose.msra.mxu0 %v6696
        %6883 = vmatprep.subr.mxu0 0.0
        %6884 = vmatpush1.xpose.msra.mxu0 %v6699
        %6885 = vmatprep.subr.mxu0 0.0
        %6886 = vmatpush1.xpose.msra.mxu0 %v6702
        %6887 = vmatprep.subr.mxu0 0.0
        %6888 = vmatpush1.xpose.msra.mxu0 %v6705
        %6889 = vmatprep.subr.mxu0 0.0
        %6890 = vmatpush1.xpose.msra.mxu0 %v6708
        %6891 = vmatprep.subr.mxu0 0.0
        %6892 = vmatpush1.xpose.msra.mxu0 %v6711
        %6893 = vmatprep.subr.mxu0 0.0
        %6894 = vmatpush1.xpose.msra.mxu0 %v6714
        %6895 = vmatprep.subr.mxu0 0.0
        %6896 = vmatpush1.xpose.msra.mxu0 %v6717
        %6897 = vmatprep.subr.mxu0 0.0
        %6898 = vmatpush1.xpose.msra.mxu0 %v6720
        %6899 = vmatprep.subr.mxu0 0.0
        %6900 = vmatpush1.xpose.msra.mxu0 %v6723
        %6901 = vmatprep.subr.mxu0 0.0
        %6902 = vmatpush1.xpose.msra.mxu0 %v6726
        %6903 = vmatprep.subr.mxu0 0.0
        %6904 = vmatpush1.xpose.msra.mxu0 %v6729
        %6905 = vmatprep.subr.mxu0 0.0
        %6906 = vmatpush1.xpose.msra.mxu0 0.0
        %6907 = vmatprep.subr.mxu0 0.0
        %6908 = vmatpush1.xpose.msra.mxu0 0.0
        %6909 = vmatprep.subr.mxu0 0.0
        %6910 = vmatpush1.xpose.msra.mxu0 0.0
        %6911 = vmatprep.subr.mxu0 0.0
        %6912 = vmatpush1.xpose.msra.mxu0 0.0
        %6913 = vmatprep.subr.mxu0 0.0
        %6914 = vmatpush1.xpose.msra.mxu0 0.0
        %6915 = vmatprep.subr.mxu0 0.0
        %6916 = vmatpush1.xpose.msra.mxu0 0.0
        %6917 = vmatprep.subr.mxu0 0.0
        %6918 = vmatpush1.xpose.msra.mxu0 0.0
        %6919 = vmatprep.subr.mxu0 0.0
        %6920 = vmatpush1.xpose.msra.mxu0 0.0
        %6921 = vmatprep.subr.mxu0 0.0
        %6922 = vmatpush1.xpose.msra.mxu0 0.0
        %6923 = vmatprep.subr.mxu0 0.0
        %6924 = vmatpush1.xpose.msra.mxu0 0.0
        %6925 = vmatprep.subr.mxu0 0.0
        %6926 = vmatpush1.xpose.msra.mxu0 0.0
        %6927 = vmatprep.subr.mxu0 0.0
        %6928 = vmatpush1.xpose.msra.mxu0 0.0
        %6929 = vmatprep.subr.mxu0 0.0
        %6930 = vmatpush1.xpose.msra.mxu0 0.0
        %6931 = vmatprep.subr.mxu0 0.0
        %6932 = vmatpush1.xpose.msra.mxu0 0.0
        %6933 = vmatprep.subr.mxu0 0.0
        %6934 = vmatpush1.xpose.msra.mxu0 0.0
        %6935 = vmatprep.subr.mxu0 0.0
        %6936 = vmatpush1.xpose.msra.mxu0 0.0
        %6937 = vmatprep.mubr.f32.mxu0 0.0
        %6938 = vmatmul.mubr.f32.gmra.mrb[0].mxu0 %v6489
        %v6939 = vpop.f32.mrb[0].mxu0
        %v6940 = vadd.f32 %v6487, %v6939
        %v6941 = vpop.f32.mrb[0].mxu0
        %6942 = vdwg.mxu0
        %v6948 = vcombine.low %v6798, %v6800
        %v6949 = vcombine.low %v6869, %v6871
        %v6951 = vunpack.c.l.s4 1966171168
        %v6952 = vunpack.c.0.s8 %v6951
        %v6953 = vlaneseq
        %v6954 = vshrl.u32 %v6953, 7
        %v6955 = vsub.s32 %v6952, %v6954
        %v6956 = vrot.slane %v6948, %v6955
        %v6958 = vunpack.c.l.s4 1966171168
        %v6959 = vunpack.c.0.s8 %v6958
        %v6960 = vlaneseq
        %v6961 = vshrl.u32 %v6960, 7
        %v6962 = vsub.s32 %v6959, %v6961
        %v6963 = vrot.slane %v6949, %v6962
        %v6965 = vunpack.c.l.s4 1966171168
        %v6966 = vunpack.c.0.s8 %v6965
        %v6967 = vlaneseq
        %v6968 = vshrl.u32 %v6967, 7
        %v6969 = vsub.s32 %v6966, %v6968
        %v6970 = vrot.slane %v6940, %v6969
        %v6971 = vcombine.low %v6956, %v6963
        %v6973 = vunpack.c.l.s4 1966171168
        %v6974 = vunpack.c.0.s8 %v6973
        %v6975 = vlaneseq
        %v6976 = vshrl.u32 %v6975, 7
        %v6977 = vsub.s32 %v6974, %v6976
        %v6978 = vrot.slane %v6971, %v6977
        %v6980 = vunpack.c.l.s4 1966171168
        %v6981 = vunpack.c.0.s8 %v6980
        %v6982 = vlaneseq
        %v6983 = vshrl.u32 %v6982, 7
        %v6984 = vsub.s32 %v6981, %v6983
        %v6985 = vrot.slane %v6970, %v6984
        %v6986 = vcombine.low %v6978, %v6985
        %v6988 = vlaneseq
        %vm6989 = vcmp.ge.s32.totalorder %v6988, 0
        %vm6990 = vcmp.lt.s32.totalorder %v6988, 640
        %vm6991 = vmand %vm6989, %vm6990
        %6992 = vst.msk [vmem:[%s328] sm:$0x1f] %vm6991, %v6986
        %s6993 = sand.u32 %s227, 1
        %s6994 = scalar_lea.sflag [#allocation4], %s6993
        %s6995 = sand.u32 %s227, 1
        %s6996 = smul.addr %s6995, 5
        %s6997 = scalar_lea.vmem [#allocation3], %s6996
        // Predicated region
        $region57: #{pnn_forward.1} parent=55 // pred_check
          %p6998 = pneg %p237
        $region58: #{pnn_forward.1} parent=55 // pred_check_branch
          %7000 = sbr.rel (%p6998) target = $region60
        $region59: #{pnn_forward.1} parent=55 // pred_region
          %s7002 = ssub.s32 80, 80
          %7003 = vsyncadd %s6994, %s7002
          %s7004 = smul.addr %s25, 5
          %s7005 = smul.addr %s7004, 16
          %s7006 = scalar_lea.hbm %s9, %s7005
          %s7008 = sshll.u32 %s6997, 4
          %s7009 = int_to_ptr.vmem [resolvable:$true] %s7008
          %7011 = dma.vmem_to_hbm [thread:$0]  %s7009, 80, %s7006, %s6994
        $region60: #{pnn_forward.1} parent=55 // pred_fallthru
          _
      $region56: #{pnn_forward.1} parent=5 // pred_fallthru
        _
      %p7012 = scmp.le.s32.totalorder 2, %s20
      // Predicated region
      $region61: #{pnn_forward.1} parent=5 // pred_check
        %p7013 = pneg %p7012
      $region62: #{pnn_forward.1} parent=5 // pred_check_branch
        %7015 = sbr.rel (%p7013) target = $region64
      $region63: #{pnn_forward.1} parent=5 // pred_region
        %s7016 = ssub.s32 %s20, 2
        // Predicated region
        $region65: #{pnn_forward.1} parent=63 // pred_check
          %p7017 = pneg %p243
        $region66: #{pnn_forward.1} parent=63 // pred_check_branch
          %7019 = sbr.rel (%p7017) target = $region68
        $region67: #{pnn_forward.1} parent=63 // pred_region
          %s7020 = sand.u32 %s228, 1
          %s7021 = scalar_lea.sflag [#allocation4], %s7020
          %s7022 = sand.u32 %s228, 1
          %s7023 = smul.addr %s7022, 5
          %s7024 = scalar_lea.vmem [#allocation3], %s7023
          %7025 = dma.done %s7021, 80
        $region68: #{pnn_forward.1} parent=63 // pred_fallthru
          _
      $region64: #{pnn_forward.1} parent=5 // pred_fallthru
        _
    $region6: #{pnn_forward.1} parent=1 // loop_footer
      %s24 = sadd.s32 1, %s20
    $region7: #{pnn_forward.1} parent=1 // loop_footer_branch
      %19 = sbr.rel target = $region3
    $region8: #{pnn_forward.1} parent=1 // loop_exit
      _
    %7026 = vsyncpa [#allocation4], 1
    %s7027 = scalar_lea.sflag [#allocation4], 1
    %7028 = vsyncpa %s7027, 1

</llo_original>
